<compile_context>
chip_gen: v7x
topology: tpu7x:2x2x1
jax: 0.10.0
libtpu: 0.0.40
codegen_flags: <defaults>
</compile_context>

<pallas_src>
import jax
import jax.numpy as jnp
from jax.experimental import pallas as pl
from jax.experimental.pallas import tpu as pltpu

# ---- sizes (small, consistent with the module's forward) ----
B = 2        # batch
S = 8        # src sequence length
T = 8        # trg sequence length
E = 16       # embedding dim
H = 32       # hidden dim
HA = 32      # attention dim
SRC_V = 48   # src vocab size
TRG_V = 40   # trg vocab size (decoder.output_dim)
PAD = 0      # src_pad_idx
V_PAD = 128  # trg vocab padded to a full lane tile for lane-dense stores


def _lstm_gates(gates, c, h_dim):
    i = jax.nn.sigmoid(gates[:, 0 * h_dim:1 * h_dim])
    f = jax.nn.sigmoid(gates[:, 1 * h_dim:2 * h_dim])
    g = jnp.tanh(gates[:, 2 * h_dim:3 * h_dim])
    o = jax.nn.sigmoid(gates[:, 3 * h_dim:4 * h_dim])
    c_new = f * c + i * g
    h_new = o * jnp.tanh(c_new)
    return h_new, c_new


# --------------- fused encoder + decoder-loop kernel ---------------
def seq2seq_kernel(tf_ref, emb_src_ref, mask_ref, trg_oh_ref, emb_trg_ref,
                   w_ih_ref, w_hh_ref, b_enc_ref,
                   wa_h_ref, wa_e_ref, ba_ref, va_ref,
                   w_gates_ref, bd_ref, w_out_ref, bo_ref,
                   out_ref):
    f32 = jnp.float32

    # ---- load weights / small tensors once ----
    mask = mask_ref[...]                         # (B, S) 1.0 valid / 0.0 pad
    emb_trg = emb_trg_ref[...]                   # (V_PAD, E)
    w_hh = w_hh_ref[...]                         # (H, 4H)
    wa_h = wa_h_ref[...]                         # (H, HA)
    va = va_ref[...]                             # (1, 1, HA)
    w_gates = w_gates_ref[...]                   # (E+2H, 4H)
    w_out = w_out_ref[...]                       # (2H+E, V_PAD)
    bd_b = jnp.broadcast_to(bd_ref[...], (B, 4 * H))     # hoisted bias broadcasts
    bo_b = jnp.broadcast_to(bo_ref[...], (B, V_PAD))

    # ---- encoder ----
    # Input-side projection hoisted out of the recurrence: one well-shaped matmul.
    x_all = emb_src_ref[...].reshape(S * B, E)
    xproj = (jnp.dot(x_all, w_ih_ref[...], preferred_element_type=f32)
             + b_enc_ref[...]).reshape(S, B, 4 * H)

    h = jnp.zeros((B, H), f32)
    c = jnp.zeros((B, H), f32)
    enc_steps = []
    for t in range(S):                           # unrolled: S is a compile-time constant
        m = mask[:, t][:, None]                  # (B, 1)
        gates = xproj[t] + jnp.dot(h, w_hh, preferred_element_type=f32)
        h_new, c_new = _lstm_gates(gates, c, H)
        # pad_packed_sequence semantics: padded steps -> zero outputs, frozen state.
        enc_steps.append(h_new * m)
        h = m * h_new + (1.0 - m) * h
        c = m * c_new + (1.0 - m) * c
    enc = jnp.stack(enc_steps, axis=1)           # (B, S, H), stays in VMEM/vregs

    # ---- decoder: attention + LSTM cell + projection per step, fully fused ----
    # Loop-invariant attention projection of encoder outputs (+ attention bias).
    e_proj = (jnp.einsum('bsh,ha->bsa', enc, wa_e_ref[...],
                         preferred_element_type=f32)
              + ba_ref[...][None])                # (B, S, HA)
    attn_bias = (mask - 1.0) * 1e9                # 0 for valid, -1e9 for pad (hoisted select)

    out_ref[0] = jnp.zeros((B, V_PAD), f32)       # outputs[:, 0] stays zero
    iota = jax.lax.broadcasted_iota(jnp.int32, (B, V_PAD), 1)

    inp_oh = trg_oh_ref[0]                        # one-hot of trg[:, 0], (B, V_PAD)
    for t in range(1, T):                         # unrolled: T is a compile-time constant
        # embedding lookup as one-hot matmul (no dynamic gather needed)
        x = jnp.dot(inp_oh, emb_trg, preferred_element_type=f32)          # (B, E)

        # additive (Bahdanau) attention, masked by src_mask
        h_proj = jnp.dot(h, wa_h, preferred_element_type=f32)             # (B, HA)
        energy = jnp.tanh(h_proj[:, None, :] + e_proj)                    # (B, S, HA)
        scores = jnp.sum(energy * va, axis=-1) + attn_bias                # (B, S)
        scores = scores - jnp.max(scores, axis=-1, keepdims=True)
        p = jnp.exp(scores)
        attn = p * pl.reciprocal(jnp.sum(p, axis=-1, keepdims=True), approx=True)
        context = jnp.sum(attn[:, :, None] * enc, axis=1)                 # (B, H)

        # LSTM cell on [x ; context ; h] -> single fused matmul
        xin = jnp.concatenate([x, context, h], axis=1)                    # (B, E+2H)
        gates = jnp.dot(xin, w_gates, preferred_element_type=f32) + bd_b
        h, c = _lstm_gates(gates, c, H)

        # output projection on [h ; context ; x] -> single fused matmul (lane-dense V_PAD)
        xo = jnp.concatenate([h, context, x], axis=1)                     # (B, 2H+E)
        logits = jnp.dot(xo, w_out, preferred_element_type=f32) + bo_b    # (B, V_PAD)
        out_ref[t] = logits

        # argmax -> one-hot (first max wins, matching torch argmax); padded vocab
        # columns carry a -1e9 bias so they can never be selected.
        mx = jnp.max(logits, axis=-1, keepdims=True)
        idx = jnp.min(jnp.where(logits == mx, iota, V_PAD), axis=-1, keepdims=True)
        pred_oh = (iota == idx).astype(f32)                               # (B, V_PAD)

        # teacher forcing select for next input
        inp_oh = jnp.where(tf_ref[t] == 1, trg_oh_ref[t], pred_oh)


def run_seq2seq_kernel(tf_flags, emb_src_tm, src_mask, trg_oh_tm, emb_trg_pad,
                       w_ih, w_hh, b_enc, wa_h, wa_e, ba, va,
                       w_gates, bd, w_out_pad, bo_pad):
    vmem = pl.BlockSpec(memory_space=pltpu.MemorySpace.VMEM)
    smem = pl.BlockSpec(memory_space=pltpu.MemorySpace.SMEM)
    return pl.pallas_call(
        seq2seq_kernel,
        out_shape=jax.ShapeDtypeStruct((T, B, V_PAD), jnp.float32),
        in_specs=[smem] + [vmem] * 15,
        out_specs=vmem,
    )(tf_flags, emb_src_tm, src_mask, trg_oh_tm, emb_trg_pad,
      w_ih, w_hh, b_enc, wa_h, wa_e, ba, va, w_gates, bd, w_out_pad, bo_pad)


# ---------------- Seq2Seq forward (thin glue around the one Pallas kernel) ----------------
def seq2seq_forward(params, src, src_len, trg, teacher_forcing_ratio=0.5, key=None):
    del src_len  # padding positions (== PAD) encode the lengths via the mask
    src_mask = (src != PAD).astype(jnp.float32)                       # create_src_mask, (B, S)
    emb_src = jnp.take(params['emb_src'], src, axis=0)                # (B, S, E) embedding lookup (glue)
    emb_tm = jnp.transpose(emb_src, (1, 0, 2))                        # (S, B, E)

    # TODO(synk): np.random teacher forcing is inherently nondeterministic; replaced
    # with deterministic per-step draws from a fixed PRNG key.
    if key is None:
        key = jax.random.PRNGKey(0)
    tf_flags = (jax.random.uniform(key, (T,)) < teacher_forcing_ratio).astype(jnp.int32)

    # one-hot trg tokens (padded to V_PAD lanes) so the in-kernel embedding lookup
    # is a tiny matmul instead of a dynamic gather
    trg_oh_tm = jnp.transpose(jax.nn.one_hot(trg, V_PAD, dtype=jnp.float32), (1, 0, 2))  # (T, B, V_PAD)
    emb_trg_pad = jnp.pad(params['emb_trg'], ((0, V_PAD - TRG_V), (0, 0)))

    # fuse decoder split matmuls at trace time; pad vocab dim to a full lane tile
    w_gates = jnp.concatenate([params['wih_e'], params['wih_c'], params['whh']], axis=0)   # (E+2H, 4H)
    w_out = jnp.concatenate([params['wo_h'], params['wo_c'], params['wo_e']], axis=0)      # (2H+E, TRG_V)
    w_out_pad = jnp.pad(w_out, ((0, 0), (0, V_PAD - TRG_V)))
    bo_pad = jnp.concatenate(
        [params['bo'], jnp.full((1, V_PAD - TRG_V), -1e9, jnp.float32)], axis=1)

    out_tm = run_seq2seq_kernel(
        tf_flags, emb_tm, src_mask, trg_oh_tm, emb_trg_pad,
        params['enc_w_ih'], params['enc_w_hh'], params['enc_b'],
        params['wa_h'], params['wa_e'], params['ba'], params['va'],
        w_gates, params['bd'], w_out_pad, bo_pad)                     # (T, B, V_PAD)

    return jnp.transpose(out_tm[:, :, :TRG_V], (1, 0, 2))             # (B, T, TRG_V)


def init_params(key):
    ks = jax.random.split(key, 17)
    scale = 0.1

    def w(k, shape):
        return jax.random.normal(k, shape, jnp.float32) * scale

    return {
        'emb_src': w(ks[0], (SRC_V, E)),
        'emb_trg': w(ks[1], (TRG_V, E)),
        # encoder LSTM (gate order i, f, g, o)
        'enc_w_ih': w(ks[2], (E, 4 * H)),
        'enc_w_hh': w(ks[3], (H, 4 * H)),
        'enc_b': w(ks[4], (1, 4 * H)),
        # attention
        'wa_h': w(ks[5], (H, HA)),
        'wa_e': w(ks[6], (H, HA)),
        'ba': w(ks[7], (1, HA)),
        'va': w(ks[8], (1, 1, HA)),
        # decoder LSTM cell on [emb ; context]
        'wih_e': w(ks[9], (E, 4 * H)),
        'wih_c': w(ks[10], (H, 4 * H)),
        'whh': w(ks[11], (H, 4 * H)),
        'bd': w(ks[12], (1, 4 * H)),
        # output projection on [h ; context ; emb]
        'wo_h': w(ks[13], (H, TRG_V)),
        'wo_c': w(ks[14], (H, TRG_V)),
        'wo_e': w(ks[15], (E, TRG_V)),
        'bo': w(ks[16], (1, TRG_V)),
    }


if __name__ == "__main__":
    key = jax.random.PRNGKey(0)
    kp, k_src, k_trg, k_tf = jax.random.split(key, 4)
    params = init_params(kp)

    src_len = jnp.array([S, 5], dtype=jnp.int32)
    src = jax.random.randint(k_src, (B, S), 1, SRC_V, dtype=jnp.int32)
    pos = jnp.arange(S)[None, :]
    src = jnp.where(pos < src_len[:, None], src, PAD)                 # pad the tails
    trg = jax.random.randint(k_trg, (B, T), 0, TRG_V, dtype=jnp.int32)

    out = seq2seq_forward(params, src, src_len, trg, teacher_forcing_ratio=0.5, key=k_tf)
    out = jax.block_until_ready(out)
    assert out.shape == (B, T, TRG_V) and out.dtype == jnp.float32
    print("KERNEL_OK")
</pallas_src>

<mosaic_0001>
module attributes {stable_mosaic.version = 11 : i64} {
  func.func @seq2seq_kernel(%arg0: memref<8xi32, #tpu.memory_space<smem>>, %arg1: memref<8x2x16xf32, #tpu.memory_space<vmem>>, %arg2: memref<2x8xf32, #tpu.memory_space<vmem>>, %arg3: memref<8x2x128xf32, #tpu.memory_space<vmem>>, %arg4: memref<128x16xf32, #tpu.memory_space<vmem>>, %arg5: memref<16x128xf32, #tpu.memory_space<vmem>>, %arg6: memref<32x128xf32, #tpu.memory_space<vmem>>, %arg7: memref<1x128xf32, #tpu.memory_space<vmem>>, %arg8: memref<32x32xf32, #tpu.memory_space<vmem>>, %arg9: memref<32x32xf32, #tpu.memory_space<vmem>>, %arg10: memref<1x32xf32, #tpu.memory_space<vmem>>, %arg11: memref<1x1x32xf32, #tpu.memory_space<vmem>>, %arg12: memref<80x128xf32, #tpu.memory_space<vmem>>, %arg13: memref<1x128xf32, #tpu.memory_space<vmem>>, %arg14: memref<80x128xf32, #tpu.memory_space<vmem>>, %arg15: memref<1x128xf32, #tpu.memory_space<vmem>>, %arg16: memref<8x2x128xf32, #tpu.memory_space<vmem>>) attributes {dimension_semantics = [], scalar_prefetch = 0 : i64, scratch_operands = 0 : i64, tpu.core_type = #tpu.core_type<tc>} {
    %c0 = arith.constant 0 : index
    %c0_0 = arith.constant 0 : index
    %0 = vector.load %arg2[%c0, %c0_0] : memref<2x8xf32, #tpu.memory_space<vmem>>, vector<2x8xf32>
    %c0_1 = arith.constant 0 : index
    %c0_2 = arith.constant 0 : index
    %1 = vector.load %arg4[%c0_1, %c0_2] : memref<128x16xf32, #tpu.memory_space<vmem>>, vector<128x16xf32>
    %c0_3 = arith.constant 0 : index
    %c0_4 = arith.constant 0 : index
    %2 = vector.load %arg6[%c0_3, %c0_4] : memref<32x128xf32, #tpu.memory_space<vmem>>, vector<32x128xf32>
    %c0_5 = arith.constant 0 : index
    %c0_6 = arith.constant 0 : index
    %3 = vector.load %arg8[%c0_5, %c0_6] : memref<32x32xf32, #tpu.memory_space<vmem>>, vector<32x32xf32>
    %c0_7 = arith.constant 0 : index
    %c0_8 = arith.constant 0 : index
    %c0_9 = arith.constant 0 : index
    %4 = vector.load %arg11[%c0_7, %c0_8, %c0_9] : memref<1x1x32xf32, #tpu.memory_space<vmem>>, vector<1x1x32xf32>
    %c0_10 = arith.constant 0 : index
    %c0_11 = arith.constant 0 : index
    %5 = vector.load %arg12[%c0_10, %c0_11] : memref<80x128xf32, #tpu.memory_space<vmem>>, vector<80x128xf32>
    %c0_12 = arith.constant 0 : index
    %c0_13 = arith.constant 0 : index
    %6 = vector.load %arg14[%c0_12, %c0_13] : memref<80x128xf32, #tpu.memory_space<vmem>>, vector<80x128xf32>
    %c0_14 = arith.constant 0 : index
    %c0_15 = arith.constant 0 : index
    %7 = vector.load %arg13[%c0_14, %c0_15] : memref<1x128xf32, #tpu.memory_space<vmem>>, vector<1x128xf32>
    %8 = vector.shape_cast %7 : vector<1x128xf32> to vector<1x128xf32>
    %9 = vector.broadcast %8 : vector<1x128xf32> to vector<2x128xf32>
    %c0_16 = arith.constant 0 : index
    %c0_17 = arith.constant 0 : index
    %10 = vector.load %arg15[%c0_16, %c0_17] : memref<1x128xf32, #tpu.memory_space<vmem>>, vector<1x128xf32>
    %11 = vector.shape_cast %10 : vector<1x128xf32> to vector<1x128xf32>
    %12 = vector.broadcast %11 : vector<1x128xf32> to vector<2x128xf32>
    %c0_18 = arith.constant 0 : index
    %c0_19 = arith.constant 0 : index
    %c0_20 = arith.constant 0 : index
    %13 = vector.load %arg1[%c0_18, %c0_19, %c0_20] : memref<8x2x16xf32, #tpu.memory_space<vmem>>, vector<8x2x16xf32>
    %14 = vector.shape_cast %13 : vector<8x2x16xf32> to vector<16x16xf32>
    %c0_21 = arith.constant 0 : index
    %c0_22 = arith.constant 0 : index
    %15 = vector.load %arg5[%c0_21, %c0_22] : memref<16x128xf32, #tpu.memory_space<vmem>>, vector<16x128xf32>
    %cst = arith.constant dense<0.000000e+00> : vector<16x128xf32>
    %16 = tpu.matmul %14, %15, %cst {dimension_numbers = #tpu.dot_dimension_numbers<[1], [0], [0], [1], [0, 0, 1, 1], [], []>} : vector<16x16xf32>, vector<16x128xf32>, vector<16x128xf32> -> vector<16x128xf32>
    %c0_23 = arith.constant 0 : index
    %c0_24 = arith.constant 0 : index
    %17 = vector.load %arg7[%c0_23, %c0_24] : memref<1x128xf32, #tpu.memory_space<vmem>>, vector<1x128xf32>
    %18 = vector.broadcast %17 : vector<1x128xf32> to vector<16x128xf32>
    %19 = arith.addf %16, %18 : vector<16x128xf32>
    %20 = vector.shape_cast %19 : vector<16x128xf32> to vector<8x2x128xf32>
    %cst_25 = arith.constant 0.000000e+00 : f32
    %21 = vector.broadcast %cst_25 : f32 to vector<2x32xf32>
    %cst_26 = arith.constant 0.000000e+00 : f32
    %22 = vector.broadcast %cst_26 : f32 to vector<2x32xf32>
    %23 = vector.extract_strided_slice %0 {offsets = [0, 0], sizes = [2, 1], strides = [1, 1]} : vector<2x8xf32> to vector<2x1xf32>
    %24 = vector.shape_cast %23 : vector<2x1xf32> to vector<2xf32>
    %25 = vector.shape_cast %24 : vector<2xf32> to vector<2x1xf32>
    %26 = vector.extract_strided_slice %20 {offsets = [0, 0, 0], sizes = [1, 2, 128], strides = [1, 1, 1]} : vector<8x2x128xf32> to vector<1x2x128xf32>
    %27 = vector.shape_cast %26 : vector<1x2x128xf32> to vector<2x128xf32>
    %cst_27 = arith.constant dense<0.000000e+00> : vector<2x128xf32>
    %28 = tpu.matmul %21, %2, %cst_27 {dimension_numbers = #tpu.dot_dimension_numbers<[1], [0], [0], [1], [0, 0, 1, 1], [], []>} : vector<2x32xf32>, vector<32x128xf32>, vector<2x128xf32> -> vector<2x128xf32>
    %29 = arith.addf %27, %28 : vector<2x128xf32>
    %30 = vector.extract_strided_slice %29 {offsets = [0, 0], sizes = [2, 32], strides = [1, 1]} : vector<2x128xf32> to vector<2x32xf32>
    %31 = arith.negf %30 : vector<2x32xf32>
    %32 = math.exp %31 : vector<2x32xf32>
    %cst_28 = arith.constant 1.000000e+00 : f32
    %33 = vector.broadcast %cst_28 : f32 to vector<2x32xf32>
    %34 = arith.addf %33, %32 : vector<2x32xf32>
    %35 = arith.divf %33, %34 : vector<2x32xf32>
    %36 = vector.extract_strided_slice %29 {offsets = [0, 32], sizes = [2, 32], strides = [1, 1]} : vector<2x128xf32> to vector<2x32xf32>
    %37 = arith.negf %36 : vector<2x32xf32>
    %38 = math.exp %37 : vector<2x32xf32>
    %cst_29 = arith.constant 1.000000e+00 : f32
    %39 = vector.broadcast %cst_29 : f32 to vector<2x32xf32>
    %40 = arith.addf %39, %38 : vector<2x32xf32>
    %41 = arith.divf %39, %40 : vector<2x32xf32>
    %42 = vector.extract_strided_slice %29 {offsets = [0, 64], sizes = [2, 32], strides = [1, 1]} : vector<2x128xf32> to vector<2x32xf32>
    %43 = math.tanh %42 : vector<2x32xf32>
    %44 = vector.extract_strided_slice %29 {offsets = [0, 96], sizes = [2, 32], strides = [1, 1]} : vector<2x128xf32> to vector<2x32xf32>
    %45 = arith.negf %44 : vector<2x32xf32>
    %46 = math.exp %45 : vector<2x32xf32>
    %cst_30 = arith.constant 1.000000e+00 : f32
    %47 = vector.broadcast %cst_30 : f32 to vector<2x32xf32>
    %48 = arith.addf %47, %46 : vector<2x32xf32>
    %49 = arith.divf %47, %48 : vector<2x32xf32>
    %50 = arith.mulf %41, %22 : vector<2x32xf32>
    %51 = arith.mulf %35, %43 : vector<2x32xf32>
    %52 = arith.addf %50, %51 : vector<2x32xf32>
    %53 = math.tanh %52 : vector<2x32xf32>
    %54 = arith.mulf %49, %53 : vector<2x32xf32>
    %55 = vector.broadcast %25 : vector<2x1xf32> to vector<2x32xf32>
    %56 = arith.mulf %54, %55 : vector<2x32xf32>
    %57 = vector.broadcast %25 : vector<2x1xf32> to vector<2x32xf32>
    %58 = arith.mulf %57, %54 : vector<2x32xf32>
    %cst_31 = arith.constant 1.000000e+00 : f32
    %59 = vector.broadcast %cst_31 : f32 to vector<2x1xf32>
    %60 = arith.subf %59, %25 : vector<2x1xf32>
    %61 = vector.broadcast %60 : vector<2x1xf32> to vector<2x32xf32>
    %62 = arith.mulf %61, %21 : vector<2x32xf32>
    %63 = arith.addf %58, %62 : vector<2x32xf32>
    %64 = vector.broadcast %25 : vector<2x1xf32> to vector<2x32xf32>
    %65 = arith.mulf %64, %52 : vector<2x32xf32>
    %cst_32 = arith.constant 1.000000e+00 : f32
    %66 = vector.broadcast %cst_32 : f32 to vector<2x1xf32>
    %67 = arith.subf %66, %25 : vector<2x1xf32>
    %68 = vector.broadcast %67 : vector<2x1xf32> to vector<2x32xf32>
    %69 = arith.mulf %68, %22 : vector<2x32xf32>
    %70 = arith.addf %65, %69 : vector<2x32xf32>
    %71 = vector.extract_strided_slice %0 {offsets = [0, 1], sizes = [2, 1], strides = [1, 1]} : vector<2x8xf32> to vector<2x1xf32>
    %72 = vector.shape_cast %71 : vector<2x1xf32> to vector<2xf32>
    %73 = vector.shape_cast %72 : vector<2xf32> to vector<2x1xf32>
    %74 = vector.extract_strided_slice %20 {offsets = [1, 0, 0], sizes = [1, 2, 128], strides = [1, 1, 1]} : vector<8x2x128xf32> to vector<1x2x128xf32>
    %75 = vector.shape_cast %74 : vector<1x2x128xf32> to vector<2x128xf32>
    %cst_33 = arith.constant dense<0.000000e+00> : vector<2x128xf32>
    %76 = tpu.matmul %63, %2, %cst_33 {dimension_numbers = #tpu.dot_dimension_numbers<[1], [0], [0], [1], [0, 0, 1, 1], [], []>} : vector<2x32xf32>, vector<32x128xf32>, vector<2x128xf32> -> vector<2x128xf32>
    %77 = arith.addf %75, %76 : vector<2x128xf32>
    %78 = vector.extract_strided_slice %77 {offsets = [0, 0], sizes = [2, 32], strides = [1, 1]} : vector<2x128xf32> to vector<2x32xf32>
    %79 = arith.negf %78 : vector<2x32xf32>
    %80 = math.exp %79 : vector<2x32xf32>
    %cst_34 = arith.constant 1.000000e+00 : f32
    %81 = vector.broadcast %cst_34 : f32 to vector<2x32xf32>
    %82 = arith.addf %81, %80 : vector<2x32xf32>
    %83 = arith.divf %81, %82 : vector<2x32xf32>
    %84 = vector.extract_strided_slice %77 {offsets = [0, 32], sizes = [2, 32], strides = [1, 1]} : vector<2x128xf32> to vector<2x32xf32>
    %85 = arith.negf %84 : vector<2x32xf32>
    %86 = math.exp %85 : vector<2x32xf32>
    %cst_35 = arith.constant 1.000000e+00 : f32
    %87 = vector.broadcast %cst_35 : f32 to vector<2x32xf32>
    %88 = arith.addf %87, %86 : vector<2x32xf32>
    %89 = arith.divf %87, %88 : vector<2x32xf32>
    %90 = vector.extract_strided_slice %77 {offsets = [0, 64], sizes = [2, 32], strides = [1, 1]} : vector<2x128xf32> to vector<2x32xf32>
    %91 = math.tanh %90 : vector<2x32xf32>
    %92 = vector.extract_strided_slice %77 {offsets = [0, 96], sizes = [2, 32], strides = [1, 1]} : vector<2x128xf32> to vector<2x32xf32>
    %93 = arith.negf %92 : vector<2x32xf32>
    %94 = math.exp %93 : vector<2x32xf32>
    %cst_36 = arith.constant 1.000000e+00 : f32
    %95 = vector.broadcast %cst_36 : f32 to vector<2x32xf32>
    %96 = arith.addf %95, %94 : vector<2x32xf32>
    %97 = arith.divf %95, %96 : vector<2x32xf32>
    %98 = arith.mulf %89, %70 : vector<2x32xf32>
    %99 = arith.mulf %83, %91 : vector<2x32xf32>
    %100 = arith.addf %98, %99 : vector<2x32xf32>
    %101 = math.tanh %100 : vector<2x32xf32>
    %102 = arith.mulf %97, %101 : vector<2x32xf32>
    %103 = vector.broadcast %73 : vector<2x1xf32> to vector<2x32xf32>
    %104 = arith.mulf %102, %103 : vector<2x32xf32>
    %105 = vector.broadcast %73 : vector<2x1xf32> to vector<2x32xf32>
    %106 = arith.mulf %105, %102 : vector<2x32xf32>
    %cst_37 = arith.constant 1.000000e+00 : f32
    %107 = vector.broadcast %cst_37 : f32 to vector<2x1xf32>
    %108 = arith.subf %107, %73 : vector<2x1xf32>
    %109 = vector.broadcast %108 : vector<2x1xf32> to vector<2x32xf32>
    %110 = arith.mulf %109, %63 : vector<2x32xf32>
    %111 = arith.addf %106, %110 : vector<2x32xf32>
    %112 = vector.broadcast %73 : vector<2x1xf32> to vector<2x32xf32>
    %113 = arith.mulf %112, %100 : vector<2x32xf32>
    %cst_38 = arith.constant 1.000000e+00 : f32
    %114 = vector.broadcast %cst_38 : f32 to vector<2x1xf32>
    %115 = arith.subf %114, %73 : vector<2x1xf32>
    %116 = vector.broadcast %115 : vector<2x1xf32> to vector<2x32xf32>
    %117 = arith.mulf %116, %70 : vector<2x32xf32>
    %118 = arith.addf %113, %117 : vector<2x32xf32>
    %119 = vector.extract_strided_slice %0 {offsets = [0, 2], sizes = [2, 1], strides = [1, 1]} : vector<2x8xf32> to vector<2x1xf32>
    %120 = vector.shape_cast %119 : vector<2x1xf32> to vector<2xf32>
    %121 = vector.shape_cast %120 : vector<2xf32> to vector<2x1xf32>
    %122 = vector.extract_strided_slice %20 {offsets = [2, 0, 0], sizes = [1, 2, 128], strides = [1, 1, 1]} : vector<8x2x128xf32> to vector<1x2x128xf32>
    %123 = vector.shape_cast %122 : vector<1x2x128xf32> to vector<2x128xf32>
    %cst_39 = arith.constant dense<0.000000e+00> : vector<2x128xf32>
    %124 = tpu.matmul %111, %2, %cst_39 {dimension_numbers = #tpu.dot_dimension_numbers<[1], [0], [0], [1], [0, 0, 1, 1], [], []>} : vector<2x32xf32>, vector<32x128xf32>, vector<2x128xf32> -> vector<2x128xf32>
    %125 = arith.addf %123, %124 : vector<2x128xf32>
    %126 = vector.extract_strided_slice %125 {offsets = [0, 0], sizes = [2, 32], strides = [1, 1]} : vector<2x128xf32> to vector<2x32xf32>
    %127 = arith.negf %126 : vector<2x32xf32>
    %128 = math.exp %127 : vector<2x32xf32>
    %cst_40 = arith.constant 1.000000e+00 : f32
    %129 = vector.broadcast %cst_40 : f32 to vector<2x32xf32>
    %130 = arith.addf %129, %128 : vector<2x32xf32>
    %131 = arith.divf %129, %130 : vector<2x32xf32>
    %132 = vector.extract_strided_slice %125 {offsets = [0, 32], sizes = [2, 32], strides = [1, 1]} : vector<2x128xf32> to vector<2x32xf32>
    %133 = arith.negf %132 : vector<2x32xf32>
    %134 = math.exp %133 : vector<2x32xf32>
    %cst_41 = arith.constant 1.000000e+00 : f32
    %135 = vector.broadcast %cst_41 : f32 to vector<2x32xf32>
    %136 = arith.addf %135, %134 : vector<2x32xf32>
    %137 = arith.divf %135, %136 : vector<2x32xf32>
    %138 = vector.extract_strided_slice %125 {offsets = [0, 64], sizes = [2, 32], strides = [1, 1]} : vector<2x128xf32> to vector<2x32xf32>
    %139 = math.tanh %138 : vector<2x32xf32>
    %140 = vector.extract_strided_slice %125 {offsets = [0, 96], sizes = [2, 32], strides = [1, 1]} : vector<2x128xf32> to vector<2x32xf32>
    %141 = arith.negf %140 : vector<2x32xf32>
    %142 = math.exp %141 : vector<2x32xf32>
    %cst_42 = arith.constant 1.000000e+00 : f32
    %143 = vector.broadcast %cst_42 : f32 to vector<2x32xf32>
    %144 = arith.addf %143, %142 : vector<2x32xf32>
    %145 = arith.divf %143, %144 : vector<2x32xf32>
    %146 = arith.mulf %137, %118 : vector<2x32xf32>
    %147 = arith.mulf %131, %139 : vector<2x32xf32>
    %148 = arith.addf %146, %147 : vector<2x32xf32>
    %149 = math.tanh %148 : vector<2x32xf32>
    %150 = arith.mulf %145, %149 : vector<2x32xf32>
    %151 = vector.broadcast %121 : vector<2x1xf32> to vector<2x32xf32>
    %152 = arith.mulf %150, %151 : vector<2x32xf32>
    %153 = vector.broadcast %121 : vector<2x1xf32> to vector<2x32xf32>
    %154 = arith.mulf %153, %150 : vector<2x32xf32>
    %cst_43 = arith.constant 1.000000e+00 : f32
    %155 = vector.broadcast %cst_43 : f32 to vector<2x1xf32>
    %156 = arith.subf %155, %121 : vector<2x1xf32>
    %157 = vector.broadcast %156 : vector<2x1xf32> to vector<2x32xf32>
    %158 = arith.mulf %157, %111 : vector<2x32xf32>
    %159 = arith.addf %154, %158 : vector<2x32xf32>
    %160 = vector.broadcast %121 : vector<2x1xf32> to vector<2x32xf32>
    %161 = arith.mulf %160, %148 : vector<2x32xf32>
    %cst_44 = arith.constant 1.000000e+00 : f32
    %162 = vector.broadcast %cst_44 : f32 to vector<2x1xf32>
    %163 = arith.subf %162, %121 : vector<2x1xf32>
    %164 = vector.broadcast %163 : vector<2x1xf32> to vector<2x32xf32>
    %165 = arith.mulf %164, %118 : vector<2x32xf32>
    %166 = arith.addf %161, %165 : vector<2x32xf32>
    %167 = vector.extract_strided_slice %0 {offsets = [0, 3], sizes = [2, 1], strides = [1, 1]} : vector<2x8xf32> to vector<2x1xf32>
    %168 = vector.shape_cast %167 : vector<2x1xf32> to vector<2xf32>
    %169 = vector.shape_cast %168 : vector<2xf32> to vector<2x1xf32>
    %170 = vector.extract_strided_slice %20 {offsets = [3, 0, 0], sizes = [1, 2, 128], strides = [1, 1, 1]} : vector<8x2x128xf32> to vector<1x2x128xf32>
    %171 = vector.shape_cast %170 : vector<1x2x128xf32> to vector<2x128xf32>
    %cst_45 = arith.constant dense<0.000000e+00> : vector<2x128xf32>
    %172 = tpu.matmul %159, %2, %cst_45 {dimension_numbers = #tpu.dot_dimension_numbers<[1], [0], [0], [1], [0, 0, 1, 1], [], []>} : vector<2x32xf32>, vector<32x128xf32>, vector<2x128xf32> -> vector<2x128xf32>
    %173 = arith.addf %171, %172 : vector<2x128xf32>
    %174 = vector.extract_strided_slice %173 {offsets = [0, 0], sizes = [2, 32], strides = [1, 1]} : vector<2x128xf32> to vector<2x32xf32>
    %175 = arith.negf %174 : vector<2x32xf32>
    %176 = math.exp %175 : vector<2x32xf32>
    %cst_46 = arith.constant 1.000000e+00 : f32
    %177 = vector.broadcast %cst_46 : f32 to vector<2x32xf32>
    %178 = arith.addf %177, %176 : vector<2x32xf32>
    %179 = arith.divf %177, %178 : vector<2x32xf32>
    %180 = vector.extract_strided_slice %173 {offsets = [0, 32], sizes = [2, 32], strides = [1, 1]} : vector<2x128xf32> to vector<2x32xf32>
    %181 = arith.negf %180 : vector<2x32xf32>
    %182 = math.exp %181 : vector<2x32xf32>
    %cst_47 = arith.constant 1.000000e+00 : f32
    %183 = vector.broadcast %cst_47 : f32 to vector<2x32xf32>
    %184 = arith.addf %183, %182 : vector<2x32xf32>
    %185 = arith.divf %183, %184 : vector<2x32xf32>
    %186 = vector.extract_strided_slice %173 {offsets = [0, 64], sizes = [2, 32], strides = [1, 1]} : vector<2x128xf32> to vector<2x32xf32>
    %187 = math.tanh %186 : vector<2x32xf32>
    %188 = vector.extract_strided_slice %173 {offsets = [0, 96], sizes = [2, 32], strides = [1, 1]} : vector<2x128xf32> to vector<2x32xf32>
    %189 = arith.negf %188 : vector<2x32xf32>
    %190 = math.exp %189 : vector<2x32xf32>
    %cst_48 = arith.constant 1.000000e+00 : f32
    %191 = vector.broadcast %cst_48 : f32 to vector<2x32xf32>
    %192 = arith.addf %191, %190 : vector<2x32xf32>
    %193 = arith.divf %191, %192 : vector<2x32xf32>
    %194 = arith.mulf %185, %166 : vector<2x32xf32>
    %195 = arith.mulf %179, %187 : vector<2x32xf32>
    %196 = arith.addf %194, %195 : vector<2x32xf32>
    %197 = math.tanh %196 : vector<2x32xf32>
    %198 = arith.mulf %193, %197 : vector<2x32xf32>
    %199 = vector.broadcast %169 : vector<2x1xf32> to vector<2x32xf32>
    %200 = arith.mulf %198, %199 : vector<2x32xf32>
    %201 = vector.broadcast %169 : vector<2x1xf32> to vector<2x32xf32>
    %202 = arith.mulf %201, %198 : vector<2x32xf32>
    %cst_49 = arith.constant 1.000000e+00 : f32
    %203 = vector.broadcast %cst_49 : f32 to vector<2x1xf32>
    %204 = arith.subf %203, %169 : vector<2x1xf32>
    %205 = vector.broadcast %204 : vector<2x1xf32> to vector<2x32xf32>
    %206 = arith.mulf %205, %159 : vector<2x32xf32>
    %207 = arith.addf %202, %206 : vector<2x32xf32>
    %208 = vector.broadcast %169 : vector<2x1xf32> to vector<2x32xf32>
    %209 = arith.mulf %208, %196 : vector<2x32xf32>
    %cst_50 = arith.constant 1.000000e+00 : f32
    %210 = vector.broadcast %cst_50 : f32 to vector<2x1xf32>
    %211 = arith.subf %210, %169 : vector<2x1xf32>
    %212 = vector.broadcast %211 : vector<2x1xf32> to vector<2x32xf32>
    %213 = arith.mulf %212, %166 : vector<2x32xf32>
    %214 = arith.addf %209, %213 : vector<2x32xf32>
    %215 = vector.extract_strided_slice %0 {offsets = [0, 4], sizes = [2, 1], strides = [1, 1]} : vector<2x8xf32> to vector<2x1xf32>
    %216 = vector.shape_cast %215 : vector<2x1xf32> to vector<2xf32>
    %217 = vector.shape_cast %216 : vector<2xf32> to vector<2x1xf32>
    %218 = vector.extract_strided_slice %20 {offsets = [4, 0, 0], sizes = [1, 2, 128], strides = [1, 1, 1]} : vector<8x2x128xf32> to vector<1x2x128xf32>
    %219 = vector.shape_cast %218 : vector<1x2x128xf32> to vector<2x128xf32>
    %cst_51 = arith.constant dense<0.000000e+00> : vector<2x128xf32>
    %220 = tpu.matmul %207, %2, %cst_51 {dimension_numbers = #tpu.dot_dimension_numbers<[1], [0], [0], [1], [0, 0, 1, 1], [], []>} : vector<2x32xf32>, vector<32x128xf32>, vector<2x128xf32> -> vector<2x128xf32>
    %221 = arith.addf %219, %220 : vector<2x128xf32>
    %222 = vector.extract_strided_slice %221 {offsets = [0, 0], sizes = [2, 32], strides = [1, 1]} : vector<2x128xf32> to vector<2x32xf32>
    %223 = arith.negf %222 : vector<2x32xf32>
    %224 = math.exp %223 : vector<2x32xf32>
    %cst_52 = arith.constant 1.000000e+00 : f32
    %225 = vector.broadcast %cst_52 : f32 to vector<2x32xf32>
    %226 = arith.addf %225, %224 : vector<2x32xf32>
    %227 = arith.divf %225, %226 : vector<2x32xf32>
    %228 = vector.extract_strided_slice %221 {offsets = [0, 32], sizes = [2, 32], strides = [1, 1]} : vector<2x128xf32> to vector<2x32xf32>
    %229 = arith.negf %228 : vector<2x32xf32>
    %230 = math.exp %229 : vector<2x32xf32>
    %cst_53 = arith.constant 1.000000e+00 : f32
    %231 = vector.broadcast %cst_53 : f32 to vector<2x32xf32>
    %232 = arith.addf %231, %230 : vector<2x32xf32>
    %233 = arith.divf %231, %232 : vector<2x32xf32>
    %234 = vector.extract_strided_slice %221 {offsets = [0, 64], sizes = [2, 32], strides = [1, 1]} : vector<2x128xf32> to vector<2x32xf32>
    %235 = math.tanh %234 : vector<2x32xf32>
    %236 = vector.extract_strided_slice %221 {offsets = [0, 96], sizes = [2, 32], strides = [1, 1]} : vector<2x128xf32> to vector<2x32xf32>
    %237 = arith.negf %236 : vector<2x32xf32>
    %238 = math.exp %237 : vector<2x32xf32>
    %cst_54 = arith.constant 1.000000e+00 : f32
    %239 = vector.broadcast %cst_54 : f32 to vector<2x32xf32>
    %240 = arith.addf %239, %238 : vector<2x32xf32>
    %241 = arith.divf %239, %240 : vector<2x32xf32>
    %242 = arith.mulf %233, %214 : vector<2x32xf32>
    %243 = arith.mulf %227, %235 : vector<2x32xf32>
    %244 = arith.addf %242, %243 : vector<2x32xf32>
    %245 = math.tanh %244 : vector<2x32xf32>
    %246 = arith.mulf %241, %245 : vector<2x32xf32>
    %247 = vector.broadcast %217 : vector<2x1xf32> to vector<2x32xf32>
    %248 = arith.mulf %246, %247 : vector<2x32xf32>
    %249 = vector.broadcast %217 : vector<2x1xf32> to vector<2x32xf32>
    %250 = arith.mulf %249, %246 : vector<2x32xf32>
    %cst_55 = arith.constant 1.000000e+00 : f32
    %251 = vector.broadcast %cst_55 : f32 to vector<2x1xf32>
    %252 = arith.subf %251, %217 : vector<2x1xf32>
    %253 = vector.broadcast %252 : vector<2x1xf32> to vector<2x32xf32>
    %254 = arith.mulf %253, %207 : vector<2x32xf32>
    %255 = arith.addf %250, %254 : vector<2x32xf32>
    %256 = vector.broadcast %217 : vector<2x1xf32> to vector<2x32xf32>
    %257 = arith.mulf %256, %244 : vector<2x32xf32>
    %cst_56 = arith.constant 1.000000e+00 : f32
    %258 = vector.broadcast %cst_56 : f32 to vector<2x1xf32>
    %259 = arith.subf %258, %217 : vector<2x1xf32>
    %260 = vector.broadcast %259 : vector<2x1xf32> to vector<2x32xf32>
    %261 = arith.mulf %260, %214 : vector<2x32xf32>
    %262 = arith.addf %257, %261 : vector<2x32xf32>
    %263 = vector.extract_strided_slice %0 {offsets = [0, 5], sizes = [2, 1], strides = [1, 1]} : vector<2x8xf32> to vector<2x1xf32>
    %264 = vector.shape_cast %263 : vector<2x1xf32> to vector<2xf32>
    %265 = vector.shape_cast %264 : vector<2xf32> to vector<2x1xf32>
    %266 = vector.extract_strided_slice %20 {offsets = [5, 0, 0], sizes = [1, 2, 128], strides = [1, 1, 1]} : vector<8x2x128xf32> to vector<1x2x128xf32>
    %267 = vector.shape_cast %266 : vector<1x2x128xf32> to vector<2x128xf32>
    %cst_57 = arith.constant dense<0.000000e+00> : vector<2x128xf32>
    %268 = tpu.matmul %255, %2, %cst_57 {dimension_numbers = #tpu.dot_dimension_numbers<[1], [0], [0], [1], [0, 0, 1, 1], [], []>} : vector<2x32xf32>, vector<32x128xf32>, vector<2x128xf32> -> vector<2x128xf32>
    %269 = arith.addf %267, %268 : vector<2x128xf32>
    %270 = vector.extract_strided_slice %269 {offsets = [0, 0], sizes = [2, 32], strides = [1, 1]} : vector<2x128xf32> to vector<2x32xf32>
    %271 = arith.negf %270 : vector<2x32xf32>
    %272 = math.exp %271 : vector<2x32xf32>
    %cst_58 = arith.constant 1.000000e+00 : f32
    %273 = vector.broadcast %cst_58 : f32 to vector<2x32xf32>
    %274 = arith.addf %273, %272 : vector<2x32xf32>
    %275 = arith.divf %273, %274 : vector<2x32xf32>
    %276 = vector.extract_strided_slice %269 {offsets = [0, 32], sizes = [2, 32], strides = [1, 1]} : vector<2x128xf32> to vector<2x32xf32>
    %277 = arith.negf %276 : vector<2x32xf32>
    %278 = math.exp %277 : vector<2x32xf32>
    %cst_59 = arith.constant 1.000000e+00 : f32
    %279 = vector.broadcast %cst_59 : f32 to vector<2x32xf32>
    %280 = arith.addf %279, %278 : vector<2x32xf32>
    %281 = arith.divf %279, %280 : vector<2x32xf32>
    %282 = vector.extract_strided_slice %269 {offsets = [0, 64], sizes = [2, 32], strides = [1, 1]} : vector<2x128xf32> to vector<2x32xf32>
    %283 = math.tanh %282 : vector<2x32xf32>
    %284 = vector.extract_strided_slice %269 {offsets = [0, 96], sizes = [2, 32], strides = [1, 1]} : vector<2x128xf32> to vector<2x32xf32>
    %285 = arith.negf %284 : vector<2x32xf32>
    %286 = math.exp %285 : vector<2x32xf32>
    %cst_60 = arith.constant 1.000000e+00 : f32
    %287 = vector.broadcast %cst_60 : f32 to vector<2x32xf32>
    %288 = arith.addf %287, %286 : vector<2x32xf32>
    %289 = arith.divf %287, %288 : vector<2x32xf32>
    %290 = arith.mulf %281, %262 : vector<2x32xf32>
    %291 = arith.mulf %275, %283 : vector<2x32xf32>
    %292 = arith.addf %290, %291 : vector<2x32xf32>
    %293 = math.tanh %292 : vector<2x32xf32>
    %294 = arith.mulf %289, %293 : vector<2x32xf32>
    %295 = vector.broadcast %265 : vector<2x1xf32> to vector<2x32xf32>
    %296 = arith.mulf %294, %295 : vector<2x32xf32>
    %297 = vector.broadcast %265 : vector<2x1xf32> to vector<2x32xf32>
    %298 = arith.mulf %297, %294 : vector<2x32xf32>
    %cst_61 = arith.constant 1.000000e+00 : f32
    %299 = vector.broadcast %cst_61 : f32 to vector<2x1xf32>
    %300 = arith.subf %299, %265 : vector<2x1xf32>
    %301 = vector.broadcast %300 : vector<2x1xf32> to vector<2x32xf32>
    %302 = arith.mulf %301, %255 : vector<2x32xf32>
    %303 = arith.addf %298, %302 : vector<2x32xf32>
    %304 = vector.broadcast %265 : vector<2x1xf32> to vector<2x32xf32>
    %305 = arith.mulf %304, %292 : vector<2x32xf32>
    %cst_62 = arith.constant 1.000000e+00 : f32
    %306 = vector.broadcast %cst_62 : f32 to vector<2x1xf32>
    %307 = arith.subf %306, %265 : vector<2x1xf32>
    %308 = vector.broadcast %307 : vector<2x1xf32> to vector<2x32xf32>
    %309 = arith.mulf %308, %262 : vector<2x32xf32>
    %310 = arith.addf %305, %309 : vector<2x32xf32>
    %311 = vector.extract_strided_slice %0 {offsets = [0, 6], sizes = [2, 1], strides = [1, 1]} : vector<2x8xf32> to vector<2x1xf32>
    %312 = vector.shape_cast %311 : vector<2x1xf32> to vector<2xf32>
    %313 = vector.shape_cast %312 : vector<2xf32> to vector<2x1xf32>
    %314 = vector.extract_strided_slice %20 {offsets = [6, 0, 0], sizes = [1, 2, 128], strides = [1, 1, 1]} : vector<8x2x128xf32> to vector<1x2x128xf32>
    %315 = vector.shape_cast %314 : vector<1x2x128xf32> to vector<2x128xf32>
    %cst_63 = arith.constant dense<0.000000e+00> : vector<2x128xf32>
    %316 = tpu.matmul %303, %2, %cst_63 {dimension_numbers = #tpu.dot_dimension_numbers<[1], [0], [0], [1], [0, 0, 1, 1], [], []>} : vector<2x32xf32>, vector<32x128xf32>, vector<2x128xf32> -> vector<2x128xf32>
    %317 = arith.addf %315, %316 : vector<2x128xf32>
    %318 = vector.extract_strided_slice %317 {offsets = [0, 0], sizes = [2, 32], strides = [1, 1]} : vector<2x128xf32> to vector<2x32xf32>
    %319 = arith.negf %318 : vector<2x32xf32>
    %320 = math.exp %319 : vector<2x32xf32>
    %cst_64 = arith.constant 1.000000e+00 : f32
    %321 = vector.broadcast %cst_64 : f32 to vector<2x32xf32>
    %322 = arith.addf %321, %320 : vector<2x32xf32>
    %323 = arith.divf %321, %322 : vector<2x32xf32>
    %324 = vector.extract_strided_slice %317 {offsets = [0, 32], sizes = [2, 32], strides = [1, 1]} : vector<2x128xf32> to vector<2x32xf32>
    %325 = arith.negf %324 : vector<2x32xf32>
    %326 = math.exp %325 : vector<2x32xf32>
    %cst_65 = arith.constant 1.000000e+00 : f32
    %327 = vector.broadcast %cst_65 : f32 to vector<2x32xf32>
    %328 = arith.addf %327, %326 : vector<2x32xf32>
    %329 = arith.divf %327, %328 : vector<2x32xf32>
    %330 = vector.extract_strided_slice %317 {offsets = [0, 64], sizes = [2, 32], strides = [1, 1]} : vector<2x128xf32> to vector<2x32xf32>
    %331 = math.tanh %330 : vector<2x32xf32>
    %332 = vector.extract_strided_slice %317 {offsets = [0, 96], sizes = [2, 32], strides = [1, 1]} : vector<2x128xf32> to vector<2x32xf32>
    %333 = arith.negf %332 : vector<2x32xf32>
    %334 = math.exp %333 : vector<2x32xf32>
    %cst_66 = arith.constant 1.000000e+00 : f32
    %335 = vector.broadcast %cst_66 : f32 to vector<2x32xf32>
    %336 = arith.addf %335, %334 : vector<2x32xf32>
    %337 = arith.divf %335, %336 : vector<2x32xf32>
    %338 = arith.mulf %329, %310 : vector<2x32xf32>
    %339 = arith.mulf %323, %331 : vector<2x32xf32>
    %340 = arith.addf %338, %339 : vector<2x32xf32>
    %341 = math.tanh %340 : vector<2x32xf32>
    %342 = arith.mulf %337, %341 : vector<2x32xf32>
    %343 = vector.broadcast %313 : vector<2x1xf32> to vector<2x32xf32>
    %344 = arith.mulf %342, %343 : vector<2x32xf32>
    %345 = vector.broadcast %313 : vector<2x1xf32> to vector<2x32xf32>
    %346 = arith.mulf %345, %342 : vector<2x32xf32>
    %cst_67 = arith.constant 1.000000e+00 : f32
    %347 = vector.broadcast %cst_67 : f32 to vector<2x1xf32>
    %348 = arith.subf %347, %313 : vector<2x1xf32>
    %349 = vector.broadcast %348 : vector<2x1xf32> to vector<2x32xf32>
    %350 = arith.mulf %349, %303 : vector<2x32xf32>
    %351 = arith.addf %346, %350 : vector<2x32xf32>
    %352 = vector.broadcast %313 : vector<2x1xf32> to vector<2x32xf32>
    %353 = arith.mulf %352, %340 : vector<2x32xf32>
    %cst_68 = arith.constant 1.000000e+00 : f32
    %354 = vector.broadcast %cst_68 : f32 to vector<2x1xf32>
    %355 = arith.subf %354, %313 : vector<2x1xf32>
    %356 = vector.broadcast %355 : vector<2x1xf32> to vector<2x32xf32>
    %357 = arith.mulf %356, %310 : vector<2x32xf32>
    %358 = arith.addf %353, %357 : vector<2x32xf32>
    %359 = vector.extract_strided_slice %0 {offsets = [0, 7], sizes = [2, 1], strides = [1, 1]} : vector<2x8xf32> to vector<2x1xf32>
    %360 = vector.shape_cast %359 : vector<2x1xf32> to vector<2xf32>
    %361 = vector.shape_cast %360 : vector<2xf32> to vector<2x1xf32>
    %362 = vector.extract_strided_slice %20 {offsets = [7, 0, 0], sizes = [1, 2, 128], strides = [1, 1, 1]} : vector<8x2x128xf32> to vector<1x2x128xf32>
    %363 = vector.shape_cast %362 : vector<1x2x128xf32> to vector<2x128xf32>
    %cst_69 = arith.constant dense<0.000000e+00> : vector<2x128xf32>
    %364 = tpu.matmul %351, %2, %cst_69 {dimension_numbers = #tpu.dot_dimension_numbers<[1], [0], [0], [1], [0, 0, 1, 1], [], []>} : vector<2x32xf32>, vector<32x128xf32>, vector<2x128xf32> -> vector<2x128xf32>
    %365 = arith.addf %363, %364 : vector<2x128xf32>
    %366 = vector.extract_strided_slice %365 {offsets = [0, 0], sizes = [2, 32], strides = [1, 1]} : vector<2x128xf32> to vector<2x32xf32>
    %367 = arith.negf %366 : vector<2x32xf32>
    %368 = math.exp %367 : vector<2x32xf32>
    %cst_70 = arith.constant 1.000000e+00 : f32
    %369 = vector.broadcast %cst_70 : f32 to vector<2x32xf32>
    %370 = arith.addf %369, %368 : vector<2x32xf32>
    %371 = arith.divf %369, %370 : vector<2x32xf32>
    %372 = vector.extract_strided_slice %365 {offsets = [0, 32], sizes = [2, 32], strides = [1, 1]} : vector<2x128xf32> to vector<2x32xf32>
    %373 = arith.negf %372 : vector<2x32xf32>
    %374 = math.exp %373 : vector<2x32xf32>
    %cst_71 = arith.constant 1.000000e+00 : f32
    %375 = vector.broadcast %cst_71 : f32 to vector<2x32xf32>
    %376 = arith.addf %375, %374 : vector<2x32xf32>
    %377 = arith.divf %375, %376 : vector<2x32xf32>
    %378 = vector.extract_strided_slice %365 {offsets = [0, 64], sizes = [2, 32], strides = [1, 1]} : vector<2x128xf32> to vector<2x32xf32>
    %379 = math.tanh %378 : vector<2x32xf32>
    %380 = vector.extract_strided_slice %365 {offsets = [0, 96], sizes = [2, 32], strides = [1, 1]} : vector<2x128xf32> to vector<2x32xf32>
    %381 = arith.negf %380 : vector<2x32xf32>
    %382 = math.exp %381 : vector<2x32xf32>
    %cst_72 = arith.constant 1.000000e+00 : f32
    %383 = vector.broadcast %cst_72 : f32 to vector<2x32xf32>
    %384 = arith.addf %383, %382 : vector<2x32xf32>
    %385 = arith.divf %383, %384 : vector<2x32xf32>
    %386 = arith.mulf %377, %358 : vector<2x32xf32>
    %387 = arith.mulf %371, %379 : vector<2x32xf32>
    %388 = arith.addf %386, %387 : vector<2x32xf32>
    %389 = math.tanh %388 : vector<2x32xf32>
    %390 = arith.mulf %385, %389 : vector<2x32xf32>
    %391 = vector.broadcast %361 : vector<2x1xf32> to vector<2x32xf32>
    %392 = arith.mulf %390, %391 : vector<2x32xf32>
    %393 = vector.broadcast %361 : vector<2x1xf32> to vector<2x32xf32>
    %394 = arith.mulf %393, %390 : vector<2x32xf32>
    %cst_73 = arith.constant 1.000000e+00 : f32
    %395 = vector.broadcast %cst_73 : f32 to vector<2x1xf32>
    %396 = arith.subf %395, %361 : vector<2x1xf32>
    %397 = vector.broadcast %396 : vector<2x1xf32> to vector<2x32xf32>
    %398 = arith.mulf %397, %351 : vector<2x32xf32>
    %399 = arith.addf %394, %398 : vector<2x32xf32>
    %400 = vector.broadcast %361 : vector<2x1xf32> to vector<2x32xf32>
    %401 = arith.mulf %400, %388 : vector<2x32xf32>
    %cst_74 = arith.constant 1.000000e+00 : f32
    %402 = vector.broadcast %cst_74 : f32 to vector<2x1xf32>
    %403 = arith.subf %402, %361 : vector<2x1xf32>
    %404 = vector.broadcast %403 : vector<2x1xf32> to vector<2x32xf32>
    %405 = arith.mulf %404, %358 : vector<2x32xf32>
    %406 = arith.addf %401, %405 : vector<2x32xf32>
    %407 = vector.shape_cast %56 : vector<2x32xf32> to vector<2x1x32xf32>
    %408 = vector.shape_cast %104 : vector<2x32xf32> to vector<2x1x32xf32>
    %409 = vector.shape_cast %152 : vector<2x32xf32> to vector<2x1x32xf32>
    %410 = vector.shape_cast %200 : vector<2x32xf32> to vector<2x1x32xf32>
    %411 = vector.shape_cast %248 : vector<2x32xf32> to vector<2x1x32xf32>
    %412 = vector.shape_cast %296 : vector<2x32xf32> to vector<2x1x32xf32>
    %413 = vector.shape_cast %344 : vector<2x32xf32> to vector<2x1x32xf32>
    %414 = vector.shape_cast %392 : vector<2x32xf32> to vector<2x1x32xf32>
    %415 = tpu.concatenate %407, %408, %409, %410, %411, %412, %413, %414 in 1 : vector<2x1x32xf32>, vector<2x1x32xf32>, vector<2x1x32xf32>, vector<2x1x32xf32>, vector<2x1x32xf32>, vector<2x1x32xf32>, vector<2x1x32xf32>, vector<2x1x32xf32> -> vector<2x8x32xf32>
    %c0_75 = arith.constant 0 : index
    %c0_76 = arith.constant 0 : index
    %416 = vector.load %arg9[%c0_75, %c0_76] : memref<32x32xf32, #tpu.memory_space<vmem>>, vector<32x32xf32>
    "tpu.trace_start"() <{level = 10 : i32, message = "bsh,ha->bsa"}> : () -> ()
    %cst_77 = arith.constant dense<0.000000e+00> : vector<2x8x32xf32>
    %417 = tpu.matmul %415, %416, %cst_77 {dimension_numbers = #tpu.dot_dimension_numbers<[2], [0], [0, 1], [1], [0, 0, 0, 1, 1, 1], [], []>} : vector<2x8x32xf32>, vector<32x32xf32>, vector<2x8x32xf32> -> vector<2x8x32xf32>
    "tpu.trace_stop"() : () -> ()
    %c0_78 = arith.constant 0 : index
    %c0_79 = arith.constant 0 : index
    %418 = vector.load %arg10[%c0_78, %c0_79] : memref<1x32xf32, #tpu.memory_space<vmem>>, vector<1x32xf32>
    %419 = vector.shape_cast %418 : vector<1x32xf32> to vector<1x1x32xf32>
    %420 = vector.broadcast %419 : vector<1x1x32xf32> to vector<2x8x32xf32>
    %421 = arith.addf %417, %420 : vector<2x8x32xf32>
    %cst_80 = arith.constant 1.000000e+00 : f32
    %422 = vector.broadcast %cst_80 : f32 to vector<2x8xf32>
    %423 = arith.subf %0, %422 : vector<2x8xf32>
    %cst_81 = arith.constant 1.000000e+09 : f32
    %424 = vector.broadcast %cst_81 : f32 to vector<2x8xf32>
    %425 = arith.mulf %423, %424 : vector<2x8xf32>
    %cst_82 = arith.constant 0.000000e+00 : f32
    %426 = vector.broadcast %cst_82 : f32 to vector<2x128xf32>
    %c0_83 = arith.constant 0 : index
    %c0_84 = arith.constant 0 : index
    %c0_85 = arith.constant 0 : index
    %427 = vector.load %arg16[%c0_83, %c0_84, %c0_85] : memref<8x2x128xf32, #tpu.memory_space<vmem>>, vector<1x2x128xf32>
    %428 = vector.shape_cast %427 : vector<1x2x128xf32> to vector<2x128xf32>
    %429 = vector.shape_cast %426 : vector<2x128xf32> to vector<1x2x128xf32>
    tpu.vector_store %arg16[%c0_83, %c0_84, %c0_85], %429 {strides = array<i32>} : memref<8x2x128xf32, #tpu.memory_space<vmem>>, vector<1x2x128xf32>,
    %430 = tpu.iota {dimensions = array<i32: 1>} : vector<2x128xi32>
    %c0_86 = arith.constant 0 : index
    %c0_87 = arith.constant 0 : index
    %c0_88 = arith.constant 0 : index
    %431 = vector.load %arg3[%c0_86, %c0_87, %c0_88] : memref<8x2x128xf32, #tpu.memory_space<vmem>>, vector<1x2x128xf32>
    %432 = vector.shape_cast %431 : vector<1x2x128xf32> to vector<2x128xf32>
    %cst_89 = arith.constant dense<0.000000e+00> : vector<2x16xf32>
    %433 = tpu.matmul %432, %1, %cst_89 {dimension_numbers = #tpu.dot_dimension_numbers<[1], [0], [0], [1], [0, 0, 1, 1], [], []>} : vector<2x128xf32>, vector<128x16xf32>, vector<2x16xf32> -> vector<2x16xf32>
    %cst_90 = arith.constant dense<0.000000e+00> : vector<2x32xf32>
    %434 = tpu.matmul %399, %3, %cst_90 {dimension_numbers = #tpu.dot_dimension_numbers<[1], [0], [0], [1], [0, 0, 1, 1], [], []>} : vector<2x32xf32>, vector<32x32xf32>, vector<2x32xf32> -> vector<2x32xf32>
    %435 = vector.shape_cast %434 : vector<2x32xf32> to vector<2x1x32xf32>
    %436 = vector.broadcast %435 : vector<2x1x32xf32> to vector<2x8x32xf32>
    %437 = arith.addf %436, %421 : vector<2x8x32xf32>
    %438 = math.tanh %437 : vector<2x8x32xf32>
    %439 = vector.broadcast %4 : vector<1x1x32xf32> to vector<2x8x32xf32>
    %440 = arith.mulf %438, %439 : vector<2x8x32xf32>
    %cst_91 = arith.constant dense<0.000000e+00> : vector<2x8xf32>
    %441 = vector.multi_reduction <add>, %440, %cst_91 [2] : vector<2x8x32xf32> to vector<2x8xf32>
    %442 = arith.addf %441, %425 : vector<2x8xf32>
    %cst_92 = arith.constant dense<0xFF800000> : vector<2xf32>
    %443 = vector.multi_reduction <maximumf>, %442, %cst_92 [1] : vector<2x8xf32> to vector<2xf32>
    %444 = vector.shape_cast %443 : vector<2xf32> to vector<2x1xf32>
    %445 = vector.broadcast %444 : vector<2x1xf32> to vector<2x8xf32>
    %446 = arith.subf %442, %445 : vector<2x8xf32>
    %447 = math.exp %446 : vector<2x8xf32>
    %cst_93 = arith.constant dense<0.000000e+00> : vector<2xf32>
    %448 = vector.multi_reduction <add>, %447, %cst_93 [1] : vector<2x8xf32> to vector<2xf32>
    %449 = vector.shape_cast %448 : vector<2xf32> to vector<2x1xf32>
    %450 = tpu.reciprocal %449 {approx = true} : vector<2x1xf32> -> vector<2x1xf32>
    %451 = vector.broadcast %450 : vector<2x1xf32> to vector<2x8xf32>
    %452 = arith.mulf %447, %451 : vector<2x8xf32>
    %453 = vector.shape_cast %452 : vector<2x8xf32> to vector<2x8x1xf32>
    %454 = vector.broadcast %453 : vector<2x8x1xf32> to vector<2x8x32xf32>
    %455 = arith.mulf %454, %415 : vector<2x8x32xf32>
    %cst_94 = arith.constant dense<0.000000e+00> : vector<2x32xf32>
    %456 = vector.multi_reduction <add>, %455, %cst_94 [1] : vector<2x8x32xf32> to vector<2x32xf32>
    %457 = tpu.concatenate %433, %456, %399 in 1 : vector<2x16xf32>, vector<2x32xf32>, vector<2x32xf32> -> vector<2x80xf32>
    %cst_95 = arith.constant dense<0.000000e+00> : vector<2x128xf32>
    %458 = tpu.matmul %457, %5, %cst_95 {dimension_numbers = #tpu.dot_dimension_numbers<[1], [0], [0], [1], [0, 0, 1, 1], [], []>} : vector<2x80xf32>, vector<80x128xf32>, vector<2x128xf32> -> vector<2x128xf32>
    %459 = arith.addf %458, %9 : vector<2x128xf32>
    %460 = vector.extract_strided_slice %459 {offsets = [0, 0], sizes = [2, 32], strides = [1, 1]} : vector<2x128xf32> to vector<2x32xf32>
    %461 = arith.negf %460 : vector<2x32xf32>
    %462 = math.exp %461 : vector<2x32xf32>
    %cst_96 = arith.constant 1.000000e+00 : f32
    %463 = vector.broadcast %cst_96 : f32 to vector<2x32xf32>
    %464 = arith.addf %463, %462 : vector<2x32xf32>
    %465 = arith.divf %463, %464 : vector<2x32xf32>
    %466 = vector.extract_strided_slice %459 {offsets = [0, 32], sizes = [2, 32], strides = [1, 1]} : vector<2x128xf32> to vector<2x32xf32>
    %467 = arith.negf %466 : vector<2x32xf32>
    %468 = math.exp %467 : vector<2x32xf32>
    %cst_97 = arith.constant 1.000000e+00 : f32
    %469 = vector.broadcast %cst_97 : f32 to vector<2x32xf32>
    %470 = arith.addf %469, %468 : vector<2x32xf32>
    %471 = arith.divf %469, %470 : vector<2x32xf32>
    %472 = vector.extract_strided_slice %459 {offsets = [0, 64], sizes = [2, 32], strides = [1, 1]} : vector<2x128xf32> to vector<2x32xf32>
    %473 = math.tanh %472 : vector<2x32xf32>
    %474 = vector.extract_strided_slice %459 {offsets = [0, 96], sizes = [2, 32], strides = [1, 1]} : vector<2x128xf32> to vector<2x32xf32>
    %475 = arith.negf %474 : vector<2x32xf32>
    %476 = math.exp %475 : vector<2x32xf32>
    %cst_98 = arith.constant 1.000000e+00 : f32
    %477 = vector.broadcast %cst_98 : f32 to vector<2x32xf32>
    %478 = arith.addf %477, %476 : vector<2x32xf32>
    %479 = arith.divf %477, %478 : vector<2x32xf32>
    %480 = arith.mulf %471, %406 : vector<2x32xf32>
    %481 = arith.mulf %465, %473 : vector<2x32xf32>
    %482 = arith.addf %480, %481 : vector<2x32xf32>
    %483 = math.tanh %482 : vector<2x32xf32>
    %484 = arith.mulf %479, %483 : vector<2x32xf32>
    %485 = tpu.concatenate %484, %456, %433 in 1 : vector<2x32xf32>, vector<2x32xf32>, vector<2x16xf32> -> vector<2x80xf32>
    %cst_99 = arith.constant dense<0.000000e+00> : vector<2x128xf32>
    %486 = tpu.matmul %485, %6, %cst_99 {dimension_numbers = #tpu.dot_dimension_numbers<[1], [0], [0], [1], [0, 0, 1, 1], [], []>} : vector<2x80xf32>, vector<80x128xf32>, vector<2x128xf32> -> vector<2x128xf32>
    %487 = arith.addf %486, %12 : vector<2x128xf32>
    %c1 = arith.constant 1 : index
    %c0_100 = arith.constant 0 : index
    %c0_101 = arith.constant 0 : index
    %488 = vector.load %arg16[%c1, %c0_100, %c0_101] : memref<8x2x128xf32, #tpu.memory_space<vmem>>, vector<1x2x128xf32>
    %489 = vector.shape_cast %488 : vector<1x2x128xf32> to vector<2x128xf32>
    %490 = vector.shape_cast %487 : vector<2x128xf32> to vector<1x2x128xf32>
    tpu.vector_store %arg16[%c1, %c0_100, %c0_101], %490 {strides = array<i32>} : memref<8x2x128xf32, #tpu.memory_space<vmem>>, vector<1x2x128xf32>,
    %cst_102 = arith.constant dense<0xFF800000> : vector<2xf32>
    %491 = vector.multi_reduction <maximumf>, %487, %cst_102 [1] : vector<2x128xf32> to vector<2xf32>
    %492 = vector.shape_cast %491 : vector<2xf32> to vector<2x1xf32>
    %493 = vector.broadcast %492 : vector<2x1xf32> to vector<2x128xf32>
    %494 = arith.cmpf oeq, %487, %493 : vector<2x128xf32>
    %c128_i32 = arith.constant 128 : i32
    %495 = vector.broadcast %c128_i32 : i32 to vector<2x128xi32>
    %496 = arith.select %494, %430, %495 : vector<2x128xi1>, vector<2x128xi32>
    %cst_103 = arith.constant dense<2147483647> : vector<2xi32>
    %497 = vector.multi_reduction <minsi>, %496, %cst_103 [1] : vector<2x128xi32> to vector<2xi32>
    %498 = vector.shape_cast %497 : vector<2xi32> to vector<2x1xi32>
    %499 = vector.broadcast %498 : vector<2x1xi32> to vector<2x128xi32>
    %500 = arith.cmpi eq, %430, %499 : vector<2x128xi32>
    %501 = arith.extui %500 : vector<2x128xi1> to vector<2x128xi32>
    %502 = arith.sitofp %501 : vector<2x128xi32> to vector<2x128xf32>
    %c1_104 = arith.constant 1 : index
    %503 = memref.load %arg0[%c1_104] : memref<8xi32, #tpu.memory_space<smem>>
    %c1_i32 = arith.constant 1 : i32
    %504 = arith.cmpi eq, %503, %c1_i32 : i32
    %c1_105 = arith.constant 1 : index
    %c0_106 = arith.constant 0 : index
    %c0_107 = arith.constant 0 : index
    %505 = vector.load %arg3[%c1_105, %c0_106, %c0_107] : memref<8x2x128xf32, #tpu.memory_space<vmem>>, vector<1x2x128xf32>
    %506 = vector.shape_cast %505 : vector<1x2x128xf32> to vector<2x128xf32>
    %507 = arith.select %504, %506, %502 : vector<2x128xf32>
    %cst_108 = arith.constant dense<0.000000e+00> : vector<2x16xf32>
    %508 = tpu.matmul %507, %1, %cst_108 {dimension_numbers = #tpu.dot_dimension_numbers<[1], [0], [0], [1], [0, 0, 1, 1], [], []>} : vector<2x128xf32>, vector<128x16xf32>, vector<2x16xf32> -> vector<2x16xf32>
    %cst_109 = arith.constant dense<0.000000e+00> : vector<2x32xf32>
    %509 = tpu.matmul %484, %3, %cst_109 {dimension_numbers = #tpu.dot_dimension_numbers<[1], [0], [0], [1], [0, 0, 1, 1], [], []>} : vector<2x32xf32>, vector<32x32xf32>, vector<2x32xf32> -> vector<2x32xf32>
    %510 = vector.shape_cast %509 : vector<2x32xf32> to vector<2x1x32xf32>
    %511 = vector.broadcast %510 : vector<2x1x32xf32> to vector<2x8x32xf32>
    %512 = arith.addf %511, %421 : vector<2x8x32xf32>
    %513 = math.tanh %512 : vector<2x8x32xf32>
    %514 = vector.broadcast %4 : vector<1x1x32xf32> to vector<2x8x32xf32>
    %515 = arith.mulf %513, %514 : vector<2x8x32xf32>
    %cst_110 = arith.constant dense<0.000000e+00> : vector<2x8xf32>
    %516 = vector.multi_reduction <add>, %515, %cst_110 [2] : vector<2x8x32xf32> to vector<2x8xf32>
    %517 = arith.addf %516, %425 : vector<2x8xf32>
    %cst_111 = arith.constant dense<0xFF800000> : vector<2xf32>
    %518 = vector.multi_reduction <maximumf>, %517, %cst_111 [1] : vector<2x8xf32> to vector<2xf32>
    %519 = vector.shape_cast %518 : vector<2xf32> to vector<2x1xf32>
    %520 = vector.broadcast %519 : vector<2x1xf32> to vector<2x8xf32>
    %521 = arith.subf %517, %520 : vector<2x8xf32>
    %522 = math.exp %521 : vector<2x8xf32>
    %cst_112 = arith.constant dense<0.000000e+00> : vector<2xf32>
    %523 = vector.multi_reduction <add>, %522, %cst_112 [1] : vector<2x8xf32> to vector<2xf32>
    %524 = vector.shape_cast %523 : vector<2xf32> to vector<2x1xf32>
    %525 = tpu.reciprocal %524 {approx = true} : vector<2x1xf32> -> vector<2x1xf32>
    %526 = vector.broadcast %525 : vector<2x1xf32> to vector<2x8xf32>
    %527 = arith.mulf %522, %526 : vector<2x8xf32>
    %528 = vector.shape_cast %527 : vector<2x8xf32> to vector<2x8x1xf32>
    %529 = vector.broadcast %528 : vector<2x8x1xf32> to vector<2x8x32xf32>
    %530 = arith.mulf %529, %415 : vector<2x8x32xf32>
    %cst_113 = arith.constant dense<0.000000e+00> : vector<2x32xf32>
    %531 = vector.multi_reduction <add>, %530, %cst_113 [1] : vector<2x8x32xf32> to vector<2x32xf32>
    %532 = tpu.concatenate %508, %531, %484 in 1 : vector<2x16xf32>, vector<2x32xf32>, vector<2x32xf32> -> vector<2x80xf32>
    %cst_114 = arith.constant dense<0.000000e+00> : vector<2x128xf32>
    %533 = tpu.matmul %532, %5, %cst_114 {dimension_numbers = #tpu.dot_dimension_numbers<[1], [0], [0], [1], [0, 0, 1, 1], [], []>} : vector<2x80xf32>, vector<80x128xf32>, vector<2x128xf32> -> vector<2x128xf32>
    %534 = arith.addf %533, %9 : vector<2x128xf32>
    %535 = vector.extract_strided_slice %534 {offsets = [0, 0], sizes = [2, 32], strides = [1, 1]} : vector<2x128xf32> to vector<2x32xf32>
    %536 = arith.negf %535 : vector<2x32xf32>
    %537 = math.exp %536 : vector<2x32xf32>
    %cst_115 = arith.constant 1.000000e+00 : f32
    %538 = vector.broadcast %cst_115 : f32 to vector<2x32xf32>
    %539 = arith.addf %538, %537 : vector<2x32xf32>
    %540 = arith.divf %538, %539 : vector<2x32xf32>
    %541 = vector.extract_strided_slice %534 {offsets = [0, 32], sizes = [2, 32], strides = [1, 1]} : vector<2x128xf32> to vector<2x32xf32>
    %542 = arith.negf %541 : vector<2x32xf32>
    %543 = math.exp %542 : vector<2x32xf32>
    %cst_116 = arith.constant 1.000000e+00 : f32
    %544 = vector.broadcast %cst_116 : f32 to vector<2x32xf32>
    %545 = arith.addf %544, %543 : vector<2x32xf32>
    %546 = arith.divf %544, %545 : vector<2x32xf32>
    %547 = vector.extract_strided_slice %534 {offsets = [0, 64], sizes = [2, 32], strides = [1, 1]} : vector<2x128xf32> to vector<2x32xf32>
    %548 = math.tanh %547 : vector<2x32xf32>
    %549 = vector.extract_strided_slice %534 {offsets = [0, 96], sizes = [2, 32], strides = [1, 1]} : vector<2x128xf32> to vector<2x32xf32>
    %550 = arith.negf %549 : vector<2x32xf32>
    %551 = math.exp %550 : vector<2x32xf32>
    %cst_117 = arith.constant 1.000000e+00 : f32
    %552 = vector.broadcast %cst_117 : f32 to vector<2x32xf32>
    %553 = arith.addf %552, %551 : vector<2x32xf32>
    %554 = arith.divf %552, %553 : vector<2x32xf32>
    %555 = arith.mulf %546, %482 : vector<2x32xf32>
    %556 = arith.mulf %540, %548 : vector<2x32xf32>
    %557 = arith.addf %555, %556 : vector<2x32xf32>
    %558 = math.tanh %557 : vector<2x32xf32>
    %559 = arith.mulf %554, %558 : vector<2x32xf32>
    %560 = tpu.concatenate %559, %531, %508 in 1 : vector<2x32xf32>, vector<2x32xf32>, vector<2x16xf32> -> vector<2x80xf32>
    %cst_118 = arith.constant dense<0.000000e+00> : vector<2x128xf32>
    %561 = tpu.matmul %560, %6, %cst_118 {dimension_numbers = #tpu.dot_dimension_numbers<[1], [0], [0], [1], [0, 0, 1, 1], [], []>} : vector<2x80xf32>, vector<80x128xf32>, vector<2x128xf32> -> vector<2x128xf32>
    %562 = arith.addf %561, %12 : vector<2x128xf32>
    %c2 = arith.constant 2 : index
    %c0_119 = arith.constant 0 : index
    %c0_120 = arith.constant 0 : index
    %563 = vector.load %arg16[%c2, %c0_119, %c0_120] : memref<8x2x128xf32, #tpu.memory_space<vmem>>, vector<1x2x128xf32>
    %564 = vector.shape_cast %563 : vector<1x2x128xf32> to vector<2x128xf32>
    %565 = vector.shape_cast %562 : vector<2x128xf32> to vector<1x2x128xf32>
    tpu.vector_store %arg16[%c2, %c0_119, %c0_120], %565 {strides = array<i32>} : memref<8x2x128xf32, #tpu.memory_space<vmem>>, vector<1x2x128xf32>,
    %cst_121 = arith.constant dense<0xFF800000> : vector<2xf32>
    %566 = vector.multi_reduction <maximumf>, %562, %cst_121 [1] : vector<2x128xf32> to vector<2xf32>
    %567 = vector.shape_cast %566 : vector<2xf32> to vector<2x1xf32>
    %568 = vector.broadcast %567 : vector<2x1xf32> to vector<2x128xf32>
    %569 = arith.cmpf oeq, %562, %568 : vector<2x128xf32>
    %c128_i32_122 = arith.constant 128 : i32
    %570 = vector.broadcast %c128_i32_122 : i32 to vector<2x128xi32>
    %571 = arith.select %569, %430, %570 : vector<2x128xi1>, vector<2x128xi32>
    %cst_123 = arith.constant dense<2147483647> : vector<2xi32>
    %572 = vector.multi_reduction <minsi>, %571, %cst_123 [1] : vector<2x128xi32> to vector<2xi32>
    %573 = vector.shape_cast %572 : vector<2xi32> to vector<2x1xi32>
    %574 = vector.broadcast %573 : vector<2x1xi32> to vector<2x128xi32>
    %575 = arith.cmpi eq, %430, %574 : vector<2x128xi32>
    %576 = arith.extui %575 : vector<2x128xi1> to vector<2x128xi32>
    %577 = arith.sitofp %576 : vector<2x128xi32> to vector<2x128xf32>
    %c2_124 = arith.constant 2 : index
    %578 = memref.load %arg0[%c2_124] : memref<8xi32, #tpu.memory_space<smem>>
    %c1_i32_125 = arith.constant 1 : i32
    %579 = arith.cmpi eq, %578, %c1_i32_125 : i32
    %c2_126 = arith.constant 2 : index
    %c0_127 = arith.constant 0 : index
    %c0_128 = arith.constant 0 : index
    %580 = vector.load %arg3[%c2_126, %c0_127, %c0_128] : memref<8x2x128xf32, #tpu.memory_space<vmem>>, vector<1x2x128xf32>
    %581 = vector.shape_cast %580 : vector<1x2x128xf32> to vector<2x128xf32>
    %582 = arith.select %579, %581, %577 : vector<2x128xf32>
    %cst_129 = arith.constant dense<0.000000e+00> : vector<2x16xf32>
    %583 = tpu.matmul %582, %1, %cst_129 {dimension_numbers = #tpu.dot_dimension_numbers<[1], [0], [0], [1], [0, 0, 1, 1], [], []>} : vector<2x128xf32>, vector<128x16xf32>, vector<2x16xf32> -> vector<2x16xf32>
    %cst_130 = arith.constant dense<0.000000e+00> : vector<2x32xf32>
    %584 = tpu.matmul %559, %3, %cst_130 {dimension_numbers = #tpu.dot_dimension_numbers<[1], [0], [0], [1], [0, 0, 1, 1], [], []>} : vector<2x32xf32>, vector<32x32xf32>, vector<2x32xf32> -> vector<2x32xf32>
    %585 = vector.shape_cast %584 : vector<2x32xf32> to vector<2x1x32xf32>
    %586 = vector.broadcast %585 : vector<2x1x32xf32> to vector<2x8x32xf32>
    %587 = arith.addf %586, %421 : vector<2x8x32xf32>
    %588 = math.tanh %587 : vector<2x8x32xf32>
    %589 = vector.broadcast %4 : vector<1x1x32xf32> to vector<2x8x32xf32>
    %590 = arith.mulf %588, %589 : vector<2x8x32xf32>
    %cst_131 = arith.constant dense<0.000000e+00> : vector<2x8xf32>
    %591 = vector.multi_reduction <add>, %590, %cst_131 [2] : vector<2x8x32xf32> to vector<2x8xf32>
    %592 = arith.addf %591, %425 : vector<2x8xf32>
    %cst_132 = arith.constant dense<0xFF800000> : vector<2xf32>
    %593 = vector.multi_reduction <maximumf>, %592, %cst_132 [1] : vector<2x8xf32> to vector<2xf32>
    %594 = vector.shape_cast %593 : vector<2xf32> to vector<2x1xf32>
    %595 = vector.broadcast %594 : vector<2x1xf32> to vector<2x8xf32>
    %596 = arith.subf %592, %595 : vector<2x8xf32>
    %597 = math.exp %596 : vector<2x8xf32>
    %cst_133 = arith.constant dense<0.000000e+00> : vector<2xf32>
    %598 = vector.multi_reduction <add>, %597, %cst_133 [1] : vector<2x8xf32> to vector<2xf32>
    %599 = vector.shape_cast %598 : vector<2xf32> to vector<2x1xf32>
    %600 = tpu.reciprocal %599 {approx = true} : vector<2x1xf32> -> vector<2x1xf32>
    %601 = vector.broadcast %600 : vector<2x1xf32> to vector<2x8xf32>
    %602 = arith.mulf %597, %601 : vector<2x8xf32>
    %603 = vector.shape_cast %602 : vector<2x8xf32> to vector<2x8x1xf32>
    %604 = vector.broadcast %603 : vector<2x8x1xf32> to vector<2x8x32xf32>
    %605 = arith.mulf %604, %415 : vector<2x8x32xf32>
    %cst_134 = arith.constant dense<0.000000e+00> : vector<2x32xf32>
    %606 = vector.multi_reduction <add>, %605, %cst_134 [1] : vector<2x8x32xf32> to vector<2x32xf32>
    %607 = tpu.concatenate %583, %606, %559 in 1 : vector<2x16xf32>, vector<2x32xf32>, vector<2x32xf32> -> vector<2x80xf32>
    %cst_135 = arith.constant dense<0.000000e+00> : vector<2x128xf32>
    %608 = tpu.matmul %607, %5, %cst_135 {dimension_numbers = #tpu.dot_dimension_numbers<[1], [0], [0], [1], [0, 0, 1, 1], [], []>} : vector<2x80xf32>, vector<80x128xf32>, vector<2x128xf32> -> vector<2x128xf32>
    %609 = arith.addf %608, %9 : vector<2x128xf32>
    %610 = vector.extract_strided_slice %609 {offsets = [0, 0], sizes = [2, 32], strides = [1, 1]} : vector<2x128xf32> to vector<2x32xf32>
    %611 = arith.negf %610 : vector<2x32xf32>
    %612 = math.exp %611 : vector<2x32xf32>
    %cst_136 = arith.constant 1.000000e+00 : f32
    %613 = vector.broadcast %cst_136 : f32 to vector<2x32xf32>
    %614 = arith.addf %613, %612 : vector<2x32xf32>
    %615 = arith.divf %613, %614 : vector<2x32xf32>
    %616 = vector.extract_strided_slice %609 {offsets = [0, 32], sizes = [2, 32], strides = [1, 1]} : vector<2x128xf32> to vector<2x32xf32>
    %617 = arith.negf %616 : vector<2x32xf32>
    %618 = math.exp %617 : vector<2x32xf32>
    %cst_137 = arith.constant 1.000000e+00 : f32
    %619 = vector.broadcast %cst_137 : f32 to vector<2x32xf32>
    %620 = arith.addf %619, %618 : vector<2x32xf32>
    %621 = arith.divf %619, %620 : vector<2x32xf32>
    %622 = vector.extract_strided_slice %609 {offsets = [0, 64], sizes = [2, 32], strides = [1, 1]} : vector<2x128xf32> to vector<2x32xf32>
    %623 = math.tanh %622 : vector<2x32xf32>
    %624 = vector.extract_strided_slice %609 {offsets = [0, 96], sizes = [2, 32], strides = [1, 1]} : vector<2x128xf32> to vector<2x32xf32>
    %625 = arith.negf %624 : vector<2x32xf32>
    %626 = math.exp %625 : vector<2x32xf32>
    %cst_138 = arith.constant 1.000000e+00 : f32
    %627 = vector.broadcast %cst_138 : f32 to vector<2x32xf32>
    %628 = arith.addf %627, %626 : vector<2x32xf32>
    %629 = arith.divf %627, %628 : vector<2x32xf32>
    %630 = arith.mulf %621, %557 : vector<2x32xf32>
    %631 = arith.mulf %615, %623 : vector<2x32xf32>
    %632 = arith.addf %630, %631 : vector<2x32xf32>
    %633 = math.tanh %632 : vector<2x32xf32>
    %634 = arith.mulf %629, %633 : vector<2x32xf32>
    %635 = tpu.concatenate %634, %606, %583 in 1 : vector<2x32xf32>, vector<2x32xf32>, vector<2x16xf32> -> vector<2x80xf32>
    %cst_139 = arith.constant dense<0.000000e+00> : vector<2x128xf32>
    %636 = tpu.matmul %635, %6, %cst_139 {dimension_numbers = #tpu.dot_dimension_numbers<[1], [0], [0], [1], [0, 0, 1, 1], [], []>} : vector<2x80xf32>, vector<80x128xf32>, vector<2x128xf32> -> vector<2x128xf32>
    %637 = arith.addf %636, %12 : vector<2x128xf32>
    %c3 = arith.constant 3 : index
    %c0_140 = arith.constant 0 : index
    %c0_141 = arith.constant 0 : index
    %638 = vector.load %arg16[%c3, %c0_140, %c0_141] : memref<8x2x128xf32, #tpu.memory_space<vmem>>, vector<1x2x128xf32>
    %639 = vector.shape_cast %638 : vector<1x2x128xf32> to vector<2x128xf32>
    %640 = vector.shape_cast %637 : vector<2x128xf32> to vector<1x2x128xf32>
    tpu.vector_store %arg16[%c3, %c0_140, %c0_141], %640 {strides = array<i32>} : memref<8x2x128xf32, #tpu.memory_space<vmem>>, vector<1x2x128xf32>,
    %cst_142 = arith.constant dense<0xFF800000> : vector<2xf32>
    %641 = vector.multi_reduction <maximumf>, %637, %cst_142 [1] : vector<2x128xf32> to vector<2xf32>
    %642 = vector.shape_cast %641 : vector<2xf32> to vector<2x1xf32>
    %643 = vector.broadcast %642 : vector<2x1xf32> to vector<2x128xf32>
    %644 = arith.cmpf oeq, %637, %643 : vector<2x128xf32>
    %c128_i32_143 = arith.constant 128 : i32
    %645 = vector.broadcast %c128_i32_143 : i32 to vector<2x128xi32>
    %646 = arith.select %644, %430, %645 : vector<2x128xi1>, vector<2x128xi32>
    %cst_144 = arith.constant dense<2147483647> : vector<2xi32>
    %647 = vector.multi_reduction <minsi>, %646, %cst_144 [1] : vector<2x128xi32> to vector<2xi32>
    %648 = vector.shape_cast %647 : vector<2xi32> to vector<2x1xi32>
    %649 = vector.broadcast %648 : vector<2x1xi32> to vector<2x128xi32>
    %650 = arith.cmpi eq, %430, %649 : vector<2x128xi32>
    %651 = arith.extui %650 : vector<2x128xi1> to vector<2x128xi32>
    %652 = arith.sitofp %651 : vector<2x128xi32> to vector<2x128xf32>
    %c3_145 = arith.constant 3 : index
    %653 = memref.load %arg0[%c3_145] : memref<8xi32, #tpu.memory_space<smem>>
    %c1_i32_146 = arith.constant 1 : i32
    %654 = arith.cmpi eq, %653, %c1_i32_146 : i32
    %c3_147 = arith.constant 3 : index
    %c0_148 = arith.constant 0 : index
    %c0_149 = arith.constant 0 : index
    %655 = vector.load %arg3[%c3_147, %c0_148, %c0_149] : memref<8x2x128xf32, #tpu.memory_space<vmem>>, vector<1x2x128xf32>
    %656 = vector.shape_cast %655 : vector<1x2x128xf32> to vector<2x128xf32>
    %657 = arith.select %654, %656, %652 : vector<2x128xf32>
    %cst_150 = arith.constant dense<0.000000e+00> : vector<2x16xf32>
    %658 = tpu.matmul %657, %1, %cst_150 {dimension_numbers = #tpu.dot_dimension_numbers<[1], [0], [0], [1], [0, 0, 1, 1], [], []>} : vector<2x128xf32>, vector<128x16xf32>, vector<2x16xf32> -> vector<2x16xf32>
    %cst_151 = arith.constant dense<0.000000e+00> : vector<2x32xf32>
    %659 = tpu.matmul %634, %3, %cst_151 {dimension_numbers = #tpu.dot_dimension_numbers<[1], [0], [0], [1], [0, 0, 1, 1], [], []>} : vector<2x32xf32>, vector<32x32xf32>, vector<2x32xf32> -> vector<2x32xf32>
    %660 = vector.shape_cast %659 : vector<2x32xf32> to vector<2x1x32xf32>
    %661 = vector.broadcast %660 : vector<2x1x32xf32> to vector<2x8x32xf32>
    %662 = arith.addf %661, %421 : vector<2x8x32xf32>
    %663 = math.tanh %662 : vector<2x8x32xf32>
    %664 = vector.broadcast %4 : vector<1x1x32xf32> to vector<2x8x32xf32>
    %665 = arith.mulf %663, %664 : vector<2x8x32xf32>
    %cst_152 = arith.constant dense<0.000000e+00> : vector<2x8xf32>
    %666 = vector.multi_reduction <add>, %665, %cst_152 [2] : vector<2x8x32xf32> to vector<2x8xf32>
    %667 = arith.addf %666, %425 : vector<2x8xf32>
    %cst_153 = arith.constant dense<0xFF800000> : vector<2xf32>
    %668 = vector.multi_reduction <maximumf>, %667, %cst_153 [1] : vector<2x8xf32> to vector<2xf32>
    %669 = vector.shape_cast %668 : vector<2xf32> to vector<2x1xf32>
    %670 = vector.broadcast %669 : vector<2x1xf32> to vector<2x8xf32>
    %671 = arith.subf %667, %670 : vector<2x8xf32>
    %672 = math.exp %671 : vector<2x8xf32>
    %cst_154 = arith.constant dense<0.000000e+00> : vector<2xf32>
    %673 = vector.multi_reduction <add>, %672, %cst_154 [1] : vector<2x8xf32> to vector<2xf32>
    %674 = vector.shape_cast %673 : vector<2xf32> to vector<2x1xf32>
    %675 = tpu.reciprocal %674 {approx = true} : vector<2x1xf32> -> vector<2x1xf32>
    %676 = vector.broadcast %675 : vector<2x1xf32> to vector<2x8xf32>
    %677 = arith.mulf %672, %676 : vector<2x8xf32>
    %678 = vector.shape_cast %677 : vector<2x8xf32> to vector<2x8x1xf32>
    %679 = vector.broadcast %678 : vector<2x8x1xf32> to vector<2x8x32xf32>
    %680 = arith.mulf %679, %415 : vector<2x8x32xf32>
    %cst_155 = arith.constant dense<0.000000e+00> : vector<2x32xf32>
    %681 = vector.multi_reduction <add>, %680, %cst_155 [1] : vector<2x8x32xf32> to vector<2x32xf32>
    %682 = tpu.concatenate %658, %681, %634 in 1 : vector<2x16xf32>, vector<2x32xf32>, vector<2x32xf32> -> vector<2x80xf32>
    %cst_156 = arith.constant dense<0.000000e+00> : vector<2x128xf32>
    %683 = tpu.matmul %682, %5, %cst_156 {dimension_numbers = #tpu.dot_dimension_numbers<[1], [0], [0], [1], [0, 0, 1, 1], [], []>} : vector<2x80xf32>, vector<80x128xf32>, vector<2x128xf32> -> vector<2x128xf32>
    %684 = arith.addf %683, %9 : vector<2x128xf32>
    %685 = vector.extract_strided_slice %684 {offsets = [0, 0], sizes = [2, 32], strides = [1, 1]} : vector<2x128xf32> to vector<2x32xf32>
    %686 = arith.negf %685 : vector<2x32xf32>
    %687 = math.exp %686 : vector<2x32xf32>
    %cst_157 = arith.constant 1.000000e+00 : f32
    %688 = vector.broadcast %cst_157 : f32 to vector<2x32xf32>
    %689 = arith.addf %688, %687 : vector<2x32xf32>
    %690 = arith.divf %688, %689 : vector<2x32xf32>
    %691 = vector.extract_strided_slice %684 {offsets = [0, 32], sizes = [2, 32], strides = [1, 1]} : vector<2x128xf32> to vector<2x32xf32>
    %692 = arith.negf %691 : vector<2x32xf32>
    %693 = math.exp %692 : vector<2x32xf32>
    %cst_158 = arith.constant 1.000000e+00 : f32
    %694 = vector.broadcast %cst_158 : f32 to vector<2x32xf32>
    %695 = arith.addf %694, %693 : vector<2x32xf32>
    %696 = arith.divf %694, %695 : vector<2x32xf32>
    %697 = vector.extract_strided_slice %684 {offsets = [0, 64], sizes = [2, 32], strides = [1, 1]} : vector<2x128xf32> to vector<2x32xf32>
    %698 = math.tanh %697 : vector<2x32xf32>
    %699 = vector.extract_strided_slice %684 {offsets = [0, 96], sizes = [2, 32], strides = [1, 1]} : vector<2x128xf32> to vector<2x32xf32>
    %700 = arith.negf %699 : vector<2x32xf32>
    %701 = math.exp %700 : vector<2x32xf32>
    %cst_159 = arith.constant 1.000000e+00 : f32
    %702 = vector.broadcast %cst_159 : f32 to vector<2x32xf32>
    %703 = arith.addf %702, %701 : vector<2x32xf32>
    %704 = arith.divf %702, %703 : vector<2x32xf32>
    %705 = arith.mulf %696, %632 : vector<2x32xf32>
    %706 = arith.mulf %690, %698 : vector<2x32xf32>
    %707 = arith.addf %705, %706 : vector<2x32xf32>
    %708 = math.tanh %707 : vector<2x32xf32>
    %709 = arith.mulf %704, %708 : vector<2x32xf32>
    %710 = tpu.concatenate %709, %681, %658 in 1 : vector<2x32xf32>, vector<2x32xf32>, vector<2x16xf32> -> vector<2x80xf32>
    %cst_160 = arith.constant dense<0.000000e+00> : vector<2x128xf32>
    %711 = tpu.matmul %710, %6, %cst_160 {dimension_numbers = #tpu.dot_dimension_numbers<[1], [0], [0], [1], [0, 0, 1, 1], [], []>} : vector<2x80xf32>, vector<80x128xf32>, vector<2x128xf32> -> vector<2x128xf32>
    %712 = arith.addf %711, %12 : vector<2x128xf32>
    %c4 = arith.constant 4 : index
    %c0_161 = arith.constant 0 : index
    %c0_162 = arith.constant 0 : index
    %713 = vector.load %arg16[%c4, %c0_161, %c0_162] : memref<8x2x128xf32, #tpu.memory_space<vmem>>, vector<1x2x128xf32>
    %714 = vector.shape_cast %713 : vector<1x2x128xf32> to vector<2x128xf32>
    %715 = vector.shape_cast %712 : vector<2x128xf32> to vector<1x2x128xf32>
    tpu.vector_store %arg16[%c4, %c0_161, %c0_162], %715 {strides = array<i32>} : memref<8x2x128xf32, #tpu.memory_space<vmem>>, vector<1x2x128xf32>,
    %cst_163 = arith.constant dense<0xFF800000> : vector<2xf32>
    %716 = vector.multi_reduction <maximumf>, %712, %cst_163 [1] : vector<2x128xf32> to vector<2xf32>
    %717 = vector.shape_cast %716 : vector<2xf32> to vector<2x1xf32>
    %718 = vector.broadcast %717 : vector<2x1xf32> to vector<2x128xf32>
    %719 = arith.cmpf oeq, %712, %718 : vector<2x128xf32>
    %c128_i32_164 = arith.constant 128 : i32
    %720 = vector.broadcast %c128_i32_164 : i32 to vector<2x128xi32>
    %721 = arith.select %719, %430, %720 : vector<2x128xi1>, vector<2x128xi32>
    %cst_165 = arith.constant dense<2147483647> : vector<2xi32>
    %722 = vector.multi_reduction <minsi>, %721, %cst_165 [1] : vector<2x128xi32> to vector<2xi32>
    %723 = vector.shape_cast %722 : vector<2xi32> to vector<2x1xi32>
    %724 = vector.broadcast %723 : vector<2x1xi32> to vector<2x128xi32>
    %725 = arith.cmpi eq, %430, %724 : vector<2x128xi32>
    %726 = arith.extui %725 : vector<2x128xi1> to vector<2x128xi32>
    %727 = arith.sitofp %726 : vector<2x128xi32> to vector<2x128xf32>
    %c4_166 = arith.constant 4 : index
    %728 = memref.load %arg0[%c4_166] : memref<8xi32, #tpu.memory_space<smem>>
    %c1_i32_167 = arith.constant 1 : i32
    %729 = arith.cmpi eq, %728, %c1_i32_167 : i32
    %c4_168 = arith.constant 4 : index
    %c0_169 = arith.constant 0 : index
    %c0_170 = arith.constant 0 : index
    %730 = vector.load %arg3[%c4_168, %c0_169, %c0_170] : memref<8x2x128xf32, #tpu.memory_space<vmem>>, vector<1x2x128xf32>
    %731 = vector.shape_cast %730 : vector<1x2x128xf32> to vector<2x128xf32>
    %732 = arith.select %729, %731, %727 : vector<2x128xf32>
    %cst_171 = arith.constant dense<0.000000e+00> : vector<2x16xf32>
    %733 = tpu.matmul %732, %1, %cst_171 {dimension_numbers = #tpu.dot_dimension_numbers<[1], [0], [0], [1], [0, 0, 1, 1], [], []>} : vector<2x128xf32>, vector<128x16xf32>, vector<2x16xf32> -> vector<2x16xf32>
    %cst_172 = arith.constant dense<0.000000e+00> : vector<2x32xf32>
    %734 = tpu.matmul %709, %3, %cst_172 {dimension_numbers = #tpu.dot_dimension_numbers<[1], [0], [0], [1], [0, 0, 1, 1], [], []>} : vector<2x32xf32>, vector<32x32xf32>, vector<2x32xf32> -> vector<2x32xf32>
    %735 = vector.shape_cast %734 : vector<2x32xf32> to vector<2x1x32xf32>
    %736 = vector.broadcast %735 : vector<2x1x32xf32> to vector<2x8x32xf32>
    %737 = arith.addf %736, %421 : vector<2x8x32xf32>
    %738 = math.tanh %737 : vector<2x8x32xf32>
    %739 = vector.broadcast %4 : vector<1x1x32xf32> to vector<2x8x32xf32>
    %740 = arith.mulf %738, %739 : vector<2x8x32xf32>
    %cst_173 = arith.constant dense<0.000000e+00> : vector<2x8xf32>
    %741 = vector.multi_reduction <add>, %740, %cst_173 [2] : vector<2x8x32xf32> to vector<2x8xf32>
    %742 = arith.addf %741, %425 : vector<2x8xf32>
    %cst_174 = arith.constant dense<0xFF800000> : vector<2xf32>
    %743 = vector.multi_reduction <maximumf>, %742, %cst_174 [1] : vector<2x8xf32> to vector<2xf32>
    %744 = vector.shape_cast %743 : vector<2xf32> to vector<2x1xf32>
    %745 = vector.broadcast %744 : vector<2x1xf32> to vector<2x8xf32>
    %746 = arith.subf %742, %745 : vector<2x8xf32>
    %747 = math.exp %746 : vector<2x8xf32>
    %cst_175 = arith.constant dense<0.000000e+00> : vector<2xf32>
    %748 = vector.multi_reduction <add>, %747, %cst_175 [1] : vector<2x8xf32> to vector<2xf32>
    %749 = vector.shape_cast %748 : vector<2xf32> to vector<2x1xf32>
    %750 = tpu.reciprocal %749 {approx = true} : vector<2x1xf32> -> vector<2x1xf32>
    %751 = vector.broadcast %750 : vector<2x1xf32> to vector<2x8xf32>
    %752 = arith.mulf %747, %751 : vector<2x8xf32>
    %753 = vector.shape_cast %752 : vector<2x8xf32> to vector<2x8x1xf32>
    %754 = vector.broadcast %753 : vector<2x8x1xf32> to vector<2x8x32xf32>
    %755 = arith.mulf %754, %415 : vector<2x8x32xf32>
    %cst_176 = arith.constant dense<0.000000e+00> : vector<2x32xf32>
    %756 = vector.multi_reduction <add>, %755, %cst_176 [1] : vector<2x8x32xf32> to vector<2x32xf32>
    %757 = tpu.concatenate %733, %756, %709 in 1 : vector<2x16xf32>, vector<2x32xf32>, vector<2x32xf32> -> vector<2x80xf32>
    %cst_177 = arith.constant dense<0.000000e+00> : vector<2x128xf32>
    %758 = tpu.matmul %757, %5, %cst_177 {dimension_numbers = #tpu.dot_dimension_numbers<[1], [0], [0], [1], [0, 0, 1, 1], [], []>} : vector<2x80xf32>, vector<80x128xf32>, vector<2x128xf32> -> vector<2x128xf32>
    %759 = arith.addf %758, %9 : vector<2x128xf32>
    %760 = vector.extract_strided_slice %759 {offsets = [0, 0], sizes = [2, 32], strides = [1, 1]} : vector<2x128xf32> to vector<2x32xf32>
    %761 = arith.negf %760 : vector<2x32xf32>
    %762 = math.exp %761 : vector<2x32xf32>
    %cst_178 = arith.constant 1.000000e+00 : f32
    %763 = vector.broadcast %cst_178 : f32 to vector<2x32xf32>
    %764 = arith.addf %763, %762 : vector<2x32xf32>
    %765 = arith.divf %763, %764 : vector<2x32xf32>
    %766 = vector.extract_strided_slice %759 {offsets = [0, 32], sizes = [2, 32], strides = [1, 1]} : vector<2x128xf32> to vector<2x32xf32>
    %767 = arith.negf %766 : vector<2x32xf32>
    %768 = math.exp %767 : vector<2x32xf32>
    %cst_179 = arith.constant 1.000000e+00 : f32
    %769 = vector.broadcast %cst_179 : f32 to vector<2x32xf32>
    %770 = arith.addf %769, %768 : vector<2x32xf32>
    %771 = arith.divf %769, %770 : vector<2x32xf32>
    %772 = vector.extract_strided_slice %759 {offsets = [0, 64], sizes = [2, 32], strides = [1, 1]} : vector<2x128xf32> to vector<2x32xf32>
    %773 = math.tanh %772 : vector<2x32xf32>
    %774 = vector.extract_strided_slice %759 {offsets = [0, 96], sizes = [2, 32], strides = [1, 1]} : vector<2x128xf32> to vector<2x32xf32>
    %775 = arith.negf %774 : vector<2x32xf32>
    %776 = math.exp %775 : vector<2x32xf32>
    %cst_180 = arith.constant 1.000000e+00 : f32
    %777 = vector.broadcast %cst_180 : f32 to vector<2x32xf32>
    %778 = arith.addf %777, %776 : vector<2x32xf32>
    %779 = arith.divf %777, %778 : vector<2x32xf32>
    %780 = arith.mulf %771, %707 : vector<2x32xf32>
    %781 = arith.mulf %765, %773 : vector<2x32xf32>
    %782 = arith.addf %780, %781 : vector<2x32xf32>
    %783 = math.tanh %782 : vector<2x32xf32>
    %784 = arith.mulf %779, %783 : vector<2x32xf32>
    %785 = tpu.concatenate %784, %756, %733 in 1 : vector<2x32xf32>, vector<2x32xf32>, vector<2x16xf32> -> vector<2x80xf32>
    %cst_181 = arith.constant dense<0.000000e+00> : vector<2x128xf32>
    %786 = tpu.matmul %785, %6, %cst_181 {dimension_numbers = #tpu.dot_dimension_numbers<[1], [0], [0], [1], [0, 0, 1, 1], [], []>} : vector<2x80xf32>, vector<80x128xf32>, vector<2x128xf32> -> vector<2x128xf32>
    %787 = arith.addf %786, %12 : vector<2x128xf32>
    %c5 = arith.constant 5 : index
    %c0_182 = arith.constant 0 : index
    %c0_183 = arith.constant 0 : index
    %788 = vector.load %arg16[%c5, %c0_182, %c0_183] : memref<8x2x128xf32, #tpu.memory_space<vmem>>, vector<1x2x128xf32>
    %789 = vector.shape_cast %788 : vector<1x2x128xf32> to vector<2x128xf32>
    %790 = vector.shape_cast %787 : vector<2x128xf32> to vector<1x2x128xf32>
    tpu.vector_store %arg16[%c5, %c0_182, %c0_183], %790 {strides = array<i32>} : memref<8x2x128xf32, #tpu.memory_space<vmem>>, vector<1x2x128xf32>,
    %cst_184 = arith.constant dense<0xFF800000> : vector<2xf32>
    %791 = vector.multi_reduction <maximumf>, %787, %cst_184 [1] : vector<2x128xf32> to vector<2xf32>
    %792 = vector.shape_cast %791 : vector<2xf32> to vector<2x1xf32>
    %793 = vector.broadcast %792 : vector<2x1xf32> to vector<2x128xf32>
    %794 = arith.cmpf oeq, %787, %793 : vector<2x128xf32>
    %c128_i32_185 = arith.constant 128 : i32
    %795 = vector.broadcast %c128_i32_185 : i32 to vector<2x128xi32>
    %796 = arith.select %794, %430, %795 : vector<2x128xi1>, vector<2x128xi32>
    %cst_186 = arith.constant dense<2147483647> : vector<2xi32>
    %797 = vector.multi_reduction <minsi>, %796, %cst_186 [1] : vector<2x128xi32> to vector<2xi32>
    %798 = vector.shape_cast %797 : vector<2xi32> to vector<2x1xi32>
    %799 = vector.broadcast %798 : vector<2x1xi32> to vector<2x128xi32>
    %800 = arith.cmpi eq, %430, %799 : vector<2x128xi32>
    %801 = arith.extui %800 : vector<2x128xi1> to vector<2x128xi32>
    %802 = arith.sitofp %801 : vector<2x128xi32> to vector<2x128xf32>
    %c5_187 = arith.constant 5 : index
    %803 = memref.load %arg0[%c5_187] : memref<8xi32, #tpu.memory_space<smem>>
    %c1_i32_188 = arith.constant 1 : i32
    %804 = arith.cmpi eq, %803, %c1_i32_188 : i32
    %c5_189 = arith.constant 5 : index
    %c0_190 = arith.constant 0 : index
    %c0_191 = arith.constant 0 : index
    %805 = vector.load %arg3[%c5_189, %c0_190, %c0_191] : memref<8x2x128xf32, #tpu.memory_space<vmem>>, vector<1x2x128xf32>
    %806 = vector.shape_cast %805 : vector<1x2x128xf32> to vector<2x128xf32>
    %807 = arith.select %804, %806, %802 : vector<2x128xf32>
    %cst_192 = arith.constant dense<0.000000e+00> : vector<2x16xf32>
    %808 = tpu.matmul %807, %1, %cst_192 {dimension_numbers = #tpu.dot_dimension_numbers<[1], [0], [0], [1], [0, 0, 1, 1], [], []>} : vector<2x128xf32>, vector<128x16xf32>, vector<2x16xf32> -> vector<2x16xf32>
    %cst_193 = arith.constant dense<0.000000e+00> : vector<2x32xf32>
    %809 = tpu.matmul %784, %3, %cst_193 {dimension_numbers = #tpu.dot_dimension_numbers<[1], [0], [0], [1], [0, 0, 1, 1], [], []>} : vector<2x32xf32>, vector<32x32xf32>, vector<2x32xf32> -> vector<2x32xf32>
    %810 = vector.shape_cast %809 : vector<2x32xf32> to vector<2x1x32xf32>
    %811 = vector.broadcast %810 : vector<2x1x32xf32> to vector<2x8x32xf32>
    %812 = arith.addf %811, %421 : vector<2x8x32xf32>
    %813 = math.tanh %812 : vector<2x8x32xf32>
    %814 = vector.broadcast %4 : vector<1x1x32xf32> to vector<2x8x32xf32>
    %815 = arith.mulf %813, %814 : vector<2x8x32xf32>
    %cst_194 = arith.constant dense<0.000000e+00> : vector<2x8xf32>
    %816 = vector.multi_reduction <add>, %815, %cst_194 [2] : vector<2x8x32xf32> to vector<2x8xf32>
    %817 = arith.addf %816, %425 : vector<2x8xf32>
    %cst_195 = arith.constant dense<0xFF800000> : vector<2xf32>
    %818 = vector.multi_reduction <maximumf>, %817, %cst_195 [1] : vector<2x8xf32> to vector<2xf32>
    %819 = vector.shape_cast %818 : vector<2xf32> to vector<2x1xf32>
    %820 = vector.broadcast %819 : vector<2x1xf32> to vector<2x8xf32>
    %821 = arith.subf %817, %820 : vector<2x8xf32>
    %822 = math.exp %821 : vector<2x8xf32>
    %cst_196 = arith.constant dense<0.000000e+00> : vector<2xf32>
    %823 = vector.multi_reduction <add>, %822, %cst_196 [1] : vector<2x8xf32> to vector<2xf32>
    %824 = vector.shape_cast %823 : vector<2xf32> to vector<2x1xf32>
    %825 = tpu.reciprocal %824 {approx = true} : vector<2x1xf32> -> vector<2x1xf32>
    %826 = vector.broadcast %825 : vector<2x1xf32> to vector<2x8xf32>
    %827 = arith.mulf %822, %826 : vector<2x8xf32>
    %828 = vector.shape_cast %827 : vector<2x8xf32> to vector<2x8x1xf32>
    %829 = vector.broadcast %828 : vector<2x8x1xf32> to vector<2x8x32xf32>
    %830 = arith.mulf %829, %415 : vector<2x8x32xf32>
    %cst_197 = arith.constant dense<0.000000e+00> : vector<2x32xf32>
    %831 = vector.multi_reduction <add>, %830, %cst_197 [1] : vector<2x8x32xf32> to vector<2x32xf32>
    %832 = tpu.concatenate %808, %831, %784 in 1 : vector<2x16xf32>, vector<2x32xf32>, vector<2x32xf32> -> vector<2x80xf32>
    %cst_198 = arith.constant dense<0.000000e+00> : vector<2x128xf32>
    %833 = tpu.matmul %832, %5, %cst_198 {dimension_numbers = #tpu.dot_dimension_numbers<[1], [0], [0], [1], [0, 0, 1, 1], [], []>} : vector<2x80xf32>, vector<80x128xf32>, vector<2x128xf32> -> vector<2x128xf32>
    %834 = arith.addf %833, %9 : vector<2x128xf32>
    %835 = vector.extract_strided_slice %834 {offsets = [0, 0], sizes = [2, 32], strides = [1, 1]} : vector<2x128xf32> to vector<2x32xf32>
    %836 = arith.negf %835 : vector<2x32xf32>
    %837 = math.exp %836 : vector<2x32xf32>
    %cst_199 = arith.constant 1.000000e+00 : f32
    %838 = vector.broadcast %cst_199 : f32 to vector<2x32xf32>
    %839 = arith.addf %838, %837 : vector<2x32xf32>
    %840 = arith.divf %838, %839 : vector<2x32xf32>
    %841 = vector.extract_strided_slice %834 {offsets = [0, 32], sizes = [2, 32], strides = [1, 1]} : vector<2x128xf32> to vector<2x32xf32>
    %842 = arith.negf %841 : vector<2x32xf32>
    %843 = math.exp %842 : vector<2x32xf32>
    %cst_200 = arith.constant 1.000000e+00 : f32
    %844 = vector.broadcast %cst_200 : f32 to vector<2x32xf32>
    %845 = arith.addf %844, %843 : vector<2x32xf32>
    %846 = arith.divf %844, %845 : vector<2x32xf32>
    %847 = vector.extract_strided_slice %834 {offsets = [0, 64], sizes = [2, 32], strides = [1, 1]} : vector<2x128xf32> to vector<2x32xf32>
    %848 = math.tanh %847 : vector<2x32xf32>
    %849 = vector.extract_strided_slice %834 {offsets = [0, 96], sizes = [2, 32], strides = [1, 1]} : vector<2x128xf32> to vector<2x32xf32>
    %850 = arith.negf %849 : vector<2x32xf32>
    %851 = math.exp %850 : vector<2x32xf32>
    %cst_201 = arith.constant 1.000000e+00 : f32
    %852 = vector.broadcast %cst_201 : f32 to vector<2x32xf32>
    %853 = arith.addf %852, %851 : vector<2x32xf32>
    %854 = arith.divf %852, %853 : vector<2x32xf32>
    %855 = arith.mulf %846, %782 : vector<2x32xf32>
    %856 = arith.mulf %840, %848 : vector<2x32xf32>
    %857 = arith.addf %855, %856 : vector<2x32xf32>
    %858 = math.tanh %857 : vector<2x32xf32>
    %859 = arith.mulf %854, %858 : vector<2x32xf32>
    %860 = tpu.concatenate %859, %831, %808 in 1 : vector<2x32xf32>, vector<2x32xf32>, vector<2x16xf32> -> vector<2x80xf32>
    %cst_202 = arith.constant dense<0.000000e+00> : vector<2x128xf32>
    %861 = tpu.matmul %860, %6, %cst_202 {dimension_numbers = #tpu.dot_dimension_numbers<[1], [0], [0], [1], [0, 0, 1, 1], [], []>} : vector<2x80xf32>, vector<80x128xf32>, vector<2x128xf32> -> vector<2x128xf32>
    %862 = arith.addf %861, %12 : vector<2x128xf32>
    %c6 = arith.constant 6 : index
    %c0_203 = arith.constant 0 : index
    %c0_204 = arith.constant 0 : index
    %863 = vector.load %arg16[%c6, %c0_203, %c0_204] : memref<8x2x128xf32, #tpu.memory_space<vmem>>, vector<1x2x128xf32>
    %864 = vector.shape_cast %863 : vector<1x2x128xf32> to vector<2x128xf32>
    %865 = vector.shape_cast %862 : vector<2x128xf32> to vector<1x2x128xf32>
    tpu.vector_store %arg16[%c6, %c0_203, %c0_204], %865 {strides = array<i32>} : memref<8x2x128xf32, #tpu.memory_space<vmem>>, vector<1x2x128xf32>,
    %cst_205 = arith.constant dense<0xFF800000> : vector<2xf32>
    %866 = vector.multi_reduction <maximumf>, %862, %cst_205 [1] : vector<2x128xf32> to vector<2xf32>
    %867 = vector.shape_cast %866 : vector<2xf32> to vector<2x1xf32>
    %868 = vector.broadcast %867 : vector<2x1xf32> to vector<2x128xf32>
    %869 = arith.cmpf oeq, %862, %868 : vector<2x128xf32>
    %c128_i32_206 = arith.constant 128 : i32
    %870 = vector.broadcast %c128_i32_206 : i32 to vector<2x128xi32>
    %871 = arith.select %869, %430, %870 : vector<2x128xi1>, vector<2x128xi32>
    %cst_207 = arith.constant dense<2147483647> : vector<2xi32>
    %872 = vector.multi_reduction <minsi>, %871, %cst_207 [1] : vector<2x128xi32> to vector<2xi32>
    %873 = vector.shape_cast %872 : vector<2xi32> to vector<2x1xi32>
    %874 = vector.broadcast %873 : vector<2x1xi32> to vector<2x128xi32>
    %875 = arith.cmpi eq, %430, %874 : vector<2x128xi32>
    %876 = arith.extui %875 : vector<2x128xi1> to vector<2x128xi32>
    %877 = arith.sitofp %876 : vector<2x128xi32> to vector<2x128xf32>
    %c6_208 = arith.constant 6 : index
    %878 = memref.load %arg0[%c6_208] : memref<8xi32, #tpu.memory_space<smem>>
    %c1_i32_209 = arith.constant 1 : i32
    %879 = arith.cmpi eq, %878, %c1_i32_209 : i32
    %c6_210 = arith.constant 6 : index
    %c0_211 = arith.constant 0 : index
    %c0_212 = arith.constant 0 : index
    %880 = vector.load %arg3[%c6_210, %c0_211, %c0_212] : memref<8x2x128xf32, #tpu.memory_space<vmem>>, vector<1x2x128xf32>
    %881 = vector.shape_cast %880 : vector<1x2x128xf32> to vector<2x128xf32>
    %882 = arith.select %879, %881, %877 : vector<2x128xf32>
    %cst_213 = arith.constant dense<0.000000e+00> : vector<2x16xf32>
    %883 = tpu.matmul %882, %1, %cst_213 {dimension_numbers = #tpu.dot_dimension_numbers<[1], [0], [0], [1], [0, 0, 1, 1], [], []>} : vector<2x128xf32>, vector<128x16xf32>, vector<2x16xf32> -> vector<2x16xf32>
    %cst_214 = arith.constant dense<0.000000e+00> : vector<2x32xf32>
    %884 = tpu.matmul %859, %3, %cst_214 {dimension_numbers = #tpu.dot_dimension_numbers<[1], [0], [0], [1], [0, 0, 1, 1], [], []>} : vector<2x32xf32>, vector<32x32xf32>, vector<2x32xf32> -> vector<2x32xf32>
    %885 = vector.shape_cast %884 : vector<2x32xf32> to vector<2x1x32xf32>
    %886 = vector.broadcast %885 : vector<2x1x32xf32> to vector<2x8x32xf32>
    %887 = arith.addf %886, %421 : vector<2x8x32xf32>
    %888 = math.tanh %887 : vector<2x8x32xf32>
    %889 = vector.broadcast %4 : vector<1x1x32xf32> to vector<2x8x32xf32>
    %890 = arith.mulf %888, %889 : vector<2x8x32xf32>
    %cst_215 = arith.constant dense<0.000000e+00> : vector<2x8xf32>
    %891 = vector.multi_reduction <add>, %890, %cst_215 [2] : vector<2x8x32xf32> to vector<2x8xf32>
    %892 = arith.addf %891, %425 : vector<2x8xf32>
    %cst_216 = arith.constant dense<0xFF800000> : vector<2xf32>
    %893 = vector.multi_reduction <maximumf>, %892, %cst_216 [1] : vector<2x8xf32> to vector<2xf32>
    %894 = vector.shape_cast %893 : vector<2xf32> to vector<2x1xf32>
    %895 = vector.broadcast %894 : vector<2x1xf32> to vector<2x8xf32>
    %896 = arith.subf %892, %895 : vector<2x8xf32>
    %897 = math.exp %896 : vector<2x8xf32>
    %cst_217 = arith.constant dense<0.000000e+00> : vector<2xf32>
    %898 = vector.multi_reduction <add>, %897, %cst_217 [1] : vector<2x8xf32> to vector<2xf32>
    %899 = vector.shape_cast %898 : vector<2xf32> to vector<2x1xf32>
    %900 = tpu.reciprocal %899 {approx = true} : vector<2x1xf32> -> vector<2x1xf32>
    %901 = vector.broadcast %900 : vector<2x1xf32> to vector<2x8xf32>
    %902 = arith.mulf %897, %901 : vector<2x8xf32>
    %903 = vector.shape_cast %902 : vector<2x8xf32> to vector<2x8x1xf32>
    %904 = vector.broadcast %903 : vector<2x8x1xf32> to vector<2x8x32xf32>
    %905 = arith.mulf %904, %415 : vector<2x8x32xf32>
    %cst_218 = arith.constant dense<0.000000e+00> : vector<2x32xf32>
    %906 = vector.multi_reduction <add>, %905, %cst_218 [1] : vector<2x8x32xf32> to vector<2x32xf32>
    %907 = tpu.concatenate %883, %906, %859 in 1 : vector<2x16xf32>, vector<2x32xf32>, vector<2x32xf32> -> vector<2x80xf32>
    %cst_219 = arith.constant dense<0.000000e+00> : vector<2x128xf32>
    %908 = tpu.matmul %907, %5, %cst_219 {dimension_numbers = #tpu.dot_dimension_numbers<[1], [0], [0], [1], [0, 0, 1, 1], [], []>} : vector<2x80xf32>, vector<80x128xf32>, vector<2x128xf32> -> vector<2x128xf32>
    %909 = arith.addf %908, %9 : vector<2x128xf32>
    %910 = vector.extract_strided_slice %909 {offsets = [0, 0], sizes = [2, 32], strides = [1, 1]} : vector<2x128xf32> to vector<2x32xf32>
    %911 = arith.negf %910 : vector<2x32xf32>
    %912 = math.exp %911 : vector<2x32xf32>
    %cst_220 = arith.constant 1.000000e+00 : f32
    %913 = vector.broadcast %cst_220 : f32 to vector<2x32xf32>
    %914 = arith.addf %913, %912 : vector<2x32xf32>
    %915 = arith.divf %913, %914 : vector<2x32xf32>
    %916 = vector.extract_strided_slice %909 {offsets = [0, 32], sizes = [2, 32], strides = [1, 1]} : vector<2x128xf32> to vector<2x32xf32>
    %917 = arith.negf %916 : vector<2x32xf32>
    %918 = math.exp %917 : vector<2x32xf32>
    %cst_221 = arith.constant 1.000000e+00 : f32
    %919 = vector.broadcast %cst_221 : f32 to vector<2x32xf32>
    %920 = arith.addf %919, %918 : vector<2x32xf32>
    %921 = arith.divf %919, %920 : vector<2x32xf32>
    %922 = vector.extract_strided_slice %909 {offsets = [0, 64], sizes = [2, 32], strides = [1, 1]} : vector<2x128xf32> to vector<2x32xf32>
    %923 = math.tanh %922 : vector<2x32xf32>
    %924 = vector.extract_strided_slice %909 {offsets = [0, 96], sizes = [2, 32], strides = [1, 1]} : vector<2x128xf32> to vector<2x32xf32>
    %925 = arith.negf %924 : vector<2x32xf32>
    %926 = math.exp %925 : vector<2x32xf32>
    %cst_222 = arith.constant 1.000000e+00 : f32
    %927 = vector.broadcast %cst_222 : f32 to vector<2x32xf32>
    %928 = arith.addf %927, %926 : vector<2x32xf32>
    %929 = arith.divf %927, %928 : vector<2x32xf32>
    %930 = arith.mulf %921, %857 : vector<2x32xf32>
    %931 = arith.mulf %915, %923 : vector<2x32xf32>
    %932 = arith.addf %930, %931 : vector<2x32xf32>
    %933 = math.tanh %932 : vector<2x32xf32>
    %934 = arith.mulf %929, %933 : vector<2x32xf32>
    %935 = tpu.concatenate %934, %906, %883 in 1 : vector<2x32xf32>, vector<2x32xf32>, vector<2x16xf32> -> vector<2x80xf32>
    %cst_223 = arith.constant dense<0.000000e+00> : vector<2x128xf32>
    %936 = tpu.matmul %935, %6, %cst_223 {dimension_numbers = #tpu.dot_dimension_numbers<[1], [0], [0], [1], [0, 0, 1, 1], [], []>} : vector<2x80xf32>, vector<80x128xf32>, vector<2x128xf32> -> vector<2x128xf32>
    %937 = arith.addf %936, %12 : vector<2x128xf32>
    %c7 = arith.constant 7 : index
    %c0_224 = arith.constant 0 : index
    %c0_225 = arith.constant 0 : index
    %938 = vector.load %arg16[%c7, %c0_224, %c0_225] : memref<8x2x128xf32, #tpu.memory_space<vmem>>, vector<1x2x128xf32>
    %939 = vector.shape_cast %938 : vector<1x2x128xf32> to vector<2x128xf32>
    %940 = vector.shape_cast %937 : vector<2x128xf32> to vector<1x2x128xf32>
    tpu.vector_store %arg16[%c7, %c0_224, %c0_225], %940 {strides = array<i32>} : memref<8x2x128xf32, #tpu.memory_space<vmem>>, vector<1x2x128xf32>,
    return
  }
}

</mosaic_0001>

<llo_original>
// kernel: tpu_custom_call.1
$region0: #{tpu_custom_call.1}
  #allocation0 [shape = 'u32[]', space=smem, size = 0x4, offset = 0x4, fixed_abs, tag = 'smem constant byte address 0x4 - core index']
  #allocation1 [shape = 'u32[144,128]{1,0:T(1,128)}', space=vmem, size = 0x12000, scoped, tag = 'internal scratch']
  %s0 = inlined_call_operand.hbm [shape: s32[8], index: 0, kind: input, shape index: {}]
  %s1 = inlined_call_operand.hbm [shape: f32[8,2,16], index: 1, kind: input, shape index: {}]
  %s2 = inlined_call_operand.vmem [shape: f32[2,8], index: 2, kind: input, shape index: {}]
  %s3 = inlined_call_operand.hbm [shape: f32[8,2,128], index: 3, kind: input, shape index: {}]
  %s4 = inlined_call_operand.vmem [shape: f32[128,16], index: 4, kind: input, shape index: {}]
  %s5 = inlined_call_operand.hbm [shape: f32[16,128], index: 5, kind: input, shape index: {}]
  %s6 = inlined_call_operand.hbm [shape: f32[32,128], index: 6, kind: input, shape index: {}]
  %s7 = inlined_call_operand.vmem [shape: f32[1,128], index: 7, kind: input, shape index: {}]
  %s8 = inlined_call_operand.hbm [shape: f32[32,32], index: 8, kind: input, shape index: {}]
  %s9 = inlined_call_operand.hbm [shape: f32[32,32], index: 9, kind: input, shape index: {}]
  %s10 = inlined_call_operand.vmem [shape: f32[1,32], index: 10, kind: input, shape index: {}]
  %s11 = inlined_call_operand.vmem [shape: f32[1,1,32], index: 11, kind: input, shape index: {}]
  %s12 = inlined_call_operand.vmem [shape: f32[80,128], index: 12, kind: input, shape index: {}]
  %s13 = inlined_call_operand.vmem [shape: f32[1,128], index: 13, kind: input, shape index: {}]
  %s14 = inlined_call_operand.vmem [shape: f32[80,128], index: 14, kind: input, shape index: {}]
  %s15 = inlined_call_operand.vmem [shape: f32[1,128], index: 15, kind: input, shape index: {}]
  %s16 = inlined_call_operand.hbm [shape: f32[8,2,128], index: 16, kind: output, shape index: {}]
  %s17 = sld [smem:[#allocation0]]
  $region102: #{tpu_custom_call.1} parent=0
    _
  %s19 = ssub.s32 1, %s17
  %s20 = scalar_select 0, %s19, %s17
  $region1: #{tpu_custom_call.1} parent=0
    #allocation2 [shape = 'u8[512]{0}', space=smem, size = 0x200, scoped, tag = 'input window, operand 0, single buffered']
    #allocation3 [shape = 's32[1]{0}', space=sflag, size = 0x4, scoped, tag = 'scoped memory for tpu_custom_call.1']
    #allocation4 [shape = 's32[1]{0}', space=sflag, size = 0x4, scoped, tag = 'scoped memory for tpu_custom_call.1']
    #allocation5 [shape = 's32[1]{0}', space=sflag, size = 0x4, scoped, tag = 'scoped memory for tpu_custom_call.1']
    #allocation6 [shape = 'u8[8192]{0}', space=vmem, size = 0x2000, scoped, tag = 'input window, operand 1, single buffered']
    #allocation7 [shape = 'u8[8192]{0}', space=vmem, size = 0x2000, scoped, tag = 'input window, operand 3, single buffered']
    #allocation8 [shape = 's32[1]{0}', space=sflag, size = 0x4, scoped, tag = 'scoped memory for tpu_custom_call.1']
    #allocation9 [shape = 'u8[8192]{0}', space=vmem, size = 0x2000, scoped, tag = 'input window, operand 5, single buffered']
    #allocation10 [shape = 'u8[16384]{0}', space=vmem, size = 0x4000, scoped, tag = 'input window, operand 6, single buffered']
    #allocation11 [shape = 's32[1]{0}', space=sflag, size = 0x4, scoped, tag = 'scoped memory for tpu_custom_call.1']
    #allocation12 [shape = 'u8[16384]{0}', space=vmem, size = 0x4000, scoped, tag = 'input window, operand 8, single buffered']
    #allocation13 [shape = 'u8[16384]{0}', space=vmem, size = 0x4000, scoped, tag = 'input window, operand 9, single buffered']
    #allocation14 [shape = 's32[1]{0}', space=sflag, size = 0x4, scoped, tag = 'scoped memory for tpu_custom_call.1']
    #allocation15 [shape = 'u8[8192]{0}', space=vmem, size = 0x2000, scoped, tag = 'output window, operand 0, single buffered']
    %21 = vsyncpa [#allocation5], 0
    %22 = vsyncpa [#allocation3], 0
    %23 = vsyncpa [#allocation8], 0
    %24 = vsyncpa [#allocation11], 0
    %25 = vsyncpa [#allocation14], 0
    %26 = vsyncpa [#allocation4], 0
    // Predicated region
    $region2: #{tpu_custom_call.1} parent=1 // pred_check
      _
    $region3: #{tpu_custom_call.1} parent=1 // pred_check_branch
      %28 = sbr.rel (0) target = $region5
    $region4: #{tpu_custom_call.1} parent=1 // pred_region
      %s30 = ssub.s32 16, 16
      %31 = vsyncadd [#allocation5], %s30
      %34 = dma.hbm_to_smem %s0, 16, [#allocation2], [#allocation5]
    $region5: #{tpu_custom_call.1} parent=1 // pred_fallthru
      _
    // Predicated region
    $region6: #{tpu_custom_call.1} parent=1 // pred_check
      _
    $region7: #{tpu_custom_call.1} parent=1 // pred_check_branch
      %36 = sbr.rel (0) target = $region9
    $region8: #{tpu_custom_call.1} parent=1 // pred_region
      %s38 = ssub.s32 256, 256
      %39 = vsyncadd [#allocation3], %s38
      %s40 = sshll.u32 [#allocation6], 4
      %s41 = int_to_ptr.vmem [resolvable:$true] %s40
      %46 = dma.hbm_to_vmem [thread:$0]  %s1, 256, %s41, [#allocation3], 32, 32, 2
    $region9: #{tpu_custom_call.1} parent=1 // pred_fallthru
      _
    // Predicated region
    $region10: #{tpu_custom_call.1} parent=1 // pred_check
      _
    $region11: #{tpu_custom_call.1} parent=1 // pred_check_branch
      %48 = sbr.rel (0) target = $region13
    $region12: #{tpu_custom_call.1} parent=1 // pred_region
      _
    $region13: #{tpu_custom_call.1} parent=1 // pred_fallthru
      _
    // Predicated region
    $region14: #{tpu_custom_call.1} parent=1 // pred_check
      _
    $region15: #{tpu_custom_call.1} parent=1 // pred_check_branch
      %50 = sbr.rel (0) target = $region17
    $region16: #{tpu_custom_call.1} parent=1 // pred_region
      %s52 = ssub.s32 256, 256
      %53 = vsyncadd [#allocation8], %s52
      %s54 = sshll.u32 [#allocation7], 4
      %s55 = int_to_ptr.vmem [resolvable:$true] %s54
      %60 = dma.hbm_to_vmem [thread:$0]  %s3, 256, %s55, [#allocation8], 32, 32, 2
    $region17: #{tpu_custom_call.1} parent=1 // pred_fallthru
      _
    // Predicated region
    $region18: #{tpu_custom_call.1} parent=1 // pred_check
      _
    $region19: #{tpu_custom_call.1} parent=1 // pred_check_branch
      %62 = sbr.rel (0) target = $region21
    $region20: #{tpu_custom_call.1} parent=1 // pred_region
      _
    $region21: #{tpu_custom_call.1} parent=1 // pred_fallthru
      _
    // Predicated region
    $region22: #{tpu_custom_call.1} parent=1 // pred_check
      _
    $region23: #{tpu_custom_call.1} parent=1 // pred_check_branch
      %64 = sbr.rel (0) target = $region25
    $region24: #{tpu_custom_call.1} parent=1 // pred_region
      %s66 = ssub.s32 256, 256
      %67 = vsyncadd [#allocation8], %s66
      %s68 = sshll.u32 [#allocation9], 4
      %s69 = int_to_ptr.vmem [resolvable:$true] %s68
      %74 = dma.hbm_to_vmem [thread:$0]  %s5, 256, %s69, [#allocation8], 128, 128, 8
    $region25: #{tpu_custom_call.1} parent=1 // pred_fallthru
      _
    // Predicated region
    $region26: #{tpu_custom_call.1} parent=1 // pred_check
      _
    $region27: #{tpu_custom_call.1} parent=1 // pred_check_branch
      %76 = sbr.rel (0) target = $region29
    $region28: #{tpu_custom_call.1} parent=1 // pred_region
      %s78 = ssub.s32 512, 512
      %79 = vsyncadd [#allocation11], %s78
      %s80 = sshll.u32 [#allocation10], 4
      %s81 = int_to_ptr.vmem [resolvable:$true] %s80
      %86 = dma.hbm_to_vmem [thread:$0]  %s6, 512, %s81, [#allocation11], 128, 128, 8
    $region29: #{tpu_custom_call.1} parent=1 // pred_fallthru
      _
    // Predicated region
    $region30: #{tpu_custom_call.1} parent=1 // pred_check
      _
    $region31: #{tpu_custom_call.1} parent=1 // pred_check_branch
      %88 = sbr.rel (0) target = $region33
    $region32: #{tpu_custom_call.1} parent=1 // pred_region
      _
    $region33: #{tpu_custom_call.1} parent=1 // pred_fallthru
      _
    // Predicated region
    $region34: #{tpu_custom_call.1} parent=1 // pred_check
      _
    $region35: #{tpu_custom_call.1} parent=1 // pred_check_branch
      %90 = sbr.rel (0) target = $region37
    $region36: #{tpu_custom_call.1} parent=1 // pred_region
      %s92 = ssub.s32 512, 512
      %93 = vsyncadd [#allocation11], %s92
      %s94 = sshll.u32 [#allocation12], 4
      %s95 = int_to_ptr.vmem [resolvable:$true] %s94
      %100 = dma.hbm_to_vmem [thread:$0]  %s8, 512, %s95, [#allocation11], 128, 128, 8
    $region37: #{tpu_custom_call.1} parent=1 // pred_fallthru
      _
    // Predicated region
    $region38: #{tpu_custom_call.1} parent=1 // pred_check
      _
    $region39: #{tpu_custom_call.1} parent=1 // pred_check_branch
      %102 = sbr.rel (0) target = $region41
    $region40: #{tpu_custom_call.1} parent=1 // pred_region
      %s104 = ssub.s32 512, 512
      %105 = vsyncadd [#allocation14], %s104
      %s106 = sshll.u32 [#allocation13], 4
      %s107 = int_to_ptr.vmem [resolvable:$true] %s106
      %112 = dma.hbm_to_vmem [thread:$0]  %s9, 512, %s107, [#allocation14], 128, 128, 8
    $region41: #{tpu_custom_call.1} parent=1 // pred_fallthru
      _
    // Predicated region
    $region42: #{tpu_custom_call.1} parent=1 // pred_check
      _
    $region43: #{tpu_custom_call.1} parent=1 // pred_check_branch
      %114 = sbr.rel (0) target = $region45
    $region44: #{tpu_custom_call.1} parent=1 // pred_region
      _
    $region45: #{tpu_custom_call.1} parent=1 // pred_fallthru
      _
    // Predicated region
    $region46: #{tpu_custom_call.1} parent=1 // pred_check
      _
    $region47: #{tpu_custom_call.1} parent=1 // pred_check_branch
      %116 = sbr.rel (0) target = $region49
    $region48: #{tpu_custom_call.1} parent=1 // pred_region
      _
    $region49: #{tpu_custom_call.1} parent=1 // pred_fallthru
      _
    // Predicated region
    $region50: #{tpu_custom_call.1} parent=1 // pred_check
      _
    $region51: #{tpu_custom_call.1} parent=1 // pred_check_branch
      %118 = sbr.rel (0) target = $region53
    $region52: #{tpu_custom_call.1} parent=1 // pred_region
      _
    $region53: #{tpu_custom_call.1} parent=1 // pred_fallthru
      _
    // Predicated region
    $region54: #{tpu_custom_call.1} parent=1 // pred_check
      _
    $region55: #{tpu_custom_call.1} parent=1 // pred_check_branch
      %120 = sbr.rel (0) target = $region57
    $region56: #{tpu_custom_call.1} parent=1 // pred_region
      _
    $region57: #{tpu_custom_call.1} parent=1 // pred_fallthru
      _
    // Predicated region
    $region58: #{tpu_custom_call.1} parent=1 // pred_check
      _
    $region59: #{tpu_custom_call.1} parent=1 // pred_check_branch
      %122 = sbr.rel (0) target = $region61
    $region60: #{tpu_custom_call.1} parent=1 // pred_region
      _
    $region61: #{tpu_custom_call.1} parent=1 // pred_fallthru
      _
    // Predicated region
    $region62: #{tpu_custom_call.1} parent=1 // pred_check
      _
    $region63: #{tpu_custom_call.1} parent=1 // pred_check_branch
      %124 = sbr.rel (0) target = $region65
    $region64: #{tpu_custom_call.1} parent=1 // pred_region
      _
    $region65: #{tpu_custom_call.1} parent=1 // pred_fallthru
      _
    // Predicated region
    $region66: #{tpu_custom_call.1} parent=1 // pred_check
      _
    $region67: #{tpu_custom_call.1} parent=1 // pred_check_branch
      %126 = sbr.rel (0) target = $region69
    $region68: #{tpu_custom_call.1} parent=1 // pred_region
      %127 = dma.done [#allocation5], 16
    $region69: #{tpu_custom_call.1} parent=1 // pred_fallthru
      _
    // Predicated region
    $region70: #{tpu_custom_call.1} parent=1 // pred_check
      _
    $region71: #{tpu_custom_call.1} parent=1 // pred_check_branch
      %129 = sbr.rel (0) target = $region73
    $region72: #{tpu_custom_call.1} parent=1 // pred_region
      %130 = dma.done [#allocation3], 256
    $region73: #{tpu_custom_call.1} parent=1 // pred_fallthru
      _
    // Predicated region
    $region74: #{tpu_custom_call.1} parent=1 // pred_check
      _
    $region75: #{tpu_custom_call.1} parent=1 // pred_check_branch
      %132 = sbr.rel (0) target = $region77
    $region76: #{tpu_custom_call.1} parent=1 // pred_region
      %133 = dma.done [#allocation8], 256
    $region77: #{tpu_custom_call.1} parent=1 // pred_fallthru
      _
    // Predicated region
    $region78: #{tpu_custom_call.1} parent=1 // pred_check
      _
    $region79: #{tpu_custom_call.1} parent=1 // pred_check_branch
      %135 = sbr.rel (0) target = $region81
    $region80: #{tpu_custom_call.1} parent=1 // pred_region
      %136 = dma.done [#allocation8], 256
    $region81: #{tpu_custom_call.1} parent=1 // pred_fallthru
      _
    // Predicated region
    $region82: #{tpu_custom_call.1} parent=1 // pred_check
      _
    $region83: #{tpu_custom_call.1} parent=1 // pred_check_branch
      %138 = sbr.rel (0) target = $region85
    $region84: #{tpu_custom_call.1} parent=1 // pred_region
      %139 = dma.done [#allocation11], 512
    $region85: #{tpu_custom_call.1} parent=1 // pred_fallthru
      _
    // Predicated region
    $region86: #{tpu_custom_call.1} parent=1 // pred_check
      _
    $region87: #{tpu_custom_call.1} parent=1 // pred_check_branch
      %141 = sbr.rel (0) target = $region89
    $region88: #{tpu_custom_call.1} parent=1 // pred_region
      %142 = dma.done [#allocation11], 512
    $region89: #{tpu_custom_call.1} parent=1 // pred_fallthru
      _
    // Predicated region
    $region90: #{tpu_custom_call.1} parent=1 // pred_check
      _
    $region91: #{tpu_custom_call.1} parent=1 // pred_check_branch
      %144 = sbr.rel (0) target = $region93
    $region92: #{tpu_custom_call.1} parent=1 // pred_region
      %145 = dma.done [#allocation14], 512
    $region93: #{tpu_custom_call.1} parent=1 // pred_fallthru
      _
    %146 = sfence
    %v147 = vld [vmem:[%s2] sm:$0x3]
    %v148 = vld [vmem:[%s4] sm:$0xff]
    %v149 = vld [vmem:[%s4 + $0x8] sm:$0xff]
    %v150 = vld [vmem:[%s4 + $0x10] sm:$0xff]
    %v151 = vld [vmem:[%s4 + $0x18] sm:$0xff]
    %v152 = vld [vmem:[%s4 + $0x20] sm:$0xff]
    %v153 = vld [vmem:[%s4 + $0x28] sm:$0xff]
    %v154 = vld [vmem:[%s4 + $0x30] sm:$0xff]
    %v155 = vld [vmem:[%s4 + $0x38] sm:$0xff]
    %v156 = vld [vmem:[%s4 + $0x40] sm:$0xff]
    %v157 = vld [vmem:[%s4 + $0x48] sm:$0xff]
    %v158 = vld [vmem:[%s4 + $0x50] sm:$0xff]
    %v159 = vld [vmem:[%s4 + $0x58] sm:$0xff]
    %v160 = vld [vmem:[%s4 + $0x60] sm:$0xff]
    %v161 = vld [vmem:[%s4 + $0x68] sm:$0xff]
    %v162 = vld [vmem:[%s4 + $0x70] sm:$0xff]
    %v163 = vld [vmem:[%s4 + $0x78] sm:$0xff]
    %v164 = vld [vmem:[#allocation10] sm:$0xff]
    %v165 = vld [vmem:[#allocation10 + $0x8] sm:$0xff]
    %v166 = vld [vmem:[#allocation10 + $0x10] sm:$0xff]
    %v167 = vld [vmem:[#allocation10 + $0x18] sm:$0xff]
    %v168 = vld [vmem:[#allocation12] sm:$0xff]
    %v169 = vld [vmem:[#allocation12 + $0x8] sm:$0xff]
    %v170 = vld [vmem:[#allocation12 + $0x10] sm:$0xff]
    %v171 = vld [vmem:[#allocation12 + $0x18] sm:$0xff]
    %v172 = vld [vmem:[%s11] sm:$0x1]
    %v173 = vld [vmem:[%s12] sm:$0xff]
    %v174 = vld [vmem:[%s12 + $0x8] sm:$0xff]
    %v175 = vld [vmem:[%s12 + $0x10] sm:$0xff]
    %v176 = vld [vmem:[%s12 + $0x18] sm:$0xff]
    %v177 = vld [vmem:[%s12 + $0x20] sm:$0xff]
    %v178 = vld [vmem:[%s12 + $0x28] sm:$0xff]
    %v179 = vld [vmem:[%s12 + $0x30] sm:$0xff]
    %v180 = vld [vmem:[%s12 + $0x38] sm:$0xff]
    %v181 = vld [vmem:[%s12 + $0x40] sm:$0xff]
    %v182 = vld [vmem:[%s12 + $0x48] sm:$0xff]
    %v183 = vld [vmem:[%s14] sm:$0xff]
    %v184 = vld [vmem:[%s14 + $0x8] sm:$0xff]
    %v185 = vld [vmem:[%s14 + $0x10] sm:$0xff]
    %v186 = vld [vmem:[%s14 + $0x18] sm:$0xff]
    %v187 = vld [vmem:[%s14 + $0x20] sm:$0xff]
    %v188 = vld [vmem:[%s14 + $0x28] sm:$0xff]
    %v189 = vld [vmem:[%s14 + $0x30] sm:$0xff]
    %v190 = vld [vmem:[%s14 + $0x38] sm:$0xff]
    %v191 = vld [vmem:[%s14 + $0x40] sm:$0xff]
    %v192 = vld [vmem:[%s14 + $0x48] sm:$0xff]
    %v193 = vld [vmem:[%s13] sm:$0x1]
    %v195 = vlaneseq
    %v196 = vshrl.u32 %v195, 7
    %v197 = vsub.s32 0, %v196
    %v198 = vrot.slane %v193, %v197
    %v200 = vld [vmem:[%s15] sm:$0x1]
    %v202 = vlaneseq
    %v203 = vshrl.u32 %v202, 7
    %v204 = vsub.s32 0, %v203
    %v205 = vrot.slane %v200, %v204
    %v207 = vld [vmem:[#allocation6] sm:$0x3]
    %v208 = vld [vmem:[#allocation6 + $0x2] sm:$0x3]
    %v209 = vld [vmem:[#allocation6 + $0x4] sm:$0x3]
    %v210 = vld [vmem:[#allocation6 + $0x6] sm:$0x3]
    %v211 = vld [vmem:[#allocation6 + $0x8] sm:$0x3]
    %v212 = vld [vmem:[#allocation6 + $0xa] sm:$0x3]
    %v213 = vld [vmem:[#allocation6 + $0xc] sm:$0x3]
    %v214 = vld [vmem:[#allocation6 + $0xe] sm:$0x3]
    %v215 = vld [vmem:[#allocation9] sm:$0xff]
    %v216 = vld [vmem:[#allocation9 + $0x8] sm:$0xff]
    %v217 = vld [vmem:[%s7] sm:$0x1]
    %v219 = vlaneseq
    %v220 = vshrl.u32 %v219, 7
    %v221 = vsub.s32 0, %v220
    %v222 = vrot.slane %v217, %v221
    %v232 = vcombine.low %v207, %v208
    %v233 = vcombine.low %v209, %v210
    %v235 = vunpack.c.l.s4 1983009808
    %v236 = vunpack.c.0.s8 %v235
    %v237 = vlaneseq
    %v238 = vshrl.u32 %v237, 7
    %v239 = vsub.s32 %v236, %v238
    %v240 = vrot.slane %v232, %v239
    %v242 = vunpack.c.l.s4 1983009808
    %v243 = vunpack.c.0.s8 %v242
    %v244 = vlaneseq
    %v245 = vshrl.u32 %v244, 7
    %v246 = vsub.s32 %v243, %v245
    %v247 = vrot.slane %v233, %v246
    %v248 = vcombine.low %v240, %v247
    %v249 = vcombine.low %v211, %v212
    %v250 = vcombine.low %v213, %v214
    %v252 = vunpack.c.l.s4 1983009808
    %v253 = vunpack.c.0.s8 %v252
    %v254 = vlaneseq
    %v255 = vshrl.u32 %v254, 7
    %v256 = vsub.s32 %v253, %v255
    %v257 = vrot.slane %v249, %v256
    %v259 = vunpack.c.l.s4 1983009808
    %v260 = vunpack.c.0.s8 %v259
    %v261 = vlaneseq
    %v262 = vshrl.u32 %v261, 7
    %v263 = vsub.s32 %v260, %v262
    %v264 = vrot.slane %v250, %v263
    %v265 = vcombine.low %v257, %v264
    %vm266 = vcmask 130048
    %v267 = vsel %vm266, %v248, 0
    %v269 = vsel %vm266, %v265, 0
    %271 = vmatprep.subr.mxu0 0.0
    %272 = vmatpush1.msra.mxu0 %v215
    %273 = vmatprep.subr.mxu0 0.0
    %274 = vmatpush1.msra.mxu0 %v216
    %275 = vmatprep.subr.mxu0 0.0
    %276 = vmatpush1.msra.mxu0 0.0
    %277 = vmatprep.subr.mxu0 0.0
    %278 = vmatpush1.msra.mxu0 0.0
    %279 = vmatprep.subr.mxu0 0.0
    %280 = vmatpush1.msra.mxu0 0.0
    %281 = vmatprep.subr.mxu0 0.0
    %282 = vmatpush1.msra.mxu0 0.0
    %283 = vmatprep.subr.mxu0 0.0
    %284 = vmatpush1.msra.mxu0 0.0
    %285 = vmatprep.subr.mxu0 0.0
    %286 = vmatpush1.msra.mxu0 0.0
    %287 = vmatprep.subr.mxu0 0.0
    %288 = vmatpush1.msra.mxu0 0.0
    %289 = vmatprep.subr.mxu0 0.0
    %290 = vmatpush1.msra.mxu0 0.0
    %291 = vmatprep.subr.mxu0 0.0
    %292 = vmatpush1.msra.mxu0 0.0
    %293 = vmatprep.subr.mxu0 0.0
    %294 = vmatpush1.msra.mxu0 0.0
    %295 = vmatprep.subr.mxu0 0.0
    %296 = vmatpush1.msra.mxu0 0.0
    %297 = vmatprep.subr.mxu0 0.0
    %298 = vmatpush1.msra.mxu0 0.0
    %299 = vmatprep.subr.mxu0 0.0
    %300 = vmatpush1.msra.mxu0 0.0
    %301 = vmatprep.subr.mxu0 0.0
    %302 = vmatpush1.msra.mxu0 0.0
    %303 = vmatprep.subr.mxu0 0.0
    %304 = vmatpush1.msra.mxu0 0.0
    %305 = vmatprep.subr.mxu0 0.0
    %306 = vmatpush1.msra.mxu0 0.0
    %307 = vmatprep.subr.mxu0 0.0
    %308 = vmatpush1.msra.mxu0 0.0
    %309 = vmatprep.subr.mxu0 0.0
    %310 = vmatpush1.msra.mxu0 0.0
    %311 = vmatprep.subr.mxu0 0.0
    %312 = vmatpush1.msra.mxu0 0.0
    %313 = vmatprep.subr.mxu0 0.0
    %314 = vmatpush1.msra.mxu0 0.0
    %315 = vmatprep.subr.mxu0 0.0
    %316 = vmatpush1.msra.mxu0 0.0
    %317 = vmatprep.subr.mxu0 0.0
    %318 = vmatpush1.msra.mxu0 0.0
    %319 = vmatprep.subr.mxu0 0.0
    %320 = vmatpush1.msra.mxu0 0.0
    %321 = vmatprep.subr.mxu0 0.0
    %322 = vmatpush1.msra.mxu0 0.0
    %323 = vmatprep.subr.mxu0 0.0
    %324 = vmatpush1.msra.mxu0 0.0
    %325 = vmatprep.subr.mxu0 0.0
    %326 = vmatpush1.msra.mxu0 0.0
    %327 = vmatprep.subr.mxu0 0.0
    %328 = vmatpush1.msra.mxu0 0.0
    %329 = vmatprep.subr.mxu0 0.0
    %330 = vmatpush1.msra.mxu0 0.0
    %331 = vmatprep.subr.mxu0 0.0
    %332 = vmatpush1.msra.mxu0 0.0
    %333 = vmatprep.subr.mxu0 0.0
    %334 = vmatpush1.msra.mxu0 0.0
    %335 = vmatprep.mubr.f32.mxu0 0.0
    %336 = vmatmul.mubr.f32.gmra.mrb[0].mxu0 %v267
    %v337 = vpop.f32.mrb[0].mxu0
    %v338 = vadd.f32 %v222, %v337
    %v339 = vpop.f32.mrb[0].mxu0
    %340 = vmatprep.mubr.f32.mxu0 0.0
    %341 = vmatmul.mubr.f32.gmra.mrb[0].mxu0 %v269
    %v342 = vpop.f32.mrb[0].mxu0
    %v343 = vadd.f32 %v222, %v342
    %v344 = vpop.f32.mrb[0].mxu0
    %345 = vdwg.mxu0
    %v348 = vcombine.high %v338, %v338
    %v350 = vunpack.c.l.s4 1983009808
    %v351 = vunpack.c.0.s8 %v350
    %v352 = vlaneseq
    %v353 = vshrl.u32 %v352, 7
    %v354 = vsub.s32 %v351, %v353
    %v355 = vrot.slane %v338, %v354
    %v357 = vunpack.c.l.s4 1983009808
    %v358 = vunpack.c.0.s8 %v357
    %v359 = vlaneseq
    %v360 = vshrl.u32 %v359, 7
    %v361 = vsub.s32 %v358, %v360
    %v362 = vrot.slane %v348, %v361
    %v363 = vcombine.high %v355, %v355
    %v364 = vcombine.high %v362, %v362
    %v365 = vcombine.high %v343, %v343
    %v367 = vunpack.c.l.s4 1983009808
    %v368 = vunpack.c.0.s8 %v367
    %v369 = vlaneseq
    %v370 = vshrl.u32 %v369, 7
    %v371 = vsub.s32 %v368, %v370
    %v372 = vrot.slane %v343, %v371
    %v374 = vunpack.c.l.s4 1983009808
    %v375 = vunpack.c.0.s8 %v374
    %v376 = vlaneseq
    %v377 = vshrl.u32 %v376, 7
    %v378 = vsub.s32 %v375, %v377
    %v379 = vrot.slane %v365, %v378
    %v380 = vcombine.high %v372, %v372
    %v381 = vcombine.high %v379, %v379
    %vm390 = vcmask 261120
    %v392 = vsel %vm390, 0.0, 0
    %394 = vmatprep.subr.mxu0 0.0
    %395 = vmatpush1.msra.mxu0 %v164
    %396 = vmatprep.subr.mxu0 0.0
    %397 = vmatpush1.msra.mxu0 %v165
    %398 = vmatprep.subr.mxu0 0.0
    %399 = vmatpush1.msra.mxu0 %v166
    %400 = vmatprep.subr.mxu0 0.0
    %401 = vmatpush1.msra.mxu0 %v167
    %402 = vmatprep.subr.mxu0 0.0
    %403 = vmatpush1.msra.mxu0 0.0
    %404 = vmatprep.subr.mxu0 0.0
    %405 = vmatpush1.msra.mxu0 0.0
    %406 = vmatprep.subr.mxu0 0.0
    %407 = vmatpush1.msra.mxu0 0.0
    %408 = vmatprep.subr.mxu0 0.0
    %409 = vmatpush1.msra.mxu0 0.0
    %410 = vmatprep.subr.mxu0 0.0
    %411 = vmatpush1.msra.mxu0 0.0
    %412 = vmatprep.subr.mxu0 0.0
    %413 = vmatpush1.msra.mxu0 0.0
    %414 = vmatprep.subr.mxu0 0.0
    %415 = vmatpush1.msra.mxu0 0.0
    %416 = vmatprep.subr.mxu0 0.0
    %417 = vmatpush1.msra.mxu0 0.0
    %418 = vmatprep.subr.mxu0 0.0
    %419 = vmatpush1.msra.mxu0 0.0
    %420 = vmatprep.subr.mxu0 0.0
    %421 = vmatpush1.msra.mxu0 0.0
    %422 = vmatprep.subr.mxu0 0.0
    %423 = vmatpush1.msra.mxu0 0.0
    %424 = vmatprep.subr.mxu0 0.0
    %425 = vmatpush1.msra.mxu0 0.0
    %426 = vmatprep.subr.mxu0 0.0
    %427 = vmatpush1.msra.mxu0 0.0
    %428 = vmatprep.subr.mxu0 0.0
    %429 = vmatpush1.msra.mxu0 0.0
    %430 = vmatprep.subr.mxu0 0.0
    %431 = vmatpush1.msra.mxu0 0.0
    %432 = vmatprep.subr.mxu0 0.0
    %433 = vmatpush1.msra.mxu0 0.0
    %434 = vmatprep.subr.mxu0 0.0
    %435 = vmatpush1.msra.mxu0 0.0
    %436 = vmatprep.subr.mxu0 0.0
    %437 = vmatpush1.msra.mxu0 0.0
    %438 = vmatprep.subr.mxu0 0.0
    %439 = vmatpush1.msra.mxu0 0.0
    %440 = vmatprep.subr.mxu0 0.0
    %441 = vmatpush1.msra.mxu0 0.0
    %442 = vmatprep.subr.mxu0 0.0
    %443 = vmatpush1.msra.mxu0 0.0
    %444 = vmatprep.subr.mxu0 0.0
    %445 = vmatpush1.msra.mxu0 0.0
    %446 = vmatprep.subr.mxu0 0.0
    %447 = vmatpush1.msra.mxu0 0.0
    %448 = vmatprep.subr.mxu0 0.0
    %449 = vmatpush1.msra.mxu0 0.0
    %450 = vmatprep.subr.mxu0 0.0
    %451 = vmatpush1.msra.mxu0 0.0
    %452 = vmatprep.subr.mxu0 0.0
    %453 = vmatpush1.msra.mxu0 0.0
    %454 = vmatprep.subr.mxu0 0.0
    %455 = vmatpush1.msra.mxu0 0.0
    %456 = vmatprep.subr.mxu0 0.0
    %457 = vmatpush1.msra.mxu0 0.0
    %458 = vmatprep.mubr.f32.mxu0 0.0
    %459 = vmatmul.mubr.f32.gmra.mrb[0].mxu0 %v392
    %v460 = vpop.f32.mrb[0].mxu0
    %v461 = vadd.f32 0.0, %v460
    %v462 = vpop.f32.mrb[0].mxu0
    %463 = vdwg.mxu0
    %v464 = vadd.f32 %v355, %v461
    %v465 = vxor.u32 %v464, 2147483648
    %v466 = vmul.f32 %v465, 1.442695
    %v467 = vpow.pop %v466
    %v468 = vadd.f32 %v467, 1.0
    %v469 = vrcp.pop %v468
    %v470 = vmul.f32 1.0, %v469
    %v471 = vtanh.pop %v464
    %v472 = vmul.f32 %v470, 0.0
    %474 = vrot.lane.b32.xlu0 %v471, 64
    %v475 = vpop.permute.xlu0 %474
    %v477 = vmul.f32 %v470, %v475
    %479 = vrot.lane.b32.xlu0 %v477, 32
    %v480 = vpop.permute.xlu0 %479
    %v482 = vadd.f32 %v472, %v480
    %v483 = vtanh.pop %v482
    %485 = vrot.lane.b32.xlu0 %v483, 64
    %v486 = vpop.permute.xlu0 %485
    %v488 = vmul.f32 %v470, %v486
    %490 = vset.pattern.permute.xlu0 0
    %491 = vperm.xlu0 %490, %v147
    %v492 = vpop.permute.xlu0 %491
    %v494 = vmul.f32 %v488, %v492
    %v495 = vsub.f32 1.0, %v147
    %497 = vset.pattern.permute.xlu0 0
    %498 = vperm.xlu0 %497, %v495
    %v499 = vpop.permute.xlu0 %498
    %v501 = vmul.f32 %v499, 0.0
    %v502 = vadd.f32 %v494, %v501
    %v505 = vunpack.c.l.s4 1983009808
    %v506 = vunpack.c.0.s8 %v505
    %v507 = vlaneseq
    %v508 = vshrl.u32 %v507, 7
    %v509 = vsub.s32 %v506, %v508
    %v510 = vrot.slane %v482, %v509
    %511 = vrot.lane.b32.xlu0 %v510, 96
    %v512 = vpop.permute.xlu0 %511
    %v514 = vmul.f32 %v492, %v512
    %v515 = vadd.f32 %v514, %v501
    %v518 = vunpack.c.l.s4 1983009808
    %v519 = vunpack.c.0.s8 %v518
    %v520 = vlaneseq
    %v521 = vshrl.u32 %v520, 7
    %v522 = vsub.s32 %v519, %v521
    %v523 = vrot.slane %v502, %v522
    %524 = vrot.lane.b32.xlu0 %v523, 32
    %v525 = vpop.permute.xlu0 %524
    %v526 = vsel %vm390, %v525, 0
    %528 = vmatprep.subr.mxu0 0.0
    %529 = vmatpush1.msra.mxu0 %v164
    %530 = vmatprep.subr.mxu0 0.0
    %531 = vmatpush1.msra.mxu0 %v165
    %532 = vmatprep.subr.mxu0 0.0
    %533 = vmatpush1.msra.mxu0 %v166
    %534 = vmatprep.subr.mxu0 0.0
    %535 = vmatpush1.msra.mxu0 %v167
    %536 = vmatprep.subr.mxu0 0.0
    %537 = vmatpush1.msra.mxu0 0.0
    %538 = vmatprep.subr.mxu0 0.0
    %539 = vmatpush1.msra.mxu0 0.0
    %540 = vmatprep.subr.mxu0 0.0
    %541 = vmatpush1.msra.mxu0 0.0
    %542 = vmatprep.subr.mxu0 0.0
    %543 = vmatpush1.msra.mxu0 0.0
    %544 = vmatprep.subr.mxu0 0.0
    %545 = vmatpush1.msra.mxu0 0.0
    %546 = vmatprep.subr.mxu0 0.0
    %547 = vmatpush1.msra.mxu0 0.0
    %548 = vmatprep.subr.mxu0 0.0
    %549 = vmatpush1.msra.mxu0 0.0
    %550 = vmatprep.subr.mxu0 0.0
    %551 = vmatpush1.msra.mxu0 0.0
    %552 = vmatprep.subr.mxu0 0.0
    %553 = vmatpush1.msra.mxu0 0.0
    %554 = vmatprep.subr.mxu0 0.0
    %555 = vmatpush1.msra.mxu0 0.0
    %556 = vmatprep.subr.mxu0 0.0
    %557 = vmatpush1.msra.mxu0 0.0
    %558 = vmatprep.subr.mxu0 0.0
    %559 = vmatpush1.msra.mxu0 0.0
    %560 = vmatprep.subr.mxu0 0.0
    %561 = vmatpush1.msra.mxu0 0.0
    %562 = vmatprep.subr.mxu0 0.0
    %563 = vmatpush1.msra.mxu0 0.0
    %564 = vmatprep.subr.mxu0 0.0
    %565 = vmatpush1.msra.mxu0 0.0
    %566 = vmatprep.subr.mxu0 0.0
    %567 = vmatpush1.msra.mxu0 0.0
    %568 = vmatprep.subr.mxu0 0.0
    %569 = vmatpush1.msra.mxu0 0.0
    %570 = vmatprep.subr.mxu0 0.0
    %571 = vmatpush1.msra.mxu0 0.0
    %572 = vmatprep.subr.mxu0 0.0
    %573 = vmatpush1.msra.mxu0 0.0
    %574 = vmatprep.subr.mxu0 0.0
    %575 = vmatpush1.msra.mxu0 0.0
    %576 = vmatprep.subr.mxu0 0.0
    %577 = vmatpush1.msra.mxu0 0.0
    %578 = vmatprep.subr.mxu0 0.0
    %579 = vmatpush1.msra.mxu0 0.0
    %580 = vmatprep.subr.mxu0 0.0
    %581 = vmatpush1.msra.mxu0 0.0
    %582 = vmatprep.subr.mxu0 0.0
    %583 = vmatpush1.msra.mxu0 0.0
    %584 = vmatprep.subr.mxu0 0.0
    %585 = vmatpush1.msra.mxu0 0.0
    %586 = vmatprep.subr.mxu0 0.0
    %587 = vmatpush1.msra.mxu0 0.0
    %588 = vmatprep.subr.mxu0 0.0
    %589 = vmatpush1.msra.mxu0 0.0
    %590 = vmatprep.subr.mxu0 0.0
    %591 = vmatpush1.msra.mxu0 0.0
    %592 = vmatprep.mubr.f32.mxu0 0.0
    %593 = vmatmul.mubr.f32.gmra.mrb[0].mxu0 %v526
    %v594 = vpop.f32.mrb[0].mxu0
    %v595 = vadd.f32 0.0, %v594
    %v596 = vpop.f32.mrb[0].mxu0
    %597 = vdwg.mxu0
    %v598 = vadd.f32 %v363, %v595
    %v599 = vxor.u32 %v598, 2147483648
    %v600 = vmul.f32 %v599, 1.442695
    %v601 = vpow.pop %v600
    %v602 = vadd.f32 %v601, 1.0
    %v603 = vrcp.pop %v602
    %v604 = vmul.f32 1.0, %v603
    %v605 = vtanh.pop %v598
    %v608 = vunpack.c.l.s4 1983009808
    %v609 = vunpack.c.0.s8 %v608
    %v610 = vlaneseq
    %v611 = vshrl.u32 %v610, 7
    %v612 = vsub.s32 %v609, %v611
    %v613 = vrot.slane %v515, %v612
    %614 = vrot.lane.b32.xlu0 %v613, 32
    %v615 = vpop.permute.xlu0 %614
    %v617 = vmul.f32 %v604, %v615
    %619 = vrot.lane.b32.xlu0 %v605, 64
    %v620 = vpop.permute.xlu0 %619
    %v622 = vmul.f32 %v604, %v620
    %624 = vrot.lane.b32.xlu0 %v622, 32
    %v625 = vpop.permute.xlu0 %624
    %v627 = vadd.f32 %v617, %v625
    %v628 = vtanh.pop %v627
    %630 = vrot.lane.b32.xlu0 %v628, 64
    %v631 = vpop.permute.xlu0 %630
    %v633 = vmul.f32 %v604, %v631
    %634 = vset.pattern.permute.xlu0 1
    %635 = vperm.xlu0 %634, %v147
    %v636 = vpop.permute.xlu0 %635
    %v638 = vmul.f32 %v633, %v636
    %639 = vset.pattern.permute.xlu0 1
    %640 = vperm.xlu0 %639, %v495
    %v641 = vpop.permute.xlu0 %640
    %v644 = vmul.f32 %v641, %v525
    %v647 = vunpack.c.l.s4 1983009808
    %v648 = vunpack.c.0.s8 %v647
    %v649 = vlaneseq
    %v650 = vshrl.u32 %v649, 7
    %v651 = vsub.s32 %v648, %v650
    %v652 = vrot.slane %v644, %v651
    %653 = vrot.lane.b32.xlu0 %v652, 96
    %v654 = vpop.permute.xlu0 %653
    %v656 = vadd.f32 %v638, %v654
    %v659 = vunpack.c.l.s4 1983009808
    %v660 = vunpack.c.0.s8 %v659
    %v661 = vlaneseq
    %v662 = vshrl.u32 %v661, 7
    %v663 = vsub.s32 %v660, %v662
    %v664 = vrot.slane %v627, %v663
    %665 = vrot.lane.b32.xlu0 %v664, 96
    %v666 = vpop.permute.xlu0 %665
    %v668 = vmul.f32 %v636, %v666
    %v669 = vmul.f32 %v641, %v515
    %v670 = vadd.f32 %v668, %v669
    %v673 = vunpack.c.l.s4 1983009808
    %v674 = vunpack.c.0.s8 %v673
    %v675 = vlaneseq
    %v676 = vshrl.u32 %v675, 7
    %v677 = vsub.s32 %v674, %v676
    %v678 = vrot.slane %v656, %v677
    %679 = vrot.lane.b32.xlu0 %v678, 32
    %v680 = vpop.permute.xlu0 %679
    %v681 = vsel %vm390, %v680, 0
    %683 = vmatprep.subr.mxu0 0.0
    %684 = vmatpush1.msra.mxu0 %v164
    %685 = vmatprep.subr.mxu0 0.0
    %686 = vmatpush1.msra.mxu0 %v165
    %687 = vmatprep.subr.mxu0 0.0
    %688 = vmatpush1.msra.mxu0 %v166
    %689 = vmatprep.subr.mxu0 0.0
    %690 = vmatpush1.msra.mxu0 %v167
    %691 = vmatprep.subr.mxu0 0.0
    %692 = vmatpush1.msra.mxu0 0.0
    %693 = vmatprep.subr.mxu0 0.0
    %694 = vmatpush1.msra.mxu0 0.0
    %695 = vmatprep.subr.mxu0 0.0
    %696 = vmatpush1.msra.mxu0 0.0
    %697 = vmatprep.subr.mxu0 0.0
    %698 = vmatpush1.msra.mxu0 0.0
    %699 = vmatprep.subr.mxu0 0.0
    %700 = vmatpush1.msra.mxu0 0.0
    %701 = vmatprep.subr.mxu0 0.0
    %702 = vmatpush1.msra.mxu0 0.0
    %703 = vmatprep.subr.mxu0 0.0
    %704 = vmatpush1.msra.mxu0 0.0
    %705 = vmatprep.subr.mxu0 0.0
    %706 = vmatpush1.msra.mxu0 0.0
    %707 = vmatprep.subr.mxu0 0.0
    %708 = vmatpush1.msra.mxu0 0.0
    %709 = vmatprep.subr.mxu0 0.0
    %710 = vmatpush1.msra.mxu0 0.0
    %711 = vmatprep.subr.mxu0 0.0
    %712 = vmatpush1.msra.mxu0 0.0
    %713 = vmatprep.subr.mxu0 0.0
    %714 = vmatpush1.msra.mxu0 0.0
    %715 = vmatprep.subr.mxu0 0.0
    %716 = vmatpush1.msra.mxu0 0.0
    %717 = vmatprep.subr.mxu0 0.0
    %718 = vmatpush1.msra.mxu0 0.0
    %719 = vmatprep.subr.mxu0 0.0
    %720 = vmatpush1.msra.mxu0 0.0
    %721 = vmatprep.subr.mxu0 0.0
    %722 = vmatpush1.msra.mxu0 0.0
    %723 = vmatprep.subr.mxu0 0.0
    %724 = vmatpush1.msra.mxu0 0.0
    %725 = vmatprep.subr.mxu0 0.0
    %726 = vmatpush1.msra.mxu0 0.0
    %727 = vmatprep.subr.mxu0 0.0
    %728 = vmatpush1.msra.mxu0 0.0
    %729 = vmatprep.subr.mxu0 0.0
    %730 = vmatpush1.msra.mxu0 0.0
    %731 = vmatprep.subr.mxu0 0.0
    %732 = vmatpush1.msra.mxu0 0.0
    %733 = vmatprep.subr.mxu0 0.0
    %734 = vmatpush1.msra.mxu0 0.0
    %735 = vmatprep.subr.mxu0 0.0
    %736 = vmatpush1.msra.mxu0 0.0
    %737 = vmatprep.subr.mxu0 0.0
    %738 = vmatpush1.msra.mxu0 0.0
    %739 = vmatprep.subr.mxu0 0.0
    %740 = vmatpush1.msra.mxu0 0.0
    %741 = vmatprep.subr.mxu0 0.0
    %742 = vmatpush1.msra.mxu0 0.0
    %743 = vmatprep.subr.mxu0 0.0
    %744 = vmatpush1.msra.mxu0 0.0
    %745 = vmatprep.subr.mxu0 0.0
    %746 = vmatpush1.msra.mxu0 0.0
    %747 = vmatprep.mubr.f32.mxu0 0.0
    %748 = vmatmul.mubr.f32.gmra.mrb[0].mxu0 %v681
    %v749 = vpop.f32.mrb[0].mxu0
    %v750 = vadd.f32 0.0, %v749
    %v751 = vpop.f32.mrb[0].mxu0
    %752 = vdwg.mxu0
    %v753 = vadd.f32 %v362, %v750
    %v754 = vxor.u32 %v753, 2147483648
    %v755 = vmul.f32 %v754, 1.442695
    %v756 = vpow.pop %v755
    %v757 = vadd.f32 %v756, 1.0
    %v758 = vrcp.pop %v757
    %v759 = vmul.f32 1.0, %v758
    %v760 = vtanh.pop %v753
    %v763 = vunpack.c.l.s4 1983009808
    %v764 = vunpack.c.0.s8 %v763
    %v765 = vlaneseq
    %v766 = vshrl.u32 %v765, 7
    %v767 = vsub.s32 %v764, %v766
    %v768 = vrot.slane %v670, %v767
    %769 = vrot.lane.b32.xlu0 %v768, 32
    %v770 = vpop.permute.xlu0 %769
    %v772 = vmul.f32 %v759, %v770
    %774 = vrot.lane.b32.xlu0 %v760, 64
    %v775 = vpop.permute.xlu0 %774
    %v777 = vmul.f32 %v759, %v775
    %779 = vrot.lane.b32.xlu0 %v777, 32
    %v780 = vpop.permute.xlu0 %779
    %v782 = vadd.f32 %v772, %v780
    %v783 = vtanh.pop %v782
    %785 = vrot.lane.b32.xlu0 %v783, 64
    %v786 = vpop.permute.xlu0 %785
    %v788 = vmul.f32 %v759, %v786
    %789 = vset.pattern.permute.xlu0 2
    %790 = vperm.xlu0 %789, %v147
    %v791 = vpop.permute.xlu0 %790
    %v793 = vmul.f32 %v788, %v791
    %794 = vset.pattern.permute.xlu0 2
    %795 = vperm.xlu0 %794, %v495
    %v796 = vpop.permute.xlu0 %795
    %v799 = vmul.f32 %v796, %v680
    %v802 = vunpack.c.l.s4 1983009808
    %v803 = vunpack.c.0.s8 %v802
    %v804 = vlaneseq
    %v805 = vshrl.u32 %v804, 7
    %v806 = vsub.s32 %v803, %v805
    %v807 = vrot.slane %v799, %v806
    %808 = vrot.lane.b32.xlu0 %v807, 96
    %v809 = vpop.permute.xlu0 %808
    %v811 = vadd.f32 %v793, %v809
    %v814 = vunpack.c.l.s4 1983009808
    %v815 = vunpack.c.0.s8 %v814
    %v816 = vlaneseq
    %v817 = vshrl.u32 %v816, 7
    %v818 = vsub.s32 %v815, %v817
    %v819 = vrot.slane %v782, %v818
    %820 = vrot.lane.b32.xlu0 %v819, 96
    %v821 = vpop.permute.xlu0 %820
    %v823 = vmul.f32 %v791, %v821
    %v824 = vmul.f32 %v796, %v670
    %v825 = vadd.f32 %v823, %v824
    %v828 = vunpack.c.l.s4 1983009808
    %v829 = vunpack.c.0.s8 %v828
    %v830 = vlaneseq
    %v831 = vshrl.u32 %v830, 7
    %v832 = vsub.s32 %v829, %v831
    %v833 = vrot.slane %v811, %v832
    %834 = vrot.lane.b32.xlu0 %v833, 32
    %v835 = vpop.permute.xlu0 %834
    %v836 = vsel %vm390, %v835, 0
    %838 = vmatprep.subr.mxu0 0.0
    %839 = vmatpush1.msra.mxu0 %v164
    %840 = vmatprep.subr.mxu0 0.0
    %841 = vmatpush1.msra.mxu0 %v165
    %842 = vmatprep.subr.mxu0 0.0
    %843 = vmatpush1.msra.mxu0 %v166
    %844 = vmatprep.subr.mxu0 0.0
    %845 = vmatpush1.msra.mxu0 %v167
    %846 = vmatprep.subr.mxu0 0.0
    %847 = vmatpush1.msra.mxu0 0.0
    %848 = vmatprep.subr.mxu0 0.0
    %849 = vmatpush1.msra.mxu0 0.0
    %850 = vmatprep.subr.mxu0 0.0
    %851 = vmatpush1.msra.mxu0 0.0
    %852 = vmatprep.subr.mxu0 0.0
    %853 = vmatpush1.msra.mxu0 0.0
    %854 = vmatprep.subr.mxu0 0.0
    %855 = vmatpush1.msra.mxu0 0.0
    %856 = vmatprep.subr.mxu0 0.0
    %857 = vmatpush1.msra.mxu0 0.0
    %858 = vmatprep.subr.mxu0 0.0
    %859 = vmatpush1.msra.mxu0 0.0
    %860 = vmatprep.subr.mxu0 0.0
    %861 = vmatpush1.msra.mxu0 0.0
    %862 = vmatprep.subr.mxu0 0.0
    %863 = vmatpush1.msra.mxu0 0.0
    %864 = vmatprep.subr.mxu0 0.0
    %865 = vmatpush1.msra.mxu0 0.0
    %866 = vmatprep.subr.mxu0 0.0
    %867 = vmatpush1.msra.mxu0 0.0
    %868 = vmatprep.subr.mxu0 0.0
    %869 = vmatpush1.msra.mxu0 0.0
    %870 = vmatprep.subr.mxu0 0.0
    %871 = vmatpush1.msra.mxu0 0.0
    %872 = vmatprep.subr.mxu0 0.0
    %873 = vmatpush1.msra.mxu0 0.0
    %874 = vmatprep.subr.mxu0 0.0
    %875 = vmatpush1.msra.mxu0 0.0
    %876 = vmatprep.subr.mxu0 0.0
    %877 = vmatpush1.msra.mxu0 0.0
    %878 = vmatprep.subr.mxu0 0.0
    %879 = vmatpush1.msra.mxu0 0.0
    %880 = vmatprep.subr.mxu0 0.0
    %881 = vmatpush1.msra.mxu0 0.0
    %882 = vmatprep.subr.mxu0 0.0
    %883 = vmatpush1.msra.mxu0 0.0
    %884 = vmatprep.subr.mxu0 0.0
    %885 = vmatpush1.msra.mxu0 0.0
    %886 = vmatprep.subr.mxu0 0.0
    %887 = vmatpush1.msra.mxu0 0.0
    %888 = vmatprep.subr.mxu0 0.0
    %889 = vmatpush1.msra.mxu0 0.0
    %890 = vmatprep.subr.mxu0 0.0
    %891 = vmatpush1.msra.mxu0 0.0
    %892 = vmatprep.subr.mxu0 0.0
    %893 = vmatpush1.msra.mxu0 0.0
    %894 = vmatprep.subr.mxu0 0.0
    %895 = vmatpush1.msra.mxu0 0.0
    %896 = vmatprep.subr.mxu0 0.0
    %897 = vmatpush1.msra.mxu0 0.0
    %898 = vmatprep.subr.mxu0 0.0
    %899 = vmatpush1.msra.mxu0 0.0
    %900 = vmatprep.subr.mxu0 0.0
    %901 = vmatpush1.msra.mxu0 0.0
    %902 = vmatprep.mubr.f32.mxu0 0.0
    %903 = vmatmul.mubr.f32.gmra.mrb[0].mxu0 %v836
    %v904 = vpop.f32.mrb[0].mxu0
    %v905 = vadd.f32 0.0, %v904
    %v906 = vpop.f32.mrb[0].mxu0
    %907 = vdwg.mxu0
    %v908 = vadd.f32 %v364, %v905
    %v909 = vxor.u32 %v908, 2147483648
    %v910 = vmul.f32 %v909, 1.442695
    %v911 = vpow.pop %v910
    %v912 = vadd.f32 %v911, 1.0
    %v913 = vrcp.pop %v912
    %v914 = vmul.f32 1.0, %v913
    %v915 = vtanh.pop %v908
    %v918 = vunpack.c.l.s4 1983009808
    %v919 = vunpack.c.0.s8 %v918
    %v920 = vlaneseq
    %v921 = vshrl.u32 %v920, 7
    %v922 = vsub.s32 %v919, %v921
    %v923 = vrot.slane %v825, %v922
    %924 = vrot.lane.b32.xlu0 %v923, 32
    %v925 = vpop.permute.xlu0 %924
    %v927 = vmul.f32 %v914, %v925
    %929 = vrot.lane.b32.xlu0 %v915, 64
    %v930 = vpop.permute.xlu0 %929
    %v932 = vmul.f32 %v914, %v930
    %934 = vrot.lane.b32.xlu0 %v932, 32
    %v935 = vpop.permute.xlu0 %934
    %v937 = vadd.f32 %v927, %v935
    %v938 = vtanh.pop %v937
    %940 = vrot.lane.b32.xlu0 %v938, 64
    %v941 = vpop.permute.xlu0 %940
    %v943 = vmul.f32 %v914, %v941
    %944 = vset.pattern.permute.xlu0 3
    %945 = vperm.xlu0 %944, %v147
    %v946 = vpop.permute.xlu0 %945
    %v948 = vmul.f32 %v943, %v946
    %949 = vset.pattern.permute.xlu0 3
    %950 = vperm.xlu0 %949, %v495
    %v951 = vpop.permute.xlu0 %950
    %v954 = vmul.f32 %v951, %v835
    %v957 = vunpack.c.l.s4 1983009808
    %v958 = vunpack.c.0.s8 %v957
    %v959 = vlaneseq
    %v960 = vshrl.u32 %v959, 7
    %v961 = vsub.s32 %v958, %v960
    %v962 = vrot.slane %v954, %v961
    %963 = vrot.lane.b32.xlu0 %v962, 96
    %v964 = vpop.permute.xlu0 %963
    %v966 = vadd.f32 %v948, %v964
    %v969 = vunpack.c.l.s4 1983009808
    %v970 = vunpack.c.0.s8 %v969
    %v971 = vlaneseq
    %v972 = vshrl.u32 %v971, 7
    %v973 = vsub.s32 %v970, %v972
    %v974 = vrot.slane %v937, %v973
    %975 = vrot.lane.b32.xlu0 %v974, 96
    %v976 = vpop.permute.xlu0 %975
    %v978 = vmul.f32 %v946, %v976
    %v979 = vmul.f32 %v951, %v825
    %v980 = vadd.f32 %v978, %v979
    %v983 = vunpack.c.l.s4 1983009808
    %v984 = vunpack.c.0.s8 %v983
    %v985 = vlaneseq
    %v986 = vshrl.u32 %v985, 7
    %v987 = vsub.s32 %v984, %v986
    %v988 = vrot.slane %v966, %v987
    %989 = vrot.lane.b32.xlu0 %v988, 32
    %v990 = vpop.permute.xlu0 %989
    %v991 = vsel %vm390, %v990, 0
    %993 = vmatprep.subr.mxu0 0.0
    %994 = vmatpush1.msra.mxu0 %v164
    %995 = vmatprep.subr.mxu0 0.0
    %996 = vmatpush1.msra.mxu0 %v165
    %997 = vmatprep.subr.mxu0 0.0
    %998 = vmatpush1.msra.mxu0 %v166
    %999 = vmatprep.subr.mxu0 0.0
    %1000 = vmatpush1.msra.mxu0 %v167
    %1001 = vmatprep.subr.mxu0 0.0
    %1002 = vmatpush1.msra.mxu0 0.0
    %1003 = vmatprep.subr.mxu0 0.0
    %1004 = vmatpush1.msra.mxu0 0.0
    %1005 = vmatprep.subr.mxu0 0.0
    %1006 = vmatpush1.msra.mxu0 0.0
    %1007 = vmatprep.subr.mxu0 0.0
    %1008 = vmatpush1.msra.mxu0 0.0
    %1009 = vmatprep.subr.mxu0 0.0
    %1010 = vmatpush1.msra.mxu0 0.0
    %1011 = vmatprep.subr.mxu0 0.0
    %1012 = vmatpush1.msra.mxu0 0.0
    %1013 = vmatprep.subr.mxu0 0.0
    %1014 = vmatpush1.msra.mxu0 0.0
    %1015 = vmatprep.subr.mxu0 0.0
    %1016 = vmatpush1.msra.mxu0 0.0
    %1017 = vmatprep.subr.mxu0 0.0
    %1018 = vmatpush1.msra.mxu0 0.0
    %1019 = vmatprep.subr.mxu0 0.0
    %1020 = vmatpush1.msra.mxu0 0.0
    %1021 = vmatprep.subr.mxu0 0.0
    %1022 = vmatpush1.msra.mxu0 0.0
    %1023 = vmatprep.subr.mxu0 0.0
    %1024 = vmatpush1.msra.mxu0 0.0
    %1025 = vmatprep.subr.mxu0 0.0
    %1026 = vmatpush1.msra.mxu0 0.0
    %1027 = vmatprep.subr.mxu0 0.0
    %1028 = vmatpush1.msra.mxu0 0.0
    %1029 = vmatprep.subr.mxu0 0.0
    %1030 = vmatpush1.msra.mxu0 0.0
    %1031 = vmatprep.subr.mxu0 0.0
    %1032 = vmatpush1.msra.mxu0 0.0
    %1033 = vmatprep.subr.mxu0 0.0
    %1034 = vmatpush1.msra.mxu0 0.0
    %1035 = vmatprep.subr.mxu0 0.0
    %1036 = vmatpush1.msra.mxu0 0.0
    %1037 = vmatprep.subr.mxu0 0.0
    %1038 = vmatpush1.msra.mxu0 0.0
    %1039 = vmatprep.subr.mxu0 0.0
    %1040 = vmatpush1.msra.mxu0 0.0
    %1041 = vmatprep.subr.mxu0 0.0
    %1042 = vmatpush1.msra.mxu0 0.0
    %1043 = vmatprep.subr.mxu0 0.0
    %1044 = vmatpush1.msra.mxu0 0.0
    %1045 = vmatprep.subr.mxu0 0.0
    %1046 = vmatpush1.msra.mxu0 0.0
    %1047 = vmatprep.subr.mxu0 0.0
    %1048 = vmatpush1.msra.mxu0 0.0
    %1049 = vmatprep.subr.mxu0 0.0
    %1050 = vmatpush1.msra.mxu0 0.0
    %1051 = vmatprep.subr.mxu0 0.0
    %1052 = vmatpush1.msra.mxu0 0.0
    %1053 = vmatprep.subr.mxu0 0.0
    %1054 = vmatpush1.msra.mxu0 0.0
    %1055 = vmatprep.subr.mxu0 0.0
    %1056 = vmatpush1.msra.mxu0 0.0
    %1057 = vmatprep.mubr.f32.mxu0 0.0
    %1058 = vmatmul.mubr.f32.gmra.mrb[0].mxu0 %v991
    %v1059 = vpop.f32.mrb[0].mxu0
    %v1060 = vadd.f32 0.0, %v1059
    %v1061 = vpop.f32.mrb[0].mxu0
    %1062 = vdwg.mxu0
    %v1063 = vadd.f32 %v372, %v1060
    %v1064 = vxor.u32 %v1063, 2147483648
    %v1065 = vmul.f32 %v1064, 1.442695
    %v1066 = vpow.pop %v1065
    %v1067 = vadd.f32 %v1066, 1.0
    %v1068 = vrcp.pop %v1067
    %v1069 = vmul.f32 1.0, %v1068
    %v1070 = vtanh.pop %v1063
    %v1073 = vunpack.c.l.s4 1983009808
    %v1074 = vunpack.c.0.s8 %v1073
    %v1075 = vlaneseq
    %v1076 = vshrl.u32 %v1075, 7
    %v1077 = vsub.s32 %v1074, %v1076
    %v1078 = vrot.slane %v980, %v1077
    %1079 = vrot.lane.b32.xlu0 %v1078, 32
    %v1080 = vpop.permute.xlu0 %1079
    %v1082 = vmul.f32 %v1069, %v1080
    %1084 = vrot.lane.b32.xlu0 %v1070, 64
    %v1085 = vpop.permute.xlu0 %1084
    %v1087 = vmul.f32 %v1069, %v1085
    %1089 = vrot.lane.b32.xlu0 %v1087, 32
    %v1090 = vpop.permute.xlu0 %1089
    %v1092 = vadd.f32 %v1082, %v1090
    %v1093 = vtanh.pop %v1092
    %1095 = vrot.lane.b32.xlu0 %v1093, 64
    %v1096 = vpop.permute.xlu0 %1095
    %v1098 = vmul.f32 %v1069, %v1096
    %1099 = vset.pattern.permute.xlu0 4
    %1100 = vperm.xlu0 %1099, %v147
    %v1101 = vpop.permute.xlu0 %1100
    %v1103 = vmul.f32 %v1098, %v1101
    %1104 = vset.pattern.permute.xlu0 4
    %1105 = vperm.xlu0 %1104, %v495
    %v1106 = vpop.permute.xlu0 %1105
    %v1109 = vmul.f32 %v1106, %v990
    %v1112 = vunpack.c.l.s4 1983009808
    %v1113 = vunpack.c.0.s8 %v1112
    %v1114 = vlaneseq
    %v1115 = vshrl.u32 %v1114, 7
    %v1116 = vsub.s32 %v1113, %v1115
    %v1117 = vrot.slane %v1109, %v1116
    %1118 = vrot.lane.b32.xlu0 %v1117, 96
    %v1119 = vpop.permute.xlu0 %1118
    %v1121 = vadd.f32 %v1103, %v1119
    %v1124 = vunpack.c.l.s4 1983009808
    %v1125 = vunpack.c.0.s8 %v1124
    %v1126 = vlaneseq
    %v1127 = vshrl.u32 %v1126, 7
    %v1128 = vsub.s32 %v1125, %v1127
    %v1129 = vrot.slane %v1092, %v1128
    %1130 = vrot.lane.b32.xlu0 %v1129, 96
    %v1131 = vpop.permute.xlu0 %1130
    %v1133 = vmul.f32 %v1101, %v1131
    %v1134 = vmul.f32 %v1106, %v980
    %v1135 = vadd.f32 %v1133, %v1134
    %v1138 = vunpack.c.l.s4 1983009808
    %v1139 = vunpack.c.0.s8 %v1138
    %v1140 = vlaneseq
    %v1141 = vshrl.u32 %v1140, 7
    %v1142 = vsub.s32 %v1139, %v1141
    %v1143 = vrot.slane %v1121, %v1142
    %1144 = vrot.lane.b32.xlu0 %v1143, 32
    %v1145 = vpop.permute.xlu0 %1144
    %v1146 = vsel %vm390, %v1145, 0
    %1148 = vmatprep.subr.mxu0 0.0
    %1149 = vmatpush1.msra.mxu0 %v164
    %1150 = vmatprep.subr.mxu0 0.0
    %1151 = vmatpush1.msra.mxu0 %v165
    %1152 = vmatprep.subr.mxu0 0.0
    %1153 = vmatpush1.msra.mxu0 %v166
    %1154 = vmatprep.subr.mxu0 0.0
    %1155 = vmatpush1.msra.mxu0 %v167
    %1156 = vmatprep.subr.mxu0 0.0
    %1157 = vmatpush1.msra.mxu0 0.0
    %1158 = vmatprep.subr.mxu0 0.0
    %1159 = vmatpush1.msra.mxu0 0.0
    %1160 = vmatprep.subr.mxu0 0.0
    %1161 = vmatpush1.msra.mxu0 0.0
    %1162 = vmatprep.subr.mxu0 0.0
    %1163 = vmatpush1.msra.mxu0 0.0
    %1164 = vmatprep.subr.mxu0 0.0
    %1165 = vmatpush1.msra.mxu0 0.0
    %1166 = vmatprep.subr.mxu0 0.0
    %1167 = vmatpush1.msra.mxu0 0.0
    %1168 = vmatprep.subr.mxu0 0.0
    %1169 = vmatpush1.msra.mxu0 0.0
    %1170 = vmatprep.subr.mxu0 0.0
    %1171 = vmatpush1.msra.mxu0 0.0
    %1172 = vmatprep.subr.mxu0 0.0
    %1173 = vmatpush1.msra.mxu0 0.0
    %1174 = vmatprep.subr.mxu0 0.0
    %1175 = vmatpush1.msra.mxu0 0.0
    %1176 = vmatprep.subr.mxu0 0.0
    %1177 = vmatpush1.msra.mxu0 0.0
    %1178 = vmatprep.subr.mxu0 0.0
    %1179 = vmatpush1.msra.mxu0 0.0
    %1180 = vmatprep.subr.mxu0 0.0
    %1181 = vmatpush1.msra.mxu0 0.0
    %1182 = vmatprep.subr.mxu0 0.0
    %1183 = vmatpush1.msra.mxu0 0.0
    %1184 = vmatprep.subr.mxu0 0.0
    %1185 = vmatpush1.msra.mxu0 0.0
    %1186 = vmatprep.subr.mxu0 0.0
    %1187 = vmatpush1.msra.mxu0 0.0
    %1188 = vmatprep.subr.mxu0 0.0
    %1189 = vmatpush1.msra.mxu0 0.0
    %1190 = vmatprep.subr.mxu0 0.0
    %1191 = vmatpush1.msra.mxu0 0.0
    %1192 = vmatprep.subr.mxu0 0.0
    %1193 = vmatpush1.msra.mxu0 0.0
    %1194 = vmatprep.subr.mxu0 0.0
    %1195 = vmatpush1.msra.mxu0 0.0
    %1196 = vmatprep.subr.mxu0 0.0
    %1197 = vmatpush1.msra.mxu0 0.0
    %1198 = vmatprep.subr.mxu0 0.0
    %1199 = vmatpush1.msra.mxu0 0.0
    %1200 = vmatprep.subr.mxu0 0.0
    %1201 = vmatpush1.msra.mxu0 0.0
    %1202 = vmatprep.subr.mxu0 0.0
    %1203 = vmatpush1.msra.mxu0 0.0
    %1204 = vmatprep.subr.mxu0 0.0
    %1205 = vmatpush1.msra.mxu0 0.0
    %1206 = vmatprep.subr.mxu0 0.0
    %1207 = vmatpush1.msra.mxu0 0.0
    %1208 = vmatprep.subr.mxu0 0.0
    %1209 = vmatpush1.msra.mxu0 0.0
    %1210 = vmatprep.subr.mxu0 0.0
    %1211 = vmatpush1.msra.mxu0 0.0
    %1212 = vmatprep.mubr.f32.mxu0 0.0
    %1213 = vmatmul.mubr.f32.gmra.mrb[0].mxu0 %v1146
    %v1214 = vpop.f32.mrb[0].mxu0
    %v1215 = vadd.f32 0.0, %v1214
    %v1216 = vpop.f32.mrb[0].mxu0
    %1217 = vdwg.mxu0
    %v1218 = vadd.f32 %v380, %v1215
    %v1219 = vxor.u32 %v1218, 2147483648
    %v1220 = vmul.f32 %v1219, 1.442695
    %v1221 = vpow.pop %v1220
    %v1222 = vadd.f32 %v1221, 1.0
    %v1223 = vrcp.pop %v1222
    %v1224 = vmul.f32 1.0, %v1223
    %v1225 = vtanh.pop %v1218
    %v1228 = vunpack.c.l.s4 1983009808
    %v1229 = vunpack.c.0.s8 %v1228
    %v1230 = vlaneseq
    %v1231 = vshrl.u32 %v1230, 7
    %v1232 = vsub.s32 %v1229, %v1231
    %v1233 = vrot.slane %v1135, %v1232
    %1234 = vrot.lane.b32.xlu0 %v1233, 32
    %v1235 = vpop.permute.xlu0 %1234
    %v1237 = vmul.f32 %v1224, %v1235
    %1239 = vrot.lane.b32.xlu0 %v1225, 64
    %v1240 = vpop.permute.xlu0 %1239
    %v1242 = vmul.f32 %v1224, %v1240
    %1244 = vrot.lane.b32.xlu0 %v1242, 32
    %v1245 = vpop.permute.xlu0 %1244
    %v1247 = vadd.f32 %v1237, %v1245
    %v1248 = vtanh.pop %v1247
    %1250 = vrot.lane.b32.xlu0 %v1248, 64
    %v1251 = vpop.permute.xlu0 %1250
    %v1253 = vmul.f32 %v1224, %v1251
    %1254 = vset.pattern.permute.xlu0 5
    %1255 = vperm.xlu0 %1254, %v147
    %v1256 = vpop.permute.xlu0 %1255
    %v1258 = vmul.f32 %v1253, %v1256
    %1259 = vset.pattern.permute.xlu0 5
    %1260 = vperm.xlu0 %1259, %v495
    %v1261 = vpop.permute.xlu0 %1260
    %v1264 = vmul.f32 %v1261, %v1145
    %v1267 = vunpack.c.l.s4 1983009808
    %v1268 = vunpack.c.0.s8 %v1267
    %v1269 = vlaneseq
    %v1270 = vshrl.u32 %v1269, 7
    %v1271 = vsub.s32 %v1268, %v1270
    %v1272 = vrot.slane %v1264, %v1271
    %1273 = vrot.lane.b32.xlu0 %v1272, 96
    %v1274 = vpop.permute.xlu0 %1273
    %v1276 = vadd.f32 %v1258, %v1274
    %v1279 = vunpack.c.l.s4 1983009808
    %v1280 = vunpack.c.0.s8 %v1279
    %v1281 = vlaneseq
    %v1282 = vshrl.u32 %v1281, 7
    %v1283 = vsub.s32 %v1280, %v1282
    %v1284 = vrot.slane %v1247, %v1283
    %1285 = vrot.lane.b32.xlu0 %v1284, 96
    %v1286 = vpop.permute.xlu0 %1285
    %v1288 = vmul.f32 %v1256, %v1286
    %v1289 = vmul.f32 %v1261, %v1135
    %v1290 = vadd.f32 %v1288, %v1289
    %v1293 = vunpack.c.l.s4 1983009808
    %v1294 = vunpack.c.0.s8 %v1293
    %v1295 = vlaneseq
    %v1296 = vshrl.u32 %v1295, 7
    %v1297 = vsub.s32 %v1294, %v1296
    %v1298 = vrot.slane %v1276, %v1297
    %1299 = vrot.lane.b32.xlu0 %v1298, 32
    %v1300 = vpop.permute.xlu0 %1299
    %v1301 = vsel %vm390, %v1300, 0
    %1303 = vmatprep.subr.mxu0 0.0
    %1304 = vmatpush1.msra.mxu0 %v164
    %1305 = vmatprep.subr.mxu0 0.0
    %1306 = vmatpush1.msra.mxu0 %v165
    %1307 = vmatprep.subr.mxu0 0.0
    %1308 = vmatpush1.msra.mxu0 %v166
    %1309 = vmatprep.subr.mxu0 0.0
    %1310 = vmatpush1.msra.mxu0 %v167
    %1311 = vmatprep.subr.mxu0 0.0
    %1312 = vmatpush1.msra.mxu0 0.0
    %1313 = vmatprep.subr.mxu0 0.0
    %1314 = vmatpush1.msra.mxu0 0.0
    %1315 = vmatprep.subr.mxu0 0.0
    %1316 = vmatpush1.msra.mxu0 0.0
    %1317 = vmatprep.subr.mxu0 0.0
    %1318 = vmatpush1.msra.mxu0 0.0
    %1319 = vmatprep.subr.mxu0 0.0
    %1320 = vmatpush1.msra.mxu0 0.0
    %1321 = vmatprep.subr.mxu0 0.0
    %1322 = vmatpush1.msra.mxu0 0.0
    %1323 = vmatprep.subr.mxu0 0.0
    %1324 = vmatpush1.msra.mxu0 0.0
    %1325 = vmatprep.subr.mxu0 0.0
    %1326 = vmatpush1.msra.mxu0 0.0
    %1327 = vmatprep.subr.mxu0 0.0
    %1328 = vmatpush1.msra.mxu0 0.0
    %1329 = vmatprep.subr.mxu0 0.0
    %1330 = vmatpush1.msra.mxu0 0.0
    %1331 = vmatprep.subr.mxu0 0.0
    %1332 = vmatpush1.msra.mxu0 0.0
    %1333 = vmatprep.subr.mxu0 0.0
    %1334 = vmatpush1.msra.mxu0 0.0
    %1335 = vmatprep.subr.mxu0 0.0
    %1336 = vmatpush1.msra.mxu0 0.0
    %1337 = vmatprep.subr.mxu0 0.0
    %1338 = vmatpush1.msra.mxu0 0.0
    %1339 = vmatprep.subr.mxu0 0.0
    %1340 = vmatpush1.msra.mxu0 0.0
    %1341 = vmatprep.subr.mxu0 0.0
    %1342 = vmatpush1.msra.mxu0 0.0
    %1343 = vmatprep.subr.mxu0 0.0
    %1344 = vmatpush1.msra.mxu0 0.0
    %1345 = vmatprep.subr.mxu0 0.0
    %1346 = vmatpush1.msra.mxu0 0.0
    %1347 = vmatprep.subr.mxu0 0.0
    %1348 = vmatpush1.msra.mxu0 0.0
    %1349 = vmatprep.subr.mxu0 0.0
    %1350 = vmatpush1.msra.mxu0 0.0
    %1351 = vmatprep.subr.mxu0 0.0
    %1352 = vmatpush1.msra.mxu0 0.0
    %1353 = vmatprep.subr.mxu0 0.0
    %1354 = vmatpush1.msra.mxu0 0.0
    %1355 = vmatprep.subr.mxu0 0.0
    %1356 = vmatpush1.msra.mxu0 0.0
    %1357 = vmatprep.subr.mxu0 0.0
    %1358 = vmatpush1.msra.mxu0 0.0
    %1359 = vmatprep.subr.mxu0 0.0
    %1360 = vmatpush1.msra.mxu0 0.0
    %1361 = vmatprep.subr.mxu0 0.0
    %1362 = vmatpush1.msra.mxu0 0.0
    %1363 = vmatprep.subr.mxu0 0.0
    %1364 = vmatpush1.msra.mxu0 0.0
    %1365 = vmatprep.subr.mxu0 0.0
    %1366 = vmatpush1.msra.mxu0 0.0
    %1367 = vmatprep.mubr.f32.mxu0 0.0
    %1368 = vmatmul.mubr.f32.gmra.mrb[0].mxu0 %v1301
    %v1369 = vpop.f32.mrb[0].mxu0
    %v1370 = vadd.f32 0.0, %v1369
    %v1371 = vpop.f32.mrb[0].mxu0
    %1372 = vdwg.mxu0
    %v1373 = vadd.f32 %v379, %v1370
    %v1374 = vxor.u32 %v1373, 2147483648
    %v1375 = vmul.f32 %v1374, 1.442695
    %v1376 = vpow.pop %v1375
    %v1377 = vadd.f32 %v1376, 1.0
    %v1378 = vrcp.pop %v1377
    %v1379 = vmul.f32 1.0, %v1378
    %v1380 = vtanh.pop %v1373
    %v1383 = vunpack.c.l.s4 1983009808
    %v1384 = vunpack.c.0.s8 %v1383
    %v1385 = vlaneseq
    %v1386 = vshrl.u32 %v1385, 7
    %v1387 = vsub.s32 %v1384, %v1386
    %v1388 = vrot.slane %v1290, %v1387
    %1389 = vrot.lane.b32.xlu0 %v1388, 32
    %v1390 = vpop.permute.xlu0 %1389
    %v1392 = vmul.f32 %v1379, %v1390
    %1394 = vrot.lane.b32.xlu0 %v1380, 64
    %v1395 = vpop.permute.xlu0 %1394
    %v1397 = vmul.f32 %v1379, %v1395
    %1399 = vrot.lane.b32.xlu0 %v1397, 32
    %v1400 = vpop.permute.xlu0 %1399
    %v1402 = vadd.f32 %v1392, %v1400
    %v1403 = vtanh.pop %v1402
    %1405 = vrot.lane.b32.xlu0 %v1403, 64
    %v1406 = vpop.permute.xlu0 %1405
    %v1408 = vmul.f32 %v1379, %v1406
    %1409 = vset.pattern.permute.xlu0 6
    %1410 = vperm.xlu0 %1409, %v147
    %v1411 = vpop.permute.xlu0 %1410
    %v1413 = vmul.f32 %v1408, %v1411
    %1414 = vset.pattern.permute.xlu0 6
    %1415 = vperm.xlu0 %1414, %v495
    %v1416 = vpop.permute.xlu0 %1415
    %v1419 = vmul.f32 %v1416, %v1300
    %v1422 = vunpack.c.l.s4 1983009808
    %v1423 = vunpack.c.0.s8 %v1422
    %v1424 = vlaneseq
    %v1425 = vshrl.u32 %v1424, 7
    %v1426 = vsub.s32 %v1423, %v1425
    %v1427 = vrot.slane %v1419, %v1426
    %1428 = vrot.lane.b32.xlu0 %v1427, 96
    %v1429 = vpop.permute.xlu0 %1428
    %v1431 = vadd.f32 %v1413, %v1429
    %v1434 = vunpack.c.l.s4 1983009808
    %v1435 = vunpack.c.0.s8 %v1434
    %v1436 = vlaneseq
    %v1437 = vshrl.u32 %v1436, 7
    %v1438 = vsub.s32 %v1435, %v1437
    %v1439 = vrot.slane %v1402, %v1438
    %1440 = vrot.lane.b32.xlu0 %v1439, 96
    %v1441 = vpop.permute.xlu0 %1440
    %v1443 = vmul.f32 %v1411, %v1441
    %v1444 = vmul.f32 %v1416, %v1290
    %v1445 = vadd.f32 %v1443, %v1444
    %v1448 = vunpack.c.l.s4 1983009808
    %v1449 = vunpack.c.0.s8 %v1448
    %v1450 = vlaneseq
    %v1451 = vshrl.u32 %v1450, 7
    %v1452 = vsub.s32 %v1449, %v1451
    %v1453 = vrot.slane %v1431, %v1452
    %1454 = vrot.lane.b32.xlu0 %v1453, 32
    %v1455 = vpop.permute.xlu0 %1454
    %v1456 = vsel %vm390, %v1455, 0
    %1458 = vmatprep.subr.mxu0 0.0
    %1459 = vmatpush1.msra.mxu0 %v164
    %1460 = vmatprep.subr.mxu0 0.0
    %1461 = vmatpush1.msra.mxu0 %v165
    %1462 = vmatprep.subr.mxu0 0.0
    %1463 = vmatpush1.msra.mxu0 %v166
    %1464 = vmatprep.subr.mxu0 0.0
    %1465 = vmatpush1.msra.mxu0 %v167
    %1466 = vmatprep.subr.mxu0 0.0
    %1467 = vmatpush1.msra.mxu0 0.0
    %1468 = vmatprep.subr.mxu0 0.0
    %1469 = vmatpush1.msra.mxu0 0.0
    %1470 = vmatprep.subr.mxu0 0.0
    %1471 = vmatpush1.msra.mxu0 0.0
    %1472 = vmatprep.subr.mxu0 0.0
    %1473 = vmatpush1.msra.mxu0 0.0
    %1474 = vmatprep.subr.mxu0 0.0
    %1475 = vmatpush1.msra.mxu0 0.0
    %1476 = vmatprep.subr.mxu0 0.0
    %1477 = vmatpush1.msra.mxu0 0.0
    %1478 = vmatprep.subr.mxu0 0.0
    %1479 = vmatpush1.msra.mxu0 0.0
    %1480 = vmatprep.subr.mxu0 0.0
    %1481 = vmatpush1.msra.mxu0 0.0
    %1482 = vmatprep.subr.mxu0 0.0
    %1483 = vmatpush1.msra.mxu0 0.0
    %1484 = vmatprep.subr.mxu0 0.0
    %1485 = vmatpush1.msra.mxu0 0.0
    %1486 = vmatprep.subr.mxu0 0.0
    %1487 = vmatpush1.msra.mxu0 0.0
    %1488 = vmatprep.subr.mxu0 0.0
    %1489 = vmatpush1.msra.mxu0 0.0
    %1490 = vmatprep.subr.mxu0 0.0
    %1491 = vmatpush1.msra.mxu0 0.0
    %1492 = vmatprep.subr.mxu0 0.0
    %1493 = vmatpush1.msra.mxu0 0.0
    %1494 = vmatprep.subr.mxu0 0.0
    %1495 = vmatpush1.msra.mxu0 0.0
    %1496 = vmatprep.subr.mxu0 0.0
    %1497 = vmatpush1.msra.mxu0 0.0
    %1498 = vmatprep.subr.mxu0 0.0
    %1499 = vmatpush1.msra.mxu0 0.0
    %1500 = vmatprep.subr.mxu0 0.0
    %1501 = vmatpush1.msra.mxu0 0.0
    %1502 = vmatprep.subr.mxu0 0.0
    %1503 = vmatpush1.msra.mxu0 0.0
    %1504 = vmatprep.subr.mxu0 0.0
    %1505 = vmatpush1.msra.mxu0 0.0
    %1506 = vmatprep.subr.mxu0 0.0
    %1507 = vmatpush1.msra.mxu0 0.0
    %1508 = vmatprep.subr.mxu0 0.0
    %1509 = vmatpush1.msra.mxu0 0.0
    %1510 = vmatprep.subr.mxu0 0.0
    %1511 = vmatpush1.msra.mxu0 0.0
    %1512 = vmatprep.subr.mxu0 0.0
    %1513 = vmatpush1.msra.mxu0 0.0
    %1514 = vmatprep.subr.mxu0 0.0
    %1515 = vmatpush1.msra.mxu0 0.0
    %1516 = vmatprep.subr.mxu0 0.0
    %1517 = vmatpush1.msra.mxu0 0.0
    %1518 = vmatprep.subr.mxu0 0.0
    %1519 = vmatpush1.msra.mxu0 0.0
    %1520 = vmatprep.subr.mxu0 0.0
    %1521 = vmatpush1.msra.mxu0 0.0
    %1522 = vmatprep.mubr.f32.mxu0 0.0
    %1523 = vmatmul.mubr.f32.gmra.mrb[0].mxu0 %v1456
    %v1524 = vpop.f32.mrb[0].mxu0
    %v1525 = vadd.f32 0.0, %v1524
    %v1526 = vpop.f32.mrb[0].mxu0
    %1527 = vdwg.mxu0
    %v1528 = vadd.f32 %v381, %v1525
    %v1529 = vxor.u32 %v1528, 2147483648
    %v1530 = vmul.f32 %v1529, 1.442695
    %v1531 = vpow.pop %v1530
    %v1532 = vadd.f32 %v1531, 1.0
    %v1533 = vrcp.pop %v1532
    %v1534 = vmul.f32 1.0, %v1533
    %v1535 = vtanh.pop %v1528
    %v1538 = vunpack.c.l.s4 1983009808
    %v1539 = vunpack.c.0.s8 %v1538
    %v1540 = vlaneseq
    %v1541 = vshrl.u32 %v1540, 7
    %v1542 = vsub.s32 %v1539, %v1541
    %v1543 = vrot.slane %v1445, %v1542
    %1544 = vrot.lane.b32.xlu0 %v1543, 32
    %v1545 = vpop.permute.xlu0 %1544
    %v1547 = vmul.f32 %v1534, %v1545
    %1549 = vrot.lane.b32.xlu0 %v1535, 64
    %v1550 = vpop.permute.xlu0 %1549
    %v1552 = vmul.f32 %v1534, %v1550
    %1554 = vrot.lane.b32.xlu0 %v1552, 32
    %v1555 = vpop.permute.xlu0 %1554
    %v1557 = vadd.f32 %v1547, %v1555
    %v1558 = vtanh.pop %v1557
    %1560 = vrot.lane.b32.xlu0 %v1558, 64
    %v1561 = vpop.permute.xlu0 %1560
    %v1563 = vmul.f32 %v1534, %v1561
    %1564 = vset.pattern.permute.xlu0 7
    %1565 = vperm.xlu0 %1564, %v147
    %v1566 = vpop.permute.xlu0 %1565
    %v1568 = vmul.f32 %v1563, %v1566
    %1569 = vset.pattern.permute.xlu0 7
    %1570 = vperm.xlu0 %1569, %v495
    %v1571 = vpop.permute.xlu0 %1570
    %v1574 = vmul.f32 %v1571, %v1455
    %v1577 = vunpack.c.l.s4 1983009808
    %v1578 = vunpack.c.0.s8 %v1577
    %v1579 = vlaneseq
    %v1580 = vshrl.u32 %v1579, 7
    %v1581 = vsub.s32 %v1578, %v1580
    %v1582 = vrot.slane %v1574, %v1581
    %1583 = vrot.lane.b32.xlu0 %v1582, 96
    %v1584 = vpop.permute.xlu0 %1583
    %v1586 = vadd.f32 %v1568, %v1584
    %v1589 = vunpack.c.l.s4 1983009808
    %v1590 = vunpack.c.0.s8 %v1589
    %v1591 = vlaneseq
    %v1592 = vshrl.u32 %v1591, 7
    %v1593 = vsub.s32 %v1590, %v1592
    %v1594 = vrot.slane %v1557, %v1593
    %1595 = vrot.lane.b32.xlu0 %v1594, 96
    %v1596 = vpop.permute.xlu0 %1595
    %v1598 = vmul.f32 %v1566, %v1596
    %v1599 = vmul.f32 %v1571, %v1445
    %v1600 = vadd.f32 %v1598, %v1599
    %v1603 = vunpack.c.l.s4 1966171168
    %v1604 = vunpack.c.0.s8 %v1603
    %v1605 = vlaneseq
    %v1606 = vshrl.u32 %v1605, 7
    %v1607 = vsub.s32 %v1604, %v1606
    %v1608 = vrot.slane %v494, %v1607
    %v1609 = vcombine.high %v1608, %v1608
    %v1614 = vunpack.c.l.s4 1966171168
    %v1615 = vunpack.c.0.s8 %v1614
    %v1616 = vlaneseq
    %v1617 = vshrl.u32 %v1616, 7
    %v1618 = vsub.s32 %v1615, %v1617
    %v1619 = vrot.slane %v638, %v1618
    %v1620 = vcombine.high %v1619, %v1619
    %v1623 = vunpack.c.l.s4 1966171168
    %v1624 = vunpack.c.0.s8 %v1623
    %v1625 = vlaneseq
    %v1626 = vshrl.u32 %v1625, 7
    %v1627 = vsub.s32 %v1624, %v1626
    %v1628 = vrot.slane %v793, %v1627
    %v1629 = vcombine.high %v1628, %v1628
    %v1632 = vunpack.c.l.s4 1966171168
    %v1633 = vunpack.c.0.s8 %v1632
    %v1634 = vlaneseq
    %v1635 = vshrl.u32 %v1634, 7
    %v1636 = vsub.s32 %v1633, %v1635
    %v1637 = vrot.slane %v948, %v1636
    %v1638 = vcombine.high %v1637, %v1637
    %v1641 = vunpack.c.l.s4 1966171168
    %v1642 = vunpack.c.0.s8 %v1641
    %v1643 = vlaneseq
    %v1644 = vshrl.u32 %v1643, 7
    %v1645 = vsub.s32 %v1642, %v1644
    %v1646 = vrot.slane %v1103, %v1645
    %v1647 = vcombine.high %v1646, %v1646
    %v1650 = vunpack.c.l.s4 1966171168
    %v1651 = vunpack.c.0.s8 %v1650
    %v1652 = vlaneseq
    %v1653 = vshrl.u32 %v1652, 7
    %v1654 = vsub.s32 %v1651, %v1653
    %v1655 = vrot.slane %v1258, %v1654
    %v1656 = vcombine.high %v1655, %v1655
    %v1659 = vunpack.c.l.s4 1966171168
    %v1660 = vunpack.c.0.s8 %v1659
    %v1661 = vlaneseq
    %v1662 = vshrl.u32 %v1661, 7
    %v1663 = vsub.s32 %v1660, %v1662
    %v1664 = vrot.slane %v1413, %v1663
    %v1665 = vcombine.high %v1664, %v1664
    %v1668 = vunpack.c.l.s4 1966171168
    %v1669 = vunpack.c.0.s8 %v1668
    %v1670 = vlaneseq
    %v1671 = vshrl.u32 %v1670, 7
    %v1672 = vsub.s32 %v1669, %v1671
    %v1673 = vrot.slane %v1568, %v1672
    %v1674 = vcombine.high %v1673, %v1673
    %v1675 = vlaneseq
    %v1676 = vshrl.u32 %v1675, 7
    %v1677 = vsub.s32 0, %v1676
    %v1678 = vrot.slane %v1619, %v1677
    %v1679 = vlaneseq
    %v1680 = vshrl.u32 %v1679, 7
    %v1681 = vsub.s32 0, %v1680
    %v1682 = vrot.slane %v1620, %v1681
    %v1685 = vlaneseq
    %v1686 = vshrl.u32 %v1685, 7
    %v1687 = vsub.s32 0, %v1686
    %v1688 = vrot.slane %v1628, %v1687
    %v1689 = vlaneseq
    %v1690 = vshrl.u32 %v1689, 7
    %v1691 = vsub.s32 0, %v1690
    %v1692 = vrot.slane %v1629, %v1691
    %v1695 = vlaneseq
    %v1696 = vshrl.u32 %v1695, 7
    %v1697 = vsub.s32 0, %v1696
    %v1698 = vrot.slane %v1637, %v1697
    %v1699 = vlaneseq
    %v1700 = vshrl.u32 %v1699, 7
    %v1701 = vsub.s32 0, %v1700
    %v1702 = vrot.slane %v1638, %v1701
    %v1705 = vlaneseq
    %v1706 = vshrl.u32 %v1705, 7
    %v1707 = vsub.s32 0, %v1706
    %v1708 = vrot.slane %v1646, %v1707
    %v1709 = vlaneseq
    %v1710 = vshrl.u32 %v1709, 7
    %v1711 = vsub.s32 0, %v1710
    %v1712 = vrot.slane %v1647, %v1711
    %v1715 = vlaneseq
    %v1716 = vshrl.u32 %v1715, 7
    %v1717 = vsub.s32 0, %v1716
    %v1718 = vrot.slane %v1655, %v1717
    %v1719 = vlaneseq
    %v1720 = vshrl.u32 %v1719, 7
    %v1721 = vsub.s32 0, %v1720
    %v1722 = vrot.slane %v1656, %v1721
    %v1725 = vlaneseq
    %v1726 = vshrl.u32 %v1725, 7
    %v1727 = vsub.s32 0, %v1726
    %v1728 = vrot.slane %v1664, %v1727
    %v1729 = vlaneseq
    %v1730 = vshrl.u32 %v1729, 7
    %v1731 = vsub.s32 0, %v1730
    %v1732 = vrot.slane %v1665, %v1731
    %v1735 = vlaneseq
    %v1736 = vshrl.u32 %v1735, 7
    %v1737 = vsub.s32 0, %v1736
    %v1738 = vrot.slane %v1673, %v1737
    %v1739 = vlaneseq
    %v1740 = vshrl.u32 %v1739, 7
    %v1741 = vsub.s32 0, %v1740
    %v1742 = vrot.slane %v1674, %v1741
    %vm1745 = vcmask 1040384
    %v1746 = vsel %vm1745, %v1608, %v1678
    %v1747 = vsel %vm1745, %v1609, %v1682
    %vm1748 = vcmask 1041408
    %v1749 = vsel %vm1748, %v1746, %v1688
    %v1750 = vsel %vm1748, %v1747, %v1692
    %vm1751 = vcmask 1042432
    %v1752 = vsel %vm1751, %v1749, %v1698
    %v1753 = vsel %vm1751, %v1750, %v1702
    %vm1754 = vcmask 1043456
    %v1755 = vsel %vm1754, %v1752, %v1708
    %v1756 = vsel %vm1754, %v1753, %v1712
    %vm1757 = vcmask 1044480
    %v1758 = vsel %vm1757, %v1755, %v1718
    %v1759 = vsel %vm1757, %v1756, %v1722
    %vm1760 = vcmask 1045504
    %v1761 = vsel %vm1760, %v1758, %v1728
    %v1762 = vsel %vm1760, %v1759, %v1732
    %vm1763 = vcmask 1046528
    %v1764 = vsel %vm1763, %v1761, %v1738
    %v1765 = vsel %vm1763, %v1762, %v1742
    %v1766 = vld [vmem:[#allocation13] sm:$0xff]
    %v1767 = vld [vmem:[#allocation13 + $0x8] sm:$0xff]
    %v1768 = vld [vmem:[#allocation13 + $0x10] sm:$0xff]
    %v1769 = vld [vmem:[#allocation13 + $0x18] sm:$0xff]
    %v1770 = vld [vmem:[%s10] sm:$0x1]
    %v1772 = vlaneseq
    %v1773 = vshrl.u32 %v1772, 7
    %v1774 = vsub.s32 0, %v1773
    %v1775 = vrot.slane %v1770, %v1774
    %1779 = vrot.lane.b32.xlu0 %v1764, 32
    %v1780 = vpop.permute.xlu0 %1779
    %1781 = vrot.lane.b32.xlu0 %v1765, 32
    %v1782 = vpop.permute.xlu0 %1781
    %v1783 = vsel %vm390, %v1780, 0
    %v1785 = vsel %vm390, %v1782, 0
    %1787 = vmatprep.subr.mxu0 0.0
    %1788 = vmatpush1.msra.mxu0 %v1766
    %1789 = vmatprep.subr.mxu0 0.0
    %1790 = vmatpush1.msra.mxu0 %v1767
    %1791 = vmatprep.subr.mxu0 0.0
    %1792 = vmatpush1.msra.mxu0 %v1768
    %1793 = vmatprep.subr.mxu0 0.0
    %1794 = vmatpush1.msra.mxu0 %v1769
    %1795 = vmatprep.subr.mxu0 0.0
    %1796 = vmatpush1.msra.mxu0 0.0
    %1797 = vmatprep.subr.mxu0 0.0
    %1798 = vmatpush1.msra.mxu0 0.0
    %1799 = vmatprep.subr.mxu0 0.0
    %1800 = vmatpush1.msra.mxu0 0.0
    %1801 = vmatprep.subr.mxu0 0.0
    %1802 = vmatpush1.msra.mxu0 0.0
    %1803 = vmatprep.subr.mxu0 0.0
    %1804 = vmatpush1.msra.mxu0 0.0
    %1805 = vmatprep.subr.mxu0 0.0
    %1806 = vmatpush1.msra.mxu0 0.0
    %1807 = vmatprep.subr.mxu0 0.0
    %1808 = vmatpush1.msra.mxu0 0.0
    %1809 = vmatprep.subr.mxu0 0.0
    %1810 = vmatpush1.msra.mxu0 0.0
    %1811 = vmatprep.subr.mxu0 0.0
    %1812 = vmatpush1.msra.mxu0 0.0
    %1813 = vmatprep.subr.mxu0 0.0
    %1814 = vmatpush1.msra.mxu0 0.0
    %1815 = vmatprep.subr.mxu0 0.0
    %1816 = vmatpush1.msra.mxu0 0.0
    %1817 = vmatprep.subr.mxu0 0.0
    %1818 = vmatpush1.msra.mxu0 0.0
    %1819 = vmatprep.subr.mxu0 0.0
    %1820 = vmatpush1.msra.mxu0 0.0
    %1821 = vmatprep.subr.mxu0 0.0
    %1822 = vmatpush1.msra.mxu0 0.0
    %1823 = vmatprep.subr.mxu0 0.0
    %1824 = vmatpush1.msra.mxu0 0.0
    %1825 = vmatprep.subr.mxu0 0.0
    %1826 = vmatpush1.msra.mxu0 0.0
    %1827 = vmatprep.subr.mxu0 0.0
    %1828 = vmatpush1.msra.mxu0 0.0
    %1829 = vmatprep.subr.mxu0 0.0
    %1830 = vmatpush1.msra.mxu0 0.0
    %1831 = vmatprep.subr.mxu0 0.0
    %1832 = vmatpush1.msra.mxu0 0.0
    %1833 = vmatprep.subr.mxu0 0.0
    %1834 = vmatpush1.msra.mxu0 0.0
    %1835 = vmatprep.subr.mxu0 0.0
    %1836 = vmatpush1.msra.mxu0 0.0
    %1837 = vmatprep.subr.mxu0 0.0
    %1838 = vmatpush1.msra.mxu0 0.0
    %1839 = vmatprep.subr.mxu0 0.0
    %1840 = vmatpush1.msra.mxu0 0.0
    %1841 = vmatprep.subr.mxu0 0.0
    %1842 = vmatpush1.msra.mxu0 0.0
    %1843 = vmatprep.subr.mxu0 0.0
    %1844 = vmatpush1.msra.mxu0 0.0
    %1845 = vmatprep.subr.mxu0 0.0
    %1846 = vmatpush1.msra.mxu0 0.0
    %1847 = vmatprep.subr.mxu0 0.0
    %1848 = vmatpush1.msra.mxu0 0.0
    %1849 = vmatprep.subr.mxu0 0.0
    %1850 = vmatpush1.msra.mxu0 0.0
    %1851 = vmatprep.mubr.f32.mxu0 0.0
    %1852 = vmatmul.mubr.f32.gmra.mrb[0].mxu0 %v1783
    %v1853 = vpop.f32.mrb[0].mxu0
    %v1854 = vadd.f32 %v1775, %v1853
    %v1855 = vpop.f32.mrb[0].mxu0
    %1856 = vmatprep.mubr.f32.mxu0 0.0
    %1857 = vmatmul.mubr.f32.gmra.mrb[0].mxu0 %v1785
    %v1858 = vpop.f32.mrb[0].mxu0
    %v1859 = vadd.f32 %v1775, %v1858
    %v1860 = vpop.f32.mrb[0].mxu0
    %1861 = vdwg.mxu0
    %v1862 = vsub.f32 %v147, 1.0
    %v1863 = vmul.f32 %v1862, 1e+09
    %1864 = vst [vmem:[#allocation15] sm:$0x3] 0.0
    %v1865 = vlaneseq
    %v1866 = vand.u32 %v1865, 127
    %v1867 = vld [vmem:[#allocation7] sm:$0x3]
    %1868 = vmatprep.subr.mxu0 0.0
    %1869 = vmatpush1.msra.mxu0 %v148
    %1870 = vmatprep.subr.mxu0 0.0
    %1871 = vmatpush1.msra.mxu0 %v149
    %1872 = vmatprep.subr.mxu0 0.0
    %1873 = vmatpush1.msra.mxu0 %v150
    %1874 = vmatprep.subr.mxu0 0.0
    %1875 = vmatpush1.msra.mxu0 %v151
    %1876 = vmatprep.subr.mxu0 0.0
    %1877 = vmatpush1.msra.mxu0 %v152
    %1878 = vmatprep.subr.mxu0 0.0
    %1879 = vmatpush1.msra.mxu0 %v153
    %1880 = vmatprep.subr.mxu0 0.0
    %1881 = vmatpush1.msra.mxu0 %v154
    %1882 = vmatprep.subr.mxu0 0.0
    %1883 = vmatpush1.msra.mxu0 %v155
    %1884 = vmatprep.subr.mxu0 0.0
    %1885 = vmatpush1.msra.mxu0 %v156
    %1886 = vmatprep.subr.mxu0 0.0
    %1887 = vmatpush1.msra.mxu0 %v157
    %1888 = vmatprep.subr.mxu0 0.0
    %1889 = vmatpush1.msra.mxu0 %v158
    %1890 = vmatprep.subr.mxu0 0.0
    %1891 = vmatpush1.msra.mxu0 %v159
    %1892 = vmatprep.subr.mxu0 0.0
    %1893 = vmatpush1.msra.mxu0 %v160
    %1894 = vmatprep.subr.mxu0 0.0
    %1895 = vmatpush1.msra.mxu0 %v161
    %1896 = vmatprep.subr.mxu0 0.0
    %1897 = vmatpush1.msra.mxu0 %v162
    %1898 = vmatprep.subr.mxu0 0.0
    %1899 = vmatpush1.msra.mxu0 %v163
    %1900 = vmatprep.subr.mxu0 0.0
    %1901 = vmatpush1.msra.mxu0 0.0
    %1902 = vmatprep.subr.mxu0 0.0
    %1903 = vmatpush1.msra.mxu0 0.0
    %1904 = vmatprep.subr.mxu0 0.0
    %1905 = vmatpush1.msra.mxu0 0.0
    %1906 = vmatprep.subr.mxu0 0.0
    %1907 = vmatpush1.msra.mxu0 0.0
    %1908 = vmatprep.subr.mxu0 0.0
    %1909 = vmatpush1.msra.mxu0 0.0
    %1910 = vmatprep.subr.mxu0 0.0
    %1911 = vmatpush1.msra.mxu0 0.0
    %1912 = vmatprep.subr.mxu0 0.0
    %1913 = vmatpush1.msra.mxu0 0.0
    %1914 = vmatprep.subr.mxu0 0.0
    %1915 = vmatpush1.msra.mxu0 0.0
    %1916 = vmatprep.subr.mxu0 0.0
    %1917 = vmatpush1.msra.mxu0 0.0
    %1918 = vmatprep.subr.mxu0 0.0
    %1919 = vmatpush1.msra.mxu0 0.0
    %1920 = vmatprep.subr.mxu0 0.0
    %1921 = vmatpush1.msra.mxu0 0.0
    %1922 = vmatprep.subr.mxu0 0.0
    %1923 = vmatpush1.msra.mxu0 0.0
    %1924 = vmatprep.subr.mxu0 0.0
    %1925 = vmatpush1.msra.mxu0 0.0
    %1926 = vmatprep.subr.mxu0 0.0
    %1927 = vmatpush1.msra.mxu0 0.0
    %1928 = vmatprep.subr.mxu0 0.0
    %1929 = vmatpush1.msra.mxu0 0.0
    %1930 = vmatprep.subr.mxu0 0.0
    %1931 = vmatpush1.msra.mxu0 0.0
    %1932 = vmatprep.mubr.f32.mxu0 0.0
    %1933 = vmatmul.mubr.f32.gmra.mrb[0].mxu0 %v1867
    %v1934 = vpop.f32.mrb[0].mxu0
    %v1935 = vadd.f32 0.0, %v1934
    %v1936 = vpop.f32.mrb[0].mxu0
    %1937 = vdwg.mxu0
    %v1940 = vunpack.c.l.s4 1983009808
    %v1941 = vunpack.c.0.s8 %v1940
    %v1942 = vlaneseq
    %v1943 = vshrl.u32 %v1942, 7
    %v1944 = vsub.s32 %v1941, %v1943
    %v1945 = vrot.slane %v1586, %v1944
    %1946 = vrot.lane.b32.xlu0 %v1945, 32
    %v1947 = vpop.permute.xlu0 %1946
    %v1948 = vsel %vm390, %v1947, 0
    %1950 = vmatprep.subr.mxu0 0.0
    %1951 = vmatpush1.msra.mxu0 %v168
    %1952 = vmatprep.subr.mxu0 0.0
    %1953 = vmatpush1.msra.mxu0 %v169
    %1954 = vmatprep.subr.mxu0 0.0
    %1955 = vmatpush1.msra.mxu0 %v170
    %1956 = vmatprep.subr.mxu0 0.0
    %1957 = vmatpush1.msra.mxu0 %v171
    %1958 = vmatprep.subr.mxu0 0.0
    %1959 = vmatpush1.msra.mxu0 0.0
    %1960 = vmatprep.subr.mxu0 0.0
    %1961 = vmatpush1.msra.mxu0 0.0
    %1962 = vmatprep.subr.mxu0 0.0
    %1963 = vmatpush1.msra.mxu0 0.0
    %1964 = vmatprep.subr.mxu0 0.0
    %1965 = vmatpush1.msra.mxu0 0.0
    %1966 = vmatprep.subr.mxu0 0.0
    %1967 = vmatpush1.msra.mxu0 0.0
    %1968 = vmatprep.subr.mxu0 0.0
    %1969 = vmatpush1.msra.mxu0 0.0
    %1970 = vmatprep.subr.mxu0 0.0
    %1971 = vmatpush1.msra.mxu0 0.0
    %1972 = vmatprep.subr.mxu0 0.0
    %1973 = vmatpush1.msra.mxu0 0.0
    %1974 = vmatprep.subr.mxu0 0.0
    %1975 = vmatpush1.msra.mxu0 0.0
    %1976 = vmatprep.subr.mxu0 0.0
    %1977 = vmatpush1.msra.mxu0 0.0
    %1978 = vmatprep.subr.mxu0 0.0
    %1979 = vmatpush1.msra.mxu0 0.0
    %1980 = vmatprep.subr.mxu0 0.0
    %1981 = vmatpush1.msra.mxu0 0.0
    %1982 = vmatprep.subr.mxu0 0.0
    %1983 = vmatpush1.msra.mxu0 0.0
    %1984 = vmatprep.subr.mxu0 0.0
    %1985 = vmatpush1.msra.mxu0 0.0
    %1986 = vmatprep.subr.mxu0 0.0
    %1987 = vmatpush1.msra.mxu0 0.0
    %1988 = vmatprep.subr.mxu0 0.0
    %1989 = vmatpush1.msra.mxu0 0.0
    %1990 = vmatprep.subr.mxu0 0.0
    %1991 = vmatpush1.msra.mxu0 0.0
    %1992 = vmatprep.subr.mxu0 0.0
    %1993 = vmatpush1.msra.mxu0 0.0
    %1994 = vmatprep.subr.mxu0 0.0
    %1995 = vmatpush1.msra.mxu0 0.0
    %1996 = vmatprep.subr.mxu0 0.0
    %1997 = vmatpush1.msra.mxu0 0.0
    %1998 = vmatprep.subr.mxu0 0.0
    %1999 = vmatpush1.msra.mxu0 0.0
    %2000 = vmatprep.subr.mxu0 0.0
    %2001 = vmatpush1.msra.mxu0 0.0
    %2002 = vmatprep.subr.mxu0 0.0
    %2003 = vmatpush1.msra.mxu0 0.0
    %2004 = vmatprep.subr.mxu0 0.0
    %2005 = vmatpush1.msra.mxu0 0.0
    %2006 = vmatprep.subr.mxu0 0.0
    %2007 = vmatpush1.msra.mxu0 0.0
    %2008 = vmatprep.subr.mxu0 0.0
    %2009 = vmatpush1.msra.mxu0 0.0
    %2010 = vmatprep.subr.mxu0 0.0
    %2011 = vmatpush1.msra.mxu0 0.0
    %2012 = vmatprep.subr.mxu0 0.0
    %2013 = vmatpush1.msra.mxu0 0.0
    %2014 = vmatprep.mubr.f32.mxu0 0.0
    %2015 = vmatmul.mubr.f32.gmra.mrb[0].mxu0 %v1948
    %v2016 = vpop.f32.mrb[0].mxu0
    %v2017 = vadd.f32 0.0, %v2016
    %v2018 = vpop.f32.mrb[0].mxu0
    %2019 = vdwg.mxu0
    %v2022 = vunpack.c.l.s4 1966171168
    %v2023 = vunpack.c.0.s8 %v2022
    %v2024 = vlaneseq
    %v2025 = vshrl.u32 %v2024, 7
    %v2026 = vsub.s32 %v2023, %v2025
    %v2027 = vrot.slane %v2017, %v2026
    %v2028 = vcombine.high %v2027, %v2027
    %v2030 = vunpack.c.l.s4 1966171168
    %v2031 = vunpack.c.0.s8 %v2030
    %v2032 = vlaneseq
    %v2033 = vshrl.u32 %v2032, 7
    %v2034 = vsub.s32 %v2031, %v2033
    %v2035 = vrot.slane %v2027, %v2034
    %v2037 = vunpack.c.l.s4 1966171168
    %v2038 = vunpack.c.0.s8 %v2037
    %v2039 = vlaneseq
    %v2040 = vshrl.u32 %v2039, 7
    %v2041 = vsub.s32 %v2038, %v2040
    %v2042 = vrot.slane %v2028, %v2041
    %v2043 = vlaneseq
    %v2044 = vshrl.u32 %v2043, 7
    %v2045 = vsub.s32 0, %v2044
    %v2046 = vrot.slane %v2035, %v2045
    %v2047 = vlaneseq
    %v2048 = vshrl.u32 %v2047, 7
    %v2049 = vsub.s32 0, %v2048
    %v2050 = vrot.slane %v2042, %v2049
    %v2053 = vadd.f32 %v2046, %v1854
    %v2054 = vadd.f32 %v2050, %v1859
    %v2055 = vtanh.pop %v2053
    %v2056 = vtanh.pop %v2054
    %v2058 = vlaneseq
    %v2059 = vshrl.u32 %v2058, 7
    %v2060 = vsub.s32 0, %v2059
    %v2061 = vrot.slane %v172, %v2060
    %v2063 = vmul.f32 %v2055, %v2061
    %v2064 = vmul.f32 %v2056, %v2061
    %v2065 = vsel %vm390, %v2063, 0.0
    %2066 = vadd.xlane.f32.xlu0 %v2065
    %v2067 = vpop.xlane.xlu0 %2066
    %v2068 = vsel %vm390, %v2064, 0.0
    %2069 = vadd.xlane.f32.xlu0 %v2068
    %v2070 = vpop.xlane.xlu0 %2069
    %v2072 = vlaneseq
    %v2073 = vshrl.u32 %v2072, 7
    %v2074 = vsub.s32 0, %v2073
    %v2075 = vrot.slane %v1863, %v2074
    %2077 = vbcast.lane.b32.xlu0 %v2075, 256
    %v2078 = vpop.permute.xlu0 %2077
    %v2079 = vlaneseq
    %v2080 = vshrl.u32 %v2079, 7
    %v2081 = vsub.s32 1, %v2080
    %v2082 = vrot.slane %v1863, %v2081
    %2084 = vbcast.lane.b32.xlu0 %v2082, 256
    %v2085 = vpop.permute.xlu0 %2084
    %v2088 = vadd.f32 %v2067, %v2078
    %v2089 = vadd.f32 %v2070, %v2085
    %2092 = vset.pattern.permute.xlu0 0
    %2093 = vperm.xlu0 %2092, %v2088
    %v2094 = vpop.permute.xlu0 %2093
    %2095 = vset.pattern.permute.xlu0 0
    %2096 = vperm.xlu0 %2095, %v2089
    %v2097 = vpop.permute.xlu0 %2096
    %v2098 = vlaneseq
    %v2099 = vshrl.u32 %v2098, 7
    %v2100 = vsub.s32 %v1866, %v2099
    %v2101 = vrot.slane %v2094, %v2100
    %v2102 = vlaneseq
    %v2103 = vshrl.u32 %v2102, 7
    %v2104 = vsub.s32 %v1866, %v2103
    %v2105 = vrot.slane %v2097, %v2104
    %vm2106 = vcmask 1041409
    %v2107 = vsel %vm2106, %v2105, %v2101
    %vm2109 = vcmask 58368
    %v2110 = vsel %vm2109, %v2107, -inf
    %2111 = vmax.xlane.f32.xlu0 %v2110
    %v2112 = vpop.xlane.xlu0 %2111
    %v2114 = vlaneseq
    %v2115 = vshrl.u32 %v2114, 7
    %v2116 = vsub.s32 0, %v2115
    %v2117 = vrot.slane %v2112, %v2116
    %v2118 = vlaneseq
    %v2119 = vshrl.u32 %v2118, 7
    %v2120 = vsub.s32 1, %v2119
    %v2121 = vrot.slane %v2112, %v2120
    %v2124 = vsub.f32 %v2088, %v2117
    %v2125 = vsub.f32 %v2089, %v2121
    %v2126 = vmul.f32 %v2124, 1.442695
    %v2127 = vpow.pop %v2126
    %v2128 = vmul.f32 %v2125, 1.442695
    %v2129 = vpow.pop %v2128
    %2132 = vset.pattern.permute.xlu0 0
    %2133 = vperm.xlu0 %2132, %v2127
    %v2134 = vpop.permute.xlu0 %2133
    %2135 = vset.pattern.permute.xlu0 0
    %2136 = vperm.xlu0 %2135, %v2129
    %v2137 = vpop.permute.xlu0 %2136
    %v2138 = vlaneseq
    %v2139 = vshrl.u32 %v2138, 7
    %v2140 = vsub.s32 %v1866, %v2139
    %v2141 = vrot.slane %v2134, %v2140
    %v2142 = vlaneseq
    %v2143 = vshrl.u32 %v2142, 7
    %v2144 = vsub.s32 %v1866, %v2143
    %v2145 = vrot.slane %v2137, %v2144
    %v2146 = vsel %vm2106, %v2145, %v2141
    %v2148 = vsel %vm2109, %v2146, 0.0
    %2149 = vadd.xlane.f32.xlu0 %v2148
    %v2150 = vpop.xlane.xlu0 %2149
    %v2151 = vrcp.pop %v2150
    %v2153 = vlaneseq
    %v2154 = vshrl.u32 %v2153, 7
    %v2155 = vsub.s32 0, %v2154
    %v2156 = vrot.slane %v2151, %v2155
    %v2157 = vlaneseq
    %v2158 = vshrl.u32 %v2157, 7
    %v2159 = vsub.s32 1, %v2158
    %v2160 = vrot.slane %v2151, %v2159
    %v2163 = vmul.f32 %v2127, %v2156
    %v2164 = vmul.f32 %v2129, %v2160
    %2166 = vset.pattern.permute.xlu0 0
    %2167 = vperm.xlu0 %2166, %v2163
    %v2168 = vpop.permute.xlu0 %2167
    %2171 = vset.pattern.permute.xlu0 0
    %2172 = vperm.xlu0 %2171, %v2164
    %v2173 = vpop.permute.xlu0 %2172
    %v2175 = vmul.f32 %v2168, %v1764
    %v2176 = vmul.f32 %v2173, %v1765
    %vm2177 = vcmask 1048320
    %v2178 = vsel %vm2177, %v2175, 0.0
    %v2179 = vrot.slane %v2178, 4
    %v2180 = vadd.f32 %v2178, %v2179
    %v2181 = vrot.slane %v2180, 2
    %v2182 = vadd.f32 %v2180, %v2181
    %v2183 = vrot.slane %v2182, 1
    %v2184 = vadd.f32 %v2182, %v2183
    %v2185 = vsel %vm2177, %v2176, 0.0
    %v2186 = vrot.slane %v2185, 4
    %v2187 = vadd.f32 %v2185, %v2186
    %v2188 = vrot.slane %v2187, 2
    %v2189 = vadd.f32 %v2187, %v2188
    %v2190 = vrot.slane %v2189, 1
    %v2191 = vadd.f32 %v2189, %v2190
    %v2194 = vsel %vm2106, %v2191, %v2184
    %2195 = vrot.lane.b32.xlu0 %v2194, 48
    %v2196 = vpop.permute.xlu0 %2195
    %2198 = vrot.lane.b32.xlu0 %v1945, 80
    %v2199 = vpop.permute.xlu0 %2198
    %v2201 = vsel %vm266, %v1935, %v2196
    %vm2202 = vcmask 392192
    %v2203 = vsel %vm2202, %v2201, %v2199
    %vm2204 = vcmask 654336
    %v2206 = vsel %vm2204, %v2203, 0
    %2208 = vmatprep.subr.mxu0 0.0
    %2209 = vmatpush1.msra.mxu0 %v173
    %2210 = vmatprep.subr.mxu0 0.0
    %2211 = vmatpush1.msra.mxu0 %v174
    %2212 = vmatprep.subr.mxu0 0.0
    %2213 = vmatpush1.msra.mxu0 %v175
    %2214 = vmatprep.subr.mxu0 0.0
    %2215 = vmatpush1.msra.mxu0 %v176
    %2216 = vmatprep.subr.mxu0 0.0
    %2217 = vmatpush1.msra.mxu0 %v177
    %2218 = vmatprep.subr.mxu0 0.0
    %2219 = vmatpush1.msra.mxu0 %v178
    %2220 = vmatprep.subr.mxu0 0.0
    %2221 = vmatpush1.msra.mxu0 %v179
    %2222 = vmatprep.subr.mxu0 0.0
    %2223 = vmatpush1.msra.mxu0 %v180
    %2224 = vmatprep.subr.mxu0 0.0
    %2225 = vmatpush1.msra.mxu0 %v181
    %2226 = vmatprep.subr.mxu0 0.0
    %2227 = vmatpush1.msra.mxu0 %v182
    %2228 = vmatprep.subr.mxu0 0.0
    %2229 = vmatpush1.msra.mxu0 0.0
    %2230 = vmatprep.subr.mxu0 0.0
    %2231 = vmatpush1.msra.mxu0 0.0
    %2232 = vmatprep.subr.mxu0 0.0
    %2233 = vmatpush1.msra.mxu0 0.0
    %2234 = vmatprep.subr.mxu0 0.0
    %2235 = vmatpush1.msra.mxu0 0.0
    %2236 = vmatprep.subr.mxu0 0.0
    %2237 = vmatpush1.msra.mxu0 0.0
    %2238 = vmatprep.subr.mxu0 0.0
    %2239 = vmatpush1.msra.mxu0 0.0
    %2240 = vmatprep.subr.mxu0 0.0
    %2241 = vmatpush1.msra.mxu0 0.0
    %2242 = vmatprep.subr.mxu0 0.0
    %2243 = vmatpush1.msra.mxu0 0.0
    %2244 = vmatprep.subr.mxu0 0.0
    %2245 = vmatpush1.msra.mxu0 0.0
    %2246 = vmatprep.subr.mxu0 0.0
    %2247 = vmatpush1.msra.mxu0 0.0
    %2248 = vmatprep.subr.mxu0 0.0
    %2249 = vmatpush1.msra.mxu0 0.0
    %2250 = vmatprep.subr.mxu0 0.0
    %2251 = vmatpush1.msra.mxu0 0.0
    %2252 = vmatprep.subr.mxu0 0.0
    %2253 = vmatpush1.msra.mxu0 0.0
    %2254 = vmatprep.subr.mxu0 0.0
    %2255 = vmatpush1.msra.mxu0 0.0
    %2256 = vmatprep.subr.mxu0 0.0
    %2257 = vmatpush1.msra.mxu0 0.0
    %2258 = vmatprep.subr.mxu0 0.0
    %2259 = vmatpush1.msra.mxu0 0.0
    %2260 = vmatprep.subr.mxu0 0.0
    %2261 = vmatpush1.msra.mxu0 0.0
    %2262 = vmatprep.subr.mxu0 0.0
    %2263 = vmatpush1.msra.mxu0 0.0
    %2264 = vmatprep.subr.mxu0 0.0
    %2265 = vmatpush1.msra.mxu0 0.0
    %2266 = vmatprep.subr.mxu0 0.0
    %2267 = vmatpush1.msra.mxu0 0.0
    %2268 = vmatprep.subr.mxu0 0.0
    %2269 = vmatpush1.msra.mxu0 0.0
    %2270 = vmatprep.subr.mxu0 0.0
    %2271 = vmatpush1.msra.mxu0 0.0
    %2272 = vmatprep.mubr.f32.mxu0 0.0
    %2273 = vmatmul.mubr.f32.gmra.mrb[0].mxu0 %v2206
    %v2274 = vpop.f32.mrb[0].mxu0
    %v2275 = vadd.f32 %v198, %v2274
    %v2276 = vpop.f32.mrb[0].mxu0
    %2277 = vdwg.mxu0
    %v2278 = vxor.u32 %v2275, 2147483648
    %v2279 = vmul.f32 %v2278, 1.442695
    %v2280 = vpow.pop %v2279
    %v2281 = vadd.f32 %v2280, 1.0
    %v2282 = vrcp.pop %v2281
    %v2283 = vmul.f32 1.0, %v2282
    %v2284 = vtanh.pop %v2275
    %2286 = vrot.lane.b32.xlu0 %v1600, 32
    %v2287 = vpop.permute.xlu0 %2286
    %v2289 = vmul.f32 %v2283, %v2287
    %2291 = vrot.lane.b32.xlu0 %v2284, 64
    %v2292 = vpop.permute.xlu0 %2291
    %v2294 = vmul.f32 %v2283, %v2292
    %2296 = vrot.lane.b32.xlu0 %v2294, 32
    %v2297 = vpop.permute.xlu0 %2296
    %v2299 = vadd.f32 %v2289, %v2297
    %v2300 = vtanh.pop %v2299
    %2302 = vrot.lane.b32.xlu0 %v2300, 64
    %v2303 = vpop.permute.xlu0 %2302
    %v2305 = vmul.f32 %v2283, %v2303
    %2307 = vrot.lane.b32.xlu0 %v2305, 32
    %v2308 = vpop.permute.xlu0 %2307
    %2310 = vrot.lane.b32.xlu0 %v2194, 64
    %v2311 = vpop.permute.xlu0 %2310
    %2314 = vrot.lane.b32.xlu0 %v1935, 64
    %v2315 = vpop.permute.xlu0 %2314
    %v2317 = vsel %vm390, %v2308, %v2311
    %vm2318 = vcmask 523264
    %v2319 = vsel %vm2318, %v2317, %v2315
    %v2321 = vsel %vm2204, %v2319, 0
    %2323 = vmatprep.subr.mxu0 0.0
    %2324 = vmatpush1.msra.mxu0 %v183
    %2325 = vmatprep.subr.mxu0 0.0
    %2326 = vmatpush1.msra.mxu0 %v184
    %2327 = vmatprep.subr.mxu0 0.0
    %2328 = vmatpush1.msra.mxu0 %v185
    %2329 = vmatprep.subr.mxu0 0.0
    %2330 = vmatpush1.msra.mxu0 %v186
    %2331 = vmatprep.subr.mxu0 0.0
    %2332 = vmatpush1.msra.mxu0 %v187
    %2333 = vmatprep.subr.mxu0 0.0
    %2334 = vmatpush1.msra.mxu0 %v188
    %2335 = vmatprep.subr.mxu0 0.0
    %2336 = vmatpush1.msra.mxu0 %v189
    %2337 = vmatprep.subr.mxu0 0.0
    %2338 = vmatpush1.msra.mxu0 %v190
    %2339 = vmatprep.subr.mxu0 0.0
    %2340 = vmatpush1.msra.mxu0 %v191
    %2341 = vmatprep.subr.mxu0 0.0
    %2342 = vmatpush1.msra.mxu0 %v192
    %2343 = vmatprep.subr.mxu0 0.0
    %2344 = vmatpush1.msra.mxu0 0.0
    %2345 = vmatprep.subr.mxu0 0.0
    %2346 = vmatpush1.msra.mxu0 0.0
    %2347 = vmatprep.subr.mxu0 0.0
    %2348 = vmatpush1.msra.mxu0 0.0
    %2349 = vmatprep.subr.mxu0 0.0
    %2350 = vmatpush1.msra.mxu0 0.0
    %2351 = vmatprep.subr.mxu0 0.0
    %2352 = vmatpush1.msra.mxu0 0.0
    %2353 = vmatprep.subr.mxu0 0.0
    %2354 = vmatpush1.msra.mxu0 0.0
    %2355 = vmatprep.subr.mxu0 0.0
    %2356 = vmatpush1.msra.mxu0 0.0
    %2357 = vmatprep.subr.mxu0 0.0
    %2358 = vmatpush1.msra.mxu0 0.0
    %2359 = vmatprep.subr.mxu0 0.0
    %2360 = vmatpush1.msra.mxu0 0.0
    %2361 = vmatprep.subr.mxu0 0.0
    %2362 = vmatpush1.msra.mxu0 0.0
    %2363 = vmatprep.subr.mxu0 0.0
    %2364 = vmatpush1.msra.mxu0 0.0
    %2365 = vmatprep.subr.mxu0 0.0
    %2366 = vmatpush1.msra.mxu0 0.0
    %2367 = vmatprep.subr.mxu0 0.0
    %2368 = vmatpush1.msra.mxu0 0.0
    %2369 = vmatprep.subr.mxu0 0.0
    %2370 = vmatpush1.msra.mxu0 0.0
    %2371 = vmatprep.subr.mxu0 0.0
    %2372 = vmatpush1.msra.mxu0 0.0
    %2373 = vmatprep.subr.mxu0 0.0
    %2374 = vmatpush1.msra.mxu0 0.0
    %2375 = vmatprep.subr.mxu0 0.0
    %2376 = vmatpush1.msra.mxu0 0.0
    %2377 = vmatprep.subr.mxu0 0.0
    %2378 = vmatpush1.msra.mxu0 0.0
    %2379 = vmatprep.subr.mxu0 0.0
    %2380 = vmatpush1.msra.mxu0 0.0
    %2381 = vmatprep.subr.mxu0 0.0
    %2382 = vmatpush1.msra.mxu0 0.0
    %2383 = vmatprep.subr.mxu0 0.0
    %2384 = vmatpush1.msra.mxu0 0.0
    %2385 = vmatprep.subr.mxu0 0.0
    %2386 = vmatpush1.msra.mxu0 0.0
    %2387 = vmatprep.mubr.f32.mxu0 0.0
    %2388 = vmatmul.mubr.f32.gmra.mrb[0].mxu0 %v2321
    %v2389 = vpop.f32.mrb[0].mxu0
    %v2390 = vadd.f32 %v205, %v2389
    %v2391 = vpop.f32.mrb[0].mxu0
    %2392 = vdwg.mxu0
    %s2393 = scalar_lea.vmem [#allocation15], 2
    %2394 = vst [vmem:[%s2393] sm:$0x3] %v2390
    %v2395 = vsel %vm1748, %v2390, -inf
    %2396 = vmax.xlane.f32.xlu0 %v2395
    %v2397 = vpop.xlane.xlu0 %2396
    %vm2398 = vcmp.eq.f32.partialorder %v2390, %v2397
    %v2399 = vsel %vm2398, %v1866, 128
    %v2400 = vsel %vm1748, %v2399, 2147483647
    %v2401 = vand.u32 %v2400, 65535
    %v2402 = vshra.s32 %v2400, 16
    %v2403 = vcvt.s32.f32 %v2401
    %v2404 = vcvt.s32.f32 %v2402
    %2405 = vmin.xlane.f32.xlu0 %v2404
    %v2406 = vpop.xlane.xlu0 %2405
    %vm2407 = vcmp.eq.f32.partialorder %v2404, %v2406
    %v2408 = vsel %vm2407, %v2403, inf
    %2409 = vmin.xlane.f32.xlu0 %v2408
    %v2410 = vpop.xlane.xlu0 %2409
    %v2411 = vcvt.f32.s32 %v2410
    %v2412 = vcvt.f32.s32 %v2406
    %v2413 = vshll.u32 %v2412, 16
    %v2414 = vadd.s32 %v2413, %v2411
    %vm2415 = vcmp.eq.s32.totalorder %v1866, %v2414
    %v2416 = vsel %vm2415, 1, 0
    %v2417 = vcvt.s32.f32 %v2416
    %s2418 = sld [smem:[#allocation2 + $0x1]]
    %p2419 = scmp.eq.s32.totalorder %s2418, 1
    %s2420 = scalar_lea.vmem [#allocation7], 2
    %v2421 = vld [vmem:[%s2420] sm:$0x3]
    %s2422 = scalar_select %p2419, 1, 0
    %v2423 = vstv %s2422
    %vm2424 = vcmp.eq.s32.totalorder %v2423, 1
    %v2425 = vsel %vm2424, %v2421, %v2417
    %2426 = vmatprep.subr.mxu0 0.0
    %2427 = vmatpush1.msra.mxu0 %v148
    %2428 = vmatprep.subr.mxu0 0.0
    %2429 = vmatpush1.msra.mxu0 %v149
    %2430 = vmatprep.subr.mxu0 0.0
    %2431 = vmatpush1.msra.mxu0 %v150
    %2432 = vmatprep.subr.mxu0 0.0
    %2433 = vmatpush1.msra.mxu0 %v151
    %2434 = vmatprep.subr.mxu0 0.0
    %2435 = vmatpush1.msra.mxu0 %v152
    %2436 = vmatprep.subr.mxu0 0.0
    %2437 = vmatpush1.msra.mxu0 %v153
    %2438 = vmatprep.subr.mxu0 0.0
    %2439 = vmatpush1.msra.mxu0 %v154
    %2440 = vmatprep.subr.mxu0 0.0
    %2441 = vmatpush1.msra.mxu0 %v155
    %2442 = vmatprep.subr.mxu0 0.0
    %2443 = vmatpush1.msra.mxu0 %v156
    %2444 = vmatprep.subr.mxu0 0.0
    %2445 = vmatpush1.msra.mxu0 %v157
    %2446 = vmatprep.subr.mxu0 0.0
    %2447 = vmatpush1.msra.mxu0 %v158
    %2448 = vmatprep.subr.mxu0 0.0
    %2449 = vmatpush1.msra.mxu0 %v159
    %2450 = vmatprep.subr.mxu0 0.0
    %2451 = vmatpush1.msra.mxu0 %v160
    %2452 = vmatprep.subr.mxu0 0.0
    %2453 = vmatpush1.msra.mxu0 %v161
    %2454 = vmatprep.subr.mxu0 0.0
    %2455 = vmatpush1.msra.mxu0 %v162
    %2456 = vmatprep.subr.mxu0 0.0
    %2457 = vmatpush1.msra.mxu0 %v163
    %2458 = vmatprep.subr.mxu0 0.0
    %2459 = vmatpush1.msra.mxu0 0.0
    %2460 = vmatprep.subr.mxu0 0.0
    %2461 = vmatpush1.msra.mxu0 0.0
    %2462 = vmatprep.subr.mxu0 0.0
    %2463 = vmatpush1.msra.mxu0 0.0
    %2464 = vmatprep.subr.mxu0 0.0
    %2465 = vmatpush1.msra.mxu0 0.0
    %2466 = vmatprep.subr.mxu0 0.0
    %2467 = vmatpush1.msra.mxu0 0.0
    %2468 = vmatprep.subr.mxu0 0.0
    %2469 = vmatpush1.msra.mxu0 0.0
    %2470 = vmatprep.subr.mxu0 0.0
    %2471 = vmatpush1.msra.mxu0 0.0
    %2472 = vmatprep.subr.mxu0 0.0
    %2473 = vmatpush1.msra.mxu0 0.0
    %2474 = vmatprep.subr.mxu0 0.0
    %2475 = vmatpush1.msra.mxu0 0.0
    %2476 = vmatprep.subr.mxu0 0.0
    %2477 = vmatpush1.msra.mxu0 0.0
    %2478 = vmatprep.subr.mxu0 0.0
    %2479 = vmatpush1.msra.mxu0 0.0
    %2480 = vmatprep.subr.mxu0 0.0
    %2481 = vmatpush1.msra.mxu0 0.0
    %2482 = vmatprep.subr.mxu0 0.0
    %2483 = vmatpush1.msra.mxu0 0.0
    %2484 = vmatprep.subr.mxu0 0.0
    %2485 = vmatpush1.msra.mxu0 0.0
    %2486 = vmatprep.subr.mxu0 0.0
    %2487 = vmatpush1.msra.mxu0 0.0
    %2488 = vmatprep.subr.mxu0 0.0
    %2489 = vmatpush1.msra.mxu0 0.0
    %2490 = vmatprep.mubr.f32.mxu0 0.0
    %2491 = vmatmul.mubr.f32.gmra.mrb[0].mxu0 %v2425
    %v2492 = vpop.f32.mrb[0].mxu0
    %v2493 = vadd.f32 0.0, %v2492
    %v2494 = vpop.f32.mrb[0].mxu0
    %2495 = vdwg.mxu0
    %v2496 = vsel %vm390, %v2308, 0
    %2498 = vmatprep.subr.mxu0 0.0
    %2499 = vmatpush1.msra.mxu0 %v168
    %2500 = vmatprep.subr.mxu0 0.0
    %2501 = vmatpush1.msra.mxu0 %v169
    %2502 = vmatprep.subr.mxu0 0.0
    %2503 = vmatpush1.msra.mxu0 %v170
    %2504 = vmatprep.subr.mxu0 0.0
    %2505 = vmatpush1.msra.mxu0 %v171
    %2506 = vmatprep.subr.mxu0 0.0
    %2507 = vmatpush1.msra.mxu0 0.0
    %2508 = vmatprep.subr.mxu0 0.0
    %2509 = vmatpush1.msra.mxu0 0.0
    %2510 = vmatprep.subr.mxu0 0.0
    %2511 = vmatpush1.msra.mxu0 0.0
    %2512 = vmatprep.subr.mxu0 0.0
    %2513 = vmatpush1.msra.mxu0 0.0
    %2514 = vmatprep.subr.mxu0 0.0
    %2515 = vmatpush1.msra.mxu0 0.0
    %2516 = vmatprep.subr.mxu0 0.0
    %2517 = vmatpush1.msra.mxu0 0.0
    %2518 = vmatprep.subr.mxu0 0.0
    %2519 = vmatpush1.msra.mxu0 0.0
    %2520 = vmatprep.subr.mxu0 0.0
    %2521 = vmatpush1.msra.mxu0 0.0
    %2522 = vmatprep.subr.mxu0 0.0
    %2523 = vmatpush1.msra.mxu0 0.0
    %2524 = vmatprep.subr.mxu0 0.0
    %2525 = vmatpush1.msra.mxu0 0.0
    %2526 = vmatprep.subr.mxu0 0.0
    %2527 = vmatpush1.msra.mxu0 0.0
    %2528 = vmatprep.subr.mxu0 0.0
    %2529 = vmatpush1.msra.mxu0 0.0
    %2530 = vmatprep.subr.mxu0 0.0
    %2531 = vmatpush1.msra.mxu0 0.0
    %2532 = vmatprep.subr.mxu0 0.0
    %2533 = vmatpush1.msra.mxu0 0.0
    %2534 = vmatprep.subr.mxu0 0.0
    %2535 = vmatpush1.msra.mxu0 0.0
    %2536 = vmatprep.subr.mxu0 0.0
    %2537 = vmatpush1.msra.mxu0 0.0
    %2538 = vmatprep.subr.mxu0 0.0
    %2539 = vmatpush1.msra.mxu0 0.0
    %2540 = vmatprep.subr.mxu0 0.0
    %2541 = vmatpush1.msra.mxu0 0.0
    %2542 = vmatprep.subr.mxu0 0.0
    %2543 = vmatpush1.msra.mxu0 0.0
    %2544 = vmatprep.subr.mxu0 0.0
    %2545 = vmatpush1.msra.mxu0 0.0
    %2546 = vmatprep.subr.mxu0 0.0
    %2547 = vmatpush1.msra.mxu0 0.0
    %2548 = vmatprep.subr.mxu0 0.0
    %2549 = vmatpush1.msra.mxu0 0.0
    %2550 = vmatprep.subr.mxu0 0.0
    %2551 = vmatpush1.msra.mxu0 0.0
    %2552 = vmatprep.subr.mxu0 0.0
    %2553 = vmatpush1.msra.mxu0 0.0
    %2554 = vmatprep.subr.mxu0 0.0
    %2555 = vmatpush1.msra.mxu0 0.0
    %2556 = vmatprep.subr.mxu0 0.0
    %2557 = vmatpush1.msra.mxu0 0.0
    %2558 = vmatprep.subr.mxu0 0.0
    %2559 = vmatpush1.msra.mxu0 0.0
    %2560 = vmatprep.subr.mxu0 0.0
    %2561 = vmatpush1.msra.mxu0 0.0
    %2562 = vmatprep.mubr.f32.mxu0 0.0
    %2563 = vmatmul.mubr.f32.gmra.mrb[0].mxu0 %v2496
    %v2564 = vpop.f32.mrb[0].mxu0
    %v2565 = vadd.f32 0.0, %v2564
    %v2566 = vpop.f32.mrb[0].mxu0
    %2567 = vdwg.mxu0
    %v2570 = vunpack.c.l.s4 1966171168
    %v2571 = vunpack.c.0.s8 %v2570
    %v2572 = vlaneseq
    %v2573 = vshrl.u32 %v2572, 7
    %v2574 = vsub.s32 %v2571, %v2573
    %v2575 = vrot.slane %v2565, %v2574
    %v2576 = vcombine.high %v2575, %v2575
    %v2578 = vunpack.c.l.s4 1966171168
    %v2579 = vunpack.c.0.s8 %v2578
    %v2580 = vlaneseq
    %v2581 = vshrl.u32 %v2580, 7
    %v2582 = vsub.s32 %v2579, %v2581
    %v2583 = vrot.slane %v2575, %v2582
    %v2585 = vunpack.c.l.s4 1966171168
    %v2586 = vunpack.c.0.s8 %v2585
    %v2587 = vlaneseq
    %v2588 = vshrl.u32 %v2587, 7
    %v2589 = vsub.s32 %v2586, %v2588
    %v2590 = vrot.slane %v2576, %v2589
    %v2591 = vlaneseq
    %v2592 = vshrl.u32 %v2591, 7
    %v2593 = vsub.s32 0, %v2592
    %v2594 = vrot.slane %v2583, %v2593
    %v2595 = vlaneseq
    %v2596 = vshrl.u32 %v2595, 7
    %v2597 = vsub.s32 0, %v2596
    %v2598 = vrot.slane %v2590, %v2597
    %v2601 = vadd.f32 %v2594, %v1854
    %v2602 = vadd.f32 %v2598, %v1859
    %v2603 = vtanh.pop %v2601
    %v2604 = vtanh.pop %v2602
    %v2605 = vmul.f32 %v2603, %v2061
    %v2606 = vmul.f32 %v2604, %v2061
    %v2607 = vsel %vm390, %v2605, 0.0
    %2608 = vadd.xlane.f32.xlu0 %v2607
    %v2609 = vpop.xlane.xlu0 %2608
    %v2610 = vsel %vm390, %v2606, 0.0
    %2611 = vadd.xlane.f32.xlu0 %v2610
    %v2612 = vpop.xlane.xlu0 %2611
    %v2613 = vadd.f32 %v2609, %v2078
    %v2614 = vadd.f32 %v2612, %v2085
    %2617 = vset.pattern.permute.xlu0 0
    %2618 = vperm.xlu0 %2617, %v2613
    %v2619 = vpop.permute.xlu0 %2618
    %2620 = vset.pattern.permute.xlu0 0
    %2621 = vperm.xlu0 %2620, %v2614
    %v2622 = vpop.permute.xlu0 %2621
    %v2623 = vlaneseq
    %v2624 = vshrl.u32 %v2623, 7
    %v2625 = vsub.s32 %v1866, %v2624
    %v2626 = vrot.slane %v2619, %v2625
    %v2627 = vlaneseq
    %v2628 = vshrl.u32 %v2627, 7
    %v2629 = vsub.s32 %v1866, %v2628
    %v2630 = vrot.slane %v2622, %v2629
    %v2631 = vsel %vm2106, %v2630, %v2626
    %v2633 = vsel %vm2109, %v2631, -inf
    %2634 = vmax.xlane.f32.xlu0 %v2633
    %v2635 = vpop.xlane.xlu0 %2634
    %v2637 = vlaneseq
    %v2638 = vshrl.u32 %v2637, 7
    %v2639 = vsub.s32 0, %v2638
    %v2640 = vrot.slane %v2635, %v2639
    %v2641 = vlaneseq
    %v2642 = vshrl.u32 %v2641, 7
    %v2643 = vsub.s32 1, %v2642
    %v2644 = vrot.slane %v2635, %v2643
    %v2647 = vsub.f32 %v2613, %v2640
    %v2648 = vsub.f32 %v2614, %v2644
    %v2649 = vmul.f32 %v2647, 1.442695
    %v2650 = vpow.pop %v2649
    %v2651 = vmul.f32 %v2648, 1.442695
    %v2652 = vpow.pop %v2651
    %2655 = vset.pattern.permute.xlu0 0
    %2656 = vperm.xlu0 %2655, %v2650
    %v2657 = vpop.permute.xlu0 %2656
    %2658 = vset.pattern.permute.xlu0 0
    %2659 = vperm.xlu0 %2658, %v2652
    %v2660 = vpop.permute.xlu0 %2659
    %v2661 = vlaneseq
    %v2662 = vshrl.u32 %v2661, 7
    %v2663 = vsub.s32 %v1866, %v2662
    %v2664 = vrot.slane %v2657, %v2663
    %v2665 = vlaneseq
    %v2666 = vshrl.u32 %v2665, 7
    %v2667 = vsub.s32 %v1866, %v2666
    %v2668 = vrot.slane %v2660, %v2667
    %v2669 = vsel %vm2106, %v2668, %v2664
    %v2671 = vsel %vm2109, %v2669, 0.0
    %2672 = vadd.xlane.f32.xlu0 %v2671
    %v2673 = vpop.xlane.xlu0 %2672
    %v2674 = vrcp.pop %v2673
    %v2676 = vlaneseq
    %v2677 = vshrl.u32 %v2676, 7
    %v2678 = vsub.s32 0, %v2677
    %v2679 = vrot.slane %v2674, %v2678
    %v2680 = vlaneseq
    %v2681 = vshrl.u32 %v2680, 7
    %v2682 = vsub.s32 1, %v2681
    %v2683 = vrot.slane %v2674, %v2682
    %v2686 = vmul.f32 %v2650, %v2679
    %v2687 = vmul.f32 %v2652, %v2683
    %2689 = vset.pattern.permute.xlu0 0
    %2690 = vperm.xlu0 %2689, %v2686
    %v2691 = vpop.permute.xlu0 %2690
    %2694 = vset.pattern.permute.xlu0 0
    %2695 = vperm.xlu0 %2694, %v2687
    %v2696 = vpop.permute.xlu0 %2695
    %v2698 = vmul.f32 %v2691, %v1764
    %v2699 = vmul.f32 %v2696, %v1765
    %v2700 = vsel %vm2177, %v2698, 0.0
    %v2701 = vrot.slane %v2700, 4
    %v2702 = vadd.f32 %v2700, %v2701
    %v2703 = vrot.slane %v2702, 2
    %v2704 = vadd.f32 %v2702, %v2703
    %v2705 = vrot.slane %v2704, 1
    %v2706 = vadd.f32 %v2704, %v2705
    %v2707 = vsel %vm2177, %v2699, 0.0
    %v2708 = vrot.slane %v2707, 4
    %v2709 = vadd.f32 %v2707, %v2708
    %v2710 = vrot.slane %v2709, 2
    %v2711 = vadd.f32 %v2709, %v2710
    %v2712 = vrot.slane %v2711, 1
    %v2713 = vadd.f32 %v2711, %v2712
    %v2716 = vsel %vm2106, %v2713, %v2706
    %2717 = vrot.lane.b32.xlu0 %v2716, 48
    %v2718 = vpop.permute.xlu0 %2717
    %2720 = vrot.lane.b32.xlu0 %v2305, 80
    %v2721 = vpop.permute.xlu0 %2720
    %v2723 = vsel %vm266, %v2493, %v2718
    %v2724 = vsel %vm2202, %v2723, %v2721
    %v2726 = vsel %vm2204, %v2724, 0
    %2728 = vmatprep.subr.mxu0 0.0
    %2729 = vmatpush1.msra.mxu0 %v173
    %2730 = vmatprep.subr.mxu0 0.0
    %2731 = vmatpush1.msra.mxu0 %v174
    %2732 = vmatprep.subr.mxu0 0.0
    %2733 = vmatpush1.msra.mxu0 %v175
    %2734 = vmatprep.subr.mxu0 0.0
    %2735 = vmatpush1.msra.mxu0 %v176
    %2736 = vmatprep.subr.mxu0 0.0
    %2737 = vmatpush1.msra.mxu0 %v177
    %2738 = vmatprep.subr.mxu0 0.0
    %2739 = vmatpush1.msra.mxu0 %v178
    %2740 = vmatprep.subr.mxu0 0.0
    %2741 = vmatpush1.msra.mxu0 %v179
    %2742 = vmatprep.subr.mxu0 0.0
    %2743 = vmatpush1.msra.mxu0 %v180
    %2744 = vmatprep.subr.mxu0 0.0
    %2745 = vmatpush1.msra.mxu0 %v181
    %2746 = vmatprep.subr.mxu0 0.0
    %2747 = vmatpush1.msra.mxu0 %v182
    %2748 = vmatprep.subr.mxu0 0.0
    %2749 = vmatpush1.msra.mxu0 0.0
    %2750 = vmatprep.subr.mxu0 0.0
    %2751 = vmatpush1.msra.mxu0 0.0
    %2752 = vmatprep.subr.mxu0 0.0
    %2753 = vmatpush1.msra.mxu0 0.0
    %2754 = vmatprep.subr.mxu0 0.0
    %2755 = vmatpush1.msra.mxu0 0.0
    %2756 = vmatprep.subr.mxu0 0.0
    %2757 = vmatpush1.msra.mxu0 0.0
    %2758 = vmatprep.subr.mxu0 0.0
    %2759 = vmatpush1.msra.mxu0 0.0
    %2760 = vmatprep.subr.mxu0 0.0
    %2761 = vmatpush1.msra.mxu0 0.0
    %2762 = vmatprep.subr.mxu0 0.0
    %2763 = vmatpush1.msra.mxu0 0.0
    %2764 = vmatprep.subr.mxu0 0.0
    %2765 = vmatpush1.msra.mxu0 0.0
    %2766 = vmatprep.subr.mxu0 0.0
    %2767 = vmatpush1.msra.mxu0 0.0
    %2768 = vmatprep.subr.mxu0 0.0
    %2769 = vmatpush1.msra.mxu0 0.0
    %2770 = vmatprep.subr.mxu0 0.0
    %2771 = vmatpush1.msra.mxu0 0.0
    %2772 = vmatprep.subr.mxu0 0.0
    %2773 = vmatpush1.msra.mxu0 0.0
    %2774 = vmatprep.subr.mxu0 0.0
    %2775 = vmatpush1.msra.mxu0 0.0
    %2776 = vmatprep.subr.mxu0 0.0
    %2777 = vmatpush1.msra.mxu0 0.0
    %2778 = vmatprep.subr.mxu0 0.0
    %2779 = vmatpush1.msra.mxu0 0.0
    %2780 = vmatprep.subr.mxu0 0.0
    %2781 = vmatpush1.msra.mxu0 0.0
    %2782 = vmatprep.subr.mxu0 0.0
    %2783 = vmatpush1.msra.mxu0 0.0
    %2784 = vmatprep.subr.mxu0 0.0
    %2785 = vmatpush1.msra.mxu0 0.0
    %2786 = vmatprep.subr.mxu0 0.0
    %2787 = vmatpush1.msra.mxu0 0.0
    %2788 = vmatprep.subr.mxu0 0.0
    %2789 = vmatpush1.msra.mxu0 0.0
    %2790 = vmatprep.subr.mxu0 0.0
    %2791 = vmatpush1.msra.mxu0 0.0
    %2792 = vmatprep.mubr.f32.mxu0 0.0
    %2793 = vmatmul.mubr.f32.gmra.mrb[0].mxu0 %v2726
    %v2794 = vpop.f32.mrb[0].mxu0
    %v2795 = vadd.f32 %v198, %v2794
    %v2796 = vpop.f32.mrb[0].mxu0
    %2797 = vdwg.mxu0
    %v2798 = vxor.u32 %v2795, 2147483648
    %v2799 = vmul.f32 %v2798, 1.442695
    %v2800 = vpow.pop %v2799
    %v2801 = vadd.f32 %v2800, 1.0
    %v2802 = vrcp.pop %v2801
    %v2803 = vmul.f32 1.0, %v2802
    %v2804 = vtanh.pop %v2795
    %v2805 = vmul.f32 %v2803, %v2299
    %2807 = vrot.lane.b32.xlu0 %v2804, 64
    %v2808 = vpop.permute.xlu0 %2807
    %v2810 = vmul.f32 %v2803, %v2808
    %2812 = vrot.lane.b32.xlu0 %v2810, 32
    %v2813 = vpop.permute.xlu0 %2812
    %v2815 = vadd.f32 %v2805, %v2813
    %v2816 = vtanh.pop %v2815
    %2818 = vrot.lane.b32.xlu0 %v2816, 64
    %v2819 = vpop.permute.xlu0 %2818
    %v2821 = vmul.f32 %v2803, %v2819
    %2823 = vrot.lane.b32.xlu0 %v2821, 32
    %v2824 = vpop.permute.xlu0 %2823
    %2826 = vrot.lane.b32.xlu0 %v2716, 64
    %v2827 = vpop.permute.xlu0 %2826
    %2830 = vrot.lane.b32.xlu0 %v2493, 64
    %v2831 = vpop.permute.xlu0 %2830
    %v2833 = vsel %vm390, %v2824, %v2827
    %v2834 = vsel %vm2318, %v2833, %v2831
    %v2836 = vsel %vm2204, %v2834, 0
    %2838 = vmatprep.subr.mxu0 0.0
    %2839 = vmatpush1.msra.mxu0 %v183
    %2840 = vmatprep.subr.mxu0 0.0
    %2841 = vmatpush1.msra.mxu0 %v184
    %2842 = vmatprep.subr.mxu0 0.0
    %2843 = vmatpush1.msra.mxu0 %v185
    %2844 = vmatprep.subr.mxu0 0.0
    %2845 = vmatpush1.msra.mxu0 %v186
    %2846 = vmatprep.subr.mxu0 0.0
    %2847 = vmatpush1.msra.mxu0 %v187
    %2848 = vmatprep.subr.mxu0 0.0
    %2849 = vmatpush1.msra.mxu0 %v188
    %2850 = vmatprep.subr.mxu0 0.0
    %2851 = vmatpush1.msra.mxu0 %v189
    %2852 = vmatprep.subr.mxu0 0.0
    %2853 = vmatpush1.msra.mxu0 %v190
    %2854 = vmatprep.subr.mxu0 0.0
    %2855 = vmatpush1.msra.mxu0 %v191
    %2856 = vmatprep.subr.mxu0 0.0
    %2857 = vmatpush1.msra.mxu0 %v192
    %2858 = vmatprep.subr.mxu0 0.0
    %2859 = vmatpush1.msra.mxu0 0.0
    %2860 = vmatprep.subr.mxu0 0.0
    %2861 = vmatpush1.msra.mxu0 0.0
    %2862 = vmatprep.subr.mxu0 0.0
    %2863 = vmatpush1.msra.mxu0 0.0
    %2864 = vmatprep.subr.mxu0 0.0
    %2865 = vmatpush1.msra.mxu0 0.0
    %2866 = vmatprep.subr.mxu0 0.0
    %2867 = vmatpush1.msra.mxu0 0.0
    %2868 = vmatprep.subr.mxu0 0.0
    %2869 = vmatpush1.msra.mxu0 0.0
    %2870 = vmatprep.subr.mxu0 0.0
    %2871 = vmatpush1.msra.mxu0 0.0
    %2872 = vmatprep.subr.mxu0 0.0
    %2873 = vmatpush1.msra.mxu0 0.0
    %2874 = vmatprep.subr.mxu0 0.0
    %2875 = vmatpush1.msra.mxu0 0.0
    %2876 = vmatprep.subr.mxu0 0.0
    %2877 = vmatpush1.msra.mxu0 0.0
    %2878 = vmatprep.subr.mxu0 0.0
    %2879 = vmatpush1.msra.mxu0 0.0
    %2880 = vmatprep.subr.mxu0 0.0
    %2881 = vmatpush1.msra.mxu0 0.0
    %2882 = vmatprep.subr.mxu0 0.0
    %2883 = vmatpush1.msra.mxu0 0.0
    %2884 = vmatprep.subr.mxu0 0.0
    %2885 = vmatpush1.msra.mxu0 0.0
    %2886 = vmatprep.subr.mxu0 0.0
    %2887 = vmatpush1.msra.mxu0 0.0
    %2888 = vmatprep.subr.mxu0 0.0
    %2889 = vmatpush1.msra.mxu0 0.0
    %2890 = vmatprep.subr.mxu0 0.0
    %2891 = vmatpush1.msra.mxu0 0.0
    %2892 = vmatprep.subr.mxu0 0.0
    %2893 = vmatpush1.msra.mxu0 0.0
    %2894 = vmatprep.subr.mxu0 0.0
    %2895 = vmatpush1.msra.mxu0 0.0
    %2896 = vmatprep.subr.mxu0 0.0
    %2897 = vmatpush1.msra.mxu0 0.0
    %2898 = vmatprep.subr.mxu0 0.0
    %2899 = vmatpush1.msra.mxu0 0.0
    %2900 = vmatprep.subr.mxu0 0.0
    %2901 = vmatpush1.msra.mxu0 0.0
    %2902 = vmatprep.mubr.f32.mxu0 0.0
    %2903 = vmatmul.mubr.f32.gmra.mrb[0].mxu0 %v2836
    %v2904 = vpop.f32.mrb[0].mxu0
    %v2905 = vadd.f32 %v205, %v2904
    %v2906 = vpop.f32.mrb[0].mxu0
    %2907 = vdwg.mxu0
    %s2908 = scalar_lea.vmem [#allocation15], 4
    %2909 = vst [vmem:[%s2908] sm:$0x3] %v2905
    %v2910 = vsel %vm1748, %v2905, -inf
    %2911 = vmax.xlane.f32.xlu0 %v2910
    %v2912 = vpop.xlane.xlu0 %2911
    %vm2913 = vcmp.eq.f32.partialorder %v2905, %v2912
    %v2914 = vsel %vm2913, %v1866, 128
    %v2915 = vsel %vm1748, %v2914, 2147483647
    %v2916 = vand.u32 %v2915, 65535
    %v2917 = vshra.s32 %v2915, 16
    %v2918 = vcvt.s32.f32 %v2916
    %v2919 = vcvt.s32.f32 %v2917
    %2920 = vmin.xlane.f32.xlu0 %v2919
    %v2921 = vpop.xlane.xlu0 %2920
    %vm2922 = vcmp.eq.f32.partialorder %v2919, %v2921
    %v2923 = vsel %vm2922, %v2918, inf
    %2924 = vmin.xlane.f32.xlu0 %v2923
    %v2925 = vpop.xlane.xlu0 %2924
    %v2926 = vcvt.f32.s32 %v2925
    %v2927 = vcvt.f32.s32 %v2921
    %v2928 = vshll.u32 %v2927, 16
    %v2929 = vadd.s32 %v2928, %v2926
    %vm2930 = vcmp.eq.s32.totalorder %v1866, %v2929
    %v2931 = vsel %vm2930, 1, 0
    %v2932 = vcvt.s32.f32 %v2931
    %s2933 = sld [smem:[#allocation2 + $0x2]]
    %p2934 = scmp.eq.s32.totalorder %s2933, 1
    %s2935 = scalar_lea.vmem [#allocation7], 4
    %v2936 = vld [vmem:[%s2935] sm:$0x3]
    %s2937 = scalar_select %p2934, 1, 0
    %v2938 = vstv %s2937
    %vm2939 = vcmp.eq.s32.totalorder %v2938, 1
    %v2940 = vsel %vm2939, %v2936, %v2932
    %2941 = vmatprep.subr.mxu0 0.0
    %2942 = vmatpush1.msra.mxu0 %v148
    %2943 = vmatprep.subr.mxu0 0.0
    %2944 = vmatpush1.msra.mxu0 %v149
    %2945 = vmatprep.subr.mxu0 0.0
    %2946 = vmatpush1.msra.mxu0 %v150
    %2947 = vmatprep.subr.mxu0 0.0
    %2948 = vmatpush1.msra.mxu0 %v151
    %2949 = vmatprep.subr.mxu0 0.0
    %2950 = vmatpush1.msra.mxu0 %v152
    %2951 = vmatprep.subr.mxu0 0.0
    %2952 = vmatpush1.msra.mxu0 %v153
    %2953 = vmatprep.subr.mxu0 0.0
    %2954 = vmatpush1.msra.mxu0 %v154
    %2955 = vmatprep.subr.mxu0 0.0
    %2956 = vmatpush1.msra.mxu0 %v155
    %2957 = vmatprep.subr.mxu0 0.0
    %2958 = vmatpush1.msra.mxu0 %v156
    %2959 = vmatprep.subr.mxu0 0.0
    %2960 = vmatpush1.msra.mxu0 %v157
    %2961 = vmatprep.subr.mxu0 0.0
    %2962 = vmatpush1.msra.mxu0 %v158
    %2963 = vmatprep.subr.mxu0 0.0
    %2964 = vmatpush1.msra.mxu0 %v159
    %2965 = vmatprep.subr.mxu0 0.0
    %2966 = vmatpush1.msra.mxu0 %v160
    %2967 = vmatprep.subr.mxu0 0.0
    %2968 = vmatpush1.msra.mxu0 %v161
    %2969 = vmatprep.subr.mxu0 0.0
    %2970 = vmatpush1.msra.mxu0 %v162
    %2971 = vmatprep.subr.mxu0 0.0
    %2972 = vmatpush1.msra.mxu0 %v163
    %2973 = vmatprep.subr.mxu0 0.0
    %2974 = vmatpush1.msra.mxu0 0.0
    %2975 = vmatprep.subr.mxu0 0.0
    %2976 = vmatpush1.msra.mxu0 0.0
    %2977 = vmatprep.subr.mxu0 0.0
    %2978 = vmatpush1.msra.mxu0 0.0
    %2979 = vmatprep.subr.mxu0 0.0
    %2980 = vmatpush1.msra.mxu0 0.0
    %2981 = vmatprep.subr.mxu0 0.0
    %2982 = vmatpush1.msra.mxu0 0.0
    %2983 = vmatprep.subr.mxu0 0.0
    %2984 = vmatpush1.msra.mxu0 0.0
    %2985 = vmatprep.subr.mxu0 0.0
    %2986 = vmatpush1.msra.mxu0 0.0
    %2987 = vmatprep.subr.mxu0 0.0
    %2988 = vmatpush1.msra.mxu0 0.0
    %2989 = vmatprep.subr.mxu0 0.0
    %2990 = vmatpush1.msra.mxu0 0.0
    %2991 = vmatprep.subr.mxu0 0.0
    %2992 = vmatpush1.msra.mxu0 0.0
    %2993 = vmatprep.subr.mxu0 0.0
    %2994 = vmatpush1.msra.mxu0 0.0
    %2995 = vmatprep.subr.mxu0 0.0
    %2996 = vmatpush1.msra.mxu0 0.0
    %2997 = vmatprep.subr.mxu0 0.0
    %2998 = vmatpush1.msra.mxu0 0.0
    %2999 = vmatprep.subr.mxu0 0.0
    %3000 = vmatpush1.msra.mxu0 0.0
    %3001 = vmatprep.subr.mxu0 0.0
    %3002 = vmatpush1.msra.mxu0 0.0
    %3003 = vmatprep.subr.mxu0 0.0
    %3004 = vmatpush1.msra.mxu0 0.0
    %3005 = vmatprep.mubr.f32.mxu0 0.0
    %3006 = vmatmul.mubr.f32.gmra.mrb[0].mxu0 %v2940
    %v3007 = vpop.f32.mrb[0].mxu0
    %v3008 = vadd.f32 0.0, %v3007
    %v3009 = vpop.f32.mrb[0].mxu0
    %3010 = vdwg.mxu0
    %v3011 = vsel %vm390, %v2824, 0
    %3013 = vmatprep.subr.mxu0 0.0
    %3014 = vmatpush1.msra.mxu0 %v168
    %3015 = vmatprep.subr.mxu0 0.0
    %3016 = vmatpush1.msra.mxu0 %v169
    %3017 = vmatprep.subr.mxu0 0.0
    %3018 = vmatpush1.msra.mxu0 %v170
    %3019 = vmatprep.subr.mxu0 0.0
    %3020 = vmatpush1.msra.mxu0 %v171
    %3021 = vmatprep.subr.mxu0 0.0
    %3022 = vmatpush1.msra.mxu0 0.0
    %3023 = vmatprep.subr.mxu0 0.0
    %3024 = vmatpush1.msra.mxu0 0.0
    %3025 = vmatprep.subr.mxu0 0.0
    %3026 = vmatpush1.msra.mxu0 0.0
    %3027 = vmatprep.subr.mxu0 0.0
    %3028 = vmatpush1.msra.mxu0 0.0
    %3029 = vmatprep.subr.mxu0 0.0
    %3030 = vmatpush1.msra.mxu0 0.0
    %3031 = vmatprep.subr.mxu0 0.0
    %3032 = vmatpush1.msra.mxu0 0.0
    %3033 = vmatprep.subr.mxu0 0.0
    %3034 = vmatpush1.msra.mxu0 0.0
    %3035 = vmatprep.subr.mxu0 0.0
    %3036 = vmatpush1.msra.mxu0 0.0
    %3037 = vmatprep.subr.mxu0 0.0
    %3038 = vmatpush1.msra.mxu0 0.0
    %3039 = vmatprep.subr.mxu0 0.0
    %3040 = vmatpush1.msra.mxu0 0.0
    %3041 = vmatprep.subr.mxu0 0.0
    %3042 = vmatpush1.msra.mxu0 0.0
    %3043 = vmatprep.subr.mxu0 0.0
    %3044 = vmatpush1.msra.mxu0 0.0
    %3045 = vmatprep.subr.mxu0 0.0
    %3046 = vmatpush1.msra.mxu0 0.0
    %3047 = vmatprep.subr.mxu0 0.0
    %3048 = vmatpush1.msra.mxu0 0.0
    %3049 = vmatprep.subr.mxu0 0.0
    %3050 = vmatpush1.msra.mxu0 0.0
    %3051 = vmatprep.subr.mxu0 0.0
    %3052 = vmatpush1.msra.mxu0 0.0
    %3053 = vmatprep.subr.mxu0 0.0
    %3054 = vmatpush1.msra.mxu0 0.0
    %3055 = vmatprep.subr.mxu0 0.0
    %3056 = vmatpush1.msra.mxu0 0.0
    %3057 = vmatprep.subr.mxu0 0.0
    %3058 = vmatpush1.msra.mxu0 0.0
    %3059 = vmatprep.subr.mxu0 0.0
    %3060 = vmatpush1.msra.mxu0 0.0
    %3061 = vmatprep.subr.mxu0 0.0
    %3062 = vmatpush1.msra.mxu0 0.0
    %3063 = vmatprep.subr.mxu0 0.0
    %3064 = vmatpush1.msra.mxu0 0.0
    %3065 = vmatprep.subr.mxu0 0.0
    %3066 = vmatpush1.msra.mxu0 0.0
    %3067 = vmatprep.subr.mxu0 0.0
    %3068 = vmatpush1.msra.mxu0 0.0
    %3069 = vmatprep.subr.mxu0 0.0
    %3070 = vmatpush1.msra.mxu0 0.0
    %3071 = vmatprep.subr.mxu0 0.0
    %3072 = vmatpush1.msra.mxu0 0.0
    %3073 = vmatprep.subr.mxu0 0.0
    %3074 = vmatpush1.msra.mxu0 0.0
    %3075 = vmatprep.subr.mxu0 0.0
    %3076 = vmatpush1.msra.mxu0 0.0
    %3077 = vmatprep.mubr.f32.mxu0 0.0
    %3078 = vmatmul.mubr.f32.gmra.mrb[0].mxu0 %v3011
    %v3079 = vpop.f32.mrb[0].mxu0
    %v3080 = vadd.f32 0.0, %v3079
    %v3081 = vpop.f32.mrb[0].mxu0
    %3082 = vdwg.mxu0
    %v3085 = vunpack.c.l.s4 1966171168
    %v3086 = vunpack.c.0.s8 %v3085
    %v3087 = vlaneseq
    %v3088 = vshrl.u32 %v3087, 7
    %v3089 = vsub.s32 %v3086, %v3088
    %v3090 = vrot.slane %v3080, %v3089
    %v3091 = vcombine.high %v3090, %v3090
    %v3093 = vunpack.c.l.s4 1966171168
    %v3094 = vunpack.c.0.s8 %v3093
    %v3095 = vlaneseq
    %v3096 = vshrl.u32 %v3095, 7
    %v3097 = vsub.s32 %v3094, %v3096
    %v3098 = vrot.slane %v3090, %v3097
    %v3100 = vunpack.c.l.s4 1966171168
    %v3101 = vunpack.c.0.s8 %v3100
    %v3102 = vlaneseq
    %v3103 = vshrl.u32 %v3102, 7
    %v3104 = vsub.s32 %v3101, %v3103
    %v3105 = vrot.slane %v3091, %v3104
    %v3106 = vlaneseq
    %v3107 = vshrl.u32 %v3106, 7
    %v3108 = vsub.s32 0, %v3107
    %v3109 = vrot.slane %v3098, %v3108
    %v3110 = vlaneseq
    %v3111 = vshrl.u32 %v3110, 7
    %v3112 = vsub.s32 0, %v3111
    %v3113 = vrot.slane %v3105, %v3112
    %v3116 = vadd.f32 %v3109, %v1854
    %v3117 = vadd.f32 %v3113, %v1859
    %v3118 = vtanh.pop %v3116
    %v3119 = vtanh.pop %v3117
    %v3120 = vmul.f32 %v3118, %v2061
    %v3121 = vmul.f32 %v3119, %v2061
    %v3122 = vsel %vm390, %v3120, 0.0
    %3123 = vadd.xlane.f32.xlu0 %v3122
    %v3124 = vpop.xlane.xlu0 %3123
    %v3125 = vsel %vm390, %v3121, 0.0
    %3126 = vadd.xlane.f32.xlu0 %v3125
    %v3127 = vpop.xlane.xlu0 %3126
    %v3128 = vadd.f32 %v3124, %v2078
    %v3129 = vadd.f32 %v3127, %v2085
    %3132 = vset.pattern.permute.xlu0 0
    %3133 = vperm.xlu0 %3132, %v3128
    %v3134 = vpop.permute.xlu0 %3133
    %3135 = vset.pattern.permute.xlu0 0
    %3136 = vperm.xlu0 %3135, %v3129
    %v3137 = vpop.permute.xlu0 %3136
    %v3138 = vlaneseq
    %v3139 = vshrl.u32 %v3138, 7
    %v3140 = vsub.s32 %v1866, %v3139
    %v3141 = vrot.slane %v3134, %v3140
    %v3142 = vlaneseq
    %v3143 = vshrl.u32 %v3142, 7
    %v3144 = vsub.s32 %v1866, %v3143
    %v3145 = vrot.slane %v3137, %v3144
    %v3146 = vsel %vm2106, %v3145, %v3141
    %v3148 = vsel %vm2109, %v3146, -inf
    %3149 = vmax.xlane.f32.xlu0 %v3148
    %v3150 = vpop.xlane.xlu0 %3149
    %v3152 = vlaneseq
    %v3153 = vshrl.u32 %v3152, 7
    %v3154 = vsub.s32 0, %v3153
    %v3155 = vrot.slane %v3150, %v3154
    %v3156 = vlaneseq
    %v3157 = vshrl.u32 %v3156, 7
    %v3158 = vsub.s32 1, %v3157
    %v3159 = vrot.slane %v3150, %v3158
    %v3162 = vsub.f32 %v3128, %v3155
    %v3163 = vsub.f32 %v3129, %v3159
    %v3164 = vmul.f32 %v3162, 1.442695
    %v3165 = vpow.pop %v3164
    %v3166 = vmul.f32 %v3163, 1.442695
    %v3167 = vpow.pop %v3166
    %3170 = vset.pattern.permute.xlu0 0
    %3171 = vperm.xlu0 %3170, %v3165
    %v3172 = vpop.permute.xlu0 %3171
    %3173 = vset.pattern.permute.xlu0 0
    %3174 = vperm.xlu0 %3173, %v3167
    %v3175 = vpop.permute.xlu0 %3174
    %v3176 = vlaneseq
    %v3177 = vshrl.u32 %v3176, 7
    %v3178 = vsub.s32 %v1866, %v3177
    %v3179 = vrot.slane %v3172, %v3178
    %v3180 = vlaneseq
    %v3181 = vshrl.u32 %v3180, 7
    %v3182 = vsub.s32 %v1866, %v3181
    %v3183 = vrot.slane %v3175, %v3182
    %v3184 = vsel %vm2106, %v3183, %v3179
    %v3186 = vsel %vm2109, %v3184, 0.0
    %3187 = vadd.xlane.f32.xlu0 %v3186
    %v3188 = vpop.xlane.xlu0 %3187
    %v3189 = vrcp.pop %v3188
    %v3191 = vlaneseq
    %v3192 = vshrl.u32 %v3191, 7
    %v3193 = vsub.s32 0, %v3192
    %v3194 = vrot.slane %v3189, %v3193
    %v3195 = vlaneseq
    %v3196 = vshrl.u32 %v3195, 7
    %v3197 = vsub.s32 1, %v3196
    %v3198 = vrot.slane %v3189, %v3197
    %v3201 = vmul.f32 %v3165, %v3194
    %v3202 = vmul.f32 %v3167, %v3198
    %3204 = vset.pattern.permute.xlu0 0
    %3205 = vperm.xlu0 %3204, %v3201
    %v3206 = vpop.permute.xlu0 %3205
    %3209 = vset.pattern.permute.xlu0 0
    %3210 = vperm.xlu0 %3209, %v3202
    %v3211 = vpop.permute.xlu0 %3210
    %v3213 = vmul.f32 %v3206, %v1764
    %v3214 = vmul.f32 %v3211, %v1765
    %v3215 = vsel %vm2177, %v3213, 0.0
    %v3216 = vrot.slane %v3215, 4
    %v3217 = vadd.f32 %v3215, %v3216
    %v3218 = vrot.slane %v3217, 2
    %v3219 = vadd.f32 %v3217, %v3218
    %v3220 = vrot.slane %v3219, 1
    %v3221 = vadd.f32 %v3219, %v3220
    %v3222 = vsel %vm2177, %v3214, 0.0
    %v3223 = vrot.slane %v3222, 4
    %v3224 = vadd.f32 %v3222, %v3223
    %v3225 = vrot.slane %v3224, 2
    %v3226 = vadd.f32 %v3224, %v3225
    %v3227 = vrot.slane %v3226, 1
    %v3228 = vadd.f32 %v3226, %v3227
    %v3231 = vsel %vm2106, %v3228, %v3221
    %3232 = vrot.lane.b32.xlu0 %v3231, 48
    %v3233 = vpop.permute.xlu0 %3232
    %3235 = vrot.lane.b32.xlu0 %v2821, 80
    %v3236 = vpop.permute.xlu0 %3235
    %v3238 = vsel %vm266, %v3008, %v3233
    %v3239 = vsel %vm2202, %v3238, %v3236
    %v3241 = vsel %vm2204, %v3239, 0
    %3243 = vmatprep.subr.mxu0 0.0
    %3244 = vmatpush1.msra.mxu0 %v173
    %3245 = vmatprep.subr.mxu0 0.0
    %3246 = vmatpush1.msra.mxu0 %v174
    %3247 = vmatprep.subr.mxu0 0.0
    %3248 = vmatpush1.msra.mxu0 %v175
    %3249 = vmatprep.subr.mxu0 0.0
    %3250 = vmatpush1.msra.mxu0 %v176
    %3251 = vmatprep.subr.mxu0 0.0
    %3252 = vmatpush1.msra.mxu0 %v177
    %3253 = vmatprep.subr.mxu0 0.0
    %3254 = vmatpush1.msra.mxu0 %v178
    %3255 = vmatprep.subr.mxu0 0.0
    %3256 = vmatpush1.msra.mxu0 %v179
    %3257 = vmatprep.subr.mxu0 0.0
    %3258 = vmatpush1.msra.mxu0 %v180
    %3259 = vmatprep.subr.mxu0 0.0
    %3260 = vmatpush1.msra.mxu0 %v181
    %3261 = vmatprep.subr.mxu0 0.0
    %3262 = vmatpush1.msra.mxu0 %v182
    %3263 = vmatprep.subr.mxu0 0.0
    %3264 = vmatpush1.msra.mxu0 0.0
    %3265 = vmatprep.subr.mxu0 0.0
    %3266 = vmatpush1.msra.mxu0 0.0
    %3267 = vmatprep.subr.mxu0 0.0
    %3268 = vmatpush1.msra.mxu0 0.0
    %3269 = vmatprep.subr.mxu0 0.0
    %3270 = vmatpush1.msra.mxu0 0.0
    %3271 = vmatprep.subr.mxu0 0.0
    %3272 = vmatpush1.msra.mxu0 0.0
    %3273 = vmatprep.subr.mxu0 0.0
    %3274 = vmatpush1.msra.mxu0 0.0
    %3275 = vmatprep.subr.mxu0 0.0
    %3276 = vmatpush1.msra.mxu0 0.0
    %3277 = vmatprep.subr.mxu0 0.0
    %3278 = vmatpush1.msra.mxu0 0.0
    %3279 = vmatprep.subr.mxu0 0.0
    %3280 = vmatpush1.msra.mxu0 0.0
    %3281 = vmatprep.subr.mxu0 0.0
    %3282 = vmatpush1.msra.mxu0 0.0
    %3283 = vmatprep.subr.mxu0 0.0
    %3284 = vmatpush1.msra.mxu0 0.0
    %3285 = vmatprep.subr.mxu0 0.0
    %3286 = vmatpush1.msra.mxu0 0.0
    %3287 = vmatprep.subr.mxu0 0.0
    %3288 = vmatpush1.msra.mxu0 0.0
    %3289 = vmatprep.subr.mxu0 0.0
    %3290 = vmatpush1.msra.mxu0 0.0
    %3291 = vmatprep.subr.mxu0 0.0
    %3292 = vmatpush1.msra.mxu0 0.0
    %3293 = vmatprep.subr.mxu0 0.0
    %3294 = vmatpush1.msra.mxu0 0.0
    %3295 = vmatprep.subr.mxu0 0.0
    %3296 = vmatpush1.msra.mxu0 0.0
    %3297 = vmatprep.subr.mxu0 0.0
    %3298 = vmatpush1.msra.mxu0 0.0
    %3299 = vmatprep.subr.mxu0 0.0
    %3300 = vmatpush1.msra.mxu0 0.0
    %3301 = vmatprep.subr.mxu0 0.0
    %3302 = vmatpush1.msra.mxu0 0.0
    %3303 = vmatprep.subr.mxu0 0.0
    %3304 = vmatpush1.msra.mxu0 0.0
    %3305 = vmatprep.subr.mxu0 0.0
    %3306 = vmatpush1.msra.mxu0 0.0
    %3307 = vmatprep.mubr.f32.mxu0 0.0
    %3308 = vmatmul.mubr.f32.gmra.mrb[0].mxu0 %v3241
    %v3309 = vpop.f32.mrb[0].mxu0
    %v3310 = vadd.f32 %v198, %v3309
    %v3311 = vpop.f32.mrb[0].mxu0
    %3312 = vdwg.mxu0
    %v3313 = vxor.u32 %v3310, 2147483648
    %v3314 = vmul.f32 %v3313, 1.442695
    %v3315 = vpow.pop %v3314
    %v3316 = vadd.f32 %v3315, 1.0
    %v3317 = vrcp.pop %v3316
    %v3318 = vmul.f32 1.0, %v3317
    %v3319 = vtanh.pop %v3310
    %v3320 = vmul.f32 %v3318, %v2815
    %3322 = vrot.lane.b32.xlu0 %v3319, 64
    %v3323 = vpop.permute.xlu0 %3322
    %v3325 = vmul.f32 %v3318, %v3323
    %3327 = vrot.lane.b32.xlu0 %v3325, 32
    %v3328 = vpop.permute.xlu0 %3327
    %v3330 = vadd.f32 %v3320, %v3328
    %v3331 = vtanh.pop %v3330
    %3333 = vrot.lane.b32.xlu0 %v3331, 64
    %v3334 = vpop.permute.xlu0 %3333
    %v3336 = vmul.f32 %v3318, %v3334
    %3338 = vrot.lane.b32.xlu0 %v3336, 32
    %v3339 = vpop.permute.xlu0 %3338
    %3341 = vrot.lane.b32.xlu0 %v3231, 64
    %v3342 = vpop.permute.xlu0 %3341
    %3345 = vrot.lane.b32.xlu0 %v3008, 64
    %v3346 = vpop.permute.xlu0 %3345
    %v3348 = vsel %vm390, %v3339, %v3342
    %v3349 = vsel %vm2318, %v3348, %v3346
    %v3351 = vsel %vm2204, %v3349, 0
    %3353 = vmatprep.subr.mxu0 0.0
    %3354 = vmatpush1.msra.mxu0 %v183
    %3355 = vmatprep.subr.mxu0 0.0
    %3356 = vmatpush1.msra.mxu0 %v184
    %3357 = vmatprep.subr.mxu0 0.0
    %3358 = vmatpush1.msra.mxu0 %v185
    %3359 = vmatprep.subr.mxu0 0.0
    %3360 = vmatpush1.msra.mxu0 %v186
    %3361 = vmatprep.subr.mxu0 0.0
    %3362 = vmatpush1.msra.mxu0 %v187
    %3363 = vmatprep.subr.mxu0 0.0
    %3364 = vmatpush1.msra.mxu0 %v188
    %3365 = vmatprep.subr.mxu0 0.0
    %3366 = vmatpush1.msra.mxu0 %v189
    %3367 = vmatprep.subr.mxu0 0.0
    %3368 = vmatpush1.msra.mxu0 %v190
    %3369 = vmatprep.subr.mxu0 0.0
    %3370 = vmatpush1.msra.mxu0 %v191
    %3371 = vmatprep.subr.mxu0 0.0
    %3372 = vmatpush1.msra.mxu0 %v192
    %3373 = vmatprep.subr.mxu0 0.0
    %3374 = vmatpush1.msra.mxu0 0.0
    %3375 = vmatprep.subr.mxu0 0.0
    %3376 = vmatpush1.msra.mxu0 0.0
    %3377 = vmatprep.subr.mxu0 0.0
    %3378 = vmatpush1.msra.mxu0 0.0
    %3379 = vmatprep.subr.mxu0 0.0
    %3380 = vmatpush1.msra.mxu0 0.0
    %3381 = vmatprep.subr.mxu0 0.0
    %3382 = vmatpush1.msra.mxu0 0.0
    %3383 = vmatprep.subr.mxu0 0.0
    %3384 = vmatpush1.msra.mxu0 0.0
    %3385 = vmatprep.subr.mxu0 0.0
    %3386 = vmatpush1.msra.mxu0 0.0
    %3387 = vmatprep.subr.mxu0 0.0
    %3388 = vmatpush1.msra.mxu0 0.0
    %3389 = vmatprep.subr.mxu0 0.0
    %3390 = vmatpush1.msra.mxu0 0.0
    %3391 = vmatprep.subr.mxu0 0.0
    %3392 = vmatpush1.msra.mxu0 0.0
    %3393 = vmatprep.subr.mxu0 0.0
    %3394 = vmatpush1.msra.mxu0 0.0
    %3395 = vmatprep.subr.mxu0 0.0
    %3396 = vmatpush1.msra.mxu0 0.0
    %3397 = vmatprep.subr.mxu0 0.0
    %3398 = vmatpush1.msra.mxu0 0.0
    %3399 = vmatprep.subr.mxu0 0.0
    %3400 = vmatpush1.msra.mxu0 0.0
    %3401 = vmatprep.subr.mxu0 0.0
    %3402 = vmatpush1.msra.mxu0 0.0
    %3403 = vmatprep.subr.mxu0 0.0
    %3404 = vmatpush1.msra.mxu0 0.0
    %3405 = vmatprep.subr.mxu0 0.0
    %3406 = vmatpush1.msra.mxu0 0.0
    %3407 = vmatprep.subr.mxu0 0.0
    %3408 = vmatpush1.msra.mxu0 0.0
    %3409 = vmatprep.subr.mxu0 0.0
    %3410 = vmatpush1.msra.mxu0 0.0
    %3411 = vmatprep.subr.mxu0 0.0
    %3412 = vmatpush1.msra.mxu0 0.0
    %3413 = vmatprep.subr.mxu0 0.0
    %3414 = vmatpush1.msra.mxu0 0.0
    %3415 = vmatprep.subr.mxu0 0.0
    %3416 = vmatpush1.msra.mxu0 0.0
    %3417 = vmatprep.mubr.f32.mxu0 0.0
    %3418 = vmatmul.mubr.f32.gmra.mrb[0].mxu0 %v3351
    %v3419 = vpop.f32.mrb[0].mxu0
    %v3420 = vadd.f32 %v205, %v3419
    %v3421 = vpop.f32.mrb[0].mxu0
    %3422 = vdwg.mxu0
    %s3423 = scalar_lea.vmem [#allocation15], 6
    %3424 = vst [vmem:[%s3423] sm:$0x3] %v3420
    %v3425 = vsel %vm1748, %v3420, -inf
    %3426 = vmax.xlane.f32.xlu0 %v3425
    %v3427 = vpop.xlane.xlu0 %3426
    %vm3428 = vcmp.eq.f32.partialorder %v3420, %v3427
    %v3429 = vsel %vm3428, %v1866, 128
    %v3430 = vsel %vm1748, %v3429, 2147483647
    %v3431 = vand.u32 %v3430, 65535
    %v3432 = vshra.s32 %v3430, 16
    %v3433 = vcvt.s32.f32 %v3431
    %v3434 = vcvt.s32.f32 %v3432
    %3435 = vmin.xlane.f32.xlu0 %v3434
    %v3436 = vpop.xlane.xlu0 %3435
    %vm3437 = vcmp.eq.f32.partialorder %v3434, %v3436
    %v3438 = vsel %vm3437, %v3433, inf
    %3439 = vmin.xlane.f32.xlu0 %v3438
    %v3440 = vpop.xlane.xlu0 %3439
    %v3441 = vcvt.f32.s32 %v3440
    %v3442 = vcvt.f32.s32 %v3436
    %v3443 = vshll.u32 %v3442, 16
    %v3444 = vadd.s32 %v3443, %v3441
    %vm3445 = vcmp.eq.s32.totalorder %v1866, %v3444
    %v3446 = vsel %vm3445, 1, 0
    %v3447 = vcvt.s32.f32 %v3446
    %s3448 = sld [smem:[#allocation2 + $0x3]]
    %p3449 = scmp.eq.s32.totalorder %s3448, 1
    %s3450 = scalar_lea.vmem [#allocation7], 6
    %v3451 = vld [vmem:[%s3450] sm:$0x3]
    %s3452 = scalar_select %p3449, 1, 0
    %v3453 = vstv %s3452
    %vm3454 = vcmp.eq.s32.totalorder %v3453, 1
    %v3455 = vsel %vm3454, %v3451, %v3447
    %3456 = vmatprep.subr.mxu0 0.0
    %3457 = vmatpush1.msra.mxu0 %v148
    %3458 = vmatprep.subr.mxu0 0.0
    %3459 = vmatpush1.msra.mxu0 %v149
    %3460 = vmatprep.subr.mxu0 0.0
    %3461 = vmatpush1.msra.mxu0 %v150
    %3462 = vmatprep.subr.mxu0 0.0
    %3463 = vmatpush1.msra.mxu0 %v151
    %3464 = vmatprep.subr.mxu0 0.0
    %3465 = vmatpush1.msra.mxu0 %v152
    %3466 = vmatprep.subr.mxu0 0.0
    %3467 = vmatpush1.msra.mxu0 %v153
    %3468 = vmatprep.subr.mxu0 0.0
    %3469 = vmatpush1.msra.mxu0 %v154
    %3470 = vmatprep.subr.mxu0 0.0
    %3471 = vmatpush1.msra.mxu0 %v155
    %3472 = vmatprep.subr.mxu0 0.0
    %3473 = vmatpush1.msra.mxu0 %v156
    %3474 = vmatprep.subr.mxu0 0.0
    %3475 = vmatpush1.msra.mxu0 %v157
    %3476 = vmatprep.subr.mxu0 0.0
    %3477 = vmatpush1.msra.mxu0 %v158
    %3478 = vmatprep.subr.mxu0 0.0
    %3479 = vmatpush1.msra.mxu0 %v159
    %3480 = vmatprep.subr.mxu0 0.0
    %3481 = vmatpush1.msra.mxu0 %v160
    %3482 = vmatprep.subr.mxu0 0.0
    %3483 = vmatpush1.msra.mxu0 %v161
    %3484 = vmatprep.subr.mxu0 0.0
    %3485 = vmatpush1.msra.mxu0 %v162
    %3486 = vmatprep.subr.mxu0 0.0
    %3487 = vmatpush1.msra.mxu0 %v163
    %3488 = vmatprep.subr.mxu0 0.0
    %3489 = vmatpush1.msra.mxu0 0.0
    %3490 = vmatprep.subr.mxu0 0.0
    %3491 = vmatpush1.msra.mxu0 0.0
    %3492 = vmatprep.subr.mxu0 0.0
    %3493 = vmatpush1.msra.mxu0 0.0
    %3494 = vmatprep.subr.mxu0 0.0
    %3495 = vmatpush1.msra.mxu0 0.0
    %3496 = vmatprep.subr.mxu0 0.0
    %3497 = vmatpush1.msra.mxu0 0.0
    %3498 = vmatprep.subr.mxu0 0.0
    %3499 = vmatpush1.msra.mxu0 0.0
    %3500 = vmatprep.subr.mxu0 0.0
    %3501 = vmatpush1.msra.mxu0 0.0
    %3502 = vmatprep.subr.mxu0 0.0
    %3503 = vmatpush1.msra.mxu0 0.0
    %3504 = vmatprep.subr.mxu0 0.0
    %3505 = vmatpush1.msra.mxu0 0.0
    %3506 = vmatprep.subr.mxu0 0.0
    %3507 = vmatpush1.msra.mxu0 0.0
    %3508 = vmatprep.subr.mxu0 0.0
    %3509 = vmatpush1.msra.mxu0 0.0
    %3510 = vmatprep.subr.mxu0 0.0
    %3511 = vmatpush1.msra.mxu0 0.0
    %3512 = vmatprep.subr.mxu0 0.0
    %3513 = vmatpush1.msra.mxu0 0.0
    %3514 = vmatprep.subr.mxu0 0.0
    %3515 = vmatpush1.msra.mxu0 0.0
    %3516 = vmatprep.subr.mxu0 0.0
    %3517 = vmatpush1.msra.mxu0 0.0
    %3518 = vmatprep.subr.mxu0 0.0
    %3519 = vmatpush1.msra.mxu0 0.0
    %3520 = vmatprep.mubr.f32.mxu0 0.0
    %3521 = vmatmul.mubr.f32.gmra.mrb[0].mxu0 %v3455
    %v3522 = vpop.f32.mrb[0].mxu0
    %v3523 = vadd.f32 0.0, %v3522
    %v3524 = vpop.f32.mrb[0].mxu0
    %3525 = vdwg.mxu0
    %v3526 = vsel %vm390, %v3339, 0
    %3528 = vmatprep.subr.mxu0 0.0
    %3529 = vmatpush1.msra.mxu0 %v168
    %3530 = vmatprep.subr.mxu0 0.0
    %3531 = vmatpush1.msra.mxu0 %v169
    %3532 = vmatprep.subr.mxu0 0.0
    %3533 = vmatpush1.msra.mxu0 %v170
    %3534 = vmatprep.subr.mxu0 0.0
    %3535 = vmatpush1.msra.mxu0 %v171
    %3536 = vmatprep.subr.mxu0 0.0
    %3537 = vmatpush1.msra.mxu0 0.0
    %3538 = vmatprep.subr.mxu0 0.0
    %3539 = vmatpush1.msra.mxu0 0.0
    %3540 = vmatprep.subr.mxu0 0.0
    %3541 = vmatpush1.msra.mxu0 0.0
    %3542 = vmatprep.subr.mxu0 0.0
    %3543 = vmatpush1.msra.mxu0 0.0
    %3544 = vmatprep.subr.mxu0 0.0
    %3545 = vmatpush1.msra.mxu0 0.0
    %3546 = vmatprep.subr.mxu0 0.0
    %3547 = vmatpush1.msra.mxu0 0.0
    %3548 = vmatprep.subr.mxu0 0.0
    %3549 = vmatpush1.msra.mxu0 0.0
    %3550 = vmatprep.subr.mxu0 0.0
    %3551 = vmatpush1.msra.mxu0 0.0
    %3552 = vmatprep.subr.mxu0 0.0
    %3553 = vmatpush1.msra.mxu0 0.0
    %3554 = vmatprep.subr.mxu0 0.0
    %3555 = vmatpush1.msra.mxu0 0.0
    %3556 = vmatprep.subr.mxu0 0.0
    %3557 = vmatpush1.msra.mxu0 0.0
    %3558 = vmatprep.subr.mxu0 0.0
    %3559 = vmatpush1.msra.mxu0 0.0
    %3560 = vmatprep.subr.mxu0 0.0
    %3561 = vmatpush1.msra.mxu0 0.0
    %3562 = vmatprep.subr.mxu0 0.0
    %3563 = vmatpush1.msra.mxu0 0.0
    %3564 = vmatprep.subr.mxu0 0.0
    %3565 = vmatpush1.msra.mxu0 0.0
    %3566 = vmatprep.subr.mxu0 0.0
    %3567 = vmatpush1.msra.mxu0 0.0
    %3568 = vmatprep.subr.mxu0 0.0
    %3569 = vmatpush1.msra.mxu0 0.0
    %3570 = vmatprep.subr.mxu0 0.0
    %3571 = vmatpush1.msra.mxu0 0.0
    %3572 = vmatprep.subr.mxu0 0.0
    %3573 = vmatpush1.msra.mxu0 0.0
    %3574 = vmatprep.subr.mxu0 0.0
    %3575 = vmatpush1.msra.mxu0 0.0
    %3576 = vmatprep.subr.mxu0 0.0
    %3577 = vmatpush1.msra.mxu0 0.0
    %3578 = vmatprep.subr.mxu0 0.0
    %3579 = vmatpush1.msra.mxu0 0.0
    %3580 = vmatprep.subr.mxu0 0.0
    %3581 = vmatpush1.msra.mxu0 0.0
    %3582 = vmatprep.subr.mxu0 0.0
    %3583 = vmatpush1.msra.mxu0 0.0
    %3584 = vmatprep.subr.mxu0 0.0
    %3585 = vmatpush1.msra.mxu0 0.0
    %3586 = vmatprep.subr.mxu0 0.0
    %3587 = vmatpush1.msra.mxu0 0.0
    %3588 = vmatprep.subr.mxu0 0.0
    %3589 = vmatpush1.msra.mxu0 0.0
    %3590 = vmatprep.subr.mxu0 0.0
    %3591 = vmatpush1.msra.mxu0 0.0
    %3592 = vmatprep.mubr.f32.mxu0 0.0
    %3593 = vmatmul.mubr.f32.gmra.mrb[0].mxu0 %v3526
    %v3594 = vpop.f32.mrb[0].mxu0
    %v3595 = vadd.f32 0.0, %v3594
    %v3596 = vpop.f32.mrb[0].mxu0
    %3597 = vdwg.mxu0
    %v3600 = vunpack.c.l.s4 1966171168
    %v3601 = vunpack.c.0.s8 %v3600
    %v3602 = vlaneseq
    %v3603 = vshrl.u32 %v3602, 7
    %v3604 = vsub.s32 %v3601, %v3603
    %v3605 = vrot.slane %v3595, %v3604
    %v3606 = vcombine.high %v3605, %v3605
    %v3608 = vunpack.c.l.s4 1966171168
    %v3609 = vunpack.c.0.s8 %v3608
    %v3610 = vlaneseq
    %v3611 = vshrl.u32 %v3610, 7
    %v3612 = vsub.s32 %v3609, %v3611
    %v3613 = vrot.slane %v3605, %v3612
    %v3615 = vunpack.c.l.s4 1966171168
    %v3616 = vunpack.c.0.s8 %v3615
    %v3617 = vlaneseq
    %v3618 = vshrl.u32 %v3617, 7
    %v3619 = vsub.s32 %v3616, %v3618
    %v3620 = vrot.slane %v3606, %v3619
    %v3621 = vlaneseq
    %v3622 = vshrl.u32 %v3621, 7
    %v3623 = vsub.s32 0, %v3622
    %v3624 = vrot.slane %v3613, %v3623
    %v3625 = vlaneseq
    %v3626 = vshrl.u32 %v3625, 7
    %v3627 = vsub.s32 0, %v3626
    %v3628 = vrot.slane %v3620, %v3627
    %v3631 = vadd.f32 %v3624, %v1854
    %v3632 = vadd.f32 %v3628, %v1859
    %v3633 = vtanh.pop %v3631
    %v3634 = vtanh.pop %v3632
    %v3635 = vmul.f32 %v3633, %v2061
    %v3636 = vmul.f32 %v3634, %v2061
    %v3637 = vsel %vm390, %v3635, 0.0
    %3638 = vadd.xlane.f32.xlu0 %v3637
    %v3639 = vpop.xlane.xlu0 %3638
    %v3640 = vsel %vm390, %v3636, 0.0
    %3641 = vadd.xlane.f32.xlu0 %v3640
    %v3642 = vpop.xlane.xlu0 %3641
    %v3643 = vadd.f32 %v3639, %v2078
    %v3644 = vadd.f32 %v3642, %v2085
    %3647 = vset.pattern.permute.xlu0 0
    %3648 = vperm.xlu0 %3647, %v3643
    %v3649 = vpop.permute.xlu0 %3648
    %3650 = vset.pattern.permute.xlu0 0
    %3651 = vperm.xlu0 %3650, %v3644
    %v3652 = vpop.permute.xlu0 %3651
    %v3653 = vlaneseq
    %v3654 = vshrl.u32 %v3653, 7
    %v3655 = vsub.s32 %v1866, %v3654
    %v3656 = vrot.slane %v3649, %v3655
    %v3657 = vlaneseq
    %v3658 = vshrl.u32 %v3657, 7
    %v3659 = vsub.s32 %v1866, %v3658
    %v3660 = vrot.slane %v3652, %v3659
    %v3661 = vsel %vm2106, %v3660, %v3656
    %v3663 = vsel %vm2109, %v3661, -inf
    %3664 = vmax.xlane.f32.xlu0 %v3663
    %v3665 = vpop.xlane.xlu0 %3664
    %v3667 = vlaneseq
    %v3668 = vshrl.u32 %v3667, 7
    %v3669 = vsub.s32 0, %v3668
    %v3670 = vrot.slane %v3665, %v3669
    %v3671 = vlaneseq
    %v3672 = vshrl.u32 %v3671, 7
    %v3673 = vsub.s32 1, %v3672
    %v3674 = vrot.slane %v3665, %v3673
    %v3677 = vsub.f32 %v3643, %v3670
    %v3678 = vsub.f32 %v3644, %v3674
    %v3679 = vmul.f32 %v3677, 1.442695
    %v3680 = vpow.pop %v3679
    %v3681 = vmul.f32 %v3678, 1.442695
    %v3682 = vpow.pop %v3681
    %3685 = vset.pattern.permute.xlu0 0
    %3686 = vperm.xlu0 %3685, %v3680
    %v3687 = vpop.permute.xlu0 %3686
    %3688 = vset.pattern.permute.xlu0 0
    %3689 = vperm.xlu0 %3688, %v3682
    %v3690 = vpop.permute.xlu0 %3689
    %v3691 = vlaneseq
    %v3692 = vshrl.u32 %v3691, 7
    %v3693 = vsub.s32 %v1866, %v3692
    %v3694 = vrot.slane %v3687, %v3693
    %v3695 = vlaneseq
    %v3696 = vshrl.u32 %v3695, 7
    %v3697 = vsub.s32 %v1866, %v3696
    %v3698 = vrot.slane %v3690, %v3697
    %v3699 = vsel %vm2106, %v3698, %v3694
    %v3701 = vsel %vm2109, %v3699, 0.0
    %3702 = vadd.xlane.f32.xlu0 %v3701
    %v3703 = vpop.xlane.xlu0 %3702
    %v3704 = vrcp.pop %v3703
    %v3706 = vlaneseq
    %v3707 = vshrl.u32 %v3706, 7
    %v3708 = vsub.s32 0, %v3707
    %v3709 = vrot.slane %v3704, %v3708
    %v3710 = vlaneseq
    %v3711 = vshrl.u32 %v3710, 7
    %v3712 = vsub.s32 1, %v3711
    %v3713 = vrot.slane %v3704, %v3712
    %v3716 = vmul.f32 %v3680, %v3709
    %v3717 = vmul.f32 %v3682, %v3713
    %3719 = vset.pattern.permute.xlu0 0
    %3720 = vperm.xlu0 %3719, %v3716
    %v3721 = vpop.permute.xlu0 %3720
    %3724 = vset.pattern.permute.xlu0 0
    %3725 = vperm.xlu0 %3724, %v3717
    %v3726 = vpop.permute.xlu0 %3725
    %v3728 = vmul.f32 %v3721, %v1764
    %v3729 = vmul.f32 %v3726, %v1765
    %v3730 = vsel %vm2177, %v3728, 0.0
    %v3731 = vrot.slane %v3730, 4
    %v3732 = vadd.f32 %v3730, %v3731
    %v3733 = vrot.slane %v3732, 2
    %v3734 = vadd.f32 %v3732, %v3733
    %v3735 = vrot.slane %v3734, 1
    %v3736 = vadd.f32 %v3734, %v3735
    %v3737 = vsel %vm2177, %v3729, 0.0
    %v3738 = vrot.slane %v3737, 4
    %v3739 = vadd.f32 %v3737, %v3738
    %v3740 = vrot.slane %v3739, 2
    %v3741 = vadd.f32 %v3739, %v3740
    %v3742 = vrot.slane %v3741, 1
    %v3743 = vadd.f32 %v3741, %v3742
    %v3746 = vsel %vm2106, %v3743, %v3736
    %3747 = vrot.lane.b32.xlu0 %v3746, 48
    %v3748 = vpop.permute.xlu0 %3747
    %3750 = vrot.lane.b32.xlu0 %v3336, 80
    %v3751 = vpop.permute.xlu0 %3750
    %v3753 = vsel %vm266, %v3523, %v3748
    %v3754 = vsel %vm2202, %v3753, %v3751
    %v3756 = vsel %vm2204, %v3754, 0
    %3758 = vmatprep.subr.mxu0 0.0
    %3759 = vmatpush1.msra.mxu0 %v173
    %3760 = vmatprep.subr.mxu0 0.0
    %3761 = vmatpush1.msra.mxu0 %v174
    %3762 = vmatprep.subr.mxu0 0.0
    %3763 = vmatpush1.msra.mxu0 %v175
    %3764 = vmatprep.subr.mxu0 0.0
    %3765 = vmatpush1.msra.mxu0 %v176
    %3766 = vmatprep.subr.mxu0 0.0
    %3767 = vmatpush1.msra.mxu0 %v177
    %3768 = vmatprep.subr.mxu0 0.0
    %3769 = vmatpush1.msra.mxu0 %v178
    %3770 = vmatprep.subr.mxu0 0.0
    %3771 = vmatpush1.msra.mxu0 %v179
    %3772 = vmatprep.subr.mxu0 0.0
    %3773 = vmatpush1.msra.mxu0 %v180
    %3774 = vmatprep.subr.mxu0 0.0
    %3775 = vmatpush1.msra.mxu0 %v181
    %3776 = vmatprep.subr.mxu0 0.0
    %3777 = vmatpush1.msra.mxu0 %v182
    %3778 = vmatprep.subr.mxu0 0.0
    %3779 = vmatpush1.msra.mxu0 0.0
    %3780 = vmatprep.subr.mxu0 0.0
    %3781 = vmatpush1.msra.mxu0 0.0
    %3782 = vmatprep.subr.mxu0 0.0
    %3783 = vmatpush1.msra.mxu0 0.0
    %3784 = vmatprep.subr.mxu0 0.0
    %3785 = vmatpush1.msra.mxu0 0.0
    %3786 = vmatprep.subr.mxu0 0.0
    %3787 = vmatpush1.msra.mxu0 0.0
    %3788 = vmatprep.subr.mxu0 0.0
    %3789 = vmatpush1.msra.mxu0 0.0
    %3790 = vmatprep.subr.mxu0 0.0
    %3791 = vmatpush1.msra.mxu0 0.0
    %3792 = vmatprep.subr.mxu0 0.0
    %3793 = vmatpush1.msra.mxu0 0.0
    %3794 = vmatprep.subr.mxu0 0.0
    %3795 = vmatpush1.msra.mxu0 0.0
    %3796 = vmatprep.subr.mxu0 0.0
    %3797 = vmatpush1.msra.mxu0 0.0
    %3798 = vmatprep.subr.mxu0 0.0
    %3799 = vmatpush1.msra.mxu0 0.0
    %3800 = vmatprep.subr.mxu0 0.0
    %3801 = vmatpush1.msra.mxu0 0.0
    %3802 = vmatprep.subr.mxu0 0.0
    %3803 = vmatpush1.msra.mxu0 0.0
    %3804 = vmatprep.subr.mxu0 0.0
    %3805 = vmatpush1.msra.mxu0 0.0
    %3806 = vmatprep.subr.mxu0 0.0
    %3807 = vmatpush1.msra.mxu0 0.0
    %3808 = vmatprep.subr.mxu0 0.0
    %3809 = vmatpush1.msra.mxu0 0.0
    %3810 = vmatprep.subr.mxu0 0.0
    %3811 = vmatpush1.msra.mxu0 0.0
    %3812 = vmatprep.subr.mxu0 0.0
    %3813 = vmatpush1.msra.mxu0 0.0
    %3814 = vmatprep.subr.mxu0 0.0
    %3815 = vmatpush1.msra.mxu0 0.0
    %3816 = vmatprep.subr.mxu0 0.0
    %3817 = vmatpush1.msra.mxu0 0.0
    %3818 = vmatprep.subr.mxu0 0.0
    %3819 = vmatpush1.msra.mxu0 0.0
    %3820 = vmatprep.subr.mxu0 0.0
    %3821 = vmatpush1.msra.mxu0 0.0
    %3822 = vmatprep.mubr.f32.mxu0 0.0
    %3823 = vmatmul.mubr.f32.gmra.mrb[0].mxu0 %v3756
    %v3824 = vpop.f32.mrb[0].mxu0
    %v3825 = vadd.f32 %v198, %v3824
    %v3826 = vpop.f32.mrb[0].mxu0
    %3827 = vdwg.mxu0
    %v3828 = vxor.u32 %v3825, 2147483648
    %v3829 = vmul.f32 %v3828, 1.442695
    %v3830 = vpow.pop %v3829
    %v3831 = vadd.f32 %v3830, 1.0
    %v3832 = vrcp.pop %v3831
    %v3833 = vmul.f32 1.0, %v3832
    %v3834 = vtanh.pop %v3825
    %v3835 = vmul.f32 %v3833, %v3330
    %3837 = vrot.lane.b32.xlu0 %v3834, 64
    %v3838 = vpop.permute.xlu0 %3837
    %v3840 = vmul.f32 %v3833, %v3838
    %3842 = vrot.lane.b32.xlu0 %v3840, 32
    %v3843 = vpop.permute.xlu0 %3842
    %v3845 = vadd.f32 %v3835, %v3843
    %v3846 = vtanh.pop %v3845
    %3848 = vrot.lane.b32.xlu0 %v3846, 64
    %v3849 = vpop.permute.xlu0 %3848
    %v3851 = vmul.f32 %v3833, %v3849
    %3853 = vrot.lane.b32.xlu0 %v3851, 32
    %v3854 = vpop.permute.xlu0 %3853
    %3856 = vrot.lane.b32.xlu0 %v3746, 64
    %v3857 = vpop.permute.xlu0 %3856
    %3860 = vrot.lane.b32.xlu0 %v3523, 64
    %v3861 = vpop.permute.xlu0 %3860
    %v3863 = vsel %vm390, %v3854, %v3857
    %v3864 = vsel %vm2318, %v3863, %v3861
    %v3866 = vsel %vm2204, %v3864, 0
    %3868 = vmatprep.subr.mxu0 0.0
    %3869 = vmatpush1.msra.mxu0 %v183
    %3870 = vmatprep.subr.mxu0 0.0
    %3871 = vmatpush1.msra.mxu0 %v184
    %3872 = vmatprep.subr.mxu0 0.0
    %3873 = vmatpush1.msra.mxu0 %v185
    %3874 = vmatprep.subr.mxu0 0.0
    %3875 = vmatpush1.msra.mxu0 %v186
    %3876 = vmatprep.subr.mxu0 0.0
    %3877 = vmatpush1.msra.mxu0 %v187
    %3878 = vmatprep.subr.mxu0 0.0
    %3879 = vmatpush1.msra.mxu0 %v188
    %3880 = vmatprep.subr.mxu0 0.0
    %3881 = vmatpush1.msra.mxu0 %v189
    %3882 = vmatprep.subr.mxu0 0.0
    %3883 = vmatpush1.msra.mxu0 %v190
    %3884 = vmatprep.subr.mxu0 0.0
    %3885 = vmatpush1.msra.mxu0 %v191
    %3886 = vmatprep.subr.mxu0 0.0
    %3887 = vmatpush1.msra.mxu0 %v192
    %3888 = vmatprep.subr.mxu0 0.0
    %3889 = vmatpush1.msra.mxu0 0.0
    %3890 = vmatprep.subr.mxu0 0.0
    %3891 = vmatpush1.msra.mxu0 0.0
    %3892 = vmatprep.subr.mxu0 0.0
    %3893 = vmatpush1.msra.mxu0 0.0
    %3894 = vmatprep.subr.mxu0 0.0
    %3895 = vmatpush1.msra.mxu0 0.0
    %3896 = vmatprep.subr.mxu0 0.0
    %3897 = vmatpush1.msra.mxu0 0.0
    %3898 = vmatprep.subr.mxu0 0.0
    %3899 = vmatpush1.msra.mxu0 0.0
    %3900 = vmatprep.subr.mxu0 0.0
    %3901 = vmatpush1.msra.mxu0 0.0
    %3902 = vmatprep.subr.mxu0 0.0
    %3903 = vmatpush1.msra.mxu0 0.0
    %3904 = vmatprep.subr.mxu0 0.0
    %3905 = vmatpush1.msra.mxu0 0.0
    %3906 = vmatprep.subr.mxu0 0.0
    %3907 = vmatpush1.msra.mxu0 0.0
    %3908 = vmatprep.subr.mxu0 0.0
    %3909 = vmatpush1.msra.mxu0 0.0
    %3910 = vmatprep.subr.mxu0 0.0
    %3911 = vmatpush1.msra.mxu0 0.0
    %3912 = vmatprep.subr.mxu0 0.0
    %3913 = vmatpush1.msra.mxu0 0.0
    %3914 = vmatprep.subr.mxu0 0.0
    %3915 = vmatpush1.msra.mxu0 0.0
    %3916 = vmatprep.subr.mxu0 0.0
    %3917 = vmatpush1.msra.mxu0 0.0
    %3918 = vmatprep.subr.mxu0 0.0
    %3919 = vmatpush1.msra.mxu0 0.0
    %3920 = vmatprep.subr.mxu0 0.0
    %3921 = vmatpush1.msra.mxu0 0.0
    %3922 = vmatprep.subr.mxu0 0.0
    %3923 = vmatpush1.msra.mxu0 0.0
    %3924 = vmatprep.subr.mxu0 0.0
    %3925 = vmatpush1.msra.mxu0 0.0
    %3926 = vmatprep.subr.mxu0 0.0
    %3927 = vmatpush1.msra.mxu0 0.0
    %3928 = vmatprep.subr.mxu0 0.0
    %3929 = vmatpush1.msra.mxu0 0.0
    %3930 = vmatprep.subr.mxu0 0.0
    %3931 = vmatpush1.msra.mxu0 0.0
    %3932 = vmatprep.mubr.f32.mxu0 0.0
    %3933 = vmatmul.mubr.f32.gmra.mrb[0].mxu0 %v3866
    %v3934 = vpop.f32.mrb[0].mxu0
    %v3935 = vadd.f32 %v205, %v3934
    %v3936 = vpop.f32.mrb[0].mxu0
    %3937 = vdwg.mxu0
    %s3938 = scalar_lea.vmem [#allocation15], 8
    %3939 = vst [vmem:[%s3938] sm:$0x3] %v3935
    %v3940 = vsel %vm1748, %v3935, -inf
    %3941 = vmax.xlane.f32.xlu0 %v3940
    %v3942 = vpop.xlane.xlu0 %3941
    %vm3943 = vcmp.eq.f32.partialorder %v3935, %v3942
    %v3944 = vsel %vm3943, %v1866, 128
    %v3945 = vsel %vm1748, %v3944, 2147483647
    %v3946 = vand.u32 %v3945, 65535
    %v3947 = vshra.s32 %v3945, 16
    %v3948 = vcvt.s32.f32 %v3946
    %v3949 = vcvt.s32.f32 %v3947
    %3950 = vmin.xlane.f32.xlu0 %v3949
    %v3951 = vpop.xlane.xlu0 %3950
    %vm3952 = vcmp.eq.f32.partialorder %v3949, %v3951
    %v3953 = vsel %vm3952, %v3948, inf
    %3954 = vmin.xlane.f32.xlu0 %v3953
    %v3955 = vpop.xlane.xlu0 %3954
    %v3956 = vcvt.f32.s32 %v3955
    %v3957 = vcvt.f32.s32 %v3951
    %v3958 = vshll.u32 %v3957, 16
    %v3959 = vadd.s32 %v3958, %v3956
    %vm3960 = vcmp.eq.s32.totalorder %v1866, %v3959
    %v3961 = vsel %vm3960, 1, 0
    %v3962 = vcvt.s32.f32 %v3961
    %s3963 = sld [smem:[#allocation2 + $0x4]]
    %p3964 = scmp.eq.s32.totalorder %s3963, 1
    %s3965 = scalar_lea.vmem [#allocation7], 8
    %v3966 = vld [vmem:[%s3965] sm:$0x3]
    %s3967 = scalar_select %p3964, 1, 0
    %v3968 = vstv %s3967
    %vm3969 = vcmp.eq.s32.totalorder %v3968, 1
    %v3970 = vsel %vm3969, %v3966, %v3962
    %3971 = vmatprep.subr.mxu0 0.0
    %3972 = vmatpush1.msra.mxu0 %v148
    %3973 = vmatprep.subr.mxu0 0.0
    %3974 = vmatpush1.msra.mxu0 %v149
    %3975 = vmatprep.subr.mxu0 0.0
    %3976 = vmatpush1.msra.mxu0 %v150
    %3977 = vmatprep.subr.mxu0 0.0
    %3978 = vmatpush1.msra.mxu0 %v151
    %3979 = vmatprep.subr.mxu0 0.0
    %3980 = vmatpush1.msra.mxu0 %v152
    %3981 = vmatprep.subr.mxu0 0.0
    %3982 = vmatpush1.msra.mxu0 %v153
    %3983 = vmatprep.subr.mxu0 0.0
    %3984 = vmatpush1.msra.mxu0 %v154
    %3985 = vmatprep.subr.mxu0 0.0
    %3986 = vmatpush1.msra.mxu0 %v155
    %3987 = vmatprep.subr.mxu0 0.0
    %3988 = vmatpush1.msra.mxu0 %v156
    %3989 = vmatprep.subr.mxu0 0.0
    %3990 = vmatpush1.msra.mxu0 %v157
    %3991 = vmatprep.subr.mxu0 0.0
    %3992 = vmatpush1.msra.mxu0 %v158
    %3993 = vmatprep.subr.mxu0 0.0
    %3994 = vmatpush1.msra.mxu0 %v159
    %3995 = vmatprep.subr.mxu0 0.0
    %3996 = vmatpush1.msra.mxu0 %v160
    %3997 = vmatprep.subr.mxu0 0.0
    %3998 = vmatpush1.msra.mxu0 %v161
    %3999 = vmatprep.subr.mxu0 0.0
    %4000 = vmatpush1.msra.mxu0 %v162
    %4001 = vmatprep.subr.mxu0 0.0
    %4002 = vmatpush1.msra.mxu0 %v163
    %4003 = vmatprep.subr.mxu0 0.0
    %4004 = vmatpush1.msra.mxu0 0.0
    %4005 = vmatprep.subr.mxu0 0.0
    %4006 = vmatpush1.msra.mxu0 0.0
    %4007 = vmatprep.subr.mxu0 0.0
    %4008 = vmatpush1.msra.mxu0 0.0
    %4009 = vmatprep.subr.mxu0 0.0
    %4010 = vmatpush1.msra.mxu0 0.0
    %4011 = vmatprep.subr.mxu0 0.0
    %4012 = vmatpush1.msra.mxu0 0.0
    %4013 = vmatprep.subr.mxu0 0.0
    %4014 = vmatpush1.msra.mxu0 0.0
    %4015 = vmatprep.subr.mxu0 0.0
    %4016 = vmatpush1.msra.mxu0 0.0
    %4017 = vmatprep.subr.mxu0 0.0
    %4018 = vmatpush1.msra.mxu0 0.0
    %4019 = vmatprep.subr.mxu0 0.0
    %4020 = vmatpush1.msra.mxu0 0.0
    %4021 = vmatprep.subr.mxu0 0.0
    %4022 = vmatpush1.msra.mxu0 0.0
    %4023 = vmatprep.subr.mxu0 0.0
    %4024 = vmatpush1.msra.mxu0 0.0
    %4025 = vmatprep.subr.mxu0 0.0
    %4026 = vmatpush1.msra.mxu0 0.0
    %4027 = vmatprep.subr.mxu0 0.0
    %4028 = vmatpush1.msra.mxu0 0.0
    %4029 = vmatprep.subr.mxu0 0.0
    %4030 = vmatpush1.msra.mxu0 0.0
    %4031 = vmatprep.subr.mxu0 0.0
    %4032 = vmatpush1.msra.mxu0 0.0
    %4033 = vmatprep.subr.mxu0 0.0
    %4034 = vmatpush1.msra.mxu0 0.0
    %4035 = vmatprep.mubr.f32.mxu0 0.0
    %4036 = vmatmul.mubr.f32.gmra.mrb[0].mxu0 %v3970
    %v4037 = vpop.f32.mrb[0].mxu0
    %v4038 = vadd.f32 0.0, %v4037
    %v4039 = vpop.f32.mrb[0].mxu0
    %4040 = vdwg.mxu0
    %v4041 = vsel %vm390, %v3854, 0
    %4043 = vmatprep.subr.mxu0 0.0
    %4044 = vmatpush1.msra.mxu0 %v168
    %4045 = vmatprep.subr.mxu0 0.0
    %4046 = vmatpush1.msra.mxu0 %v169
    %4047 = vmatprep.subr.mxu0 0.0
    %4048 = vmatpush1.msra.mxu0 %v170
    %4049 = vmatprep.subr.mxu0 0.0
    %4050 = vmatpush1.msra.mxu0 %v171
    %4051 = vmatprep.subr.mxu0 0.0
    %4052 = vmatpush1.msra.mxu0 0.0
    %4053 = vmatprep.subr.mxu0 0.0
    %4054 = vmatpush1.msra.mxu0 0.0
    %4055 = vmatprep.subr.mxu0 0.0
    %4056 = vmatpush1.msra.mxu0 0.0
    %4057 = vmatprep.subr.mxu0 0.0
    %4058 = vmatpush1.msra.mxu0 0.0
    %4059 = vmatprep.subr.mxu0 0.0
    %4060 = vmatpush1.msra.mxu0 0.0
    %4061 = vmatprep.subr.mxu0 0.0
    %4062 = vmatpush1.msra.mxu0 0.0
    %4063 = vmatprep.subr.mxu0 0.0
    %4064 = vmatpush1.msra.mxu0 0.0
    %4065 = vmatprep.subr.mxu0 0.0
    %4066 = vmatpush1.msra.mxu0 0.0
    %4067 = vmatprep.subr.mxu0 0.0
    %4068 = vmatpush1.msra.mxu0 0.0
    %4069 = vmatprep.subr.mxu0 0.0
    %4070 = vmatpush1.msra.mxu0 0.0
    %4071 = vmatprep.subr.mxu0 0.0
    %4072 = vmatpush1.msra.mxu0 0.0
    %4073 = vmatprep.subr.mxu0 0.0
    %4074 = vmatpush1.msra.mxu0 0.0
    %4075 = vmatprep.subr.mxu0 0.0
    %4076 = vmatpush1.msra.mxu0 0.0
    %4077 = vmatprep.subr.mxu0 0.0
    %4078 = vmatpush1.msra.mxu0 0.0
    %4079 = vmatprep.subr.mxu0 0.0
    %4080 = vmatpush1.msra.mxu0 0.0
    %4081 = vmatprep.subr.mxu0 0.0
    %4082 = vmatpush1.msra.mxu0 0.0
    %4083 = vmatprep.subr.mxu0 0.0
    %4084 = vmatpush1.msra.mxu0 0.0
    %4085 = vmatprep.subr.mxu0 0.0
    %4086 = vmatpush1.msra.mxu0 0.0
    %4087 = vmatprep.subr.mxu0 0.0
    %4088 = vmatpush1.msra.mxu0 0.0
    %4089 = vmatprep.subr.mxu0 0.0
    %4090 = vmatpush1.msra.mxu0 0.0
    %4091 = vmatprep.subr.mxu0 0.0
    %4092 = vmatpush1.msra.mxu0 0.0
    %4093 = vmatprep.subr.mxu0 0.0
    %4094 = vmatpush1.msra.mxu0 0.0
    %4095 = vmatprep.subr.mxu0 0.0
    %4096 = vmatpush1.msra.mxu0 0.0
    %4097 = vmatprep.subr.mxu0 0.0
    %4098 = vmatpush1.msra.mxu0 0.0
    %4099 = vmatprep.subr.mxu0 0.0
    %4100 = vmatpush1.msra.mxu0 0.0
    %4101 = vmatprep.subr.mxu0 0.0
    %4102 = vmatpush1.msra.mxu0 0.0
    %4103 = vmatprep.subr.mxu0 0.0
    %4104 = vmatpush1.msra.mxu0 0.0
    %4105 = vmatprep.subr.mxu0 0.0
    %4106 = vmatpush1.msra.mxu0 0.0
    %4107 = vmatprep.mubr.f32.mxu0 0.0
    %4108 = vmatmul.mubr.f32.gmra.mrb[0].mxu0 %v4041
    %v4109 = vpop.f32.mrb[0].mxu0
    %v4110 = vadd.f32 0.0, %v4109
    %v4111 = vpop.f32.mrb[0].mxu0
    %4112 = vdwg.mxu0
    %v4115 = vunpack.c.l.s4 1966171168
    %v4116 = vunpack.c.0.s8 %v4115
    %v4117 = vlaneseq
    %v4118 = vshrl.u32 %v4117, 7
    %v4119 = vsub.s32 %v4116, %v4118
    %v4120 = vrot.slane %v4110, %v4119
    %v4121 = vcombine.high %v4120, %v4120
    %v4123 = vunpack.c.l.s4 1966171168
    %v4124 = vunpack.c.0.s8 %v4123
    %v4125 = vlaneseq
    %v4126 = vshrl.u32 %v4125, 7
    %v4127 = vsub.s32 %v4124, %v4126
    %v4128 = vrot.slane %v4120, %v4127
    %v4130 = vunpack.c.l.s4 1966171168
    %v4131 = vunpack.c.0.s8 %v4130
    %v4132 = vlaneseq
    %v4133 = vshrl.u32 %v4132, 7
    %v4134 = vsub.s32 %v4131, %v4133
    %v4135 = vrot.slane %v4121, %v4134
    %v4136 = vlaneseq
    %v4137 = vshrl.u32 %v4136, 7
    %v4138 = vsub.s32 0, %v4137
    %v4139 = vrot.slane %v4128, %v4138
    %v4140 = vlaneseq
    %v4141 = vshrl.u32 %v4140, 7
    %v4142 = vsub.s32 0, %v4141
    %v4143 = vrot.slane %v4135, %v4142
    %v4146 = vadd.f32 %v4139, %v1854
    %v4147 = vadd.f32 %v4143, %v1859
    %v4148 = vtanh.pop %v4146
    %v4149 = vtanh.pop %v4147
    %v4150 = vmul.f32 %v4148, %v2061
    %v4151 = vmul.f32 %v4149, %v2061
    %v4152 = vsel %vm390, %v4150, 0.0
    %4153 = vadd.xlane.f32.xlu0 %v4152
    %v4154 = vpop.xlane.xlu0 %4153
    %v4155 = vsel %vm390, %v4151, 0.0
    %4156 = vadd.xlane.f32.xlu0 %v4155
    %v4157 = vpop.xlane.xlu0 %4156
    %v4158 = vadd.f32 %v4154, %v2078
    %v4159 = vadd.f32 %v4157, %v2085
    %4162 = vset.pattern.permute.xlu0 0
    %4163 = vperm.xlu0 %4162, %v4158
    %v4164 = vpop.permute.xlu0 %4163
    %4165 = vset.pattern.permute.xlu0 0
    %4166 = vperm.xlu0 %4165, %v4159
    %v4167 = vpop.permute.xlu0 %4166
    %v4168 = vlaneseq
    %v4169 = vshrl.u32 %v4168, 7
    %v4170 = vsub.s32 %v1866, %v4169
    %v4171 = vrot.slane %v4164, %v4170
    %v4172 = vlaneseq
    %v4173 = vshrl.u32 %v4172, 7
    %v4174 = vsub.s32 %v1866, %v4173
    %v4175 = vrot.slane %v4167, %v4174
    %v4176 = vsel %vm2106, %v4175, %v4171
    %v4178 = vsel %vm2109, %v4176, -inf
    %4179 = vmax.xlane.f32.xlu0 %v4178
    %v4180 = vpop.xlane.xlu0 %4179
    %v4182 = vlaneseq
    %v4183 = vshrl.u32 %v4182, 7
    %v4184 = vsub.s32 0, %v4183
    %v4185 = vrot.slane %v4180, %v4184
    %v4186 = vlaneseq
    %v4187 = vshrl.u32 %v4186, 7
    %v4188 = vsub.s32 1, %v4187
    %v4189 = vrot.slane %v4180, %v4188
    %v4192 = vsub.f32 %v4158, %v4185
    %v4193 = vsub.f32 %v4159, %v4189
    %v4194 = vmul.f32 %v4192, 1.442695
    %v4195 = vpow.pop %v4194
    %v4196 = vmul.f32 %v4193, 1.442695
    %v4197 = vpow.pop %v4196
    %4200 = vset.pattern.permute.xlu0 0
    %4201 = vperm.xlu0 %4200, %v4195
    %v4202 = vpop.permute.xlu0 %4201
    %4203 = vset.pattern.permute.xlu0 0
    %4204 = vperm.xlu0 %4203, %v4197
    %v4205 = vpop.permute.xlu0 %4204
    %v4206 = vlaneseq
    %v4207 = vshrl.u32 %v4206, 7
    %v4208 = vsub.s32 %v1866, %v4207
    %v4209 = vrot.slane %v4202, %v4208
    %v4210 = vlaneseq
    %v4211 = vshrl.u32 %v4210, 7
    %v4212 = vsub.s32 %v1866, %v4211
    %v4213 = vrot.slane %v4205, %v4212
    %v4214 = vsel %vm2106, %v4213, %v4209
    %v4216 = vsel %vm2109, %v4214, 0.0
    %4217 = vadd.xlane.f32.xlu0 %v4216
    %v4218 = vpop.xlane.xlu0 %4217
    %v4219 = vrcp.pop %v4218
    %v4221 = vlaneseq
    %v4222 = vshrl.u32 %v4221, 7
    %v4223 = vsub.s32 0, %v4222
    %v4224 = vrot.slane %v4219, %v4223
    %v4225 = vlaneseq
    %v4226 = vshrl.u32 %v4225, 7
    %v4227 = vsub.s32 1, %v4226
    %v4228 = vrot.slane %v4219, %v4227
    %v4231 = vmul.f32 %v4195, %v4224
    %v4232 = vmul.f32 %v4197, %v4228
    %4234 = vset.pattern.permute.xlu0 0
    %4235 = vperm.xlu0 %4234, %v4231
    %v4236 = vpop.permute.xlu0 %4235
    %4239 = vset.pattern.permute.xlu0 0
    %4240 = vperm.xlu0 %4239, %v4232
    %v4241 = vpop.permute.xlu0 %4240
    %v4243 = vmul.f32 %v4236, %v1764
    %v4244 = vmul.f32 %v4241, %v1765
    %v4245 = vsel %vm2177, %v4243, 0.0
    %v4246 = vrot.slane %v4245, 4
    %v4247 = vadd.f32 %v4245, %v4246
    %v4248 = vrot.slane %v4247, 2
    %v4249 = vadd.f32 %v4247, %v4248
    %v4250 = vrot.slane %v4249, 1
    %v4251 = vadd.f32 %v4249, %v4250
    %v4252 = vsel %vm2177, %v4244, 0.0
    %v4253 = vrot.slane %v4252, 4
    %v4254 = vadd.f32 %v4252, %v4253
    %v4255 = vrot.slane %v4254, 2
    %v4256 = vadd.f32 %v4254, %v4255
    %v4257 = vrot.slane %v4256, 1
    %v4258 = vadd.f32 %v4256, %v4257
    %v4261 = vsel %vm2106, %v4258, %v4251
    %4262 = vrot.lane.b32.xlu0 %v4261, 48
    %v4263 = vpop.permute.xlu0 %4262
    %4265 = vrot.lane.b32.xlu0 %v3851, 80
    %v4266 = vpop.permute.xlu0 %4265
    %v4268 = vsel %vm266, %v4038, %v4263
    %v4269 = vsel %vm2202, %v4268, %v4266
    %v4271 = vsel %vm2204, %v4269, 0
    %4273 = vmatprep.subr.mxu0 0.0
    %4274 = vmatpush1.msra.mxu0 %v173
    %4275 = vmatprep.subr.mxu0 0.0
    %4276 = vmatpush1.msra.mxu0 %v174
    %4277 = vmatprep.subr.mxu0 0.0
    %4278 = vmatpush1.msra.mxu0 %v175
    %4279 = vmatprep.subr.mxu0 0.0
    %4280 = vmatpush1.msra.mxu0 %v176
    %4281 = vmatprep.subr.mxu0 0.0
    %4282 = vmatpush1.msra.mxu0 %v177
    %4283 = vmatprep.subr.mxu0 0.0
    %4284 = vmatpush1.msra.mxu0 %v178
    %4285 = vmatprep.subr.mxu0 0.0
    %4286 = vmatpush1.msra.mxu0 %v179
    %4287 = vmatprep.subr.mxu0 0.0
    %4288 = vmatpush1.msra.mxu0 %v180
    %4289 = vmatprep.subr.mxu0 0.0
    %4290 = vmatpush1.msra.mxu0 %v181
    %4291 = vmatprep.subr.mxu0 0.0
    %4292 = vmatpush1.msra.mxu0 %v182
    %4293 = vmatprep.subr.mxu0 0.0
    %4294 = vmatpush1.msra.mxu0 0.0
    %4295 = vmatprep.subr.mxu0 0.0
    %4296 = vmatpush1.msra.mxu0 0.0
    %4297 = vmatprep.subr.mxu0 0.0
    %4298 = vmatpush1.msra.mxu0 0.0
    %4299 = vmatprep.subr.mxu0 0.0
    %4300 = vmatpush1.msra.mxu0 0.0
    %4301 = vmatprep.subr.mxu0 0.0
    %4302 = vmatpush1.msra.mxu0 0.0
    %4303 = vmatprep.subr.mxu0 0.0
    %4304 = vmatpush1.msra.mxu0 0.0
    %4305 = vmatprep.subr.mxu0 0.0
    %4306 = vmatpush1.msra.mxu0 0.0
    %4307 = vmatprep.subr.mxu0 0.0
    %4308 = vmatpush1.msra.mxu0 0.0
    %4309 = vmatprep.subr.mxu0 0.0
    %4310 = vmatpush1.msra.mxu0 0.0
    %4311 = vmatprep.subr.mxu0 0.0
    %4312 = vmatpush1.msra.mxu0 0.0
    %4313 = vmatprep.subr.mxu0 0.0
    %4314 = vmatpush1.msra.mxu0 0.0
    %4315 = vmatprep.subr.mxu0 0.0
    %4316 = vmatpush1.msra.mxu0 0.0
    %4317 = vmatprep.subr.mxu0 0.0
    %4318 = vmatpush1.msra.mxu0 0.0
    %4319 = vmatprep.subr.mxu0 0.0
    %4320 = vmatpush1.msra.mxu0 0.0
    %4321 = vmatprep.subr.mxu0 0.0
    %4322 = vmatpush1.msra.mxu0 0.0
    %4323 = vmatprep.subr.mxu0 0.0
    %4324 = vmatpush1.msra.mxu0 0.0
    %4325 = vmatprep.subr.mxu0 0.0
    %4326 = vmatpush1.msra.mxu0 0.0
    %4327 = vmatprep.subr.mxu0 0.0
    %4328 = vmatpush1.msra.mxu0 0.0
    %4329 = vmatprep.subr.mxu0 0.0
    %4330 = vmatpush1.msra.mxu0 0.0
    %4331 = vmatprep.subr.mxu0 0.0
    %4332 = vmatpush1.msra.mxu0 0.0
    %4333 = vmatprep.subr.mxu0 0.0
    %4334 = vmatpush1.msra.mxu0 0.0
    %4335 = vmatprep.subr.mxu0 0.0
    %4336 = vmatpush1.msra.mxu0 0.0
    %4337 = vmatprep.mubr.f32.mxu0 0.0
    %4338 = vmatmul.mubr.f32.gmra.mrb[0].mxu0 %v4271
    %v4339 = vpop.f32.mrb[0].mxu0
    %v4340 = vadd.f32 %v198, %v4339
    %v4341 = vpop.f32.mrb[0].mxu0
    %4342 = vdwg.mxu0
    %v4343 = vxor.u32 %v4340, 2147483648
    %v4344 = vmul.f32 %v4343, 1.442695
    %v4345 = vpow.pop %v4344
    %v4346 = vadd.f32 %v4345, 1.0
    %v4347 = vrcp.pop %v4346
    %v4348 = vmul.f32 1.0, %v4347
    %v4349 = vtanh.pop %v4340
    %v4350 = vmul.f32 %v4348, %v3845
    %4352 = vrot.lane.b32.xlu0 %v4349, 64
    %v4353 = vpop.permute.xlu0 %4352
    %v4355 = vmul.f32 %v4348, %v4353
    %4357 = vrot.lane.b32.xlu0 %v4355, 32
    %v4358 = vpop.permute.xlu0 %4357
    %v4360 = vadd.f32 %v4350, %v4358
    %v4361 = vtanh.pop %v4360
    %4363 = vrot.lane.b32.xlu0 %v4361, 64
    %v4364 = vpop.permute.xlu0 %4363
    %v4366 = vmul.f32 %v4348, %v4364
    %4368 = vrot.lane.b32.xlu0 %v4366, 32
    %v4369 = vpop.permute.xlu0 %4368
    %4371 = vrot.lane.b32.xlu0 %v4261, 64
    %v4372 = vpop.permute.xlu0 %4371
    %4375 = vrot.lane.b32.xlu0 %v4038, 64
    %v4376 = vpop.permute.xlu0 %4375
    %v4378 = vsel %vm390, %v4369, %v4372
    %v4379 = vsel %vm2318, %v4378, %v4376
    %v4381 = vsel %vm2204, %v4379, 0
    %4383 = vmatprep.subr.mxu0 0.0
    %4384 = vmatpush1.msra.mxu0 %v183
    %4385 = vmatprep.subr.mxu0 0.0
    %4386 = vmatpush1.msra.mxu0 %v184
    %4387 = vmatprep.subr.mxu0 0.0
    %4388 = vmatpush1.msra.mxu0 %v185
    %4389 = vmatprep.subr.mxu0 0.0
    %4390 = vmatpush1.msra.mxu0 %v186
    %4391 = vmatprep.subr.mxu0 0.0
    %4392 = vmatpush1.msra.mxu0 %v187
    %4393 = vmatprep.subr.mxu0 0.0
    %4394 = vmatpush1.msra.mxu0 %v188
    %4395 = vmatprep.subr.mxu0 0.0
    %4396 = vmatpush1.msra.mxu0 %v189
    %4397 = vmatprep.subr.mxu0 0.0
    %4398 = vmatpush1.msra.mxu0 %v190
    %4399 = vmatprep.subr.mxu0 0.0
    %4400 = vmatpush1.msra.mxu0 %v191
    %4401 = vmatprep.subr.mxu0 0.0
    %4402 = vmatpush1.msra.mxu0 %v192
    %4403 = vmatprep.subr.mxu0 0.0
    %4404 = vmatpush1.msra.mxu0 0.0
    %4405 = vmatprep.subr.mxu0 0.0
    %4406 = vmatpush1.msra.mxu0 0.0
    %4407 = vmatprep.subr.mxu0 0.0
    %4408 = vmatpush1.msra.mxu0 0.0
    %4409 = vmatprep.subr.mxu0 0.0
    %4410 = vmatpush1.msra.mxu0 0.0
    %4411 = vmatprep.subr.mxu0 0.0
    %4412 = vmatpush1.msra.mxu0 0.0
    %4413 = vmatprep.subr.mxu0 0.0
    %4414 = vmatpush1.msra.mxu0 0.0
    %4415 = vmatprep.subr.mxu0 0.0
    %4416 = vmatpush1.msra.mxu0 0.0
    %4417 = vmatprep.subr.mxu0 0.0
    %4418 = vmatpush1.msra.mxu0 0.0
    %4419 = vmatprep.subr.mxu0 0.0
    %4420 = vmatpush1.msra.mxu0 0.0
    %4421 = vmatprep.subr.mxu0 0.0
    %4422 = vmatpush1.msra.mxu0 0.0
    %4423 = vmatprep.subr.mxu0 0.0
    %4424 = vmatpush1.msra.mxu0 0.0
    %4425 = vmatprep.subr.mxu0 0.0
    %4426 = vmatpush1.msra.mxu0 0.0
    %4427 = vmatprep.subr.mxu0 0.0
    %4428 = vmatpush1.msra.mxu0 0.0
    %4429 = vmatprep.subr.mxu0 0.0
    %4430 = vmatpush1.msra.mxu0 0.0
    %4431 = vmatprep.subr.mxu0 0.0
    %4432 = vmatpush1.msra.mxu0 0.0
    %4433 = vmatprep.subr.mxu0 0.0
    %4434 = vmatpush1.msra.mxu0 0.0
    %4435 = vmatprep.subr.mxu0 0.0
    %4436 = vmatpush1.msra.mxu0 0.0
    %4437 = vmatprep.subr.mxu0 0.0
    %4438 = vmatpush1.msra.mxu0 0.0
    %4439 = vmatprep.subr.mxu0 0.0
    %4440 = vmatpush1.msra.mxu0 0.0
    %4441 = vmatprep.subr.mxu0 0.0
    %4442 = vmatpush1.msra.mxu0 0.0
    %4443 = vmatprep.subr.mxu0 0.0
    %4444 = vmatpush1.msra.mxu0 0.0
    %4445 = vmatprep.subr.mxu0 0.0
    %4446 = vmatpush1.msra.mxu0 0.0
    %4447 = vmatprep.mubr.f32.mxu0 0.0
    %4448 = vmatmul.mubr.f32.gmra.mrb[0].mxu0 %v4381
    %v4449 = vpop.f32.mrb[0].mxu0
    %v4450 = vadd.f32 %v205, %v4449
    %v4451 = vpop.f32.mrb[0].mxu0
    %4452 = vdwg.mxu0
    %s4453 = scalar_lea.vmem [#allocation15], 10
    %4454 = vst [vmem:[%s4453] sm:$0x3] %v4450
    %v4455 = vsel %vm1748, %v4450, -inf
    %4456 = vmax.xlane.f32.xlu0 %v4455
    %v4457 = vpop.xlane.xlu0 %4456
    %vm4458 = vcmp.eq.f32.partialorder %v4450, %v4457
    %v4459 = vsel %vm4458, %v1866, 128
    %v4460 = vsel %vm1748, %v4459, 2147483647
    %v4461 = vand.u32 %v4460, 65535
    %v4462 = vshra.s32 %v4460, 16
    %v4463 = vcvt.s32.f32 %v4461
    %v4464 = vcvt.s32.f32 %v4462
    %4465 = vmin.xlane.f32.xlu0 %v4464
    %v4466 = vpop.xlane.xlu0 %4465
    %vm4467 = vcmp.eq.f32.partialorder %v4464, %v4466
    %v4468 = vsel %vm4467, %v4463, inf
    %4469 = vmin.xlane.f32.xlu0 %v4468
    %v4470 = vpop.xlane.xlu0 %4469
    %v4471 = vcvt.f32.s32 %v4470
    %v4472 = vcvt.f32.s32 %v4466
    %v4473 = vshll.u32 %v4472, 16
    %v4474 = vadd.s32 %v4473, %v4471
    %vm4475 = vcmp.eq.s32.totalorder %v1866, %v4474
    %v4476 = vsel %vm4475, 1, 0
    %v4477 = vcvt.s32.f32 %v4476
    %s4478 = sld [smem:[#allocation2 + $0x5]]
    %p4479 = scmp.eq.s32.totalorder %s4478, 1
    %s4480 = scalar_lea.vmem [#allocation7], 10
    %v4481 = vld [vmem:[%s4480] sm:$0x3]
    %s4482 = scalar_select %p4479, 1, 0
    %v4483 = vstv %s4482
    %vm4484 = vcmp.eq.s32.totalorder %v4483, 1
    %v4485 = vsel %vm4484, %v4481, %v4477
    %4486 = vmatprep.subr.mxu0 0.0
    %4487 = vmatpush1.msra.mxu0 %v148
    %4488 = vmatprep.subr.mxu0 0.0
    %4489 = vmatpush1.msra.mxu0 %v149
    %4490 = vmatprep.subr.mxu0 0.0
    %4491 = vmatpush1.msra.mxu0 %v150
    %4492 = vmatprep.subr.mxu0 0.0
    %4493 = vmatpush1.msra.mxu0 %v151
    %4494 = vmatprep.subr.mxu0 0.0
    %4495 = vmatpush1.msra.mxu0 %v152
    %4496 = vmatprep.subr.mxu0 0.0
    %4497 = vmatpush1.msra.mxu0 %v153
    %4498 = vmatprep.subr.mxu0 0.0
    %4499 = vmatpush1.msra.mxu0 %v154
    %4500 = vmatprep.subr.mxu0 0.0
    %4501 = vmatpush1.msra.mxu0 %v155
    %4502 = vmatprep.subr.mxu0 0.0
    %4503 = vmatpush1.msra.mxu0 %v156
    %4504 = vmatprep.subr.mxu0 0.0
    %4505 = vmatpush1.msra.mxu0 %v157
    %4506 = vmatprep.subr.mxu0 0.0
    %4507 = vmatpush1.msra.mxu0 %v158
    %4508 = vmatprep.subr.mxu0 0.0
    %4509 = vmatpush1.msra.mxu0 %v159
    %4510 = vmatprep.subr.mxu0 0.0
    %4511 = vmatpush1.msra.mxu0 %v160
    %4512 = vmatprep.subr.mxu0 0.0
    %4513 = vmatpush1.msra.mxu0 %v161
    %4514 = vmatprep.subr.mxu0 0.0
    %4515 = vmatpush1.msra.mxu0 %v162
    %4516 = vmatprep.subr.mxu0 0.0
    %4517 = vmatpush1.msra.mxu0 %v163
    %4518 = vmatprep.subr.mxu0 0.0
    %4519 = vmatpush1.msra.mxu0 0.0
    %4520 = vmatprep.subr.mxu0 0.0
    %4521 = vmatpush1.msra.mxu0 0.0
    %4522 = vmatprep.subr.mxu0 0.0
    %4523 = vmatpush1.msra.mxu0 0.0
    %4524 = vmatprep.subr.mxu0 0.0
    %4525 = vmatpush1.msra.mxu0 0.0
    %4526 = vmatprep.subr.mxu0 0.0
    %4527 = vmatpush1.msra.mxu0 0.0
    %4528 = vmatprep.subr.mxu0 0.0
    %4529 = vmatpush1.msra.mxu0 0.0
    %4530 = vmatprep.subr.mxu0 0.0
    %4531 = vmatpush1.msra.mxu0 0.0
    %4532 = vmatprep.subr.mxu0 0.0
    %4533 = vmatpush1.msra.mxu0 0.0
    %4534 = vmatprep.subr.mxu0 0.0
    %4535 = vmatpush1.msra.mxu0 0.0
    %4536 = vmatprep.subr.mxu0 0.0
    %4537 = vmatpush1.msra.mxu0 0.0
    %4538 = vmatprep.subr.mxu0 0.0
    %4539 = vmatpush1.msra.mxu0 0.0
    %4540 = vmatprep.subr.mxu0 0.0
    %4541 = vmatpush1.msra.mxu0 0.0
    %4542 = vmatprep.subr.mxu0 0.0
    %4543 = vmatpush1.msra.mxu0 0.0
    %4544 = vmatprep.subr.mxu0 0.0
    %4545 = vmatpush1.msra.mxu0 0.0
    %4546 = vmatprep.subr.mxu0 0.0
    %4547 = vmatpush1.msra.mxu0 0.0
    %4548 = vmatprep.subr.mxu0 0.0
    %4549 = vmatpush1.msra.mxu0 0.0
    %4550 = vmatprep.mubr.f32.mxu0 0.0
    %4551 = vmatmul.mubr.f32.gmra.mrb[0].mxu0 %v4485
    %v4552 = vpop.f32.mrb[0].mxu0
    %v4553 = vadd.f32 0.0, %v4552
    %v4554 = vpop.f32.mrb[0].mxu0
    %4555 = vdwg.mxu0
    %v4556 = vsel %vm390, %v4369, 0
    %4558 = vmatprep.subr.mxu0 0.0
    %4559 = vmatpush1.msra.mxu0 %v168
    %4560 = vmatprep.subr.mxu0 0.0
    %4561 = vmatpush1.msra.mxu0 %v169
    %4562 = vmatprep.subr.mxu0 0.0
    %4563 = vmatpush1.msra.mxu0 %v170
    %4564 = vmatprep.subr.mxu0 0.0
    %4565 = vmatpush1.msra.mxu0 %v171
    %4566 = vmatprep.subr.mxu0 0.0
    %4567 = vmatpush1.msra.mxu0 0.0
    %4568 = vmatprep.subr.mxu0 0.0
    %4569 = vmatpush1.msra.mxu0 0.0
    %4570 = vmatprep.subr.mxu0 0.0
    %4571 = vmatpush1.msra.mxu0 0.0
    %4572 = vmatprep.subr.mxu0 0.0
    %4573 = vmatpush1.msra.mxu0 0.0
    %4574 = vmatprep.subr.mxu0 0.0
    %4575 = vmatpush1.msra.mxu0 0.0
    %4576 = vmatprep.subr.mxu0 0.0
    %4577 = vmatpush1.msra.mxu0 0.0
    %4578 = vmatprep.subr.mxu0 0.0
    %4579 = vmatpush1.msra.mxu0 0.0
    %4580 = vmatprep.subr.mxu0 0.0
    %4581 = vmatpush1.msra.mxu0 0.0
    %4582 = vmatprep.subr.mxu0 0.0
    %4583 = vmatpush1.msra.mxu0 0.0
    %4584 = vmatprep.subr.mxu0 0.0
    %4585 = vmatpush1.msra.mxu0 0.0
    %4586 = vmatprep.subr.mxu0 0.0
    %4587 = vmatpush1.msra.mxu0 0.0
    %4588 = vmatprep.subr.mxu0 0.0
    %4589 = vmatpush1.msra.mxu0 0.0
    %4590 = vmatprep.subr.mxu0 0.0
    %4591 = vmatpush1.msra.mxu0 0.0
    %4592 = vmatprep.subr.mxu0 0.0
    %4593 = vmatpush1.msra.mxu0 0.0
    %4594 = vmatprep.subr.mxu0 0.0
    %4595 = vmatpush1.msra.mxu0 0.0
    %4596 = vmatprep.subr.mxu0 0.0
    %4597 = vmatpush1.msra.mxu0 0.0
    %4598 = vmatprep.subr.mxu0 0.0
    %4599 = vmatpush1.msra.mxu0 0.0
    %4600 = vmatprep.subr.mxu0 0.0
    %4601 = vmatpush1.msra.mxu0 0.0
    %4602 = vmatprep.subr.mxu0 0.0
    %4603 = vmatpush1.msra.mxu0 0.0
    %4604 = vmatprep.subr.mxu0 0.0
    %4605 = vmatpush1.msra.mxu0 0.0
    %4606 = vmatprep.subr.mxu0 0.0
    %4607 = vmatpush1.msra.mxu0 0.0
    %4608 = vmatprep.subr.mxu0 0.0
    %4609 = vmatpush1.msra.mxu0 0.0
    %4610 = vmatprep.subr.mxu0 0.0
    %4611 = vmatpush1.msra.mxu0 0.0
    %4612 = vmatprep.subr.mxu0 0.0
    %4613 = vmatpush1.msra.mxu0 0.0
    %4614 = vmatprep.subr.mxu0 0.0
    %4615 = vmatpush1.msra.mxu0 0.0
    %4616 = vmatprep.subr.mxu0 0.0
    %4617 = vmatpush1.msra.mxu0 0.0
    %4618 = vmatprep.subr.mxu0 0.0
    %4619 = vmatpush1.msra.mxu0 0.0
    %4620 = vmatprep.subr.mxu0 0.0
    %4621 = vmatpush1.msra.mxu0 0.0
    %4622 = vmatprep.mubr.f32.mxu0 0.0
    %4623 = vmatmul.mubr.f32.gmra.mrb[0].mxu0 %v4556
    %v4624 = vpop.f32.mrb[0].mxu0
    %v4625 = vadd.f32 0.0, %v4624
    %v4626 = vpop.f32.mrb[0].mxu0
    %4627 = vdwg.mxu0
    %v4630 = vunpack.c.l.s4 1966171168
    %v4631 = vunpack.c.0.s8 %v4630
    %v4632 = vlaneseq
    %v4633 = vshrl.u32 %v4632, 7
    %v4634 = vsub.s32 %v4631, %v4633
    %v4635 = vrot.slane %v4625, %v4634
    %v4636 = vcombine.high %v4635, %v4635
    %v4638 = vunpack.c.l.s4 1966171168
    %v4639 = vunpack.c.0.s8 %v4638
    %v4640 = vlaneseq
    %v4641 = vshrl.u32 %v4640, 7
    %v4642 = vsub.s32 %v4639, %v4641
    %v4643 = vrot.slane %v4635, %v4642
    %v4645 = vunpack.c.l.s4 1966171168
    %v4646 = vunpack.c.0.s8 %v4645
    %v4647 = vlaneseq
    %v4648 = vshrl.u32 %v4647, 7
    %v4649 = vsub.s32 %v4646, %v4648
    %v4650 = vrot.slane %v4636, %v4649
    %v4651 = vlaneseq
    %v4652 = vshrl.u32 %v4651, 7
    %v4653 = vsub.s32 0, %v4652
    %v4654 = vrot.slane %v4643, %v4653
    %v4655 = vlaneseq
    %v4656 = vshrl.u32 %v4655, 7
    %v4657 = vsub.s32 0, %v4656
    %v4658 = vrot.slane %v4650, %v4657
    %v4661 = vadd.f32 %v4654, %v1854
    %v4662 = vadd.f32 %v4658, %v1859
    %v4663 = vtanh.pop %v4661
    %v4664 = vtanh.pop %v4662
    %v4665 = vmul.f32 %v4663, %v2061
    %v4666 = vmul.f32 %v4664, %v2061
    %v4667 = vsel %vm390, %v4665, 0.0
    %4668 = vadd.xlane.f32.xlu0 %v4667
    %v4669 = vpop.xlane.xlu0 %4668
    %v4670 = vsel %vm390, %v4666, 0.0
    %4671 = vadd.xlane.f32.xlu0 %v4670
    %v4672 = vpop.xlane.xlu0 %4671
    %v4673 = vadd.f32 %v4669, %v2078
    %v4674 = vadd.f32 %v4672, %v2085
    %4677 = vset.pattern.permute.xlu0 0
    %4678 = vperm.xlu0 %4677, %v4673
    %v4679 = vpop.permute.xlu0 %4678
    %4680 = vset.pattern.permute.xlu0 0
    %4681 = vperm.xlu0 %4680, %v4674
    %v4682 = vpop.permute.xlu0 %4681
    %v4683 = vlaneseq
    %v4684 = vshrl.u32 %v4683, 7
    %v4685 = vsub.s32 %v1866, %v4684
    %v4686 = vrot.slane %v4679, %v4685
    %v4687 = vlaneseq
    %v4688 = vshrl.u32 %v4687, 7
    %v4689 = vsub.s32 %v1866, %v4688
    %v4690 = vrot.slane %v4682, %v4689
    %v4691 = vsel %vm2106, %v4690, %v4686
    %v4693 = vsel %vm2109, %v4691, -inf
    %4694 = vmax.xlane.f32.xlu0 %v4693
    %v4695 = vpop.xlane.xlu0 %4694
    %v4697 = vlaneseq
    %v4698 = vshrl.u32 %v4697, 7
    %v4699 = vsub.s32 0, %v4698
    %v4700 = vrot.slane %v4695, %v4699
    %v4701 = vlaneseq
    %v4702 = vshrl.u32 %v4701, 7
    %v4703 = vsub.s32 1, %v4702
    %v4704 = vrot.slane %v4695, %v4703
    %v4707 = vsub.f32 %v4673, %v4700
    %v4708 = vsub.f32 %v4674, %v4704
    %v4709 = vmul.f32 %v4707, 1.442695
    %v4710 = vpow.pop %v4709
    %v4711 = vmul.f32 %v4708, 1.442695
    %v4712 = vpow.pop %v4711
    %4715 = vset.pattern.permute.xlu0 0
    %4716 = vperm.xlu0 %4715, %v4710
    %v4717 = vpop.permute.xlu0 %4716
    %4718 = vset.pattern.permute.xlu0 0
    %4719 = vperm.xlu0 %4718, %v4712
    %v4720 = vpop.permute.xlu0 %4719
    %v4721 = vlaneseq
    %v4722 = vshrl.u32 %v4721, 7
    %v4723 = vsub.s32 %v1866, %v4722
    %v4724 = vrot.slane %v4717, %v4723
    %v4725 = vlaneseq
    %v4726 = vshrl.u32 %v4725, 7
    %v4727 = vsub.s32 %v1866, %v4726
    %v4728 = vrot.slane %v4720, %v4727
    %v4729 = vsel %vm2106, %v4728, %v4724
    %v4731 = vsel %vm2109, %v4729, 0.0
    %4732 = vadd.xlane.f32.xlu0 %v4731
    %v4733 = vpop.xlane.xlu0 %4732
    %v4734 = vrcp.pop %v4733
    %v4736 = vlaneseq
    %v4737 = vshrl.u32 %v4736, 7
    %v4738 = vsub.s32 0, %v4737
    %v4739 = vrot.slane %v4734, %v4738
    %v4740 = vlaneseq
    %v4741 = vshrl.u32 %v4740, 7
    %v4742 = vsub.s32 1, %v4741
    %v4743 = vrot.slane %v4734, %v4742
    %v4746 = vmul.f32 %v4710, %v4739
    %v4747 = vmul.f32 %v4712, %v4743
    %4749 = vset.pattern.permute.xlu0 0
    %4750 = vperm.xlu0 %4749, %v4746
    %v4751 = vpop.permute.xlu0 %4750
    %4754 = vset.pattern.permute.xlu0 0
    %4755 = vperm.xlu0 %4754, %v4747
    %v4756 = vpop.permute.xlu0 %4755
    %v4758 = vmul.f32 %v4751, %v1764
    %v4759 = vmul.f32 %v4756, %v1765
    %v4760 = vsel %vm2177, %v4758, 0.0
    %v4761 = vrot.slane %v4760, 4
    %v4762 = vadd.f32 %v4760, %v4761
    %v4763 = vrot.slane %v4762, 2
    %v4764 = vadd.f32 %v4762, %v4763
    %v4765 = vrot.slane %v4764, 1
    %v4766 = vadd.f32 %v4764, %v4765
    %v4767 = vsel %vm2177, %v4759, 0.0
    %v4768 = vrot.slane %v4767, 4
    %v4769 = vadd.f32 %v4767, %v4768
    %v4770 = vrot.slane %v4769, 2
    %v4771 = vadd.f32 %v4769, %v4770
    %v4772 = vrot.slane %v4771, 1
    %v4773 = vadd.f32 %v4771, %v4772
    %v4776 = vsel %vm2106, %v4773, %v4766
    %4777 = vrot.lane.b32.xlu0 %v4776, 48
    %v4778 = vpop.permute.xlu0 %4777
    %4780 = vrot.lane.b32.xlu0 %v4366, 80
    %v4781 = vpop.permute.xlu0 %4780
    %v4783 = vsel %vm266, %v4553, %v4778
    %v4784 = vsel %vm2202, %v4783, %v4781
    %v4786 = vsel %vm2204, %v4784, 0
    %4788 = vmatprep.subr.mxu0 0.0
    %4789 = vmatpush1.msra.mxu0 %v173
    %4790 = vmatprep.subr.mxu0 0.0
    %4791 = vmatpush1.msra.mxu0 %v174
    %4792 = vmatprep.subr.mxu0 0.0
    %4793 = vmatpush1.msra.mxu0 %v175
    %4794 = vmatprep.subr.mxu0 0.0
    %4795 = vmatpush1.msra.mxu0 %v176
    %4796 = vmatprep.subr.mxu0 0.0
    %4797 = vmatpush1.msra.mxu0 %v177
    %4798 = vmatprep.subr.mxu0 0.0
    %4799 = vmatpush1.msra.mxu0 %v178
    %4800 = vmatprep.subr.mxu0 0.0
    %4801 = vmatpush1.msra.mxu0 %v179
    %4802 = vmatprep.subr.mxu0 0.0
    %4803 = vmatpush1.msra.mxu0 %v180
    %4804 = vmatprep.subr.mxu0 0.0
    %4805 = vmatpush1.msra.mxu0 %v181
    %4806 = vmatprep.subr.mxu0 0.0
    %4807 = vmatpush1.msra.mxu0 %v182
    %4808 = vmatprep.subr.mxu0 0.0
    %4809 = vmatpush1.msra.mxu0 0.0
    %4810 = vmatprep.subr.mxu0 0.0
    %4811 = vmatpush1.msra.mxu0 0.0
    %4812 = vmatprep.subr.mxu0 0.0
    %4813 = vmatpush1.msra.mxu0 0.0
    %4814 = vmatprep.subr.mxu0 0.0
    %4815 = vmatpush1.msra.mxu0 0.0
    %4816 = vmatprep.subr.mxu0 0.0
    %4817 = vmatpush1.msra.mxu0 0.0
    %4818 = vmatprep.subr.mxu0 0.0
    %4819 = vmatpush1.msra.mxu0 0.0
    %4820 = vmatprep.subr.mxu0 0.0
    %4821 = vmatpush1.msra.mxu0 0.0
    %4822 = vmatprep.subr.mxu0 0.0
    %4823 = vmatpush1.msra.mxu0 0.0
    %4824 = vmatprep.subr.mxu0 0.0
    %4825 = vmatpush1.msra.mxu0 0.0
    %4826 = vmatprep.subr.mxu0 0.0
    %4827 = vmatpush1.msra.mxu0 0.0
    %4828 = vmatprep.subr.mxu0 0.0
    %4829 = vmatpush1.msra.mxu0 0.0
    %4830 = vmatprep.subr.mxu0 0.0
    %4831 = vmatpush1.msra.mxu0 0.0
    %4832 = vmatprep.subr.mxu0 0.0
    %4833 = vmatpush1.msra.mxu0 0.0
    %4834 = vmatprep.subr.mxu0 0.0
    %4835 = vmatpush1.msra.mxu0 0.0
    %4836 = vmatprep.subr.mxu0 0.0
    %4837 = vmatpush1.msra.mxu0 0.0
    %4838 = vmatprep.subr.mxu0 0.0
    %4839 = vmatpush1.msra.mxu0 0.0
    %4840 = vmatprep.subr.mxu0 0.0
    %4841 = vmatpush1.msra.mxu0 0.0
    %4842 = vmatprep.subr.mxu0 0.0
    %4843 = vmatpush1.msra.mxu0 0.0
    %4844 = vmatprep.subr.mxu0 0.0
    %4845 = vmatpush1.msra.mxu0 0.0
    %4846 = vmatprep.subr.mxu0 0.0
    %4847 = vmatpush1.msra.mxu0 0.0
    %4848 = vmatprep.subr.mxu0 0.0
    %4849 = vmatpush1.msra.mxu0 0.0
    %4850 = vmatprep.subr.mxu0 0.0
    %4851 = vmatpush1.msra.mxu0 0.0
    %4852 = vmatprep.mubr.f32.mxu0 0.0
    %4853 = vmatmul.mubr.f32.gmra.mrb[0].mxu0 %v4786
    %v4854 = vpop.f32.mrb[0].mxu0
    %v4855 = vadd.f32 %v198, %v4854
    %v4856 = vpop.f32.mrb[0].mxu0
    %4857 = vdwg.mxu0
    %v4858 = vxor.u32 %v4855, 2147483648
    %v4859 = vmul.f32 %v4858, 1.442695
    %v4860 = vpow.pop %v4859
    %v4861 = vadd.f32 %v4860, 1.0
    %v4862 = vrcp.pop %v4861
    %v4863 = vmul.f32 1.0, %v4862
    %v4864 = vtanh.pop %v4855
    %v4865 = vmul.f32 %v4863, %v4360
    %4867 = vrot.lane.b32.xlu0 %v4864, 64
    %v4868 = vpop.permute.xlu0 %4867
    %v4870 = vmul.f32 %v4863, %v4868
    %4872 = vrot.lane.b32.xlu0 %v4870, 32
    %v4873 = vpop.permute.xlu0 %4872
    %v4875 = vadd.f32 %v4865, %v4873
    %v4876 = vtanh.pop %v4875
    %4878 = vrot.lane.b32.xlu0 %v4876, 64
    %v4879 = vpop.permute.xlu0 %4878
    %v4881 = vmul.f32 %v4863, %v4879
    %4883 = vrot.lane.b32.xlu0 %v4881, 32
    %v4884 = vpop.permute.xlu0 %4883
    %4886 = vrot.lane.b32.xlu0 %v4776, 64
    %v4887 = vpop.permute.xlu0 %4886
    %4890 = vrot.lane.b32.xlu0 %v4553, 64
    %v4891 = vpop.permute.xlu0 %4890
    %v4893 = vsel %vm390, %v4884, %v4887
    %v4894 = vsel %vm2318, %v4893, %v4891
    %v4896 = vsel %vm2204, %v4894, 0
    %4898 = vmatprep.subr.mxu0 0.0
    %4899 = vmatpush1.msra.mxu0 %v183
    %4900 = vmatprep.subr.mxu0 0.0
    %4901 = vmatpush1.msra.mxu0 %v184
    %4902 = vmatprep.subr.mxu0 0.0
    %4903 = vmatpush1.msra.mxu0 %v185
    %4904 = vmatprep.subr.mxu0 0.0
    %4905 = vmatpush1.msra.mxu0 %v186
    %4906 = vmatprep.subr.mxu0 0.0
    %4907 = vmatpush1.msra.mxu0 %v187
    %4908 = vmatprep.subr.mxu0 0.0
    %4909 = vmatpush1.msra.mxu0 %v188
    %4910 = vmatprep.subr.mxu0 0.0
    %4911 = vmatpush1.msra.mxu0 %v189
    %4912 = vmatprep.subr.mxu0 0.0
    %4913 = vmatpush1.msra.mxu0 %v190
    %4914 = vmatprep.subr.mxu0 0.0
    %4915 = vmatpush1.msra.mxu0 %v191
    %4916 = vmatprep.subr.mxu0 0.0
    %4917 = vmatpush1.msra.mxu0 %v192
    %4918 = vmatprep.subr.mxu0 0.0
    %4919 = vmatpush1.msra.mxu0 0.0
    %4920 = vmatprep.subr.mxu0 0.0
    %4921 = vmatpush1.msra.mxu0 0.0
    %4922 = vmatprep.subr.mxu0 0.0
    %4923 = vmatpush1.msra.mxu0 0.0
    %4924 = vmatprep.subr.mxu0 0.0
    %4925 = vmatpush1.msra.mxu0 0.0
    %4926 = vmatprep.subr.mxu0 0.0
    %4927 = vmatpush1.msra.mxu0 0.0
    %4928 = vmatprep.subr.mxu0 0.0
    %4929 = vmatpush1.msra.mxu0 0.0
    %4930 = vmatprep.subr.mxu0 0.0
    %4931 = vmatpush1.msra.mxu0 0.0
    %4932 = vmatprep.subr.mxu0 0.0
    %4933 = vmatpush1.msra.mxu0 0.0
    %4934 = vmatprep.subr.mxu0 0.0
    %4935 = vmatpush1.msra.mxu0 0.0
    %4936 = vmatprep.subr.mxu0 0.0
    %4937 = vmatpush1.msra.mxu0 0.0
    %4938 = vmatprep.subr.mxu0 0.0
    %4939 = vmatpush1.msra.mxu0 0.0
    %4940 = vmatprep.subr.mxu0 0.0
    %4941 = vmatpush1.msra.mxu0 0.0
    %4942 = vmatprep.subr.mxu0 0.0
    %4943 = vmatpush1.msra.mxu0 0.0
    %4944 = vmatprep.subr.mxu0 0.0
    %4945 = vmatpush1.msra.mxu0 0.0
    %4946 = vmatprep.subr.mxu0 0.0
    %4947 = vmatpush1.msra.mxu0 0.0
    %4948 = vmatprep.subr.mxu0 0.0
    %4949 = vmatpush1.msra.mxu0 0.0
    %4950 = vmatprep.subr.mxu0 0.0
    %4951 = vmatpush1.msra.mxu0 0.0
    %4952 = vmatprep.subr.mxu0 0.0
    %4953 = vmatpush1.msra.mxu0 0.0
    %4954 = vmatprep.subr.mxu0 0.0
    %4955 = vmatpush1.msra.mxu0 0.0
    %4956 = vmatprep.subr.mxu0 0.0
    %4957 = vmatpush1.msra.mxu0 0.0
    %4958 = vmatprep.subr.mxu0 0.0
    %4959 = vmatpush1.msra.mxu0 0.0
    %4960 = vmatprep.subr.mxu0 0.0
    %4961 = vmatpush1.msra.mxu0 0.0
    %4962 = vmatprep.mubr.f32.mxu0 0.0
    %4963 = vmatmul.mubr.f32.gmra.mrb[0].mxu0 %v4896
    %v4964 = vpop.f32.mrb[0].mxu0
    %v4965 = vadd.f32 %v205, %v4964
    %v4966 = vpop.f32.mrb[0].mxu0
    %4967 = vdwg.mxu0
    %s4968 = scalar_lea.vmem [#allocation15], 12
    %4969 = vst [vmem:[%s4968] sm:$0x3] %v4965
    %v4970 = vsel %vm1748, %v4965, -inf
    %4971 = vmax.xlane.f32.xlu0 %v4970
    %v4972 = vpop.xlane.xlu0 %4971
    %vm4973 = vcmp.eq.f32.partialorder %v4965, %v4972
    %v4974 = vsel %vm4973, %v1866, 128
    %v4975 = vsel %vm1748, %v4974, 2147483647
    %v4976 = vand.u32 %v4975, 65535
    %v4977 = vshra.s32 %v4975, 16
    %v4978 = vcvt.s32.f32 %v4976
    %v4979 = vcvt.s32.f32 %v4977
    %4980 = vmin.xlane.f32.xlu0 %v4979
    %v4981 = vpop.xlane.xlu0 %4980
    %vm4982 = vcmp.eq.f32.partialorder %v4979, %v4981
    %v4983 = vsel %vm4982, %v4978, inf
    %4984 = vmin.xlane.f32.xlu0 %v4983
    %v4985 = vpop.xlane.xlu0 %4984
    %v4986 = vcvt.f32.s32 %v4985
    %v4987 = vcvt.f32.s32 %v4981
    %v4988 = vshll.u32 %v4987, 16
    %v4989 = vadd.s32 %v4988, %v4986
    %vm4990 = vcmp.eq.s32.totalorder %v1866, %v4989
    %v4991 = vsel %vm4990, 1, 0
    %v4992 = vcvt.s32.f32 %v4991
    %s4993 = sld [smem:[#allocation2 + $0x6]]
    %p4994 = scmp.eq.s32.totalorder %s4993, 1
    %s4995 = scalar_lea.vmem [#allocation7], 12
    %v4996 = vld [vmem:[%s4995] sm:$0x3]
    %s4997 = scalar_select %p4994, 1, 0
    %v4998 = vstv %s4997
    %vm4999 = vcmp.eq.s32.totalorder %v4998, 1
    %v5000 = vsel %vm4999, %v4996, %v4992
    %5001 = vmatprep.subr.mxu0 0.0
    %5002 = vmatpush1.msra.mxu0 %v148
    %5003 = vmatprep.subr.mxu0 0.0
    %5004 = vmatpush1.msra.mxu0 %v149
    %5005 = vmatprep.subr.mxu0 0.0
    %5006 = vmatpush1.msra.mxu0 %v150
    %5007 = vmatprep.subr.mxu0 0.0
    %5008 = vmatpush1.msra.mxu0 %v151
    %5009 = vmatprep.subr.mxu0 0.0
    %5010 = vmatpush1.msra.mxu0 %v152
    %5011 = vmatprep.subr.mxu0 0.0
    %5012 = vmatpush1.msra.mxu0 %v153
    %5013 = vmatprep.subr.mxu0 0.0
    %5014 = vmatpush1.msra.mxu0 %v154
    %5015 = vmatprep.subr.mxu0 0.0
    %5016 = vmatpush1.msra.mxu0 %v155
    %5017 = vmatprep.subr.mxu0 0.0
    %5018 = vmatpush1.msra.mxu0 %v156
    %5019 = vmatprep.subr.mxu0 0.0
    %5020 = vmatpush1.msra.mxu0 %v157
    %5021 = vmatprep.subr.mxu0 0.0
    %5022 = vmatpush1.msra.mxu0 %v158
    %5023 = vmatprep.subr.mxu0 0.0
    %5024 = vmatpush1.msra.mxu0 %v159
    %5025 = vmatprep.subr.mxu0 0.0
    %5026 = vmatpush1.msra.mxu0 %v160
    %5027 = vmatprep.subr.mxu0 0.0
    %5028 = vmatpush1.msra.mxu0 %v161
    %5029 = vmatprep.subr.mxu0 0.0
    %5030 = vmatpush1.msra.mxu0 %v162
    %5031 = vmatprep.subr.mxu0 0.0
    %5032 = vmatpush1.msra.mxu0 %v163
    %5033 = vmatprep.subr.mxu0 0.0
    %5034 = vmatpush1.msra.mxu0 0.0
    %5035 = vmatprep.subr.mxu0 0.0
    %5036 = vmatpush1.msra.mxu0 0.0
    %5037 = vmatprep.subr.mxu0 0.0
    %5038 = vmatpush1.msra.mxu0 0.0
    %5039 = vmatprep.subr.mxu0 0.0
    %5040 = vmatpush1.msra.mxu0 0.0
    %5041 = vmatprep.subr.mxu0 0.0
    %5042 = vmatpush1.msra.mxu0 0.0
    %5043 = vmatprep.subr.mxu0 0.0
    %5044 = vmatpush1.msra.mxu0 0.0
    %5045 = vmatprep.subr.mxu0 0.0
    %5046 = vmatpush1.msra.mxu0 0.0
    %5047 = vmatprep.subr.mxu0 0.0
    %5048 = vmatpush1.msra.mxu0 0.0
    %5049 = vmatprep.subr.mxu0 0.0
    %5050 = vmatpush1.msra.mxu0 0.0
    %5051 = vmatprep.subr.mxu0 0.0
    %5052 = vmatpush1.msra.mxu0 0.0
    %5053 = vmatprep.subr.mxu0 0.0
    %5054 = vmatpush1.msra.mxu0 0.0
    %5055 = vmatprep.subr.mxu0 0.0
    %5056 = vmatpush1.msra.mxu0 0.0
    %5057 = vmatprep.subr.mxu0 0.0
    %5058 = vmatpush1.msra.mxu0 0.0
    %5059 = vmatprep.subr.mxu0 0.0
    %5060 = vmatpush1.msra.mxu0 0.0
    %5061 = vmatprep.subr.mxu0 0.0
    %5062 = vmatpush1.msra.mxu0 0.0
    %5063 = vmatprep.subr.mxu0 0.0
    %5064 = vmatpush1.msra.mxu0 0.0
    %5065 = vmatprep.mubr.f32.mxu0 0.0
    %5066 = vmatmul.mubr.f32.gmra.mrb[0].mxu0 %v5000
    %v5067 = vpop.f32.mrb[0].mxu0
    %v5068 = vadd.f32 0.0, %v5067
    %v5069 = vpop.f32.mrb[0].mxu0
    %5070 = vdwg.mxu0
    %v5071 = vsel %vm390, %v4884, 0
    %5073 = vmatprep.subr.mxu0 0.0
    %5074 = vmatpush1.msra.mxu0 %v168
    %5075 = vmatprep.subr.mxu0 0.0
    %5076 = vmatpush1.msra.mxu0 %v169
    %5077 = vmatprep.subr.mxu0 0.0
    %5078 = vmatpush1.msra.mxu0 %v170
    %5079 = vmatprep.subr.mxu0 0.0
    %5080 = vmatpush1.msra.mxu0 %v171
    %5081 = vmatprep.subr.mxu0 0.0
    %5082 = vmatpush1.msra.mxu0 0.0
    %5083 = vmatprep.subr.mxu0 0.0
    %5084 = vmatpush1.msra.mxu0 0.0
    %5085 = vmatprep.subr.mxu0 0.0
    %5086 = vmatpush1.msra.mxu0 0.0
    %5087 = vmatprep.subr.mxu0 0.0
    %5088 = vmatpush1.msra.mxu0 0.0
    %5089 = vmatprep.subr.mxu0 0.0
    %5090 = vmatpush1.msra.mxu0 0.0
    %5091 = vmatprep.subr.mxu0 0.0
    %5092 = vmatpush1.msra.mxu0 0.0
    %5093 = vmatprep.subr.mxu0 0.0
    %5094 = vmatpush1.msra.mxu0 0.0
    %5095 = vmatprep.subr.mxu0 0.0
    %5096 = vmatpush1.msra.mxu0 0.0
    %5097 = vmatprep.subr.mxu0 0.0
    %5098 = vmatpush1.msra.mxu0 0.0
    %5099 = vmatprep.subr.mxu0 0.0
    %5100 = vmatpush1.msra.mxu0 0.0
    %5101 = vmatprep.subr.mxu0 0.0
    %5102 = vmatpush1.msra.mxu0 0.0
    %5103 = vmatprep.subr.mxu0 0.0
    %5104 = vmatpush1.msra.mxu0 0.0
    %5105 = vmatprep.subr.mxu0 0.0
    %5106 = vmatpush1.msra.mxu0 0.0
    %5107 = vmatprep.subr.mxu0 0.0
    %5108 = vmatpush1.msra.mxu0 0.0
    %5109 = vmatprep.subr.mxu0 0.0
    %5110 = vmatpush1.msra.mxu0 0.0
    %5111 = vmatprep.subr.mxu0 0.0
    %5112 = vmatpush1.msra.mxu0 0.0
    %5113 = vmatprep.subr.mxu0 0.0
    %5114 = vmatpush1.msra.mxu0 0.0
    %5115 = vmatprep.subr.mxu0 0.0
    %5116 = vmatpush1.msra.mxu0 0.0
    %5117 = vmatprep.subr.mxu0 0.0
    %5118 = vmatpush1.msra.mxu0 0.0
    %5119 = vmatprep.subr.mxu0 0.0
    %5120 = vmatpush1.msra.mxu0 0.0
    %5121 = vmatprep.subr.mxu0 0.0
    %5122 = vmatpush1.msra.mxu0 0.0
    %5123 = vmatprep.subr.mxu0 0.0
    %5124 = vmatpush1.msra.mxu0 0.0
    %5125 = vmatprep.subr.mxu0 0.0
    %5126 = vmatpush1.msra.mxu0 0.0
    %5127 = vmatprep.subr.mxu0 0.0
    %5128 = vmatpush1.msra.mxu0 0.0
    %5129 = vmatprep.subr.mxu0 0.0
    %5130 = vmatpush1.msra.mxu0 0.0
    %5131 = vmatprep.subr.mxu0 0.0
    %5132 = vmatpush1.msra.mxu0 0.0
    %5133 = vmatprep.subr.mxu0 0.0
    %5134 = vmatpush1.msra.mxu0 0.0
    %5135 = vmatprep.subr.mxu0 0.0
    %5136 = vmatpush1.msra.mxu0 0.0
    %5137 = vmatprep.mubr.f32.mxu0 0.0
    %5138 = vmatmul.mubr.f32.gmra.mrb[0].mxu0 %v5071
    %v5139 = vpop.f32.mrb[0].mxu0
    %v5140 = vadd.f32 0.0, %v5139
    %v5141 = vpop.f32.mrb[0].mxu0
    %5142 = vdwg.mxu0
    %v5145 = vunpack.c.l.s4 1966171168
    %v5146 = vunpack.c.0.s8 %v5145
    %v5147 = vlaneseq
    %v5148 = vshrl.u32 %v5147, 7
    %v5149 = vsub.s32 %v5146, %v5148
    %v5150 = vrot.slane %v5140, %v5149
    %v5151 = vcombine.high %v5150, %v5150
    %v5153 = vunpack.c.l.s4 1966171168
    %v5154 = vunpack.c.0.s8 %v5153
    %v5155 = vlaneseq
    %v5156 = vshrl.u32 %v5155, 7
    %v5157 = vsub.s32 %v5154, %v5156
    %v5158 = vrot.slane %v5150, %v5157
    %v5160 = vunpack.c.l.s4 1966171168
    %v5161 = vunpack.c.0.s8 %v5160
    %v5162 = vlaneseq
    %v5163 = vshrl.u32 %v5162, 7
    %v5164 = vsub.s32 %v5161, %v5163
    %v5165 = vrot.slane %v5151, %v5164
    %v5166 = vlaneseq
    %v5167 = vshrl.u32 %v5166, 7
    %v5168 = vsub.s32 0, %v5167
    %v5169 = vrot.slane %v5158, %v5168
    %v5170 = vlaneseq
    %v5171 = vshrl.u32 %v5170, 7
    %v5172 = vsub.s32 0, %v5171
    %v5173 = vrot.slane %v5165, %v5172
    %v5176 = vadd.f32 %v5169, %v1854
    %v5177 = vadd.f32 %v5173, %v1859
    %v5178 = vtanh.pop %v5176
    %v5179 = vtanh.pop %v5177
    %v5180 = vmul.f32 %v5178, %v2061
    %v5181 = vmul.f32 %v5179, %v2061
    %v5182 = vsel %vm390, %v5180, 0.0
    %5183 = vadd.xlane.f32.xlu0 %v5182
    %v5184 = vpop.xlane.xlu0 %5183
    %v5185 = vsel %vm390, %v5181, 0.0
    %5186 = vadd.xlane.f32.xlu0 %v5185
    %v5187 = vpop.xlane.xlu0 %5186
    %v5188 = vadd.f32 %v5184, %v2078
    %v5189 = vadd.f32 %v5187, %v2085
    %5192 = vset.pattern.permute.xlu0 0
    %5193 = vperm.xlu0 %5192, %v5188
    %v5194 = vpop.permute.xlu0 %5193
    %5195 = vset.pattern.permute.xlu0 0
    %5196 = vperm.xlu0 %5195, %v5189
    %v5197 = vpop.permute.xlu0 %5196
    %v5198 = vlaneseq
    %v5199 = vshrl.u32 %v5198, 7
    %v5200 = vsub.s32 %v1866, %v5199
    %v5201 = vrot.slane %v5194, %v5200
    %v5202 = vlaneseq
    %v5203 = vshrl.u32 %v5202, 7
    %v5204 = vsub.s32 %v1866, %v5203
    %v5205 = vrot.slane %v5197, %v5204
    %v5206 = vsel %vm2106, %v5205, %v5201
    %v5208 = vsel %vm2109, %v5206, -inf
    %5209 = vmax.xlane.f32.xlu0 %v5208
    %v5210 = vpop.xlane.xlu0 %5209
    %v5212 = vlaneseq
    %v5213 = vshrl.u32 %v5212, 7
    %v5214 = vsub.s32 0, %v5213
    %v5215 = vrot.slane %v5210, %v5214
    %v5216 = vlaneseq
    %v5217 = vshrl.u32 %v5216, 7
    %v5218 = vsub.s32 1, %v5217
    %v5219 = vrot.slane %v5210, %v5218
    %v5222 = vsub.f32 %v5188, %v5215
    %v5223 = vsub.f32 %v5189, %v5219
    %v5224 = vmul.f32 %v5222, 1.442695
    %v5225 = vpow.pop %v5224
    %v5226 = vmul.f32 %v5223, 1.442695
    %v5227 = vpow.pop %v5226
    %5230 = vset.pattern.permute.xlu0 0
    %5231 = vperm.xlu0 %5230, %v5225
    %v5232 = vpop.permute.xlu0 %5231
    %5233 = vset.pattern.permute.xlu0 0
    %5234 = vperm.xlu0 %5233, %v5227
    %v5235 = vpop.permute.xlu0 %5234
    %v5236 = vlaneseq
    %v5237 = vshrl.u32 %v5236, 7
    %v5238 = vsub.s32 %v1866, %v5237
    %v5239 = vrot.slane %v5232, %v5238
    %v5240 = vlaneseq
    %v5241 = vshrl.u32 %v5240, 7
    %v5242 = vsub.s32 %v1866, %v5241
    %v5243 = vrot.slane %v5235, %v5242
    %v5244 = vsel %vm2106, %v5243, %v5239
    %v5246 = vsel %vm2109, %v5244, 0.0
    %5247 = vadd.xlane.f32.xlu0 %v5246
    %v5248 = vpop.xlane.xlu0 %5247
    %v5249 = vrcp.pop %v5248
    %v5251 = vlaneseq
    %v5252 = vshrl.u32 %v5251, 7
    %v5253 = vsub.s32 0, %v5252
    %v5254 = vrot.slane %v5249, %v5253
    %v5255 = vlaneseq
    %v5256 = vshrl.u32 %v5255, 7
    %v5257 = vsub.s32 1, %v5256
    %v5258 = vrot.slane %v5249, %v5257
    %v5261 = vmul.f32 %v5225, %v5254
    %v5262 = vmul.f32 %v5227, %v5258
    %5264 = vset.pattern.permute.xlu0 0
    %5265 = vperm.xlu0 %5264, %v5261
    %v5266 = vpop.permute.xlu0 %5265
    %5269 = vset.pattern.permute.xlu0 0
    %5270 = vperm.xlu0 %5269, %v5262
    %v5271 = vpop.permute.xlu0 %5270
    %v5273 = vmul.f32 %v5266, %v1764
    %v5274 = vmul.f32 %v5271, %v1765
    %v5275 = vsel %vm2177, %v5273, 0.0
    %v5276 = vrot.slane %v5275, 4
    %v5277 = vadd.f32 %v5275, %v5276
    %v5278 = vrot.slane %v5277, 2
    %v5279 = vadd.f32 %v5277, %v5278
    %v5280 = vrot.slane %v5279, 1
    %v5281 = vadd.f32 %v5279, %v5280
    %v5282 = vsel %vm2177, %v5274, 0.0
    %v5283 = vrot.slane %v5282, 4
    %v5284 = vadd.f32 %v5282, %v5283
    %v5285 = vrot.slane %v5284, 2
    %v5286 = vadd.f32 %v5284, %v5285
    %v5287 = vrot.slane %v5286, 1
    %v5288 = vadd.f32 %v5286, %v5287
    %v5291 = vsel %vm2106, %v5288, %v5281
    %5292 = vrot.lane.b32.xlu0 %v5291, 48
    %v5293 = vpop.permute.xlu0 %5292
    %5295 = vrot.lane.b32.xlu0 %v4881, 80
    %v5296 = vpop.permute.xlu0 %5295
    %v5298 = vsel %vm266, %v5068, %v5293
    %v5299 = vsel %vm2202, %v5298, %v5296
    %v5301 = vsel %vm2204, %v5299, 0
    %5303 = vmatprep.subr.mxu0 0.0
    %5304 = vmatpush1.msra.mxu0 %v173
    %5305 = vmatprep.subr.mxu0 0.0
    %5306 = vmatpush1.msra.mxu0 %v174
    %5307 = vmatprep.subr.mxu0 0.0
    %5308 = vmatpush1.msra.mxu0 %v175
    %5309 = vmatprep.subr.mxu0 0.0
    %5310 = vmatpush1.msra.mxu0 %v176
    %5311 = vmatprep.subr.mxu0 0.0
    %5312 = vmatpush1.msra.mxu0 %v177
    %5313 = vmatprep.subr.mxu0 0.0
    %5314 = vmatpush1.msra.mxu0 %v178
    %5315 = vmatprep.subr.mxu0 0.0
    %5316 = vmatpush1.msra.mxu0 %v179
    %5317 = vmatprep.subr.mxu0 0.0
    %5318 = vmatpush1.msra.mxu0 %v180
    %5319 = vmatprep.subr.mxu0 0.0
    %5320 = vmatpush1.msra.mxu0 %v181
    %5321 = vmatprep.subr.mxu0 0.0
    %5322 = vmatpush1.msra.mxu0 %v182
    %5323 = vmatprep.subr.mxu0 0.0
    %5324 = vmatpush1.msra.mxu0 0.0
    %5325 = vmatprep.subr.mxu0 0.0
    %5326 = vmatpush1.msra.mxu0 0.0
    %5327 = vmatprep.subr.mxu0 0.0
    %5328 = vmatpush1.msra.mxu0 0.0
    %5329 = vmatprep.subr.mxu0 0.0
    %5330 = vmatpush1.msra.mxu0 0.0
    %5331 = vmatprep.subr.mxu0 0.0
    %5332 = vmatpush1.msra.mxu0 0.0
    %5333 = vmatprep.subr.mxu0 0.0
    %5334 = vmatpush1.msra.mxu0 0.0
    %5335 = vmatprep.subr.mxu0 0.0
    %5336 = vmatpush1.msra.mxu0 0.0
    %5337 = vmatprep.subr.mxu0 0.0
    %5338 = vmatpush1.msra.mxu0 0.0
    %5339 = vmatprep.subr.mxu0 0.0
    %5340 = vmatpush1.msra.mxu0 0.0
    %5341 = vmatprep.subr.mxu0 0.0
    %5342 = vmatpush1.msra.mxu0 0.0
    %5343 = vmatprep.subr.mxu0 0.0
    %5344 = vmatpush1.msra.mxu0 0.0
    %5345 = vmatprep.subr.mxu0 0.0
    %5346 = vmatpush1.msra.mxu0 0.0
    %5347 = vmatprep.subr.mxu0 0.0
    %5348 = vmatpush1.msra.mxu0 0.0
    %5349 = vmatprep.subr.mxu0 0.0
    %5350 = vmatpush1.msra.mxu0 0.0
    %5351 = vmatprep.subr.mxu0 0.0
    %5352 = vmatpush1.msra.mxu0 0.0
    %5353 = vmatprep.subr.mxu0 0.0
    %5354 = vmatpush1.msra.mxu0 0.0
    %5355 = vmatprep.subr.mxu0 0.0
    %5356 = vmatpush1.msra.mxu0 0.0
    %5357 = vmatprep.subr.mxu0 0.0
    %5358 = vmatpush1.msra.mxu0 0.0
    %5359 = vmatprep.subr.mxu0 0.0
    %5360 = vmatpush1.msra.mxu0 0.0
    %5361 = vmatprep.subr.mxu0 0.0
    %5362 = vmatpush1.msra.mxu0 0.0
    %5363 = vmatprep.subr.mxu0 0.0
    %5364 = vmatpush1.msra.mxu0 0.0
    %5365 = vmatprep.subr.mxu0 0.0
    %5366 = vmatpush1.msra.mxu0 0.0
    %5367 = vmatprep.mubr.f32.mxu0 0.0
    %5368 = vmatmul.mubr.f32.gmra.mrb[0].mxu0 %v5301
    %v5369 = vpop.f32.mrb[0].mxu0
    %v5370 = vadd.f32 %v198, %v5369
    %v5371 = vpop.f32.mrb[0].mxu0
    %5372 = vdwg.mxu0
    %v5373 = vxor.u32 %v5370, 2147483648
    %v5374 = vmul.f32 %v5373, 1.442695
    %v5375 = vpow.pop %v5374
    %v5376 = vadd.f32 %v5375, 1.0
    %v5377 = vrcp.pop %v5376
    %v5378 = vmul.f32 1.0, %v5377
    %v5379 = vtanh.pop %v5370
    %v5380 = vmul.f32 %v5378, %v4875
    %5382 = vrot.lane.b32.xlu0 %v5379, 64
    %v5383 = vpop.permute.xlu0 %5382
    %v5385 = vmul.f32 %v5378, %v5383
    %5387 = vrot.lane.b32.xlu0 %v5385, 32
    %v5388 = vpop.permute.xlu0 %5387
    %v5390 = vadd.f32 %v5380, %v5388
    %v5391 = vtanh.pop %v5390
    %5393 = vrot.lane.b32.xlu0 %v5391, 64
    %v5394 = vpop.permute.xlu0 %5393
    %v5396 = vmul.f32 %v5378, %v5394
    %5398 = vrot.lane.b32.xlu0 %v5396, 32
    %v5399 = vpop.permute.xlu0 %5398
    %5401 = vrot.lane.b32.xlu0 %v5291, 64
    %v5402 = vpop.permute.xlu0 %5401
    %5405 = vrot.lane.b32.xlu0 %v5068, 64
    %v5406 = vpop.permute.xlu0 %5405
    %v5408 = vsel %vm390, %v5399, %v5402
    %v5409 = vsel %vm2318, %v5408, %v5406
    %v5411 = vsel %vm2204, %v5409, 0
    %5413 = vmatprep.subr.mxu0 0.0
    %5414 = vmatpush1.msra.mxu0 %v183
    %5415 = vmatprep.subr.mxu0 0.0
    %5416 = vmatpush1.msra.mxu0 %v184
    %5417 = vmatprep.subr.mxu0 0.0
    %5418 = vmatpush1.msra.mxu0 %v185
    %5419 = vmatprep.subr.mxu0 0.0
    %5420 = vmatpush1.msra.mxu0 %v186
    %5421 = vmatprep.subr.mxu0 0.0
    %5422 = vmatpush1.msra.mxu0 %v187
    %5423 = vmatprep.subr.mxu0 0.0
    %5424 = vmatpush1.msra.mxu0 %v188
    %5425 = vmatprep.subr.mxu0 0.0
    %5426 = vmatpush1.msra.mxu0 %v189
    %5427 = vmatprep.subr.mxu0 0.0
    %5428 = vmatpush1.msra.mxu0 %v190
    %5429 = vmatprep.subr.mxu0 0.0
    %5430 = vmatpush1.msra.mxu0 %v191
    %5431 = vmatprep.subr.mxu0 0.0
    %5432 = vmatpush1.msra.mxu0 %v192
    %5433 = vmatprep.subr.mxu0 0.0
    %5434 = vmatpush1.msra.mxu0 0.0
    %5435 = vmatprep.subr.mxu0 0.0
    %5436 = vmatpush1.msra.mxu0 0.0
    %5437 = vmatprep.subr.mxu0 0.0
    %5438 = vmatpush1.msra.mxu0 0.0
    %5439 = vmatprep.subr.mxu0 0.0
    %5440 = vmatpush1.msra.mxu0 0.0
    %5441 = vmatprep.subr.mxu0 0.0
    %5442 = vmatpush1.msra.mxu0 0.0
    %5443 = vmatprep.subr.mxu0 0.0
    %5444 = vmatpush1.msra.mxu0 0.0
    %5445 = vmatprep.subr.mxu0 0.0
    %5446 = vmatpush1.msra.mxu0 0.0
    %5447 = vmatprep.subr.mxu0 0.0
    %5448 = vmatpush1.msra.mxu0 0.0
    %5449 = vmatprep.subr.mxu0 0.0
    %5450 = vmatpush1.msra.mxu0 0.0
    %5451 = vmatprep.subr.mxu0 0.0
    %5452 = vmatpush1.msra.mxu0 0.0
    %5453 = vmatprep.subr.mxu0 0.0
    %5454 = vmatpush1.msra.mxu0 0.0
    %5455 = vmatprep.subr.mxu0 0.0
    %5456 = vmatpush1.msra.mxu0 0.0
    %5457 = vmatprep.subr.mxu0 0.0
    %5458 = vmatpush1.msra.mxu0 0.0
    %5459 = vmatprep.subr.mxu0 0.0
    %5460 = vmatpush1.msra.mxu0 0.0
    %5461 = vmatprep.subr.mxu0 0.0
    %5462 = vmatpush1.msra.mxu0 0.0
    %5463 = vmatprep.subr.mxu0 0.0
    %5464 = vmatpush1.msra.mxu0 0.0
    %5465 = vmatprep.subr.mxu0 0.0
    %5466 = vmatpush1.msra.mxu0 0.0
    %5467 = vmatprep.subr.mxu0 0.0
    %5468 = vmatpush1.msra.mxu0 0.0
    %5469 = vmatprep.subr.mxu0 0.0
    %5470 = vmatpush1.msra.mxu0 0.0
    %5471 = vmatprep.subr.mxu0 0.0
    %5472 = vmatpush1.msra.mxu0 0.0
    %5473 = vmatprep.subr.mxu0 0.0
    %5474 = vmatpush1.msra.mxu0 0.0
    %5475 = vmatprep.subr.mxu0 0.0
    %5476 = vmatpush1.msra.mxu0 0.0
    %5477 = vmatprep.mubr.f32.mxu0 0.0
    %5478 = vmatmul.mubr.f32.gmra.mrb[0].mxu0 %v5411
    %v5479 = vpop.f32.mrb[0].mxu0
    %v5480 = vadd.f32 %v205, %v5479
    %v5481 = vpop.f32.mrb[0].mxu0
    %5482 = vdwg.mxu0
    %s5483 = scalar_lea.vmem [#allocation15], 14
    %5484 = vst [vmem:[%s5483] sm:$0x3] %v5480
    // Predicated region
    $region94: #{tpu_custom_call.1} parent=1 // pred_check
      _
    $region95: #{tpu_custom_call.1} parent=1 // pred_check_branch
      %5486 = sbr.rel (0) target = $region97
    $region96: #{tpu_custom_call.1} parent=1 // pred_region
      %s5488 = ssub.s32 256, 256
      %5489 = vsyncadd [#allocation4], %s5488
      %s5490 = sshll.u32 [#allocation15], 4
      %s5491 = int_to_ptr.vmem [resolvable:$true] %s5490
      %5496 = dma.vmem_to_hbm [thread:$0]  %s5491, 256, %s16, [#allocation4], 32, 32, 2
    $region97: #{tpu_custom_call.1} parent=1 // pred_fallthru
      _
    // Predicated region
    $region98: #{tpu_custom_call.1} parent=1 // pred_check
      _
    $region99: #{tpu_custom_call.1} parent=1 // pred_check_branch
      %5498 = sbr.rel (0) target = $region101
    $region100: #{tpu_custom_call.1} parent=1 // pred_region
      %5499 = dma.done [#allocation4], 256
    $region101: #{tpu_custom_call.1} parent=1 // pred_fallthru
      _
    %5500 = vsyncpa [#allocation3], 1
    %5501 = vsyncpa [#allocation8], 1
    %5502 = vsyncpa [#allocation11], 1
    %5503 = vsyncpa [#allocation14], 1
    %5504 = vsyncpa [#allocation4], 1
    %5505 = vsyncpa [#allocation5], 1

</llo_original>
